<compile_context>
chip_gen: v6e
topology: v6e:2x2x1
jax: 0.10.0
libtpu: 0.0.40
codegen_flags: <defaults>
</compile_context>

<pallas_src>
import functools
import math

import jax
import jax.numpy as jnp
from jax import lax
from jax.experimental import pallas as pl
from jax.experimental.pallas import tpu as pltpu

KH = KW = 5
STRIDE = 2


def _conv_out(size):
    return (size - KH) // STRIDE + 1


# ---------------------------------------------------------------------------
# Fused Pallas kernel (one batch element per grid program)
# ---------------------------------------------------------------------------
def _fused_value_kernel(x_ref, ps_ref,
                        cw1_ref, cb1_ref, cw2_ref, cb2_ref, cw3_ref, cb3_ref,
                        we_ref, be_ref, w1a_ref, w1b_ref, bf1_ref,
                        wf2_ref, bf2_ref, wf3_ref, bf3_ref,
                        o_ref,
                        a1_ref, a2_ref, pool_ref,
                        *, ho1, wo1, ho2, wo2, ho3, wo3):
    f32 = jnp.float32

    def parity_mats(wo):
        # Row de-interleave selection matrices (constants, built from 2-D iota):
        # (S_e @ y)[r] = y[2r], (S_o @ y)[r] = y[2r+1] (out-of-range rows -> 0).
        woc = (wo + 1) // 2
        r = lax.broadcasted_iota(jnp.int32, (woc, wo), 0)
        c = lax.broadcasted_iota(jnp.int32, (woc, wo), 1)
        return (c == 2 * r).astype(f32), (c == 2 * r + 1).astype(f32)

    def conv_rows(read_tap, write_row, n_rows, w_ref, b_ref):
        # w_ref: (25, cin, cout); read_tap(h_in, b, q) -> (wo, cin) contiguous slice.
        def body(ho, carry):
            acc = None
            for i in range(KH):
                hin = STRIDE * ho + i
                for j in range(KW):
                    lhs = read_tap(hin, j // 2, j % 2)                 # (wo, cin)
                    part = jnp.dot(lhs, w_ref[i * KW + j],
                                   preferred_element_type=f32)          # (wo, cout)
                    acc = part if acc is None else acc + part
            write_row(ho, jnp.maximum(acc + b_ref[...], 0.0))
            return carry
        lax.fori_loop(0, n_rows, body, 0)

    # ---- conv1: input (parity-split) -> a1 scratch (parity-split) ------------
    s_e1, s_o1 = parity_mats(wo1)

    def read1(h, b, q):
        return x_ref[0, q, h, pl.ds(b, wo1), :]

    def write1(ho, y):  # y: (wo1, 16)
        a1_ref[0, ho, :, :] = jnp.dot(s_e1, y, preferred_element_type=f32)
        a1_ref[1, ho, :, :] = jnp.dot(s_o1, y, preferred_element_type=f32)

    conv_rows(read1, write1, ho1, cw1_ref, cb1_ref)

    # ---- conv2: a1 -> a2 scratch (parity-split) ------------------------------
    s_e2, s_o2 = parity_mats(wo2)

    def read2(h, b, q):
        return a1_ref[q, h, pl.ds(b, wo2), :]

    def write2(ho, y):  # y: (wo2, 64)
        a2_ref[0, ho, :, :] = jnp.dot(s_e2, y, preferred_element_type=f32)
        a2_ref[1, ho, :, :] = jnp.dot(s_o2, y, preferred_element_type=f32)

    conv_rows(read2, write2, ho2, cw2_ref, cb2_ref)

    # ---- conv3 + AdaptiveAvgPool2d((1,1)) fused: accumulate spatial sum ------
    pool_ref[...] = jnp.zeros_like(pool_ref)

    def read3(h, b, q):
        return a2_ref[q, h, pl.ds(b, wo3), :]

    def write3(ho, y):  # y: (wo3, 256)
        pool_ref[...] += jnp.sum(y, axis=0, keepdims=True)

    conv_rows(read3, write3, ho3, cw3_ref, cb3_ref)

    feat = pool_ref[...] * (1.0 / float(ho3 * wo3))                     # (1, 256)

    # ---- head: fc_embed, concat (as split matmuls), fc1, fc2, fc3 ------------
    emb = jnp.dot(ps_ref[0], we_ref[...], preferred_element_type=f32)
    emb = jnp.maximum(emb + be_ref[...], 0.0)                           # (1, 32)

    h = (jnp.dot(feat, w1a_ref[...], preferred_element_type=f32)
         + jnp.dot(emb, w1b_ref[...], preferred_element_type=f32)
         + bf1_ref[...])
    h = jnp.maximum(h, 0.0)                                             # (1, 128)
    h = jnp.maximum(jnp.dot(h, wf2_ref[...], preferred_element_type=f32)
                    + bf2_ref[...], 0.0)                                # (1, 32)
    o_ref[0] = (jnp.dot(h, wf3_ref[...], preferred_element_type=f32)
                + bf3_ref[...])                                         # (1, A)


# ---------------------------------------------------------------------------
# Parameters (deterministic synthetic init; shapes from ValueNetwork.__init__)
# ---------------------------------------------------------------------------
def init_params(key, channel, nb_actions, nb_pstate):
    ks = jax.random.split(key, 16)

    def unif(k, shape, bound):
        return jax.random.uniform(k, shape, jnp.float32, -bound, bound)

    def xavier(k, fan_in, fan_out):
        return unif(k, (fan_in, fan_out), math.sqrt(6.0 / (fan_in + fan_out)))

    p = {}
    p["conv1_w"] = unif(ks[0], (16, channel, 5, 5), 1.0 / math.sqrt(channel * 25))
    p["conv1_b"] = unif(ks[1], (16,), 1.0 / math.sqrt(channel * 25))
    p["conv2_w"] = unif(ks[2], (64, 16, 5, 5), 1.0 / math.sqrt(16 * 25))
    p["conv2_b"] = unif(ks[3], (64,), 1.0 / math.sqrt(16 * 25))
    p["conv3_w"] = unif(ks[4], (256, 64, 5, 5), 1.0 / math.sqrt(64 * 25))
    p["conv3_b"] = unif(ks[5], (256,), 1.0 / math.sqrt(64 * 25))
    d_fc1_in = 256 + 32 + nb_actions
    p["fc1_w"] = xavier(ks[6], d_fc1_in, 128)           # stored (in, out)
    p["fc1_b"] = unif(ks[7], (128,), 1.0 / math.sqrt(d_fc1_in))
    p["fc2_w"] = xavier(ks[8], 128, 32)
    p["fc2_b"] = unif(ks[9], (32,), 1.0 / math.sqrt(128))
    p["fc3_w"] = xavier(ks[10], 32, nb_actions)
    p["fc3_b"] = unif(ks[11], (nb_actions,), 1.0 / math.sqrt(32))
    p["fce_w"] = xavier(ks[12], nb_pstate, 32)
    p["fce_b"] = unif(ks[13], (32,), 1.0 / math.sqrt(nb_pstate))
    return p


def pack_params(params):
    """One-time weight re-packing (done outside the per-step forward)."""
    def pack_conv(w):  # OIHW -> (KH*KW, Cin, Cout), tap index t = i*KW + j
        o, i, kh, kw = w.shape
        return jnp.transpose(w, (2, 3, 1, 0)).reshape(kh * kw, i, o)

    # TODO(synk): fc1 is declared with in_features = 256+32+nb_actions but the
    # PyTorch forward only concatenates 256+32 features (it would raise a shape
    # error); we use fc1_w's first 288 input rows, same as the reference below.
    return {
        "cw1": pack_conv(params["conv1_w"]), "cb1": params["conv1_b"].reshape(1, -1),
        "cw2": pack_conv(params["conv2_w"]), "cb2": params["conv2_b"].reshape(1, -1),
        "cw3": pack_conv(params["conv3_w"]), "cb3": params["conv3_b"].reshape(1, -1),
        "we": params["fce_w"], "be": params["fce_b"].reshape(1, -1),
        "w1a": params["fc1_w"][:256], "w1b": params["fc1_w"][256:288],
        "bf1": params["fc1_b"].reshape(1, -1),
        "wf2": params["fc2_w"], "bf2": params["fc2_b"].reshape(1, -1),
        "wf3": params["fc3_w"], "bf3": params["fc3_b"].reshape(1, -1),
    }


# ---------------------------------------------------------------------------
# Forward pass (single fused pallas_call under jit) and pure-JAX reference
# ---------------------------------------------------------------------------
@jax.jit
def value_network_forward(packed, istate_nchw, pstate):
    x = jnp.transpose(istate_nchw, (0, 2, 3, 1)).astype(jnp.float32)   # NHWC
    n, hi, wi, c0 = x.shape
    if wi % 2:
        x = jnp.pad(x, ((0, 0), (0, 0), (0, 1), (0, 0)))
    wic = (wi + 1) // 2
    # W-parity split: [n, q, h, r, c] = x[n, h, 2r+q, c]
    x = x.reshape(n, hi, wic, 2, c0).transpose(0, 3, 1, 2, 4)

    ho1, wo1 = _conv_out(hi), _conv_out(wi)
    ho2, wo2 = _conv_out(ho1), _conv_out(wo1)
    ho3, wo3 = _conv_out(ho2), _conv_out(wo2)

    ps = pstate.astype(jnp.float32).reshape(n, 1, -1)
    nb_p = ps.shape[-1]
    nb_a = packed["wf3"].shape[-1]
    c1 = packed["cw1"].shape[-1]
    c2 = packed["cw2"].shape[-1]
    c3 = packed["cw3"].shape[-1]

    kernel = functools.partial(_fused_value_kernel, ho1=ho1, wo1=wo1,
                               ho2=ho2, wo2=wo2, ho3=ho3, wo3=wo3)

    def full(shape):
        return pl.BlockSpec(shape, lambda i, _s=shape: (0,) * len(_s))

    in_specs = [
        pl.BlockSpec((1, 2, hi, wic, c0), lambda i: (i, 0, 0, 0, 0)),
        pl.BlockSpec((1, 1, nb_p), lambda i: (i, 0, 0)),
        full(packed["cw1"].shape), full(packed["cb1"].shape),
        full(packed["cw2"].shape), full(packed["cb2"].shape),
        full(packed["cw3"].shape), full(packed["cb3"].shape),
        full(packed["we"].shape), full(packed["be"].shape),
        full(packed["w1a"].shape), full(packed["w1b"].shape), full(packed["bf1"].shape),
        full(packed["wf2"].shape), full(packed["bf2"].shape),
        full(packed["wf3"].shape), full(packed["bf3"].shape),
    ]

    out = pl.pallas_call(
        kernel,
        out_shape=jax.ShapeDtypeStruct((n, 1, nb_a), jnp.float32),
        grid=(n,),
        in_specs=in_specs,
        out_specs=pl.BlockSpec((1, 1, nb_a), lambda i: (i, 0, 0)),
        scratch_shapes=[
            pltpu.VMEM((2, ho1, (wo1 + 1) // 2, c1), jnp.float32),  # conv1 out
            pltpu.VMEM((2, ho2, (wo2 + 1) // 2, c2), jnp.float32),  # conv2 out
            pltpu.VMEM((1, c3), jnp.float32),                       # pooled sum
        ],
        compiler_params=pltpu.CompilerParams(
            dimension_semantics=("parallel",)),
    )(x, ps, packed["cw1"], packed["cb1"], packed["cw2"], packed["cb2"],
      packed["cw3"], packed["cb3"], packed["we"], packed["be"],
      packed["w1a"], packed["w1b"], packed["bf1"],
      packed["wf2"], packed["bf2"], packed["wf3"], packed["bf3"])
    return out.reshape(n, nb_a)


def reference_forward(params, istate_nchw, pstate):
    def conv(x, w, b):
        y = lax.conv_general_dilated(x, w, (2, 2), "VALID",
                                     dimension_numbers=("NCHW", "OIHW", "NCHW"))
        return jax.nn.relu(y + b[None, :, None, None])

    x = conv(istate_nchw, params["conv1_w"], params["conv1_b"])
    x = conv(x, params["conv2_w"], params["conv2_b"])
    x = conv(x, params["conv3_w"], params["conv3_b"])
    x1 = jnp.mean(x, axis=(2, 3))
    x2 = jax.nn.relu(pstate @ params["fce_w"] + params["fce_b"])
    xc = jnp.concatenate([x1, x2], axis=1)
    h = jax.nn.relu(xc @ params["fc1_w"][:288] + params["fc1_b"])
    h = jax.nn.relu(h @ params["fc2_w"] + params["fc2_b"])
    return h @ params["fc3_w"] + params["fc3_b"]


# ---------------------------------------------------------------------------
if __name__ == "__main__":
    # batch=2, channel=4, spatial=37 (-> 17 -> 7 -> 2 after three stride-2 5x5
    # convs), nb_pstate=5, nb_actions=3.
    batch, channel, spatial = 2, 4, 37
    nb_actions, nb_pstate = 3, 5

    key = jax.random.PRNGKey(0)
    k_params, k_istate, k_pstate = jax.random.split(key, 3)

    params = init_params(k_params, channel, nb_actions, nb_pstate)
    packed = pack_params(params)
    istate = jax.random.normal(k_istate, (batch, channel, spatial, spatial),
                               jnp.float32)
    pstate = jax.random.normal(k_pstate, (batch, nb_pstate), jnp.float32)

    out = value_network_forward(packed, istate, pstate)
    out = jax.block_until_ready(out)
    assert out.shape == (batch, nb_actions), out.shape

    ref = reference_forward(params, istate, pstate)
    assert jnp.allclose(out, ref, rtol=2e-2, atol=2e-2), (out, ref)

    print("KERNEL_OK")
</pallas_src>

<mosaic_0001>
module attributes {stable_mosaic.version = 11 : i64} {
  func.func @_fused_value_kernel(%arg0: i32, %arg1: memref<1x2x37x19x4xf32, #tpu.memory_space<vmem>>, %arg2: memref<1x1x5xf32, #tpu.memory_space<vmem>>, %arg3: memref<25x4x16xf32, #tpu.memory_space<vmem>>, %arg4: memref<1x16xf32, #tpu.memory_space<vmem>>, %arg5: memref<25x16x64xf32, #tpu.memory_space<vmem>>, %arg6: memref<1x64xf32, #tpu.memory_space<vmem>>, %arg7: memref<25x64x256xf32, #tpu.memory_space<vmem>>, %arg8: memref<1x256xf32, #tpu.memory_space<vmem>>, %arg9: memref<5x32xf32, #tpu.memory_space<vmem>>, %arg10: memref<1x32xf32, #tpu.memory_space<vmem>>, %arg11: memref<256x128xf32, #tpu.memory_space<vmem>>, %arg12: memref<32x128xf32, #tpu.memory_space<vmem>>, %arg13: memref<1x128xf32, #tpu.memory_space<vmem>>, %arg14: memref<128x32xf32, #tpu.memory_space<vmem>>, %arg15: memref<1x32xf32, #tpu.memory_space<vmem>>, %arg16: memref<32x3xf32, #tpu.memory_space<vmem>>, %arg17: memref<1x3xf32, #tpu.memory_space<vmem>>, %arg18: memref<1x1x3xf32, #tpu.memory_space<vmem>>, %arg19: memref<2x17x9x16xf32, #tpu.memory_space<vmem>>, %arg20: memref<2x7x4x64xf32, #tpu.memory_space<vmem>>, %arg21: memref<1x256xf32, #tpu.memory_space<vmem>>) attributes {dimension_semantics = [#tpu.dimension_semantics<parallel>], iteration_bounds = array<i64: 2>, scalar_prefetch = 0 : i64, scratch_operands = 3 : i64, tpu.core_type = #tpu.core_type<tc>, window_params = [{transform_indices = @transform_0, window_bounds = array<i64: 1, 2, 37, 19, 4>}, {transform_indices = @transform_1, window_bounds = array<i64: 1, 1, 5>}, {pipeline_mode = #tpu.pipeline_mode<synchronous>, transform_indices = @transform_2, window_bounds = array<i64: 25, 4, 16>}, {pipeline_mode = #tpu.pipeline_mode<synchronous>, transform_indices = @transform_3, window_bounds = array<i64: 1, 16>}, {pipeline_mode = #tpu.pipeline_mode<synchronous>, transform_indices = @transform_4, window_bounds = array<i64: 25, 16, 64>}, {pipeline_mode = #tpu.pipeline_mode<synchronous>, transform_indices = @transform_5, window_bounds = array<i64: 1, 64>}, {pipeline_mode = #tpu.pipeline_mode<synchronous>, transform_indices = @transform_6, window_bounds = array<i64: 25, 64, 256>}, {pipeline_mode = #tpu.pipeline_mode<synchronous>, transform_indices = @transform_7, window_bounds = array<i64: 1, 256>}, {pipeline_mode = #tpu.pipeline_mode<synchronous>, transform_indices = @transform_8, window_bounds = array<i64: 5, 32>}, {pipeline_mode = #tpu.pipeline_mode<synchronous>, transform_indices = @transform_9, window_bounds = array<i64: 1, 32>}, {pipeline_mode = #tpu.pipeline_mode<synchronous>, transform_indices = @transform_10, window_bounds = array<i64: 256, 128>}, {pipeline_mode = #tpu.pipeline_mode<synchronous>, transform_indices = @transform_11, window_bounds = array<i64: 32, 128>}, {pipeline_mode = #tpu.pipeline_mode<synchronous>, transform_indices = @transform_12, window_bounds = array<i64: 1, 128>}, {pipeline_mode = #tpu.pipeline_mode<synchronous>, transform_indices = @transform_13, window_bounds = array<i64: 128, 32>}, {pipeline_mode = #tpu.pipeline_mode<synchronous>, transform_indices = @transform_14, window_bounds = array<i64: 1, 32>}, {pipeline_mode = #tpu.pipeline_mode<synchronous>, transform_indices = @transform_15, window_bounds = array<i64: 32, 3>}, {pipeline_mode = #tpu.pipeline_mode<synchronous>, transform_indices = @transform_16, window_bounds = array<i64: 1, 3>}, {transform_indices = @transform_17, window_bounds = array<i64: 1, 1, 3>}]} {
    %0 = tpu.iota {dimensions = array<i32: 0>} : vector<9x17xi32>
    %1 = tpu.iota {dimensions = array<i32: 1>} : vector<9x17xi32>
    %c2_i32 = arith.constant 2 : i32
    %2 = vector.broadcast %c2_i32 : i32 to vector<9x17xi32>
    %3 = arith.muli %2, %0 : vector<9x17xi32>
    %4 = arith.cmpi eq, %1, %3 : vector<9x17xi32>
    %5 = arith.extui %4 : vector<9x17xi1> to vector<9x17xi32>
    %6 = arith.sitofp %5 : vector<9x17xi32> to vector<9x17xf32>
    %c2_i32_0 = arith.constant 2 : i32
    %7 = vector.broadcast %c2_i32_0 : i32 to vector<9x17xi32>
    %8 = arith.muli %7, %0 : vector<9x17xi32>
    %c1_i32 = arith.constant 1 : i32
    %9 = vector.broadcast %c1_i32 : i32 to vector<9x17xi32>
    %10 = arith.addi %8, %9 : vector<9x17xi32>
    %11 = arith.cmpi eq, %1, %10 : vector<9x17xi32>
    %12 = arith.extui %11 : vector<9x17xi1> to vector<9x17xi32>
    %13 = arith.sitofp %12 : vector<9x17xi32> to vector<9x17xf32>
    %c0_i32 = arith.constant 0 : i32
    %c17_i32 = arith.constant 17 : i32
    %14 = arith.addi %c0_i32, %c17_i32 : i32
    %c1_i32_1 = arith.constant 1 : i32
    scf.for %arg22 = %c0_i32 to %14 step %c1_i32_1  : i32 {
      %c2_i32_49 = arith.constant 2 : i32
      %66 = arith.muli %c2_i32_49, %arg22 : i32
      %c0_i32_50 = arith.constant 0 : i32
      %67 = arith.addi %66, %c0_i32_50 : i32
      %c0_51 = arith.constant 0 : index
      %c0_52 = arith.constant 0 : index
      %68 = arith.index_cast %67 : i32 to index
      %c0_53 = arith.constant 0 : index
      %c0_54 = arith.constant 0 : index
      %69 = vector.load %arg1[%c0_51, %c0_52, %68, %c0_53, %c0_54] : memref<1x2x37x19x4xf32, #tpu.memory_space<vmem>>, vector<1x1x1x17x4xf32>
      %70 = vector.shape_cast %69 : vector<1x1x1x17x4xf32> to vector<17x4xf32>
      %c0_55 = arith.constant 0 : index
      %c0_56 = arith.constant 0 : index
      %c0_57 = arith.constant 0 : index
      %71 = vector.load %arg3[%c0_55, %c0_56, %c0_57] : memref<25x4x16xf32, #tpu.memory_space<vmem>>, vector<1x4x16xf32>
      %72 = vector.shape_cast %71 : vector<1x4x16xf32> to vector<4x16xf32>
      %cst_58 = arith.constant dense<0.000000e+00> : vector<17x16xf32>
      %73 = tpu.matmul %70, %72, %cst_58 {dimension_numbers = #tpu.dot_dimension_numbers<[1], [0], [0], [1], [0, 0, 1, 1], [], []>} : vector<17x4xf32>, vector<4x16xf32>, vector<17x16xf32> -> vector<17x16xf32>
      %c0_59 = arith.constant 0 : index
      %c1 = arith.constant 1 : index
      %74 = arith.index_cast %67 : i32 to index
      %c0_60 = arith.constant 0 : index
      %c0_61 = arith.constant 0 : index
      %75 = vector.load %arg1[%c0_59, %c1, %74, %c0_60, %c0_61] : memref<1x2x37x19x4xf32, #tpu.memory_space<vmem>>, vector<1x1x1x17x4xf32>
      %76 = vector.shape_cast %75 : vector<1x1x1x17x4xf32> to vector<17x4xf32>
      %c1_62 = arith.constant 1 : index
      %c0_63 = arith.constant 0 : index
      %c0_64 = arith.constant 0 : index
      %77 = vector.load %arg3[%c1_62, %c0_63, %c0_64] : memref<25x4x16xf32, #tpu.memory_space<vmem>>, vector<1x4x16xf32>
      %78 = vector.shape_cast %77 : vector<1x4x16xf32> to vector<4x16xf32>
      %cst_65 = arith.constant dense<0.000000e+00> : vector<17x16xf32>
      %79 = tpu.matmul %76, %78, %cst_65 {dimension_numbers = #tpu.dot_dimension_numbers<[1], [0], [0], [1], [0, 0, 1, 1], [], []>} : vector<17x4xf32>, vector<4x16xf32>, vector<17x16xf32> -> vector<17x16xf32>
      %80 = arith.addf %73, %79 : vector<17x16xf32>
      %c0_66 = arith.constant 0 : index
      %c0_67 = arith.constant 0 : index
      %81 = arith.index_cast %67 : i32 to index
      %c1_68 = arith.constant 1 : index
      %c0_69 = arith.constant 0 : index
      %82 = vector.load %arg1[%c0_66, %c0_67, %81, %c1_68, %c0_69] : memref<1x2x37x19x4xf32, #tpu.memory_space<vmem>>, vector<1x1x1x17x4xf32>
      %83 = vector.shape_cast %82 : vector<1x1x1x17x4xf32> to vector<17x4xf32>
      %c2 = arith.constant 2 : index
      %c0_70 = arith.constant 0 : index
      %c0_71 = arith.constant 0 : index
      %84 = vector.load %arg3[%c2, %c0_70, %c0_71] : memref<25x4x16xf32, #tpu.memory_space<vmem>>, vector<1x4x16xf32>
      %85 = vector.shape_cast %84 : vector<1x4x16xf32> to vector<4x16xf32>
      %cst_72 = arith.constant dense<0.000000e+00> : vector<17x16xf32>
      %86 = tpu.matmul %83, %85, %cst_72 {dimension_numbers = #tpu.dot_dimension_numbers<[1], [0], [0], [1], [0, 0, 1, 1], [], []>} : vector<17x4xf32>, vector<4x16xf32>, vector<17x16xf32> -> vector<17x16xf32>
      %87 = arith.addf %80, %86 : vector<17x16xf32>
      %c0_73 = arith.constant 0 : index
      %c1_74 = arith.constant 1 : index
      %88 = arith.index_cast %67 : i32 to index
      %c1_75 = arith.constant 1 : index
      %c0_76 = arith.constant 0 : index
      %89 = vector.load %arg1[%c0_73, %c1_74, %88, %c1_75, %c0_76] : memref<1x2x37x19x4xf32, #tpu.memory_space<vmem>>, vector<1x1x1x17x4xf32>
      %90 = vector.shape_cast %89 : vector<1x1x1x17x4xf32> to vector<17x4xf32>
      %c3 = arith.constant 3 : index
      %c0_77 = arith.constant 0 : index
      %c0_78 = arith.constant 0 : index
      %91 = vector.load %arg3[%c3, %c0_77, %c0_78] : memref<25x4x16xf32, #tpu.memory_space<vmem>>, vector<1x4x16xf32>
      %92 = vector.shape_cast %91 : vector<1x4x16xf32> to vector<4x16xf32>
      %cst_79 = arith.constant dense<0.000000e+00> : vector<17x16xf32>
      %93 = tpu.matmul %90, %92, %cst_79 {dimension_numbers = #tpu.dot_dimension_numbers<[1], [0], [0], [1], [0, 0, 1, 1], [], []>} : vector<17x4xf32>, vector<4x16xf32>, vector<17x16xf32> -> vector<17x16xf32>
      %94 = arith.addf %87, %93 : vector<17x16xf32>
      %c0_80 = arith.constant 0 : index
      %c0_81 = arith.constant 0 : index
      %95 = arith.index_cast %67 : i32 to index
      %c2_82 = arith.constant 2 : index
      %c0_83 = arith.constant 0 : index
      %96 = vector.load %arg1[%c0_80, %c0_81, %95, %c2_82, %c0_83] : memref<1x2x37x19x4xf32, #tpu.memory_space<vmem>>, vector<1x1x1x17x4xf32>
      %97 = vector.shape_cast %96 : vector<1x1x1x17x4xf32> to vector<17x4xf32>
      %c4 = arith.constant 4 : index
      %c0_84 = arith.constant 0 : index
      %c0_85 = arith.constant 0 : index
      %98 = vector.load %arg3[%c4, %c0_84, %c0_85] : memref<25x4x16xf32, #tpu.memory_space<vmem>>, vector<1x4x16xf32>
      %99 = vector.shape_cast %98 : vector<1x4x16xf32> to vector<4x16xf32>
      %cst_86 = arith.constant dense<0.000000e+00> : vector<17x16xf32>
      %100 = tpu.matmul %97, %99, %cst_86 {dimension_numbers = #tpu.dot_dimension_numbers<[1], [0], [0], [1], [0, 0, 1, 1], [], []>} : vector<17x4xf32>, vector<4x16xf32>, vector<17x16xf32> -> vector<17x16xf32>
      %101 = arith.addf %94, %100 : vector<17x16xf32>
      %c2_i32_87 = arith.constant 2 : i32
      %102 = arith.muli %c2_i32_87, %arg22 : i32
      %c1_i32_88 = arith.constant 1 : i32
      %103 = arith.addi %102, %c1_i32_88 : i32
      %c0_89 = arith.constant 0 : index
      %c0_90 = arith.constant 0 : index
      %104 = arith.index_cast %103 : i32 to index
      %c0_91 = arith.constant 0 : index
      %c0_92 = arith.constant 0 : index
      %105 = vector.load %arg1[%c0_89, %c0_90, %104, %c0_91, %c0_92] : memref<1x2x37x19x4xf32, #tpu.memory_space<vmem>>, vector<1x1x1x17x4xf32>
      %106 = vector.shape_cast %105 : vector<1x1x1x17x4xf32> to vector<17x4xf32>
      %c5 = arith.constant 5 : index
      %c0_93 = arith.constant 0 : index
      %c0_94 = arith.constant 0 : index
      %107 = vector.load %arg3[%c5, %c0_93, %c0_94] : memref<25x4x16xf32, #tpu.memory_space<vmem>>, vector<1x4x16xf32>
      %108 = vector.shape_cast %107 : vector<1x4x16xf32> to vector<4x16xf32>
      %cst_95 = arith.constant dense<0.000000e+00> : vector<17x16xf32>
      %109 = tpu.matmul %106, %108, %cst_95 {dimension_numbers = #tpu.dot_dimension_numbers<[1], [0], [0], [1], [0, 0, 1, 1], [], []>} : vector<17x4xf32>, vector<4x16xf32>, vector<17x16xf32> -> vector<17x16xf32>
      %110 = arith.addf %101, %109 : vector<17x16xf32>
      %c0_96 = arith.constant 0 : index
      %c1_97 = arith.constant 1 : index
      %111 = arith.index_cast %103 : i32 to index
      %c0_98 = arith.constant 0 : index
      %c0_99 = arith.constant 0 : index
      %112 = vector.load %arg1[%c0_96, %c1_97, %111, %c0_98, %c0_99] : memref<1x2x37x19x4xf32, #tpu.memory_space<vmem>>, vector<1x1x1x17x4xf32>
      %113 = vector.shape_cast %112 : vector<1x1x1x17x4xf32> to vector<17x4xf32>
      %c6 = arith.constant 6 : index
      %c0_100 = arith.constant 0 : index
      %c0_101 = arith.constant 0 : index
      %114 = vector.load %arg3[%c6, %c0_100, %c0_101] : memref<25x4x16xf32, #tpu.memory_space<vmem>>, vector<1x4x16xf32>
      %115 = vector.shape_cast %114 : vector<1x4x16xf32> to vector<4x16xf32>
      %cst_102 = arith.constant dense<0.000000e+00> : vector<17x16xf32>
      %116 = tpu.matmul %113, %115, %cst_102 {dimension_numbers = #tpu.dot_dimension_numbers<[1], [0], [0], [1], [0, 0, 1, 1], [], []>} : vector<17x4xf32>, vector<4x16xf32>, vector<17x16xf32> -> vector<17x16xf32>
      %117 = arith.addf %110, %116 : vector<17x16xf32>
      %c0_103 = arith.constant 0 : index
      %c0_104 = arith.constant 0 : index
      %118 = arith.index_cast %103 : i32 to index
      %c1_105 = arith.constant 1 : index
      %c0_106 = arith.constant 0 : index
      %119 = vector.load %arg1[%c0_103, %c0_104, %118, %c1_105, %c0_106] : memref<1x2x37x19x4xf32, #tpu.memory_space<vmem>>, vector<1x1x1x17x4xf32>
      %120 = vector.shape_cast %119 : vector<1x1x1x17x4xf32> to vector<17x4xf32>
      %c7 = arith.constant 7 : index
      %c0_107 = arith.constant 0 : index
      %c0_108 = arith.constant 0 : index
      %121 = vector.load %arg3[%c7, %c0_107, %c0_108] : memref<25x4x16xf32, #tpu.memory_space<vmem>>, vector<1x4x16xf32>
      %122 = vector.shape_cast %121 : vector<1x4x16xf32> to vector<4x16xf32>
      %cst_109 = arith.constant dense<0.000000e+00> : vector<17x16xf32>
      %123 = tpu.matmul %120, %122, %cst_109 {dimension_numbers = #tpu.dot_dimension_numbers<[1], [0], [0], [1], [0, 0, 1, 1], [], []>} : vector<17x4xf32>, vector<4x16xf32>, vector<17x16xf32> -> vector<17x16xf32>
      %124 = arith.addf %117, %123 : vector<17x16xf32>
      %c0_110 = arith.constant 0 : index
      %c1_111 = arith.constant 1 : index
      %125 = arith.index_cast %103 : i32 to index
      %c1_112 = arith.constant 1 : index
      %c0_113 = arith.constant 0 : index
      %126 = vector.load %arg1[%c0_110, %c1_111, %125, %c1_112, %c0_113] : memref<1x2x37x19x4xf32, #tpu.memory_space<vmem>>, vector<1x1x1x17x4xf32>
      %127 = vector.shape_cast %126 : vector<1x1x1x17x4xf32> to vector<17x4xf32>
      %c8 = arith.constant 8 : index
      %c0_114 = arith.constant 0 : index
      %c0_115 = arith.constant 0 : index
      %128 = vector.load %arg3[%c8, %c0_114, %c0_115] : memref<25x4x16xf32, #tpu.memory_space<vmem>>, vector<1x4x16xf32>
      %129 = vector.shape_cast %128 : vector<1x4x16xf32> to vector<4x16xf32>
      %cst_116 = arith.constant dense<0.000000e+00> : vector<17x16xf32>
      %130 = tpu.matmul %127, %129, %cst_116 {dimension_numbers = #tpu.dot_dimension_numbers<[1], [0], [0], [1], [0, 0, 1, 1], [], []>} : vector<17x4xf32>, vector<4x16xf32>, vector<17x16xf32> -> vector<17x16xf32>
      %131 = arith.addf %124, %130 : vector<17x16xf32>
      %c0_117 = arith.constant 0 : index
      %c0_118 = arith.constant 0 : index
      %132 = arith.index_cast %103 : i32 to index
      %c2_119 = arith.constant 2 : index
      %c0_120 = arith.constant 0 : index
      %133 = vector.load %arg1[%c0_117, %c0_118, %132, %c2_119, %c0_120] : memref<1x2x37x19x4xf32, #tpu.memory_space<vmem>>, vector<1x1x1x17x4xf32>
      %134 = vector.shape_cast %133 : vector<1x1x1x17x4xf32> to vector<17x4xf32>
      %c9 = arith.constant 9 : index
      %c0_121 = arith.constant 0 : index
      %c0_122 = arith.constant 0 : index
      %135 = vector.load %arg3[%c9, %c0_121, %c0_122] : memref<25x4x16xf32, #tpu.memory_space<vmem>>, vector<1x4x16xf32>
      %136 = vector.shape_cast %135 : vector<1x4x16xf32> to vector<4x16xf32>
      %cst_123 = arith.constant dense<0.000000e+00> : vector<17x16xf32>
      %137 = tpu.matmul %134, %136, %cst_123 {dimension_numbers = #tpu.dot_dimension_numbers<[1], [0], [0], [1], [0, 0, 1, 1], [], []>} : vector<17x4xf32>, vector<4x16xf32>, vector<17x16xf32> -> vector<17x16xf32>
      %138 = arith.addf %131, %137 : vector<17x16xf32>
      %c2_i32_124 = arith.constant 2 : i32
      %139 = arith.muli %c2_i32_124, %arg22 : i32
      %c2_i32_125 = arith.constant 2 : i32
      %140 = arith.addi %139, %c2_i32_125 : i32
      %c0_126 = arith.constant 0 : index
      %c0_127 = arith.constant 0 : index
      %141 = arith.index_cast %140 : i32 to index
      %c0_128 = arith.constant 0 : index
      %c0_129 = arith.constant 0 : index
      %142 = vector.load %arg1[%c0_126, %c0_127, %141, %c0_128, %c0_129] : memref<1x2x37x19x4xf32, #tpu.memory_space<vmem>>, vector<1x1x1x17x4xf32>
      %143 = vector.shape_cast %142 : vector<1x1x1x17x4xf32> to vector<17x4xf32>
      %c10 = arith.constant 10 : index
      %c0_130 = arith.constant 0 : index
      %c0_131 = arith.constant 0 : index
      %144 = vector.load %arg3[%c10, %c0_130, %c0_131] : memref<25x4x16xf32, #tpu.memory_space<vmem>>, vector<1x4x16xf32>
      %145 = vector.shape_cast %144 : vector<1x4x16xf32> to vector<4x16xf32>
      %cst_132 = arith.constant dense<0.000000e+00> : vector<17x16xf32>
      %146 = tpu.matmul %143, %145, %cst_132 {dimension_numbers = #tpu.dot_dimension_numbers<[1], [0], [0], [1], [0, 0, 1, 1], [], []>} : vector<17x4xf32>, vector<4x16xf32>, vector<17x16xf32> -> vector<17x16xf32>
      %147 = arith.addf %138, %146 : vector<17x16xf32>
      %c0_133 = arith.constant 0 : index
      %c1_134 = arith.constant 1 : index
      %148 = arith.index_cast %140 : i32 to index
      %c0_135 = arith.constant 0 : index
      %c0_136 = arith.constant 0 : index
      %149 = vector.load %arg1[%c0_133, %c1_134, %148, %c0_135, %c0_136] : memref<1x2x37x19x4xf32, #tpu.memory_space<vmem>>, vector<1x1x1x17x4xf32>
      %150 = vector.shape_cast %149 : vector<1x1x1x17x4xf32> to vector<17x4xf32>
      %c11 = arith.constant 11 : index
      %c0_137 = arith.constant 0 : index
      %c0_138 = arith.constant 0 : index
      %151 = vector.load %arg3[%c11, %c0_137, %c0_138] : memref<25x4x16xf32, #tpu.memory_space<vmem>>, vector<1x4x16xf32>
      %152 = vector.shape_cast %151 : vector<1x4x16xf32> to vector<4x16xf32>
      %cst_139 = arith.constant dense<0.000000e+00> : vector<17x16xf32>
      %153 = tpu.matmul %150, %152, %cst_139 {dimension_numbers = #tpu.dot_dimension_numbers<[1], [0], [0], [1], [0, 0, 1, 1], [], []>} : vector<17x4xf32>, vector<4x16xf32>, vector<17x16xf32> -> vector<17x16xf32>
      %154 = arith.addf %147, %153 : vector<17x16xf32>
      %c0_140 = arith.constant 0 : index
      %c0_141 = arith.constant 0 : index
      %155 = arith.index_cast %140 : i32 to index
      %c1_142 = arith.constant 1 : index
      %c0_143 = arith.constant 0 : index
      %156 = vector.load %arg1[%c0_140, %c0_141, %155, %c1_142, %c0_143] : memref<1x2x37x19x4xf32, #tpu.memory_space<vmem>>, vector<1x1x1x17x4xf32>
      %157 = vector.shape_cast %156 : vector<1x1x1x17x4xf32> to vector<17x4xf32>
      %c12 = arith.constant 12 : index
      %c0_144 = arith.constant 0 : index
      %c0_145 = arith.constant 0 : index
      %158 = vector.load %arg3[%c12, %c0_144, %c0_145] : memref<25x4x16xf32, #tpu.memory_space<vmem>>, vector<1x4x16xf32>
      %159 = vector.shape_cast %158 : vector<1x4x16xf32> to vector<4x16xf32>
      %cst_146 = arith.constant dense<0.000000e+00> : vector<17x16xf32>
      %160 = tpu.matmul %157, %159, %cst_146 {dimension_numbers = #tpu.dot_dimension_numbers<[1], [0], [0], [1], [0, 0, 1, 1], [], []>} : vector<17x4xf32>, vector<4x16xf32>, vector<17x16xf32> -> vector<17x16xf32>
      %161 = arith.addf %154, %160 : vector<17x16xf32>
      %c0_147 = arith.constant 0 : index
      %c1_148 = arith.constant 1 : index
      %162 = arith.index_cast %140 : i32 to index
      %c1_149 = arith.constant 1 : index
      %c0_150 = arith.constant 0 : index
      %163 = vector.load %arg1[%c0_147, %c1_148, %162, %c1_149, %c0_150] : memref<1x2x37x19x4xf32, #tpu.memory_space<vmem>>, vector<1x1x1x17x4xf32>
      %164 = vector.shape_cast %163 : vector<1x1x1x17x4xf32> to vector<17x4xf32>
      %c13 = arith.constant 13 : index
      %c0_151 = arith.constant 0 : index
      %c0_152 = arith.constant 0 : index
      %165 = vector.load %arg3[%c13, %c0_151, %c0_152] : memref<25x4x16xf32, #tpu.memory_space<vmem>>, vector<1x4x16xf32>
      %166 = vector.shape_cast %165 : vector<1x4x16xf32> to vector<4x16xf32>
      %cst_153 = arith.constant dense<0.000000e+00> : vector<17x16xf32>
      %167 = tpu.matmul %164, %166, %cst_153 {dimension_numbers = #tpu.dot_dimension_numbers<[1], [0], [0], [1], [0, 0, 1, 1], [], []>} : vector<17x4xf32>, vector<4x16xf32>, vector<17x16xf32> -> vector<17x16xf32>
      %168 = arith.addf %161, %167 : vector<17x16xf32>
      %c0_154 = arith.constant 0 : index
      %c0_155 = arith.constant 0 : index
      %169 = arith.index_cast %140 : i32 to index
      %c2_156 = arith.constant 2 : index
      %c0_157 = arith.constant 0 : index
      %170 = vector.load %arg1[%c0_154, %c0_155, %169, %c2_156, %c0_157] : memref<1x2x37x19x4xf32, #tpu.memory_space<vmem>>, vector<1x1x1x17x4xf32>
      %171 = vector.shape_cast %170 : vector<1x1x1x17x4xf32> to vector<17x4xf32>
      %c14 = arith.constant 14 : index
      %c0_158 = arith.constant 0 : index
      %c0_159 = arith.constant 0 : index
      %172 = vector.load %arg3[%c14, %c0_158, %c0_159] : memref<25x4x16xf32, #tpu.memory_space<vmem>>, vector<1x4x16xf32>
      %173 = vector.shape_cast %172 : vector<1x4x16xf32> to vector<4x16xf32>
      %cst_160 = arith.constant dense<0.000000e+00> : vector<17x16xf32>
      %174 = tpu.matmul %171, %173, %cst_160 {dimension_numbers = #tpu.dot_dimension_numbers<[1], [0], [0], [1], [0, 0, 1, 1], [], []>} : vector<17x4xf32>, vector<4x16xf32>, vector<17x16xf32> -> vector<17x16xf32>
      %175 = arith.addf %168, %174 : vector<17x16xf32>
      %c2_i32_161 = arith.constant 2 : i32
      %176 = arith.muli %c2_i32_161, %arg22 : i32
      %c3_i32 = arith.constant 3 : i32
      %177 = arith.addi %176, %c3_i32 : i32
      %c0_162 = arith.constant 0 : index
      %c0_163 = arith.constant 0 : index
      %178 = arith.index_cast %177 : i32 to index
      %c0_164 = arith.constant 0 : index
      %c0_165 = arith.constant 0 : index
      %179 = vector.load %arg1[%c0_162, %c0_163, %178, %c0_164, %c0_165] : memref<1x2x37x19x4xf32, #tpu.memory_space<vmem>>, vector<1x1x1x17x4xf32>
      %180 = vector.shape_cast %179 : vector<1x1x1x17x4xf32> to vector<17x4xf32>
      %c15 = arith.constant 15 : index
      %c0_166 = arith.constant 0 : index
      %c0_167 = arith.constant 0 : index
      %181 = vector.load %arg3[%c15, %c0_166, %c0_167] : memref<25x4x16xf32, #tpu.memory_space<vmem>>, vector<1x4x16xf32>
      %182 = vector.shape_cast %181 : vector<1x4x16xf32> to vector<4x16xf32>
      %cst_168 = arith.constant dense<0.000000e+00> : vector<17x16xf32>
      %183 = tpu.matmul %180, %182, %cst_168 {dimension_numbers = #tpu.dot_dimension_numbers<[1], [0], [0], [1], [0, 0, 1, 1], [], []>} : vector<17x4xf32>, vector<4x16xf32>, vector<17x16xf32> -> vector<17x16xf32>
      %184 = arith.addf %175, %183 : vector<17x16xf32>
      %c0_169 = arith.constant 0 : index
      %c1_170 = arith.constant 1 : index
      %185 = arith.index_cast %177 : i32 to index
      %c0_171 = arith.constant 0 : index
      %c0_172 = arith.constant 0 : index
      %186 = vector.load %arg1[%c0_169, %c1_170, %185, %c0_171, %c0_172] : memref<1x2x37x19x4xf32, #tpu.memory_space<vmem>>, vector<1x1x1x17x4xf32>
      %187 = vector.shape_cast %186 : vector<1x1x1x17x4xf32> to vector<17x4xf32>
      %c16 = arith.constant 16 : index
      %c0_173 = arith.constant 0 : index
      %c0_174 = arith.constant 0 : index
      %188 = vector.load %arg3[%c16, %c0_173, %c0_174] : memref<25x4x16xf32, #tpu.memory_space<vmem>>, vector<1x4x16xf32>
      %189 = vector.shape_cast %188 : vector<1x4x16xf32> to vector<4x16xf32>
      %cst_175 = arith.constant dense<0.000000e+00> : vector<17x16xf32>
      %190 = tpu.matmul %187, %189, %cst_175 {dimension_numbers = #tpu.dot_dimension_numbers<[1], [0], [0], [1], [0, 0, 1, 1], [], []>} : vector<17x4xf32>, vector<4x16xf32>, vector<17x16xf32> -> vector<17x16xf32>
      %191 = arith.addf %184, %190 : vector<17x16xf32>
      %c0_176 = arith.constant 0 : index
      %c0_177 = arith.constant 0 : index
      %192 = arith.index_cast %177 : i32 to index
      %c1_178 = arith.constant 1 : index
      %c0_179 = arith.constant 0 : index
      %193 = vector.load %arg1[%c0_176, %c0_177, %192, %c1_178, %c0_179] : memref<1x2x37x19x4xf32, #tpu.memory_space<vmem>>, vector<1x1x1x17x4xf32>
      %194 = vector.shape_cast %193 : vector<1x1x1x17x4xf32> to vector<17x4xf32>
      %c17 = arith.constant 17 : index
      %c0_180 = arith.constant 0 : index
      %c0_181 = arith.constant 0 : index
      %195 = vector.load %arg3[%c17, %c0_180, %c0_181] : memref<25x4x16xf32, #tpu.memory_space<vmem>>, vector<1x4x16xf32>
      %196 = vector.shape_cast %195 : vector<1x4x16xf32> to vector<4x16xf32>
      %cst_182 = arith.constant dense<0.000000e+00> : vector<17x16xf32>
      %197 = tpu.matmul %194, %196, %cst_182 {dimension_numbers = #tpu.dot_dimension_numbers<[1], [0], [0], [1], [0, 0, 1, 1], [], []>} : vector<17x4xf32>, vector<4x16xf32>, vector<17x16xf32> -> vector<17x16xf32>
      %198 = arith.addf %191, %197 : vector<17x16xf32>
      %c0_183 = arith.constant 0 : index
      %c1_184 = arith.constant 1 : index
      %199 = arith.index_cast %177 : i32 to index
      %c1_185 = arith.constant 1 : index
      %c0_186 = arith.constant 0 : index
      %200 = vector.load %arg1[%c0_183, %c1_184, %199, %c1_185, %c0_186] : memref<1x2x37x19x4xf32, #tpu.memory_space<vmem>>, vector<1x1x1x17x4xf32>
      %201 = vector.shape_cast %200 : vector<1x1x1x17x4xf32> to vector<17x4xf32>
      %c18 = arith.constant 18 : index
      %c0_187 = arith.constant 0 : index
      %c0_188 = arith.constant 0 : index
      %202 = vector.load %arg3[%c18, %c0_187, %c0_188] : memref<25x4x16xf32, #tpu.memory_space<vmem>>, vector<1x4x16xf32>
      %203 = vector.shape_cast %202 : vector<1x4x16xf32> to vector<4x16xf32>
      %cst_189 = arith.constant dense<0.000000e+00> : vector<17x16xf32>
      %204 = tpu.matmul %201, %203, %cst_189 {dimension_numbers = #tpu.dot_dimension_numbers<[1], [0], [0], [1], [0, 0, 1, 1], [], []>} : vector<17x4xf32>, vector<4x16xf32>, vector<17x16xf32> -> vector<17x16xf32>
      %205 = arith.addf %198, %204 : vector<17x16xf32>
      %c0_190 = arith.constant 0 : index
      %c0_191 = arith.constant 0 : index
      %206 = arith.index_cast %177 : i32 to index
      %c2_192 = arith.constant 2 : index
      %c0_193 = arith.constant 0 : index
      %207 = vector.load %arg1[%c0_190, %c0_191, %206, %c2_192, %c0_193] : memref<1x2x37x19x4xf32, #tpu.memory_space<vmem>>, vector<1x1x1x17x4xf32>
      %208 = vector.shape_cast %207 : vector<1x1x1x17x4xf32> to vector<17x4xf32>
      %c19 = arith.constant 19 : index
      %c0_194 = arith.constant 0 : index
      %c0_195 = arith.constant 0 : index
      %209 = vector.load %arg3[%c19, %c0_194, %c0_195] : memref<25x4x16xf32, #tpu.memory_space<vmem>>, vector<1x4x16xf32>
      %210 = vector.shape_cast %209 : vector<1x4x16xf32> to vector<4x16xf32>
      %cst_196 = arith.constant dense<0.000000e+00> : vector<17x16xf32>
      %211 = tpu.matmul %208, %210, %cst_196 {dimension_numbers = #tpu.dot_dimension_numbers<[1], [0], [0], [1], [0, 0, 1, 1], [], []>} : vector<17x4xf32>, vector<4x16xf32>, vector<17x16xf32> -> vector<17x16xf32>
      %212 = arith.addf %205, %211 : vector<17x16xf32>
      %c2_i32_197 = arith.constant 2 : i32
      %213 = arith.muli %c2_i32_197, %arg22 : i32
      %c4_i32 = arith.constant 4 : i32
      %214 = arith.addi %213, %c4_i32 : i32
      %c0_198 = arith.constant 0 : index
      %c0_199 = arith.constant 0 : index
      %215 = arith.index_cast %214 : i32 to index
      %c0_200 = arith.constant 0 : index
      %c0_201 = arith.constant 0 : index
      %216 = vector.load %arg1[%c0_198, %c0_199, %215, %c0_200, %c0_201] : memref<1x2x37x19x4xf32, #tpu.memory_space<vmem>>, vector<1x1x1x17x4xf32>
      %217 = vector.shape_cast %216 : vector<1x1x1x17x4xf32> to vector<17x4xf32>
      %c20 = arith.constant 20 : index
      %c0_202 = arith.constant 0 : index
      %c0_203 = arith.constant 0 : index
      %218 = vector.load %arg3[%c20, %c0_202, %c0_203] : memref<25x4x16xf32, #tpu.memory_space<vmem>>, vector<1x4x16xf32>
      %219 = vector.shape_cast %218 : vector<1x4x16xf32> to vector<4x16xf32>
      %cst_204 = arith.constant dense<0.000000e+00> : vector<17x16xf32>
      %220 = tpu.matmul %217, %219, %cst_204 {dimension_numbers = #tpu.dot_dimension_numbers<[1], [0], [0], [1], [0, 0, 1, 1], [], []>} : vector<17x4xf32>, vector<4x16xf32>, vector<17x16xf32> -> vector<17x16xf32>
      %221 = arith.addf %212, %220 : vector<17x16xf32>
      %c0_205 = arith.constant 0 : index
      %c1_206 = arith.constant 1 : index
      %222 = arith.index_cast %214 : i32 to index
      %c0_207 = arith.constant 0 : index
      %c0_208 = arith.constant 0 : index
      %223 = vector.load %arg1[%c0_205, %c1_206, %222, %c0_207, %c0_208] : memref<1x2x37x19x4xf32, #tpu.memory_space<vmem>>, vector<1x1x1x17x4xf32>
      %224 = vector.shape_cast %223 : vector<1x1x1x17x4xf32> to vector<17x4xf32>
      %c21 = arith.constant 21 : index
      %c0_209 = arith.constant 0 : index
      %c0_210 = arith.constant 0 : index
      %225 = vector.load %arg3[%c21, %c0_209, %c0_210] : memref<25x4x16xf32, #tpu.memory_space<vmem>>, vector<1x4x16xf32>
      %226 = vector.shape_cast %225 : vector<1x4x16xf32> to vector<4x16xf32>
      %cst_211 = arith.constant dense<0.000000e+00> : vector<17x16xf32>
      %227 = tpu.matmul %224, %226, %cst_211 {dimension_numbers = #tpu.dot_dimension_numbers<[1], [0], [0], [1], [0, 0, 1, 1], [], []>} : vector<17x4xf32>, vector<4x16xf32>, vector<17x16xf32> -> vector<17x16xf32>
      %228 = arith.addf %221, %227 : vector<17x16xf32>
      %c0_212 = arith.constant 0 : index
      %c0_213 = arith.constant 0 : index
      %229 = arith.index_cast %214 : i32 to index
      %c1_214 = arith.constant 1 : index
      %c0_215 = arith.constant 0 : index
      %230 = vector.load %arg1[%c0_212, %c0_213, %229, %c1_214, %c0_215] : memref<1x2x37x19x4xf32, #tpu.memory_space<vmem>>, vector<1x1x1x17x4xf32>
      %231 = vector.shape_cast %230 : vector<1x1x1x17x4xf32> to vector<17x4xf32>
      %c22 = arith.constant 22 : index
      %c0_216 = arith.constant 0 : index
      %c0_217 = arith.constant 0 : index
      %232 = vector.load %arg3[%c22, %c0_216, %c0_217] : memref<25x4x16xf32, #tpu.memory_space<vmem>>, vector<1x4x16xf32>
      %233 = vector.shape_cast %232 : vector<1x4x16xf32> to vector<4x16xf32>
      %cst_218 = arith.constant dense<0.000000e+00> : vector<17x16xf32>
      %234 = tpu.matmul %231, %233, %cst_218 {dimension_numbers = #tpu.dot_dimension_numbers<[1], [0], [0], [1], [0, 0, 1, 1], [], []>} : vector<17x4xf32>, vector<4x16xf32>, vector<17x16xf32> -> vector<17x16xf32>
      %235 = arith.addf %228, %234 : vector<17x16xf32>
      %c0_219 = arith.constant 0 : index
      %c1_220 = arith.constant 1 : index
      %236 = arith.index_cast %214 : i32 to index
      %c1_221 = arith.constant 1 : index
      %c0_222 = arith.constant 0 : index
      %237 = vector.load %arg1[%c0_219, %c1_220, %236, %c1_221, %c0_222] : memref<1x2x37x19x4xf32, #tpu.memory_space<vmem>>, vector<1x1x1x17x4xf32>
      %238 = vector.shape_cast %237 : vector<1x1x1x17x4xf32> to vector<17x4xf32>
      %c23 = arith.constant 23 : index
      %c0_223 = arith.constant 0 : index
      %c0_224 = arith.constant 0 : index
      %239 = vector.load %arg3[%c23, %c0_223, %c0_224] : memref<25x4x16xf32, #tpu.memory_space<vmem>>, vector<1x4x16xf32>
      %240 = vector.shape_cast %239 : vector<1x4x16xf32> to vector<4x16xf32>
      %cst_225 = arith.constant dense<0.000000e+00> : vector<17x16xf32>
      %241 = tpu.matmul %238, %240, %cst_225 {dimension_numbers = #tpu.dot_dimension_numbers<[1], [0], [0], [1], [0, 0, 1, 1], [], []>} : vector<17x4xf32>, vector<4x16xf32>, vector<17x16xf32> -> vector<17x16xf32>
      %242 = arith.addf %235, %241 : vector<17x16xf32>
      %c0_226 = arith.constant 0 : index
      %c0_227 = arith.constant 0 : index
      %243 = arith.index_cast %214 : i32 to index
      %c2_228 = arith.constant 2 : index
      %c0_229 = arith.constant 0 : index
      %244 = vector.load %arg1[%c0_226, %c0_227, %243, %c2_228, %c0_229] : memref<1x2x37x19x4xf32, #tpu.memory_space<vmem>>, vector<1x1x1x17x4xf32>
      %245 = vector.shape_cast %244 : vector<1x1x1x17x4xf32> to vector<17x4xf32>
      %c24 = arith.constant 24 : index
      %c0_230 = arith.constant 0 : index
      %c0_231 = arith.constant 0 : index
      %246 = vector.load %arg3[%c24, %c0_230, %c0_231] : memref<25x4x16xf32, #tpu.memory_space<vmem>>, vector<1x4x16xf32>
      %247 = vector.shape_cast %246 : vector<1x4x16xf32> to vector<4x16xf32>
      %cst_232 = arith.constant dense<0.000000e+00> : vector<17x16xf32>
      %248 = tpu.matmul %245, %247, %cst_232 {dimension_numbers = #tpu.dot_dimension_numbers<[1], [0], [0], [1], [0, 0, 1, 1], [], []>} : vector<17x4xf32>, vector<4x16xf32>, vector<17x16xf32> -> vector<17x16xf32>
      %249 = arith.addf %242, %248 : vector<17x16xf32>
      %c0_233 = arith.constant 0 : index
      %c0_234 = arith.constant 0 : index
      %250 = vector.load %arg4[%c0_233, %c0_234] : memref<1x16xf32, #tpu.memory_space<vmem>>, vector<1x16xf32>
      %251 = vector.broadcast %250 : vector<1x16xf32> to vector<17x16xf32>
      %252 = arith.addf %249, %251 : vector<17x16xf32>
      %cst_235 = arith.constant 0.000000e+00 : f32
      %253 = vector.broadcast %cst_235 : f32 to vector<17x16xf32>
      %254 = arith.maximumf %252, %253 : vector<17x16xf32>
      %cst_236 = arith.constant dense<0.000000e+00> : vector<9x16xf32>
      %255 = tpu.matmul %6, %254, %cst_236 {dimension_numbers = #tpu.dot_dimension_numbers<[1], [0], [0], [1], [0, 0, 1, 1], [], []>} : vector<9x17xf32>, vector<17x16xf32>, vector<9x16xf32> -> vector<9x16xf32>
      %c0_237 = arith.constant 0 : index
      %256 = arith.index_cast %arg22 : i32 to index
      %c0_238 = arith.constant 0 : index
      %c0_239 = arith.constant 0 : index
      %257 = vector.load %arg19[%c0_237, %256, %c0_238, %c0_239] : memref<2x17x9x16xf32, #tpu.memory_space<vmem>>, vector<1x1x9x16xf32>
      %258 = vector.shape_cast %257 : vector<1x1x9x16xf32> to vector<9x16xf32>
      %259 = vector.shape_cast %255 : vector<9x16xf32> to vector<1x1x9x16xf32>
      tpu.vector_store %arg19[%c0_237, %256, %c0_238, %c0_239], %259 {strides = array<i32>} : memref<2x17x9x16xf32, #tpu.memory_space<vmem>>, vector<1x1x9x16xf32>,
      %cst_240 = arith.constant dense<0.000000e+00> : vector<9x16xf32>
      %260 = tpu.matmul %13, %254, %cst_240 {dimension_numbers = #tpu.dot_dimension_numbers<[1], [0], [0], [1], [0, 0, 1, 1], [], []>} : vector<9x17xf32>, vector<17x16xf32>, vector<9x16xf32> -> vector<9x16xf32>
      %c1_241 = arith.constant 1 : index
      %261 = arith.index_cast %arg22 : i32 to index
      %c0_242 = arith.constant 0 : index
      %c0_243 = arith.constant 0 : index
      %262 = vector.load %arg19[%c1_241, %261, %c0_242, %c0_243] : memref<2x17x9x16xf32, #tpu.memory_space<vmem>>, vector<1x1x9x16xf32>
      %263 = vector.shape_cast %262 : vector<1x1x9x16xf32> to vector<9x16xf32>
      %264 = vector.shape_cast %260 : vector<9x16xf32> to vector<1x1x9x16xf32>
      tpu.vector_store %arg19[%c1_241, %261, %c0_242, %c0_243], %264 {strides = array<i32>} : memref<2x17x9x16xf32, #tpu.memory_space<vmem>>, vector<1x1x9x16xf32>,
    }
    %c17_i32_2 = arith.constant 17 : i32
    %15 = tpu.iota {dimensions = array<i32: 0>} : vector<4x7xi32>
    %16 = tpu.iota {dimensions = array<i32: 1>} : vector<4x7xi32>
    %c2_i32_3 = arith.constant 2 : i32
    %17 = vector.broadcast %c2_i32_3 : i32 to vector<4x7xi32>
    %18 = arith.muli %17, %15 : vector<4x7xi32>
    %19 = arith.cmpi eq, %16, %18 : vector<4x7xi32>
    %20 = arith.extui %19 : vector<4x7xi1> to vector<4x7xi32>
    %21 = arith.sitofp %20 : vector<4x7xi32> to vector<4x7xf32>
    %c2_i32_4 = arith.constant 2 : i32
    %22 = vector.broadcast %c2_i32_4 : i32 to vector<4x7xi32>
    %23 = arith.muli %22, %15 : vector<4x7xi32>
    %c1_i32_5 = arith.constant 1 : i32
    %24 = vector.broadcast %c1_i32_5 : i32 to vector<4x7xi32>
    %25 = arith.addi %23, %24 : vector<4x7xi32>
    %26 = arith.cmpi eq, %16, %25 : vector<4x7xi32>
    %27 = arith.extui %26 : vector<4x7xi1> to vector<4x7xi32>
    %28 = arith.sitofp %27 : vector<4x7xi32> to vector<4x7xf32>
    %c0_i32_6 = arith.constant 0 : i32
    %c7_i32 = arith.constant 7 : i32
    %29 = arith.addi %c0_i32_6, %c7_i32 : i32
    %c1_i32_7 = arith.constant 1 : i32
    scf.for %arg22 = %c0_i32_6 to %29 step %c1_i32_7  : i32 {
      %c2_i32_49 = arith.constant 2 : i32
      %66 = arith.muli %c2_i32_49, %arg22 : i32
      %c0_i32_50 = arith.constant 0 : i32
      %67 = arith.addi %66, %c0_i32_50 : i32
      %c0_51 = arith.constant 0 : index
      %68 = arith.index_cast %67 : i32 to index
      %c0_52 = arith.constant 0 : index
      %c0_53 = arith.constant 0 : index
      %69 = vector.load %arg19[%c0_51, %68, %c0_52, %c0_53] : memref<2x17x9x16xf32, #tpu.memory_space<vmem>>, vector<1x1x7x16xf32>
      %70 = vector.shape_cast %69 : vector<1x1x7x16xf32> to vector<7x16xf32>
      %c0_54 = arith.constant 0 : index
      %c0_55 = arith.constant 0 : index
      %c0_56 = arith.constant 0 : index
      %71 = vector.load %arg5[%c0_54, %c0_55, %c0_56] : memref<25x16x64xf32, #tpu.memory_space<vmem>>, vector<1x16x64xf32>
      %72 = vector.shape_cast %71 : vector<1x16x64xf32> to vector<16x64xf32>
      %cst_57 = arith.constant dense<0.000000e+00> : vector<7x64xf32>
      %73 = tpu.matmul %70, %72, %cst_57 {dimension_numbers = #tpu.dot_dimension_numbers<[1], [0], [0], [1], [0, 0, 1, 1], [], []>} : vector<7x16xf32>, vector<16x64xf32>, vector<7x64xf32> -> vector<7x64xf32>
      %c1 = arith.constant 1 : index
      %74 = arith.index_cast %67 : i32 to index
      %c0_58 = arith.constant 0 : index
      %c0_59 = arith.constant 0 : index
      %75 = vector.load %arg19[%c1, %74, %c0_58, %c0_59] : memref<2x17x9x16xf32, #tpu.memory_space<vmem>>, vector<1x1x7x16xf32>
      %76 = vector.shape_cast %75 : vector<1x1x7x16xf32> to vector<7x16xf32>
      %c1_60 = arith.constant 1 : index
      %c0_61 = arith.constant 0 : index
      %c0_62 = arith.constant 0 : index
      %77 = vector.load %arg5[%c1_60, %c0_61, %c0_62] : memref<25x16x64xf32, #tpu.memory_space<vmem>>, vector<1x16x64xf32>
      %78 = vector.shape_cast %77 : vector<1x16x64xf32> to vector<16x64xf32>
      %cst_63 = arith.constant dense<0.000000e+00> : vector<7x64xf32>
      %79 = tpu.matmul %76, %78, %cst_63 {dimension_numbers = #tpu.dot_dimension_numbers<[1], [0], [0], [1], [0, 0, 1, 1], [], []>} : vector<7x16xf32>, vector<16x64xf32>, vector<7x64xf32> -> vector<7x64xf32>
      %80 = arith.addf %73, %79 : vector<7x64xf32>
      %c0_64 = arith.constant 0 : index
      %81 = arith.index_cast %67 : i32 to index
      %c1_65 = arith.constant 1 : index
      %c0_66 = arith.constant 0 : index
      %82 = vector.load %arg19[%c0_64, %81, %c1_65, %c0_66] : memref<2x17x9x16xf32, #tpu.memory_space<vmem>>, vector<1x1x7x16xf32>
      %83 = vector.shape_cast %82 : vector<1x1x7x16xf32> to vector<7x16xf32>
      %c2 = arith.constant 2 : index
      %c0_67 = arith.constant 0 : index
      %c0_68 = arith.constant 0 : index
      %84 = vector.load %arg5[%c2, %c0_67, %c0_68] : memref<25x16x64xf32, #tpu.memory_space<vmem>>, vector<1x16x64xf32>
      %85 = vector.shape_cast %84 : vector<1x16x64xf32> to vector<16x64xf32>
      %cst_69 = arith.constant dense<0.000000e+00> : vector<7x64xf32>
      %86 = tpu.matmul %83, %85, %cst_69 {dimension_numbers = #tpu.dot_dimension_numbers<[1], [0], [0], [1], [0, 0, 1, 1], [], []>} : vector<7x16xf32>, vector<16x64xf32>, vector<7x64xf32> -> vector<7x64xf32>
      %87 = arith.addf %80, %86 : vector<7x64xf32>
      %c1_70 = arith.constant 1 : index
      %88 = arith.index_cast %67 : i32 to index
      %c1_71 = arith.constant 1 : index
      %c0_72 = arith.constant 0 : index
      %89 = vector.load %arg19[%c1_70, %88, %c1_71, %c0_72] : memref<2x17x9x16xf32, #tpu.memory_space<vmem>>, vector<1x1x7x16xf32>
      %90 = vector.shape_cast %89 : vector<1x1x7x16xf32> to vector<7x16xf32>
      %c3 = arith.constant 3 : index
      %c0_73 = arith.constant 0 : index
      %c0_74 = arith.constant 0 : index
      %91 = vector.load %arg5[%c3, %c0_73, %c0_74] : memref<25x16x64xf32, #tpu.memory_space<vmem>>, vector<1x16x64xf32>
      %92 = vector.shape_cast %91 : vector<1x16x64xf32> to vector<16x64xf32>
      %cst_75 = arith.constant dense<0.000000e+00> : vector<7x64xf32>
      %93 = tpu.matmul %90, %92, %cst_75 {dimension_numbers = #tpu.dot_dimension_numbers<[1], [0], [0], [1], [0, 0, 1, 1], [], []>} : vector<7x16xf32>, vector<16x64xf32>, vector<7x64xf32> -> vector<7x64xf32>
      %94 = arith.addf %87, %93 : vector<7x64xf32>
      %c0_76 = arith.constant 0 : index
      %95 = arith.index_cast %67 : i32 to index
      %c2_77 = arith.constant 2 : index
      %c0_78 = arith.constant 0 : index
      %96 = vector.load %arg19[%c0_76, %95, %c2_77, %c0_78] : memref<2x17x9x16xf32, #tpu.memory_space<vmem>>, vector<1x1x7x16xf32>
      %97 = vector.shape_cast %96 : vector<1x1x7x16xf32> to vector<7x16xf32>
      %c4 = arith.constant 4 : index
      %c0_79 = arith.constant 0 : index
      %c0_80 = arith.constant 0 : index
      %98 = vector.load %arg5[%c4, %c0_79, %c0_80] : memref<25x16x64xf32, #tpu.memory_space<vmem>>, vector<1x16x64xf32>
      %99 = vector.shape_cast %98 : vector<1x16x64xf32> to vector<16x64xf32>
      %cst_81 = arith.constant dense<0.000000e+00> : vector<7x64xf32>
      %100 = tpu.matmul %97, %99, %cst_81 {dimension_numbers = #tpu.dot_dimension_numbers<[1], [0], [0], [1], [0, 0, 1, 1], [], []>} : vector<7x16xf32>, vector<16x64xf32>, vector<7x64xf32> -> vector<7x64xf32>
      %101 = arith.addf %94, %100 : vector<7x64xf32>
      %c2_i32_82 = arith.constant 2 : i32
      %102 = arith.muli %c2_i32_82, %arg22 : i32
      %c1_i32_83 = arith.constant 1 : i32
      %103 = arith.addi %102, %c1_i32_83 : i32
      %c0_84 = arith.constant 0 : index
      %104 = arith.index_cast %103 : i32 to index
      %c0_85 = arith.constant 0 : index
      %c0_86 = arith.constant 0 : index
      %105 = vector.load %arg19[%c0_84, %104, %c0_85, %c0_86] : memref<2x17x9x16xf32, #tpu.memory_space<vmem>>, vector<1x1x7x16xf32>
      %106 = vector.shape_cast %105 : vector<1x1x7x16xf32> to vector<7x16xf32>
      %c5 = arith.constant 5 : index
      %c0_87 = arith.constant 0 : index
      %c0_88 = arith.constant 0 : index
      %107 = vector.load %arg5[%c5, %c0_87, %c0_88] : memref<25x16x64xf32, #tpu.memory_space<vmem>>, vector<1x16x64xf32>
      %108 = vector.shape_cast %107 : vector<1x16x64xf32> to vector<16x64xf32>
      %cst_89 = arith.constant dense<0.000000e+00> : vector<7x64xf32>
      %109 = tpu.matmul %106, %108, %cst_89 {dimension_numbers = #tpu.dot_dimension_numbers<[1], [0], [0], [1], [0, 0, 1, 1], [], []>} : vector<7x16xf32>, vector<16x64xf32>, vector<7x64xf32> -> vector<7x64xf32>
      %110 = arith.addf %101, %109 : vector<7x64xf32>
      %c1_90 = arith.constant 1 : index
      %111 = arith.index_cast %103 : i32 to index
      %c0_91 = arith.constant 0 : index
      %c0_92 = arith.constant 0 : index
      %112 = vector.load %arg19[%c1_90, %111, %c0_91, %c0_92] : memref<2x17x9x16xf32, #tpu.memory_space<vmem>>, vector<1x1x7x16xf32>
      %113 = vector.shape_cast %112 : vector<1x1x7x16xf32> to vector<7x16xf32>
      %c6 = arith.constant 6 : index
      %c0_93 = arith.constant 0 : index
      %c0_94 = arith.constant 0 : index
      %114 = vector.load %arg5[%c6, %c0_93, %c0_94] : memref<25x16x64xf32, #tpu.memory_space<vmem>>, vector<1x16x64xf32>
      %115 = vector.shape_cast %114 : vector<1x16x64xf32> to vector<16x64xf32>
      %cst_95 = arith.constant dense<0.000000e+00> : vector<7x64xf32>
      %116 = tpu.matmul %113, %115, %cst_95 {dimension_numbers = #tpu.dot_dimension_numbers<[1], [0], [0], [1], [0, 0, 1, 1], [], []>} : vector<7x16xf32>, vector<16x64xf32>, vector<7x64xf32> -> vector<7x64xf32>
      %117 = arith.addf %110, %116 : vector<7x64xf32>
      %c0_96 = arith.constant 0 : index
      %118 = arith.index_cast %103 : i32 to index
      %c1_97 = arith.constant 1 : index
      %c0_98 = arith.constant 0 : index
      %119 = vector.load %arg19[%c0_96, %118, %c1_97, %c0_98] : memref<2x17x9x16xf32, #tpu.memory_space<vmem>>, vector<1x1x7x16xf32>
      %120 = vector.shape_cast %119 : vector<1x1x7x16xf32> to vector<7x16xf32>
      %c7 = arith.constant 7 : index
      %c0_99 = arith.constant 0 : index
      %c0_100 = arith.constant 0 : index
      %121 = vector.load %arg5[%c7, %c0_99, %c0_100] : memref<25x16x64xf32, #tpu.memory_space<vmem>>, vector<1x16x64xf32>
      %122 = vector.shape_cast %121 : vector<1x16x64xf32> to vector<16x64xf32>
      %cst_101 = arith.constant dense<0.000000e+00> : vector<7x64xf32>
      %123 = tpu.matmul %120, %122, %cst_101 {dimension_numbers = #tpu.dot_dimension_numbers<[1], [0], [0], [1], [0, 0, 1, 1], [], []>} : vector<7x16xf32>, vector<16x64xf32>, vector<7x64xf32> -> vector<7x64xf32>
      %124 = arith.addf %117, %123 : vector<7x64xf32>
      %c1_102 = arith.constant 1 : index
      %125 = arith.index_cast %103 : i32 to index
      %c1_103 = arith.constant 1 : index
      %c0_104 = arith.constant 0 : index
      %126 = vector.load %arg19[%c1_102, %125, %c1_103, %c0_104] : memref<2x17x9x16xf32, #tpu.memory_space<vmem>>, vector<1x1x7x16xf32>
      %127 = vector.shape_cast %126 : vector<1x1x7x16xf32> to vector<7x16xf32>
      %c8 = arith.constant 8 : index
      %c0_105 = arith.constant 0 : index
      %c0_106 = arith.constant 0 : index
      %128 = vector.load %arg5[%c8, %c0_105, %c0_106] : memref<25x16x64xf32, #tpu.memory_space<vmem>>, vector<1x16x64xf32>
      %129 = vector.shape_cast %128 : vector<1x16x64xf32> to vector<16x64xf32>
      %cst_107 = arith.constant dense<0.000000e+00> : vector<7x64xf32>
      %130 = tpu.matmul %127, %129, %cst_107 {dimension_numbers = #tpu.dot_dimension_numbers<[1], [0], [0], [1], [0, 0, 1, 1], [], []>} : vector<7x16xf32>, vector<16x64xf32>, vector<7x64xf32> -> vector<7x64xf32>
      %131 = arith.addf %124, %130 : vector<7x64xf32>
      %c0_108 = arith.constant 0 : index
      %132 = arith.index_cast %103 : i32 to index
      %c2_109 = arith.constant 2 : index
      %c0_110 = arith.constant 0 : index
      %133 = vector.load %arg19[%c0_108, %132, %c2_109, %c0_110] : memref<2x17x9x16xf32, #tpu.memory_space<vmem>>, vector<1x1x7x16xf32>
      %134 = vector.shape_cast %133 : vector<1x1x7x16xf32> to vector<7x16xf32>
      %c9 = arith.constant 9 : index
      %c0_111 = arith.constant 0 : index
      %c0_112 = arith.constant 0 : index
      %135 = vector.load %arg5[%c9, %c0_111, %c0_112] : memref<25x16x64xf32, #tpu.memory_space<vmem>>, vector<1x16x64xf32>
      %136 = vector.shape_cast %135 : vector<1x16x64xf32> to vector<16x64xf32>
      %cst_113 = arith.constant dense<0.000000e+00> : vector<7x64xf32>
      %137 = tpu.matmul %134, %136, %cst_113 {dimension_numbers = #tpu.dot_dimension_numbers<[1], [0], [0], [1], [0, 0, 1, 1], [], []>} : vector<7x16xf32>, vector<16x64xf32>, vector<7x64xf32> -> vector<7x64xf32>
      %138 = arith.addf %131, %137 : vector<7x64xf32>
      %c2_i32_114 = arith.constant 2 : i32
      %139 = arith.muli %c2_i32_114, %arg22 : i32
      %c2_i32_115 = arith.constant 2 : i32
      %140 = arith.addi %139, %c2_i32_115 : i32
      %c0_116 = arith.constant 0 : index
      %141 = arith.index_cast %140 : i32 to index
      %c0_117 = arith.constant 0 : index
      %c0_118 = arith.constant 0 : index
      %142 = vector.load %arg19[%c0_116, %141, %c0_117, %c0_118] : memref<2x17x9x16xf32, #tpu.memory_space<vmem>>, vector<1x1x7x16xf32>
      %143 = vector.shape_cast %142 : vector<1x1x7x16xf32> to vector<7x16xf32>
      %c10 = arith.constant 10 : index
      %c0_119 = arith.constant 0 : index
      %c0_120 = arith.constant 0 : index
      %144 = vector.load %arg5[%c10, %c0_119, %c0_120] : memref<25x16x64xf32, #tpu.memory_space<vmem>>, vector<1x16x64xf32>
      %145 = vector.shape_cast %144 : vector<1x16x64xf32> to vector<16x64xf32>
      %cst_121 = arith.constant dense<0.000000e+00> : vector<7x64xf32>
      %146 = tpu.matmul %143, %145, %cst_121 {dimension_numbers = #tpu.dot_dimension_numbers<[1], [0], [0], [1], [0, 0, 1, 1], [], []>} : vector<7x16xf32>, vector<16x64xf32>, vector<7x64xf32> -> vector<7x64xf32>
      %147 = arith.addf %138, %146 : vector<7x64xf32>
      %c1_122 = arith.constant 1 : index
      %148 = arith.index_cast %140 : i32 to index
      %c0_123 = arith.constant 0 : index
      %c0_124 = arith.constant 0 : index
      %149 = vector.load %arg19[%c1_122, %148, %c0_123, %c0_124] : memref<2x17x9x16xf32, #tpu.memory_space<vmem>>, vector<1x1x7x16xf32>
      %150 = vector.shape_cast %149 : vector<1x1x7x16xf32> to vector<7x16xf32>
      %c11 = arith.constant 11 : index
      %c0_125 = arith.constant 0 : index
      %c0_126 = arith.constant 0 : index
      %151 = vector.load %arg5[%c11, %c0_125, %c0_126] : memref<25x16x64xf32, #tpu.memory_space<vmem>>, vector<1x16x64xf32>
      %152 = vector.shape_cast %151 : vector<1x16x64xf32> to vector<16x64xf32>
      %cst_127 = arith.constant dense<0.000000e+00> : vector<7x64xf32>
      %153 = tpu.matmul %150, %152, %cst_127 {dimension_numbers = #tpu.dot_dimension_numbers<[1], [0], [0], [1], [0, 0, 1, 1], [], []>} : vector<7x16xf32>, vector<16x64xf32>, vector<7x64xf32> -> vector<7x64xf32>
      %154 = arith.addf %147, %153 : vector<7x64xf32>
      %c0_128 = arith.constant 0 : index
      %155 = arith.index_cast %140 : i32 to index
      %c1_129 = arith.constant 1 : index
      %c0_130 = arith.constant 0 : index
      %156 = vector.load %arg19[%c0_128, %155, %c1_129, %c0_130] : memref<2x17x9x16xf32, #tpu.memory_space<vmem>>, vector<1x1x7x16xf32>
      %157 = vector.shape_cast %156 : vector<1x1x7x16xf32> to vector<7x16xf32>
      %c12 = arith.constant 12 : index
      %c0_131 = arith.constant 0 : index
      %c0_132 = arith.constant 0 : index
      %158 = vector.load %arg5[%c12, %c0_131, %c0_132] : memref<25x16x64xf32, #tpu.memory_space<vmem>>, vector<1x16x64xf32>
      %159 = vector.shape_cast %158 : vector<1x16x64xf32> to vector<16x64xf32>
      %cst_133 = arith.constant dense<0.000000e+00> : vector<7x64xf32>
      %160 = tpu.matmul %157, %159, %cst_133 {dimension_numbers = #tpu.dot_dimension_numbers<[1], [0], [0], [1], [0, 0, 1, 1], [], []>} : vector<7x16xf32>, vector<16x64xf32>, vector<7x64xf32> -> vector<7x64xf32>
      %161 = arith.addf %154, %160 : vector<7x64xf32>
      %c1_134 = arith.constant 1 : index
      %162 = arith.index_cast %140 : i32 to index
      %c1_135 = arith.constant 1 : index
      %c0_136 = arith.constant 0 : index
      %163 = vector.load %arg19[%c1_134, %162, %c1_135, %c0_136] : memref<2x17x9x16xf32, #tpu.memory_space<vmem>>, vector<1x1x7x16xf32>
      %164 = vector.shape_cast %163 : vector<1x1x7x16xf32> to vector<7x16xf32>
      %c13 = arith.constant 13 : index
      %c0_137 = arith.constant 0 : index
      %c0_138 = arith.constant 0 : index
      %165 = vector.load %arg5[%c13, %c0_137, %c0_138] : memref<25x16x64xf32, #tpu.memory_space<vmem>>, vector<1x16x64xf32>
      %166 = vector.shape_cast %165 : vector<1x16x64xf32> to vector<16x64xf32>
      %cst_139 = arith.constant dense<0.000000e+00> : vector<7x64xf32>
      %167 = tpu.matmul %164, %166, %cst_139 {dimension_numbers = #tpu.dot_dimension_numbers<[1], [0], [0], [1], [0, 0, 1, 1], [], []>} : vector<7x16xf32>, vector<16x64xf32>, vector<7x64xf32> -> vector<7x64xf32>
      %168 = arith.addf %161, %167 : vector<7x64xf32>
      %c0_140 = arith.constant 0 : index
      %169 = arith.index_cast %140 : i32 to index
      %c2_141 = arith.constant 2 : index
      %c0_142 = arith.constant 0 : index
      %170 = vector.load %arg19[%c0_140, %169, %c2_141, %c0_142] : memref<2x17x9x16xf32, #tpu.memory_space<vmem>>, vector<1x1x7x16xf32>
      %171 = vector.shape_cast %170 : vector<1x1x7x16xf32> to vector<7x16xf32>
      %c14 = arith.constant 14 : index
      %c0_143 = arith.constant 0 : index
      %c0_144 = arith.constant 0 : index
      %172 = vector.load %arg5[%c14, %c0_143, %c0_144] : memref<25x16x64xf32, #tpu.memory_space<vmem>>, vector<1x16x64xf32>
      %173 = vector.shape_cast %172 : vector<1x16x64xf32> to vector<16x64xf32>
      %cst_145 = arith.constant dense<0.000000e+00> : vector<7x64xf32>
      %174 = tpu.matmul %171, %173, %cst_145 {dimension_numbers = #tpu.dot_dimension_numbers<[1], [0], [0], [1], [0, 0, 1, 1], [], []>} : vector<7x16xf32>, vector<16x64xf32>, vector<7x64xf32> -> vector<7x64xf32>
      %175 = arith.addf %168, %174 : vector<7x64xf32>
      %c2_i32_146 = arith.constant 2 : i32
      %176 = arith.muli %c2_i32_146, %arg22 : i32
      %c3_i32 = arith.constant 3 : i32
      %177 = arith.addi %176, %c3_i32 : i32
      %c0_147 = arith.constant 0 : index
      %178 = arith.index_cast %177 : i32 to index
      %c0_148 = arith.constant 0 : index
      %c0_149 = arith.constant 0 : index
      %179 = vector.load %arg19[%c0_147, %178, %c0_148, %c0_149] : memref<2x17x9x16xf32, #tpu.memory_space<vmem>>, vector<1x1x7x16xf32>
      %180 = vector.shape_cast %179 : vector<1x1x7x16xf32> to vector<7x16xf32>
      %c15 = arith.constant 15 : index
      %c0_150 = arith.constant 0 : index
      %c0_151 = arith.constant 0 : index
      %181 = vector.load %arg5[%c15, %c0_150, %c0_151] : memref<25x16x64xf32, #tpu.memory_space<vmem>>, vector<1x16x64xf32>
      %182 = vector.shape_cast %181 : vector<1x16x64xf32> to vector<16x64xf32>
      %cst_152 = arith.constant dense<0.000000e+00> : vector<7x64xf32>
      %183 = tpu.matmul %180, %182, %cst_152 {dimension_numbers = #tpu.dot_dimension_numbers<[1], [0], [0], [1], [0, 0, 1, 1], [], []>} : vector<7x16xf32>, vector<16x64xf32>, vector<7x64xf32> -> vector<7x64xf32>
      %184 = arith.addf %175, %183 : vector<7x64xf32>
      %c1_153 = arith.constant 1 : index
      %185 = arith.index_cast %177 : i32 to index
      %c0_154 = arith.constant 0 : index
      %c0_155 = arith.constant 0 : index
      %186 = vector.load %arg19[%c1_153, %185, %c0_154, %c0_155] : memref<2x17x9x16xf32, #tpu.memory_space<vmem>>, vector<1x1x7x16xf32>
      %187 = vector.shape_cast %186 : vector<1x1x7x16xf32> to vector<7x16xf32>
      %c16 = arith.constant 16 : index
      %c0_156 = arith.constant 0 : index
      %c0_157 = arith.constant 0 : index
      %188 = vector.load %arg5[%c16, %c0_156, %c0_157] : memref<25x16x64xf32, #tpu.memory_space<vmem>>, vector<1x16x64xf32>
      %189 = vector.shape_cast %188 : vector<1x16x64xf32> to vector<16x64xf32>
      %cst_158 = arith.constant dense<0.000000e+00> : vector<7x64xf32>
      %190 = tpu.matmul %187, %189, %cst_158 {dimension_numbers = #tpu.dot_dimension_numbers<[1], [0], [0], [1], [0, 0, 1, 1], [], []>} : vector<7x16xf32>, vector<16x64xf32>, vector<7x64xf32> -> vector<7x64xf32>
      %191 = arith.addf %184, %190 : vector<7x64xf32>
      %c0_159 = arith.constant 0 : index
      %192 = arith.index_cast %177 : i32 to index
      %c1_160 = arith.constant 1 : index
      %c0_161 = arith.constant 0 : index
      %193 = vector.load %arg19[%c0_159, %192, %c1_160, %c0_161] : memref<2x17x9x16xf32, #tpu.memory_space<vmem>>, vector<1x1x7x16xf32>
      %194 = vector.shape_cast %193 : vector<1x1x7x16xf32> to vector<7x16xf32>
      %c17 = arith.constant 17 : index
      %c0_162 = arith.constant 0 : index
      %c0_163 = arith.constant 0 : index
      %195 = vector.load %arg5[%c17, %c0_162, %c0_163] : memref<25x16x64xf32, #tpu.memory_space<vmem>>, vector<1x16x64xf32>
      %196 = vector.shape_cast %195 : vector<1x16x64xf32> to vector<16x64xf32>
      %cst_164 = arith.constant dense<0.000000e+00> : vector<7x64xf32>
      %197 = tpu.matmul %194, %196, %cst_164 {dimension_numbers = #tpu.dot_dimension_numbers<[1], [0], [0], [1], [0, 0, 1, 1], [], []>} : vector<7x16xf32>, vector<16x64xf32>, vector<7x64xf32> -> vector<7x64xf32>
      %198 = arith.addf %191, %197 : vector<7x64xf32>
      %c1_165 = arith.constant 1 : index
      %199 = arith.index_cast %177 : i32 to index
      %c1_166 = arith.constant 1 : index
      %c0_167 = arith.constant 0 : index
      %200 = vector.load %arg19[%c1_165, %199, %c1_166, %c0_167] : memref<2x17x9x16xf32, #tpu.memory_space<vmem>>, vector<1x1x7x16xf32>
      %201 = vector.shape_cast %200 : vector<1x1x7x16xf32> to vector<7x16xf32>
      %c18 = arith.constant 18 : index
      %c0_168 = arith.constant 0 : index
      %c0_169 = arith.constant 0 : index
      %202 = vector.load %arg5[%c18, %c0_168, %c0_169] : memref<25x16x64xf32, #tpu.memory_space<vmem>>, vector<1x16x64xf32>
      %203 = vector.shape_cast %202 : vector<1x16x64xf32> to vector<16x64xf32>
      %cst_170 = arith.constant dense<0.000000e+00> : vector<7x64xf32>
      %204 = tpu.matmul %201, %203, %cst_170 {dimension_numbers = #tpu.dot_dimension_numbers<[1], [0], [0], [1], [0, 0, 1, 1], [], []>} : vector<7x16xf32>, vector<16x64xf32>, vector<7x64xf32> -> vector<7x64xf32>
      %205 = arith.addf %198, %204 : vector<7x64xf32>
      %c0_171 = arith.constant 0 : index
      %206 = arith.index_cast %177 : i32 to index
      %c2_172 = arith.constant 2 : index
      %c0_173 = arith.constant 0 : index
      %207 = vector.load %arg19[%c0_171, %206, %c2_172, %c0_173] : memref<2x17x9x16xf32, #tpu.memory_space<vmem>>, vector<1x1x7x16xf32>
      %208 = vector.shape_cast %207 : vector<1x1x7x16xf32> to vector<7x16xf32>
      %c19 = arith.constant 19 : index
      %c0_174 = arith.constant 0 : index
      %c0_175 = arith.constant 0 : index
      %209 = vector.load %arg5[%c19, %c0_174, %c0_175] : memref<25x16x64xf32, #tpu.memory_space<vmem>>, vector<1x16x64xf32>
      %210 = vector.shape_cast %209 : vector<1x16x64xf32> to vector<16x64xf32>
      %cst_176 = arith.constant dense<0.000000e+00> : vector<7x64xf32>
      %211 = tpu.matmul %208, %210, %cst_176 {dimension_numbers = #tpu.dot_dimension_numbers<[1], [0], [0], [1], [0, 0, 1, 1], [], []>} : vector<7x16xf32>, vector<16x64xf32>, vector<7x64xf32> -> vector<7x64xf32>
      %212 = arith.addf %205, %211 : vector<7x64xf32>
      %c2_i32_177 = arith.constant 2 : i32
      %213 = arith.muli %c2_i32_177, %arg22 : i32
      %c4_i32 = arith.constant 4 : i32
      %214 = arith.addi %213, %c4_i32 : i32
      %c0_178 = arith.constant 0 : index
      %215 = arith.index_cast %214 : i32 to index
      %c0_179 = arith.constant 0 : index
      %c0_180 = arith.constant 0 : index
      %216 = vector.load %arg19[%c0_178, %215, %c0_179, %c0_180] : memref<2x17x9x16xf32, #tpu.memory_space<vmem>>, vector<1x1x7x16xf32>
      %217 = vector.shape_cast %216 : vector<1x1x7x16xf32> to vector<7x16xf32>
      %c20 = arith.constant 20 : index
      %c0_181 = arith.constant 0 : index
      %c0_182 = arith.constant 0 : index
      %218 = vector.load %arg5[%c20, %c0_181, %c0_182] : memref<25x16x64xf32, #tpu.memory_space<vmem>>, vector<1x16x64xf32>
      %219 = vector.shape_cast %218 : vector<1x16x64xf32> to vector<16x64xf32>
      %cst_183 = arith.constant dense<0.000000e+00> : vector<7x64xf32>
      %220 = tpu.matmul %217, %219, %cst_183 {dimension_numbers = #tpu.dot_dimension_numbers<[1], [0], [0], [1], [0, 0, 1, 1], [], []>} : vector<7x16xf32>, vector<16x64xf32>, vector<7x64xf32> -> vector<7x64xf32>
      %221 = arith.addf %212, %220 : vector<7x64xf32>
      %c1_184 = arith.constant 1 : index
      %222 = arith.index_cast %214 : i32 to index
      %c0_185 = arith.constant 0 : index
      %c0_186 = arith.constant 0 : index
      %223 = vector.load %arg19[%c1_184, %222, %c0_185, %c0_186] : memref<2x17x9x16xf32, #tpu.memory_space<vmem>>, vector<1x1x7x16xf32>
      %224 = vector.shape_cast %223 : vector<1x1x7x16xf32> to vector<7x16xf32>
      %c21 = arith.constant 21 : index
      %c0_187 = arith.constant 0 : index
      %c0_188 = arith.constant 0 : index
      %225 = vector.load %arg5[%c21, %c0_187, %c0_188] : memref<25x16x64xf32, #tpu.memory_space<vmem>>, vector<1x16x64xf32>
      %226 = vector.shape_cast %225 : vector<1x16x64xf32> to vector<16x64xf32>
      %cst_189 = arith.constant dense<0.000000e+00> : vector<7x64xf32>
      %227 = tpu.matmul %224, %226, %cst_189 {dimension_numbers = #tpu.dot_dimension_numbers<[1], [0], [0], [1], [0, 0, 1, 1], [], []>} : vector<7x16xf32>, vector<16x64xf32>, vector<7x64xf32> -> vector<7x64xf32>
      %228 = arith.addf %221, %227 : vector<7x64xf32>
      %c0_190 = arith.constant 0 : index
      %229 = arith.index_cast %214 : i32 to index
      %c1_191 = arith.constant 1 : index
      %c0_192 = arith.constant 0 : index
      %230 = vector.load %arg19[%c0_190, %229, %c1_191, %c0_192] : memref<2x17x9x16xf32, #tpu.memory_space<vmem>>, vector<1x1x7x16xf32>
      %231 = vector.shape_cast %230 : vector<1x1x7x16xf32> to vector<7x16xf32>
      %c22 = arith.constant 22 : index
      %c0_193 = arith.constant 0 : index
      %c0_194 = arith.constant 0 : index
      %232 = vector.load %arg5[%c22, %c0_193, %c0_194] : memref<25x16x64xf32, #tpu.memory_space<vmem>>, vector<1x16x64xf32>
      %233 = vector.shape_cast %232 : vector<1x16x64xf32> to vector<16x64xf32>
      %cst_195 = arith.constant dense<0.000000e+00> : vector<7x64xf32>
      %234 = tpu.matmul %231, %233, %cst_195 {dimension_numbers = #tpu.dot_dimension_numbers<[1], [0], [0], [1], [0, 0, 1, 1], [], []>} : vector<7x16xf32>, vector<16x64xf32>, vector<7x64xf32> -> vector<7x64xf32>
      %235 = arith.addf %228, %234 : vector<7x64xf32>
      %c1_196 = arith.constant 1 : index
      %236 = arith.index_cast %214 : i32 to index
      %c1_197 = arith.constant 1 : index
      %c0_198 = arith.constant 0 : index
      %237 = vector.load %arg19[%c1_196, %236, %c1_197, %c0_198] : memref<2x17x9x16xf32, #tpu.memory_space<vmem>>, vector<1x1x7x16xf32>
      %238 = vector.shape_cast %237 : vector<1x1x7x16xf32> to vector<7x16xf32>
      %c23 = arith.constant 23 : index
      %c0_199 = arith.constant 0 : index
      %c0_200 = arith.constant 0 : index
      %239 = vector.load %arg5[%c23, %c0_199, %c0_200] : memref<25x16x64xf32, #tpu.memory_space<vmem>>, vector<1x16x64xf32>
      %240 = vector.shape_cast %239 : vector<1x16x64xf32> to vector<16x64xf32>
      %cst_201 = arith.constant dense<0.000000e+00> : vector<7x64xf32>
      %241 = tpu.matmul %238, %240, %cst_201 {dimension_numbers = #tpu.dot_dimension_numbers<[1], [0], [0], [1], [0, 0, 1, 1], [], []>} : vector<7x16xf32>, vector<16x64xf32>, vector<7x64xf32> -> vector<7x64xf32>
      %242 = arith.addf %235, %241 : vector<7x64xf32>
      %c0_202 = arith.constant 0 : index
      %243 = arith.index_cast %214 : i32 to index
      %c2_203 = arith.constant 2 : index
      %c0_204 = arith.constant 0 : index
      %244 = vector.load %arg19[%c0_202, %243, %c2_203, %c0_204] : memref<2x17x9x16xf32, #tpu.memory_space<vmem>>, vector<1x1x7x16xf32>
      %245 = vector.shape_cast %244 : vector<1x1x7x16xf32> to vector<7x16xf32>
      %c24 = arith.constant 24 : index
      %c0_205 = arith.constant 0 : index
      %c0_206 = arith.constant 0 : index
      %246 = vector.load %arg5[%c24, %c0_205, %c0_206] : memref<25x16x64xf32, #tpu.memory_space<vmem>>, vector<1x16x64xf32>
      %247 = vector.shape_cast %246 : vector<1x16x64xf32> to vector<16x64xf32>
      %cst_207 = arith.constant dense<0.000000e+00> : vector<7x64xf32>
      %248 = tpu.matmul %245, %247, %cst_207 {dimension_numbers = #tpu.dot_dimension_numbers<[1], [0], [0], [1], [0, 0, 1, 1], [], []>} : vector<7x16xf32>, vector<16x64xf32>, vector<7x64xf32> -> vector<7x64xf32>
      %249 = arith.addf %242, %248 : vector<7x64xf32>
      %c0_208 = arith.constant 0 : index
      %c0_209 = arith.constant 0 : index
      %250 = vector.load %arg6[%c0_208, %c0_209] : memref<1x64xf32, #tpu.memory_space<vmem>>, vector<1x64xf32>
      %251 = vector.broadcast %250 : vector<1x64xf32> to vector<7x64xf32>
      %252 = arith.addf %249, %251 : vector<7x64xf32>
      %cst_210 = arith.constant 0.000000e+00 : f32
      %253 = vector.broadcast %cst_210 : f32 to vector<7x64xf32>
      %254 = arith.maximumf %252, %253 : vector<7x64xf32>
      %cst_211 = arith.constant dense<0.000000e+00> : vector<4x64xf32>
      %255 = tpu.matmul %21, %254, %cst_211 {dimension_numbers = #tpu.dot_dimension_numbers<[1], [0], [0], [1], [0, 0, 1, 1], [], []>} : vector<4x7xf32>, vector<7x64xf32>, vector<4x64xf32> -> vector<4x64xf32>
      %c0_212 = arith.constant 0 : index
      %256 = arith.index_cast %arg22 : i32 to index
      %c0_213 = arith.constant 0 : index
      %c0_214 = arith.constant 0 : index
      %257 = vector.load %arg20[%c0_212, %256, %c0_213, %c0_214] : memref<2x7x4x64xf32, #tpu.memory_space<vmem>>, vector<1x1x4x64xf32>
      %258 = vector.shape_cast %257 : vector<1x1x4x64xf32> to vector<4x64xf32>
      %259 = vector.shape_cast %255 : vector<4x64xf32> to vector<1x1x4x64xf32>
      tpu.vector_store %arg20[%c0_212, %256, %c0_213, %c0_214], %259 {strides = array<i32>} : memref<2x7x4x64xf32, #tpu.memory_space<vmem>>, vector<1x1x4x64xf32>,
      %cst_215 = arith.constant dense<0.000000e+00> : vector<4x64xf32>
      %260 = tpu.matmul %28, %254, %cst_215 {dimension_numbers = #tpu.dot_dimension_numbers<[1], [0], [0], [1], [0, 0, 1, 1], [], []>} : vector<4x7xf32>, vector<7x64xf32>, vector<4x64xf32> -> vector<4x64xf32>
      %c1_216 = arith.constant 1 : index
      %261 = arith.index_cast %arg22 : i32 to index
      %c0_217 = arith.constant 0 : index
      %c0_218 = arith.constant 0 : index
      %262 = vector.load %arg20[%c1_216, %261, %c0_217, %c0_218] : memref<2x7x4x64xf32, #tpu.memory_space<vmem>>, vector<1x1x4x64xf32>
      %263 = vector.shape_cast %262 : vector<1x1x4x64xf32> to vector<4x64xf32>
      %264 = vector.shape_cast %260 : vector<4x64xf32> to vector<1x1x4x64xf32>
      tpu.vector_store %arg20[%c1_216, %261, %c0_217, %c0_218], %264 {strides = array<i32>} : memref<2x7x4x64xf32, #tpu.memory_space<vmem>>, vector<1x1x4x64xf32>,
    }
    %c7_i32_8 = arith.constant 7 : i32
    %cst = arith.constant 0.000000e+00 : f32
    %30 = vector.broadcast %cst : f32 to vector<1x256xf32>
    %c0 = arith.constant 0 : index
    %c0_9 = arith.constant 0 : index
    %31 = vector.load %arg21[%c0, %c0_9] : memref<1x256xf32, #tpu.memory_space<vmem>>, vector<1x256xf32>
    tpu.vector_store %arg21[%c0, %c0_9], %30 {strides = array<i32>} : memref<1x256xf32, #tpu.memory_space<vmem>>, vector<1x256xf32>,
    %c0_i32_10 = arith.constant 0 : i32
    %c2_i32_11 = arith.constant 2 : i32
    %32 = arith.addi %c0_i32_10, %c2_i32_11 : i32
    %c1_i32_12 = arith.constant 1 : i32
    scf.for %arg22 = %c0_i32_10 to %32 step %c1_i32_12  : i32 {
      %c2_i32_49 = arith.constant 2 : i32
      %66 = arith.muli %c2_i32_49, %arg22 : i32
      %c0_i32_50 = arith.constant 0 : i32
      %67 = arith.addi %66, %c0_i32_50 : i32
      %c0_51 = arith.constant 0 : index
      %68 = arith.index_cast %67 : i32 to index
      %c0_52 = arith.constant 0 : index
      %c0_53 = arith.constant 0 : index
      %69 = vector.load %arg20[%c0_51, %68, %c0_52, %c0_53] : memref<2x7x4x64xf32, #tpu.memory_space<vmem>>, vector<1x1x2x64xf32>
      %70 = vector.shape_cast %69 : vector<1x1x2x64xf32> to vector<2x64xf32>
      %c0_54 = arith.constant 0 : index
      %c0_55 = arith.constant 0 : index
      %c0_56 = arith.constant 0 : index
      %71 = vector.load %arg7[%c0_54, %c0_55, %c0_56] : memref<25x64x256xf32, #tpu.memory_space<vmem>>, vector<1x64x256xf32>
      %72 = vector.shape_cast %71 : vector<1x64x256xf32> to vector<64x256xf32>
      %cst_57 = arith.constant dense<0.000000e+00> : vector<2x256xf32>
      %73 = tpu.matmul %70, %72, %cst_57 {dimension_numbers = #tpu.dot_dimension_numbers<[1], [0], [0], [1], [0, 0, 1, 1], [], []>} : vector<2x64xf32>, vector<64x256xf32>, vector<2x256xf32> -> vector<2x256xf32>
      %c1 = arith.constant 1 : index
      %74 = arith.index_cast %67 : i32 to index
      %c0_58 = arith.constant 0 : index
      %c0_59 = arith.constant 0 : index
      %75 = vector.load %arg20[%c1, %74, %c0_58, %c0_59] : memref<2x7x4x64xf32, #tpu.memory_space<vmem>>, vector<1x1x2x64xf32>
      %76 = vector.shape_cast %75 : vector<1x1x2x64xf32> to vector<2x64xf32>
      %c1_60 = arith.constant 1 : index
      %c0_61 = arith.constant 0 : index
      %c0_62 = arith.constant 0 : index
      %77 = vector.load %arg7[%c1_60, %c0_61, %c0_62] : memref<25x64x256xf32, #tpu.memory_space<vmem>>, vector<1x64x256xf32>
      %78 = vector.shape_cast %77 : vector<1x64x256xf32> to vector<64x256xf32>
      %cst_63 = arith.constant dense<0.000000e+00> : vector<2x256xf32>
      %79 = tpu.matmul %76, %78, %cst_63 {dimension_numbers = #tpu.dot_dimension_numbers<[1], [0], [0], [1], [0, 0, 1, 1], [], []>} : vector<2x64xf32>, vector<64x256xf32>, vector<2x256xf32> -> vector<2x256xf32>
      %80 = arith.addf %73, %79 : vector<2x256xf32>
      %c0_64 = arith.constant 0 : index
      %81 = arith.index_cast %67 : i32 to index
      %c1_65 = arith.constant 1 : index
      %c0_66 = arith.constant 0 : index
      %82 = vector.load %arg20[%c0_64, %81, %c1_65, %c0_66] : memref<2x7x4x64xf32, #tpu.memory_space<vmem>>, vector<1x1x2x64xf32>
      %83 = vector.shape_cast %82 : vector<1x1x2x64xf32> to vector<2x64xf32>
      %c2 = arith.constant 2 : index
      %c0_67 = arith.constant 0 : index
      %c0_68 = arith.constant 0 : index
      %84 = vector.load %arg7[%c2, %c0_67, %c0_68] : memref<25x64x256xf32, #tpu.memory_space<vmem>>, vector<1x64x256xf32>
      %85 = vector.shape_cast %84 : vector<1x64x256xf32> to vector<64x256xf32>
      %cst_69 = arith.constant dense<0.000000e+00> : vector<2x256xf32>
      %86 = tpu.matmul %83, %85, %cst_69 {dimension_numbers = #tpu.dot_dimension_numbers<[1], [0], [0], [1], [0, 0, 1, 1], [], []>} : vector<2x64xf32>, vector<64x256xf32>, vector<2x256xf32> -> vector<2x256xf32>
      %87 = arith.addf %80, %86 : vector<2x256xf32>
      %c1_70 = arith.constant 1 : index
      %88 = arith.index_cast %67 : i32 to index
      %c1_71 = arith.constant 1 : index
      %c0_72 = arith.constant 0 : index
      %89 = vector.load %arg20[%c1_70, %88, %c1_71, %c0_72] : memref<2x7x4x64xf32, #tpu.memory_space<vmem>>, vector<1x1x2x64xf32>
      %90 = vector.shape_cast %89 : vector<1x1x2x64xf32> to vector<2x64xf32>
      %c3 = arith.constant 3 : index
      %c0_73 = arith.constant 0 : index
      %c0_74 = arith.constant 0 : index
      %91 = vector.load %arg7[%c3, %c0_73, %c0_74] : memref<25x64x256xf32, #tpu.memory_space<vmem>>, vector<1x64x256xf32>
      %92 = vector.shape_cast %91 : vector<1x64x256xf32> to vector<64x256xf32>
      %cst_75 = arith.constant dense<0.000000e+00> : vector<2x256xf32>
      %93 = tpu.matmul %90, %92, %cst_75 {dimension_numbers = #tpu.dot_dimension_numbers<[1], [0], [0], [1], [0, 0, 1, 1], [], []>} : vector<2x64xf32>, vector<64x256xf32>, vector<2x256xf32> -> vector<2x256xf32>
      %94 = arith.addf %87, %93 : vector<2x256xf32>
      %c0_76 = arith.constant 0 : index
      %95 = arith.index_cast %67 : i32 to index
      %c2_77 = arith.constant 2 : index
      %c0_78 = arith.constant 0 : index
      %96 = vector.load %arg20[%c0_76, %95, %c2_77, %c0_78] : memref<2x7x4x64xf32, #tpu.memory_space<vmem>>, vector<1x1x2x64xf32>
      %97 = vector.shape_cast %96 : vector<1x1x2x64xf32> to vector<2x64xf32>
      %c4 = arith.constant 4 : index
      %c0_79 = arith.constant 0 : index
      %c0_80 = arith.constant 0 : index
      %98 = vector.load %arg7[%c4, %c0_79, %c0_80] : memref<25x64x256xf32, #tpu.memory_space<vmem>>, vector<1x64x256xf32>
      %99 = vector.shape_cast %98 : vector<1x64x256xf32> to vector<64x256xf32>
      %cst_81 = arith.constant dense<0.000000e+00> : vector<2x256xf32>
      %100 = tpu.matmul %97, %99, %cst_81 {dimension_numbers = #tpu.dot_dimension_numbers<[1], [0], [0], [1], [0, 0, 1, 1], [], []>} : vector<2x64xf32>, vector<64x256xf32>, vector<2x256xf32> -> vector<2x256xf32>
      %101 = arith.addf %94, %100 : vector<2x256xf32>
      %c2_i32_82 = arith.constant 2 : i32
      %102 = arith.muli %c2_i32_82, %arg22 : i32
      %c1_i32_83 = arith.constant 1 : i32
      %103 = arith.addi %102, %c1_i32_83 : i32
      %c0_84 = arith.constant 0 : index
      %104 = arith.index_cast %103 : i32 to index
      %c0_85 = arith.constant 0 : index
      %c0_86 = arith.constant 0 : index
      %105 = vector.load %arg20[%c0_84, %104, %c0_85, %c0_86] : memref<2x7x4x64xf32, #tpu.memory_space<vmem>>, vector<1x1x2x64xf32>
      %106 = vector.shape_cast %105 : vector<1x1x2x64xf32> to vector<2x64xf32>
      %c5 = arith.constant 5 : index
      %c0_87 = arith.constant 0 : index
      %c0_88 = arith.constant 0 : index
      %107 = vector.load %arg7[%c5, %c0_87, %c0_88] : memref<25x64x256xf32, #tpu.memory_space<vmem>>, vector<1x64x256xf32>
      %108 = vector.shape_cast %107 : vector<1x64x256xf32> to vector<64x256xf32>
      %cst_89 = arith.constant dense<0.000000e+00> : vector<2x256xf32>
      %109 = tpu.matmul %106, %108, %cst_89 {dimension_numbers = #tpu.dot_dimension_numbers<[1], [0], [0], [1], [0, 0, 1, 1], [], []>} : vector<2x64xf32>, vector<64x256xf32>, vector<2x256xf32> -> vector<2x256xf32>
      %110 = arith.addf %101, %109 : vector<2x256xf32>
      %c1_90 = arith.constant 1 : index
      %111 = arith.index_cast %103 : i32 to index
      %c0_91 = arith.constant 0 : index
      %c0_92 = arith.constant 0 : index
      %112 = vector.load %arg20[%c1_90, %111, %c0_91, %c0_92] : memref<2x7x4x64xf32, #tpu.memory_space<vmem>>, vector<1x1x2x64xf32>
      %113 = vector.shape_cast %112 : vector<1x1x2x64xf32> to vector<2x64xf32>
      %c6 = arith.constant 6 : index
      %c0_93 = arith.constant 0 : index
      %c0_94 = arith.constant 0 : index
      %114 = vector.load %arg7[%c6, %c0_93, %c0_94] : memref<25x64x256xf32, #tpu.memory_space<vmem>>, vector<1x64x256xf32>
      %115 = vector.shape_cast %114 : vector<1x64x256xf32> to vector<64x256xf32>
      %cst_95 = arith.constant dense<0.000000e+00> : vector<2x256xf32>
      %116 = tpu.matmul %113, %115, %cst_95 {dimension_numbers = #tpu.dot_dimension_numbers<[1], [0], [0], [1], [0, 0, 1, 1], [], []>} : vector<2x64xf32>, vector<64x256xf32>, vector<2x256xf32> -> vector<2x256xf32>
      %117 = arith.addf %110, %116 : vector<2x256xf32>
      %c0_96 = arith.constant 0 : index
      %118 = arith.index_cast %103 : i32 to index
      %c1_97 = arith.constant 1 : index
      %c0_98 = arith.constant 0 : index
      %119 = vector.load %arg20[%c0_96, %118, %c1_97, %c0_98] : memref<2x7x4x64xf32, #tpu.memory_space<vmem>>, vector<1x1x2x64xf32>
      %120 = vector.shape_cast %119 : vector<1x1x2x64xf32> to vector<2x64xf32>
      %c7 = arith.constant 7 : index
      %c0_99 = arith.constant 0 : index
      %c0_100 = arith.constant 0 : index
      %121 = vector.load %arg7[%c7, %c0_99, %c0_100] : memref<25x64x256xf32, #tpu.memory_space<vmem>>, vector<1x64x256xf32>
      %122 = vector.shape_cast %121 : vector<1x64x256xf32> to vector<64x256xf32>
      %cst_101 = arith.constant dense<0.000000e+00> : vector<2x256xf32>
      %123 = tpu.matmul %120, %122, %cst_101 {dimension_numbers = #tpu.dot_dimension_numbers<[1], [0], [0], [1], [0, 0, 1, 1], [], []>} : vector<2x64xf32>, vector<64x256xf32>, vector<2x256xf32> -> vector<2x256xf32>
      %124 = arith.addf %117, %123 : vector<2x256xf32>
      %c1_102 = arith.constant 1 : index
      %125 = arith.index_cast %103 : i32 to index
      %c1_103 = arith.constant 1 : index
      %c0_104 = arith.constant 0 : index
      %126 = vector.load %arg20[%c1_102, %125, %c1_103, %c0_104] : memref<2x7x4x64xf32, #tpu.memory_space<vmem>>, vector<1x1x2x64xf32>
      %127 = vector.shape_cast %126 : vector<1x1x2x64xf32> to vector<2x64xf32>
      %c8 = arith.constant 8 : index
      %c0_105 = arith.constant 0 : index
      %c0_106 = arith.constant 0 : index
      %128 = vector.load %arg7[%c8, %c0_105, %c0_106] : memref<25x64x256xf32, #tpu.memory_space<vmem>>, vector<1x64x256xf32>
      %129 = vector.shape_cast %128 : vector<1x64x256xf32> to vector<64x256xf32>
      %cst_107 = arith.constant dense<0.000000e+00> : vector<2x256xf32>
      %130 = tpu.matmul %127, %129, %cst_107 {dimension_numbers = #tpu.dot_dimension_numbers<[1], [0], [0], [1], [0, 0, 1, 1], [], []>} : vector<2x64xf32>, vector<64x256xf32>, vector<2x256xf32> -> vector<2x256xf32>
      %131 = arith.addf %124, %130 : vector<2x256xf32>
      %c0_108 = arith.constant 0 : index
      %132 = arith.index_cast %103 : i32 to index
      %c2_109 = arith.constant 2 : index
      %c0_110 = arith.constant 0 : index
      %133 = vector.load %arg20[%c0_108, %132, %c2_109, %c0_110] : memref<2x7x4x64xf32, #tpu.memory_space<vmem>>, vector<1x1x2x64xf32>
      %134 = vector.shape_cast %133 : vector<1x1x2x64xf32> to vector<2x64xf32>
      %c9 = arith.constant 9 : index
      %c0_111 = arith.constant 0 : index
      %c0_112 = arith.constant 0 : index
      %135 = vector.load %arg7[%c9, %c0_111, %c0_112] : memref<25x64x256xf32, #tpu.memory_space<vmem>>, vector<1x64x256xf32>
      %136 = vector.shape_cast %135 : vector<1x64x256xf32> to vector<64x256xf32>
      %cst_113 = arith.constant dense<0.000000e+00> : vector<2x256xf32>
      %137 = tpu.matmul %134, %136, %cst_113 {dimension_numbers = #tpu.dot_dimension_numbers<[1], [0], [0], [1], [0, 0, 1, 1], [], []>} : vector<2x64xf32>, vector<64x256xf32>, vector<2x256xf32> -> vector<2x256xf32>
      %138 = arith.addf %131, %137 : vector<2x256xf32>
      %c2_i32_114 = arith.constant 2 : i32
      %139 = arith.muli %c2_i32_114, %arg22 : i32
      %c2_i32_115 = arith.constant 2 : i32
      %140 = arith.addi %139, %c2_i32_115 : i32
      %c0_116 = arith.constant 0 : index
      %141 = arith.index_cast %140 : i32 to index
      %c0_117 = arith.constant 0 : index
      %c0_118 = arith.constant 0 : index
      %142 = vector.load %arg20[%c0_116, %141, %c0_117, %c0_118] : memref<2x7x4x64xf32, #tpu.memory_space<vmem>>, vector<1x1x2x64xf32>
      %143 = vector.shape_cast %142 : vector<1x1x2x64xf32> to vector<2x64xf32>
      %c10 = arith.constant 10 : index
      %c0_119 = arith.constant 0 : index
      %c0_120 = arith.constant 0 : index
      %144 = vector.load %arg7[%c10, %c0_119, %c0_120] : memref<25x64x256xf32, #tpu.memory_space<vmem>>, vector<1x64x256xf32>
      %145 = vector.shape_cast %144 : vector<1x64x256xf32> to vector<64x256xf32>
      %cst_121 = arith.constant dense<0.000000e+00> : vector<2x256xf32>
      %146 = tpu.matmul %143, %145, %cst_121 {dimension_numbers = #tpu.dot_dimension_numbers<[1], [0], [0], [1], [0, 0, 1, 1], [], []>} : vector<2x64xf32>, vector<64x256xf32>, vector<2x256xf32> -> vector<2x256xf32>
      %147 = arith.addf %138, %146 : vector<2x256xf32>
      %c1_122 = arith.constant 1 : index
      %148 = arith.index_cast %140 : i32 to index
      %c0_123 = arith.constant 0 : index
      %c0_124 = arith.constant 0 : index
      %149 = vector.load %arg20[%c1_122, %148, %c0_123, %c0_124] : memref<2x7x4x64xf32, #tpu.memory_space<vmem>>, vector<1x1x2x64xf32>
      %150 = vector.shape_cast %149 : vector<1x1x2x64xf32> to vector<2x64xf32>
      %c11 = arith.constant 11 : index
      %c0_125 = arith.constant 0 : index
      %c0_126 = arith.constant 0 : index
      %151 = vector.load %arg7[%c11, %c0_125, %c0_126] : memref<25x64x256xf32, #tpu.memory_space<vmem>>, vector<1x64x256xf32>
      %152 = vector.shape_cast %151 : vector<1x64x256xf32> to vector<64x256xf32>
      %cst_127 = arith.constant dense<0.000000e+00> : vector<2x256xf32>
      %153 = tpu.matmul %150, %152, %cst_127 {dimension_numbers = #tpu.dot_dimension_numbers<[1], [0], [0], [1], [0, 0, 1, 1], [], []>} : vector<2x64xf32>, vector<64x256xf32>, vector<2x256xf32> -> vector<2x256xf32>
      %154 = arith.addf %147, %153 : vector<2x256xf32>
      %c0_128 = arith.constant 0 : index
      %155 = arith.index_cast %140 : i32 to index
      %c1_129 = arith.constant 1 : index
      %c0_130 = arith.constant 0 : index
      %156 = vector.load %arg20[%c0_128, %155, %c1_129, %c0_130] : memref<2x7x4x64xf32, #tpu.memory_space<vmem>>, vector<1x1x2x64xf32>
      %157 = vector.shape_cast %156 : vector<1x1x2x64xf32> to vector<2x64xf32>
      %c12 = arith.constant 12 : index
      %c0_131 = arith.constant 0 : index
      %c0_132 = arith.constant 0 : index
      %158 = vector.load %arg7[%c12, %c0_131, %c0_132] : memref<25x64x256xf32, #tpu.memory_space<vmem>>, vector<1x64x256xf32>
      %159 = vector.shape_cast %158 : vector<1x64x256xf32> to vector<64x256xf32>
      %cst_133 = arith.constant dense<0.000000e+00> : vector<2x256xf32>
      %160 = tpu.matmul %157, %159, %cst_133 {dimension_numbers = #tpu.dot_dimension_numbers<[1], [0], [0], [1], [0, 0, 1, 1], [], []>} : vector<2x64xf32>, vector<64x256xf32>, vector<2x256xf32> -> vector<2x256xf32>
      %161 = arith.addf %154, %160 : vector<2x256xf32>
      %c1_134 = arith.constant 1 : index
      %162 = arith.index_cast %140 : i32 to index
      %c1_135 = arith.constant 1 : index
      %c0_136 = arith.constant 0 : index
      %163 = vector.load %arg20[%c1_134, %162, %c1_135, %c0_136] : memref<2x7x4x64xf32, #tpu.memory_space<vmem>>, vector<1x1x2x64xf32>
      %164 = vector.shape_cast %163 : vector<1x1x2x64xf32> to vector<2x64xf32>
      %c13 = arith.constant 13 : index
      %c0_137 = arith.constant 0 : index
      %c0_138 = arith.constant 0 : index
      %165 = vector.load %arg7[%c13, %c0_137, %c0_138] : memref<25x64x256xf32, #tpu.memory_space<vmem>>, vector<1x64x256xf32>
      %166 = vector.shape_cast %165 : vector<1x64x256xf32> to vector<64x256xf32>
      %cst_139 = arith.constant dense<0.000000e+00> : vector<2x256xf32>
      %167 = tpu.matmul %164, %166, %cst_139 {dimension_numbers = #tpu.dot_dimension_numbers<[1], [0], [0], [1], [0, 0, 1, 1], [], []>} : vector<2x64xf32>, vector<64x256xf32>, vector<2x256xf32> -> vector<2x256xf32>
      %168 = arith.addf %161, %167 : vector<2x256xf32>
      %c0_140 = arith.constant 0 : index
      %169 = arith.index_cast %140 : i32 to index
      %c2_141 = arith.constant 2 : index
      %c0_142 = arith.constant 0 : index
      %170 = vector.load %arg20[%c0_140, %169, %c2_141, %c0_142] : memref<2x7x4x64xf32, #tpu.memory_space<vmem>>, vector<1x1x2x64xf32>
      %171 = vector.shape_cast %170 : vector<1x1x2x64xf32> to vector<2x64xf32>
      %c14 = arith.constant 14 : index
      %c0_143 = arith.constant 0 : index
      %c0_144 = arith.constant 0 : index
      %172 = vector.load %arg7[%c14, %c0_143, %c0_144] : memref<25x64x256xf32, #tpu.memory_space<vmem>>, vector<1x64x256xf32>
      %173 = vector.shape_cast %172 : vector<1x64x256xf32> to vector<64x256xf32>
      %cst_145 = arith.constant dense<0.000000e+00> : vector<2x256xf32>
      %174 = tpu.matmul %171, %173, %cst_145 {dimension_numbers = #tpu.dot_dimension_numbers<[1], [0], [0], [1], [0, 0, 1, 1], [], []>} : vector<2x64xf32>, vector<64x256xf32>, vector<2x256xf32> -> vector<2x256xf32>
      %175 = arith.addf %168, %174 : vector<2x256xf32>
      %c2_i32_146 = arith.constant 2 : i32
      %176 = arith.muli %c2_i32_146, %arg22 : i32
      %c3_i32 = arith.constant 3 : i32
      %177 = arith.addi %176, %c3_i32 : i32
      %c0_147 = arith.constant 0 : index
      %178 = arith.index_cast %177 : i32 to index
      %c0_148 = arith.constant 0 : index
      %c0_149 = arith.constant 0 : index
      %179 = vector.load %arg20[%c0_147, %178, %c0_148, %c0_149] : memref<2x7x4x64xf32, #tpu.memory_space<vmem>>, vector<1x1x2x64xf32>
      %180 = vector.shape_cast %179 : vector<1x1x2x64xf32> to vector<2x64xf32>
      %c15 = arith.constant 15 : index
      %c0_150 = arith.constant 0 : index
      %c0_151 = arith.constant 0 : index
      %181 = vector.load %arg7[%c15, %c0_150, %c0_151] : memref<25x64x256xf32, #tpu.memory_space<vmem>>, vector<1x64x256xf32>
      %182 = vector.shape_cast %181 : vector<1x64x256xf32> to vector<64x256xf32>
      %cst_152 = arith.constant dense<0.000000e+00> : vector<2x256xf32>
      %183 = tpu.matmul %180, %182, %cst_152 {dimension_numbers = #tpu.dot_dimension_numbers<[1], [0], [0], [1], [0, 0, 1, 1], [], []>} : vector<2x64xf32>, vector<64x256xf32>, vector<2x256xf32> -> vector<2x256xf32>
      %184 = arith.addf %175, %183 : vector<2x256xf32>
      %c1_153 = arith.constant 1 : index
      %185 = arith.index_cast %177 : i32 to index
      %c0_154 = arith.constant 0 : index
      %c0_155 = arith.constant 0 : index
      %186 = vector.load %arg20[%c1_153, %185, %c0_154, %c0_155] : memref<2x7x4x64xf32, #tpu.memory_space<vmem>>, vector<1x1x2x64xf32>
      %187 = vector.shape_cast %186 : vector<1x1x2x64xf32> to vector<2x64xf32>
      %c16 = arith.constant 16 : index
      %c0_156 = arith.constant 0 : index
      %c0_157 = arith.constant 0 : index
      %188 = vector.load %arg7[%c16, %c0_156, %c0_157] : memref<25x64x256xf32, #tpu.memory_space<vmem>>, vector<1x64x256xf32>
      %189 = vector.shape_cast %188 : vector<1x64x256xf32> to vector<64x256xf32>
      %cst_158 = arith.constant dense<0.000000e+00> : vector<2x256xf32>
      %190 = tpu.matmul %187, %189, %cst_158 {dimension_numbers = #tpu.dot_dimension_numbers<[1], [0], [0], [1], [0, 0, 1, 1], [], []>} : vector<2x64xf32>, vector<64x256xf32>, vector<2x256xf32> -> vector<2x256xf32>
      %191 = arith.addf %184, %190 : vector<2x256xf32>
      %c0_159 = arith.constant 0 : index
      %192 = arith.index_cast %177 : i32 to index
      %c1_160 = arith.constant 1 : index
      %c0_161 = arith.constant 0 : index
      %193 = vector.load %arg20[%c0_159, %192, %c1_160, %c0_161] : memref<2x7x4x64xf32, #tpu.memory_space<vmem>>, vector<1x1x2x64xf32>
      %194 = vector.shape_cast %193 : vector<1x1x2x64xf32> to vector<2x64xf32>
      %c17 = arith.constant 17 : index
      %c0_162 = arith.constant 0 : index
      %c0_163 = arith.constant 0 : index
      %195 = vector.load %arg7[%c17, %c0_162, %c0_163] : memref<25x64x256xf32, #tpu.memory_space<vmem>>, vector<1x64x256xf32>
      %196 = vector.shape_cast %195 : vector<1x64x256xf32> to vector<64x256xf32>
      %cst_164 = arith.constant dense<0.000000e+00> : vector<2x256xf32>
      %197 = tpu.matmul %194, %196, %cst_164 {dimension_numbers = #tpu.dot_dimension_numbers<[1], [0], [0], [1], [0, 0, 1, 1], [], []>} : vector<2x64xf32>, vector<64x256xf32>, vector<2x256xf32> -> vector<2x256xf32>
      %198 = arith.addf %191, %197 : vector<2x256xf32>
      %c1_165 = arith.constant 1 : index
      %199 = arith.index_cast %177 : i32 to index
      %c1_166 = arith.constant 1 : index
      %c0_167 = arith.constant 0 : index
      %200 = vector.load %arg20[%c1_165, %199, %c1_166, %c0_167] : memref<2x7x4x64xf32, #tpu.memory_space<vmem>>, vector<1x1x2x64xf32>
      %201 = vector.shape_cast %200 : vector<1x1x2x64xf32> to vector<2x64xf32>
      %c18 = arith.constant 18 : index
      %c0_168 = arith.constant 0 : index
      %c0_169 = arith.constant 0 : index
      %202 = vector.load %arg7[%c18, %c0_168, %c0_169] : memref<25x64x256xf32, #tpu.memory_space<vmem>>, vector<1x64x256xf32>
      %203 = vector.shape_cast %202 : vector<1x64x256xf32> to vector<64x256xf32>
      %cst_170 = arith.constant dense<0.000000e+00> : vector<2x256xf32>
      %204 = tpu.matmul %201, %203, %cst_170 {dimension_numbers = #tpu.dot_dimension_numbers<[1], [0], [0], [1], [0, 0, 1, 1], [], []>} : vector<2x64xf32>, vector<64x256xf32>, vector<2x256xf32> -> vector<2x256xf32>
      %205 = arith.addf %198, %204 : vector<2x256xf32>
      %c0_171 = arith.constant 0 : index
      %206 = arith.index_cast %177 : i32 to index
      %c2_172 = arith.constant 2 : index
      %c0_173 = arith.constant 0 : index
      %207 = vector.load %arg20[%c0_171, %206, %c2_172, %c0_173] : memref<2x7x4x64xf32, #tpu.memory_space<vmem>>, vector<1x1x2x64xf32>
      %208 = vector.shape_cast %207 : vector<1x1x2x64xf32> to vector<2x64xf32>
      %c19 = arith.constant 19 : index
      %c0_174 = arith.constant 0 : index
      %c0_175 = arith.constant 0 : index
      %209 = vector.load %arg7[%c19, %c0_174, %c0_175] : memref<25x64x256xf32, #tpu.memory_space<vmem>>, vector<1x64x256xf32>
      %210 = vector.shape_cast %209 : vector<1x64x256xf32> to vector<64x256xf32>
      %cst_176 = arith.constant dense<0.000000e+00> : vector<2x256xf32>
      %211 = tpu.matmul %208, %210, %cst_176 {dimension_numbers = #tpu.dot_dimension_numbers<[1], [0], [0], [1], [0, 0, 1, 1], [], []>} : vector<2x64xf32>, vector<64x256xf32>, vector<2x256xf32> -> vector<2x256xf32>
      %212 = arith.addf %205, %211 : vector<2x256xf32>
      %c2_i32_177 = arith.constant 2 : i32
      %213 = arith.muli %c2_i32_177, %arg22 : i32
      %c4_i32 = arith.constant 4 : i32
      %214 = arith.addi %213, %c4_i32 : i32
      %c0_178 = arith.constant 0 : index
      %215 = arith.index_cast %214 : i32 to index
      %c0_179 = arith.constant 0 : index
      %c0_180 = arith.constant 0 : index
      %216 = vector.load %arg20[%c0_178, %215, %c0_179, %c0_180] : memref<2x7x4x64xf32, #tpu.memory_space<vmem>>, vector<1x1x2x64xf32>
      %217 = vector.shape_cast %216 : vector<1x1x2x64xf32> to vector<2x64xf32>
      %c20 = arith.constant 20 : index
      %c0_181 = arith.constant 0 : index
      %c0_182 = arith.constant 0 : index
      %218 = vector.load %arg7[%c20, %c0_181, %c0_182] : memref<25x64x256xf32, #tpu.memory_space<vmem>>, vector<1x64x256xf32>
      %219 = vector.shape_cast %218 : vector<1x64x256xf32> to vector<64x256xf32>
      %cst_183 = arith.constant dense<0.000000e+00> : vector<2x256xf32>
      %220 = tpu.matmul %217, %219, %cst_183 {dimension_numbers = #tpu.dot_dimension_numbers<[1], [0], [0], [1], [0, 0, 1, 1], [], []>} : vector<2x64xf32>, vector<64x256xf32>, vector<2x256xf32> -> vector<2x256xf32>
      %221 = arith.addf %212, %220 : vector<2x256xf32>
      %c1_184 = arith.constant 1 : index
      %222 = arith.index_cast %214 : i32 to index
      %c0_185 = arith.constant 0 : index
      %c0_186 = arith.constant 0 : index
      %223 = vector.load %arg20[%c1_184, %222, %c0_185, %c0_186] : memref<2x7x4x64xf32, #tpu.memory_space<vmem>>, vector<1x1x2x64xf32>
      %224 = vector.shape_cast %223 : vector<1x1x2x64xf32> to vector<2x64xf32>
      %c21 = arith.constant 21 : index
      %c0_187 = arith.constant 0 : index
      %c0_188 = arith.constant 0 : index
      %225 = vector.load %arg7[%c21, %c0_187, %c0_188] : memref<25x64x256xf32, #tpu.memory_space<vmem>>, vector<1x64x256xf32>
      %226 = vector.shape_cast %225 : vector<1x64x256xf32> to vector<64x256xf32>
      %cst_189 = arith.constant dense<0.000000e+00> : vector<2x256xf32>
      %227 = tpu.matmul %224, %226, %cst_189 {dimension_numbers = #tpu.dot_dimension_numbers<[1], [0], [0], [1], [0, 0, 1, 1], [], []>} : vector<2x64xf32>, vector<64x256xf32>, vector<2x256xf32> -> vector<2x256xf32>
      %228 = arith.addf %221, %227 : vector<2x256xf32>
      %c0_190 = arith.constant 0 : index
      %229 = arith.index_cast %214 : i32 to index
      %c1_191 = arith.constant 1 : index
      %c0_192 = arith.constant 0 : index
      %230 = vector.load %arg20[%c0_190, %229, %c1_191, %c0_192] : memref<2x7x4x64xf32, #tpu.memory_space<vmem>>, vector<1x1x2x64xf32>
      %231 = vector.shape_cast %230 : vector<1x1x2x64xf32> to vector<2x64xf32>
      %c22 = arith.constant 22 : index
      %c0_193 = arith.constant 0 : index
      %c0_194 = arith.constant 0 : index
      %232 = vector.load %arg7[%c22, %c0_193, %c0_194] : memref<25x64x256xf32, #tpu.memory_space<vmem>>, vector<1x64x256xf32>
      %233 = vector.shape_cast %232 : vector<1x64x256xf32> to vector<64x256xf32>
      %cst_195 = arith.constant dense<0.000000e+00> : vector<2x256xf32>
      %234 = tpu.matmul %231, %233, %cst_195 {dimension_numbers = #tpu.dot_dimension_numbers<[1], [0], [0], [1], [0, 0, 1, 1], [], []>} : vector<2x64xf32>, vector<64x256xf32>, vector<2x256xf32> -> vector<2x256xf32>
      %235 = arith.addf %228, %234 : vector<2x256xf32>
      %c1_196 = arith.constant 1 : index
      %236 = arith.index_cast %214 : i32 to index
      %c1_197 = arith.constant 1 : index
      %c0_198 = arith.constant 0 : index
      %237 = vector.load %arg20[%c1_196, %236, %c1_197, %c0_198] : memref<2x7x4x64xf32, #tpu.memory_space<vmem>>, vector<1x1x2x64xf32>
      %238 = vector.shape_cast %237 : vector<1x1x2x64xf32> to vector<2x64xf32>
      %c23 = arith.constant 23 : index
      %c0_199 = arith.constant 0 : index
      %c0_200 = arith.constant 0 : index
      %239 = vector.load %arg7[%c23, %c0_199, %c0_200] : memref<25x64x256xf32, #tpu.memory_space<vmem>>, vector<1x64x256xf32>
      %240 = vector.shape_cast %239 : vector<1x64x256xf32> to vector<64x256xf32>
      %cst_201 = arith.constant dense<0.000000e+00> : vector<2x256xf32>
      %241 = tpu.matmul %238, %240, %cst_201 {dimension_numbers = #tpu.dot_dimension_numbers<[1], [0], [0], [1], [0, 0, 1, 1], [], []>} : vector<2x64xf32>, vector<64x256xf32>, vector<2x256xf32> -> vector<2x256xf32>
      %242 = arith.addf %235, %241 : vector<2x256xf32>
      %c0_202 = arith.constant 0 : index
      %243 = arith.index_cast %214 : i32 to index
      %c2_203 = arith.constant 2 : index
      %c0_204 = arith.constant 0 : index
      %244 = vector.load %arg20[%c0_202, %243, %c2_203, %c0_204] : memref<2x7x4x64xf32, #tpu.memory_space<vmem>>, vector<1x1x2x64xf32>
      %245 = vector.shape_cast %244 : vector<1x1x2x64xf32> to vector<2x64xf32>
      %c24 = arith.constant 24 : index
      %c0_205 = arith.constant 0 : index
      %c0_206 = arith.constant 0 : index
      %246 = vector.load %arg7[%c24, %c0_205, %c0_206] : memref<25x64x256xf32, #tpu.memory_space<vmem>>, vector<1x64x256xf32>
      %247 = vector.shape_cast %246 : vector<1x64x256xf32> to vector<64x256xf32>
      %cst_207 = arith.constant dense<0.000000e+00> : vector<2x256xf32>
      %248 = tpu.matmul %245, %247, %cst_207 {dimension_numbers = #tpu.dot_dimension_numbers<[1], [0], [0], [1], [0, 0, 1, 1], [], []>} : vector<2x64xf32>, vector<64x256xf32>, vector<2x256xf32> -> vector<2x256xf32>
      %249 = arith.addf %242, %248 : vector<2x256xf32>
      %c0_208 = arith.constant 0 : index
      %c0_209 = arith.constant 0 : index
      %250 = vector.load %arg8[%c0_208, %c0_209] : memref<1x256xf32, #tpu.memory_space<vmem>>, vector<1x256xf32>
      %251 = vector.broadcast %250 : vector<1x256xf32> to vector<2x256xf32>
      %252 = arith.addf %249, %251 : vector<2x256xf32>
      %cst_210 = arith.constant 0.000000e+00 : f32
      %253 = vector.broadcast %cst_210 : f32 to vector<2x256xf32>
      %254 = arith.maximumf %252, %253 : vector<2x256xf32>
      %c0_211 = arith.constant 0 : index
      %c0_212 = arith.constant 0 : index
      %255 = vector.load %arg21[%c0_211, %c0_212] : memref<1x256xf32, #tpu.memory_space<vmem>>, vector<1x256xf32>
      %cst_213 = arith.constant dense<0.000000e+00> : vector<256xf32>
      %256 = vector.multi_reduction <add>, %254, %cst_213 [0] : vector<2x256xf32> to vector<256xf32>
      %257 = vector.shape_cast %256 : vector<256xf32> to vector<1x256xf32>
      %258 = arith.addf %255, %257 : vector<1x256xf32>
      %c0_214 = arith.constant 0 : index
      %c0_215 = arith.constant 0 : index
      %259 = vector.load %arg21[%c0_214, %c0_215] : memref<1x256xf32, #tpu.memory_space<vmem>>, vector<1x256xf32>
      tpu.vector_store %arg21[%c0_214, %c0_215], %258 {strides = array<i32>} : memref<1x256xf32, #tpu.memory_space<vmem>>, vector<1x256xf32>,
    }
    %c2_i32_13 = arith.constant 2 : i32
    %c0_14 = arith.constant 0 : index
    %c0_15 = arith.constant 0 : index
    %33 = vector.load %arg21[%c0_14, %c0_15] : memref<1x256xf32, #tpu.memory_space<vmem>>, vector<1x256xf32>
    %cst_16 = arith.constant 2.500000e-01 : f32
    %34 = vector.broadcast %cst_16 : f32 to vector<1x256xf32>
    %35 = arith.mulf %33, %34 : vector<1x256xf32>
    %c0_17 = arith.constant 0 : index
    %c0_18 = arith.constant 0 : index
    %c0_19 = arith.constant 0 : index
    %36 = vector.load %arg2[%c0_17, %c0_18, %c0_19] : memref<1x1x5xf32, #tpu.memory_space<vmem>>, vector<1x1x5xf32>
    %37 = vector.shape_cast %36 : vector<1x1x5xf32> to vector<1x5xf32>
    %c0_20 = arith.constant 0 : index
    %c0_21 = arith.constant 0 : index
    %38 = vector.load %arg9[%c0_20, %c0_21] : memref<5x32xf32, #tpu.memory_space<vmem>>, vector<5x32xf32>
    %cst_22 = arith.constant dense<0.000000e+00> : vector<1x32xf32>
    %39 = tpu.matmul %37, %38, %cst_22 {dimension_numbers = #tpu.dot_dimension_numbers<[1], [0], [0], [1], [0, 0, 1, 1], [], []>} : vector<1x5xf32>, vector<5x32xf32>, vector<1x32xf32> -> vector<1x32xf32>
    %c0_23 = arith.constant 0 : index
    %c0_24 = arith.constant 0 : index
    %40 = vector.load %arg10[%c0_23, %c0_24] : memref<1x32xf32, #tpu.memory_space<vmem>>, vector<1x32xf32>
    %41 = arith.addf %39, %40 : vector<1x32xf32>
    %cst_25 = arith.constant 0.000000e+00 : f32
    %42 = vector.broadcast %cst_25 : f32 to vector<1x32xf32>
    %43 = arith.maximumf %41, %42 : vector<1x32xf32>
    %c0_26 = arith.constant 0 : index
    %c0_27 = arith.constant 0 : index
    %44 = vector.load %arg11[%c0_26, %c0_27] : memref<256x128xf32, #tpu.memory_space<vmem>>, vector<256x128xf32>
    %cst_28 = arith.constant dense<0.000000e+00> : vector<1x128xf32>
    %45 = tpu.matmul %35, %44, %cst_28 {dimension_numbers = #tpu.dot_dimension_numbers<[1], [0], [0], [1], [0, 0, 1, 1], [], []>} : vector<1x256xf32>, vector<256x128xf32>, vector<1x128xf32> -> vector<1x128xf32>
    %c0_29 = arith.constant 0 : index
    %c0_30 = arith.constant 0 : index
    %46 = vector.load %arg12[%c0_29, %c0_30] : memref<32x128xf32, #tpu.memory_space<vmem>>, vector<32x128xf32>
    %cst_31 = arith.constant dense<0.000000e+00> : vector<1x128xf32>
    %47 = tpu.matmul %43, %46, %cst_31 {dimension_numbers = #tpu.dot_dimension_numbers<[1], [0], [0], [1], [0, 0, 1, 1], [], []>} : vector<1x32xf32>, vector<32x128xf32>, vector<1x128xf32> -> vector<1x128xf32>
    %48 = arith.addf %45, %47 : vector<1x128xf32>
    %c0_32 = arith.constant 0 : index
    %c0_33 = arith.constant 0 : index
    %49 = vector.load %arg13[%c0_32, %c0_33] : memref<1x128xf32, #tpu.memory_space<vmem>>, vector<1x128xf32>
    %50 = arith.addf %48, %49 : vector<1x128xf32>
    %cst_34 = arith.constant 0.000000e+00 : f32
    %51 = vector.broadcast %cst_34 : f32 to vector<1x128xf32>
    %52 = arith.maximumf %50, %51 : vector<1x128xf32>
    %c0_35 = arith.constant 0 : index
    %c0_36 = arith.constant 0 : index
    %53 = vector.load %arg14[%c0_35, %c0_36] : memref<128x32xf32, #tpu.memory_space<vmem>>, vector<128x32xf32>
    %cst_37 = arith.constant dense<0.000000e+00> : vector<1x32xf32>
    %54 = tpu.matmul %52, %53, %cst_37 {dimension_numbers = #tpu.dot_dimension_numbers<[1], [0], [0], [1], [0, 0, 1, 1], [], []>} : vector<1x128xf32>, vector<128x32xf32>, vector<1x32xf32> -> vector<1x32xf32>
    %c0_38 = arith.constant 0 : index
    %c0_39 = arith.constant 0 : index
    %55 = vector.load %arg15[%c0_38, %c0_39] : memref<1x32xf32, #tpu.memory_space<vmem>>, vector<1x32xf32>
    %56 = arith.addf %54, %55 : vector<1x32xf32>
    %cst_40 = arith.constant 0.000000e+00 : f32
    %57 = vector.broadcast %cst_40 : f32 to vector<1x32xf32>
    %58 = arith.maximumf %56, %57 : vector<1x32xf32>
    %c0_41 = arith.constant 0 : index
    %c0_42 = arith.constant 0 : index
    %59 = vector.load %arg16[%c0_41, %c0_42] : memref<32x3xf32, #tpu.memory_space<vmem>>, vector<32x3xf32>
    %cst_43 = arith.constant dense<0.000000e+00> : vector<1x3xf32>
    %60 = tpu.matmul %58, %59, %cst_43 {dimension_numbers = #tpu.dot_dimension_numbers<[1], [0], [0], [1], [0, 0, 1, 1], [], []>} : vector<1x32xf32>, vector<32x3xf32>, vector<1x3xf32> -> vector<1x3xf32>
    %c0_44 = arith.constant 0 : index
    %c0_45 = arith.constant 0 : index
    %61 = vector.load %arg17[%c0_44, %c0_45] : memref<1x3xf32, #tpu.memory_space<vmem>>, vector<1x3xf32>
    %62 = arith.addf %60, %61 : vector<1x3xf32>
    %c0_46 = arith.constant 0 : index
    %c0_47 = arith.constant 0 : index
    %c0_48 = arith.constant 0 : index
    %63 = vector.load %arg18[%c0_46, %c0_47, %c0_48] : memref<1x1x3xf32, #tpu.memory_space<vmem>>, vector<1x1x3xf32>
    %64 = vector.shape_cast %63 : vector<1x1x3xf32> to vector<1x3xf32>
    %65 = vector.shape_cast %62 : vector<1x3xf32> to vector<1x1x3xf32>
    tpu.vector_store %arg18[%c0_46, %c0_47, %c0_48], %65 {strides = array<i32>} : memref<1x1x3xf32, #tpu.memory_space<vmem>>, vector<1x1x3xf32>,
    return
  }
  func.func @transform_0(%arg0: i32) -> (i32, i32, i32, i32, i32) {
    %c0_i32 = arith.constant 0 : i32
    %c0_i32_0 = arith.constant 0 : i32
    %c0_i32_1 = arith.constant 0 : i32
    %c0_i32_2 = arith.constant 0 : i32
    %c0_i32_3 = arith.constant 0 : i32
    return %arg0, %c0_i32, %c0_i32_0, %c0_i32_1, %c0_i32_2 : i32, i32, i32, i32, i32
  }
  func.func @transform_1(%arg0: i32) -> (i32, i32, i32) {
    %c0_i32 = arith.constant 0 : i32
    %c0_i32_0 = arith.constant 0 : i32
    %c0_i32_1 = arith.constant 0 : i32
    return %arg0, %c0_i32, %c0_i32_0 : i32, i32, i32
  }
  func.func @transform_2(%arg0: i32) -> (i32, i32, i32) {
    %c0_i32 = arith.constant 0 : i32
    %c0_i32_0 = arith.constant 0 : i32
    %c0_i32_1 = arith.constant 0 : i32
    %c0_i32_2 = arith.constant 0 : i32
    return %c0_i32, %c0_i32_0, %c0_i32_1 : i32, i32, i32
  }
  func.func @transform_3(%arg0: i32) -> (i32, i32) {
    %c0_i32 = arith.constant 0 : i32
    %c0_i32_0 = arith.constant 0 : i32
    %c0_i32_1 = arith.constant 0 : i32
    return %c0_i32, %c0_i32_0 : i32, i32
  }
  func.func @transform_4(%arg0: i32) -> (i32, i32, i32) {
    %c0_i32 = arith.constant 0 : i32
    %c0_i32_0 = arith.constant 0 : i32
    %c0_i32_1 = arith.constant 0 : i32
    %c0_i32_2 = arith.constant 0 : i32
    return %c0_i32, %c0_i32_0, %c0_i32_1 : i32, i32, i32
  }
  func.func @transform_5(%arg0: i32) -> (i32, i32) {
    %c0_i32 = arith.constant 0 : i32
    %c0_i32_0 = arith.constant 0 : i32
    %c0_i32_1 = arith.constant 0 : i32
    return %c0_i32, %c0_i32_0 : i32, i32
  }
  func.func @transform_6(%arg0: i32) -> (i32, i32, i32) {
    %c0_i32 = arith.constant 0 : i32
    %c0_i32_0 = arith.constant 0 : i32
    %c0_i32_1 = arith.constant 0 : i32
    %c0_i32_2 = arith.constant 0 : i32
    return %c0_i32, %c0_i32_0, %c0_i32_1 : i32, i32, i32
  }
  func.func @transform_7(%arg0: i32) -> (i32, i32) {
    %c0_i32 = arith.constant 0 : i32
    %c0_i32_0 = arith.constant 0 : i32
    %c0_i32_1 = arith.constant 0 : i32
    return %c0_i32, %c0_i32_0 : i32, i32
  }
  func.func @transform_8(%arg0: i32) -> (i32, i32) {
    %c0_i32 = arith.constant 0 : i32
    %c0_i32_0 = arith.constant 0 : i32
    %c0_i32_1 = arith.constant 0 : i32
    return %c0_i32, %c0_i32_0 : i32, i32
  }
  func.func @transform_9(%arg0: i32) -> (i32, i32) {
    %c0_i32 = arith.constant 0 : i32
    %c0_i32_0 = arith.constant 0 : i32
    %c0_i32_1 = arith.constant 0 : i32
    return %c0_i32, %c0_i32_0 : i32, i32
  }
  func.func @transform_10(%arg0: i32) -> (i32, i32) {
    %c0_i32 = arith.constant 0 : i32
    %c0_i32_0 = arith.constant 0 : i32
    %c0_i32_1 = arith.constant 0 : i32
    return %c0_i32, %c0_i32_0 : i32, i32
  }
  func.func @transform_11(%arg0: i32) -> (i32, i32) {
    %c0_i32 = arith.constant 0 : i32
    %c0_i32_0 = arith.constant 0 : i32
    %c0_i32_1 = arith.constant 0 : i32
    return %c0_i32, %c0_i32_0 : i32, i32
  }
  func.func @transform_12(%arg0: i32) -> (i32, i32) {
    %c0_i32 = arith.constant 0 : i32
    %c0_i32_0 = arith.constant 0 : i32
    %c0_i32_1 = arith.constant 0 : i32
    return %c0_i32, %c0_i32_0 : i32, i32
  }
  func.func @transform_13(%arg0: i32) -> (i32, i32) {
    %c0_i32 = arith.constant 0 : i32
    %c0_i32_0 = arith.constant 0 : i32
    %c0_i32_1 = arith.constant 0 : i32
    return %c0_i32, %c0_i32_0 : i32, i32
  }
  func.func @transform_14(%arg0: i32) -> (i32, i32) {
    %c0_i32 = arith.constant 0 : i32
    %c0_i32_0 = arith.constant 0 : i32
    %c0_i32_1 = arith.constant 0 : i32
    return %c0_i32, %c0_i32_0 : i32, i32
  }
  func.func @transform_15(%arg0: i32) -> (i32, i32) {
    %c0_i32 = arith.constant 0 : i32
    %c0_i32_0 = arith.constant 0 : i32
    %c0_i32_1 = arith.constant 0 : i32
    return %c0_i32, %c0_i32_0 : i32, i32
  }
  func.func @transform_16(%arg0: i32) -> (i32, i32) {
    %c0_i32 = arith.constant 0 : i32
    %c0_i32_0 = arith.constant 0 : i32
    %c0_i32_1 = arith.constant 0 : i32
    return %c0_i32, %c0_i32_0 : i32, i32
  }
  func.func @transform_17(%arg0: i32) -> (i32, i32, i32) {
    %c0_i32 = arith.constant 0 : i32
    %c0_i32_0 = arith.constant 0 : i32
    %c0_i32_1 = arith.constant 0 : i32
    return %arg0, %c0_i32, %c0_i32_0 : i32, i32, i32
  }
}

</mosaic_0001>

<llo_original>
// kernel: value_network_forward.1
$region0: #{value_network_forward.1}
  #allocation0 [shape = 'u32[]', space=smem, size = 0x4, offset = 0x4, fixed_abs, tag = 'smem constant byte address 0x4 - core index']
  #allocation1 [shape = 'u32[144,128]{1,0:T(1,128)}', space=vmem, size = 0x12000, scoped, tag = 'internal scratch']
  #allocation2 [shape = 'f32[2,17,9,16]{3,2,1,0:T(8,128)}', space=vmem, size = 0x44000, scoped, tag = 'scratch operand']
  #allocation3 [shape = 'f32[2,7,4,64]{3,2,1,0:T(4,128)}', space=vmem, size = 0x7000, scoped, tag = 'scratch operand']
  #allocation4 [shape = 'f32[1,256]{1,0:T(1,128)}', space=vmem, size = 0x400, scoped, tag = 'scratch operand']
  %s0 = inlined_call_operand.vmem [shape: f32[2,2,37,19,4], index: 0, kind: input, shape index: {}]
  %s1 = inlined_call_operand.vmem [shape: f32[2,1,5], index: 1, kind: input, shape index: {}]
  %s2 = inlined_call_operand.vmem [shape: f32[25,4,16], index: 2, kind: input, shape index: {}]
  %s3 = inlined_call_operand.vmem [shape: f32[1,16], index: 3, kind: input, shape index: {}]
  %s4 = inlined_call_operand.vmem [shape: f32[25,16,64], index: 4, kind: input, shape index: {}]
  %s5 = inlined_call_operand.vmem [shape: f32[1,64], index: 5, kind: input, shape index: {}]
  %s6 = inlined_call_operand.vmem [shape: f32[25,64,256], index: 6, kind: input, shape index: {}]
  %s7 = inlined_call_operand.vmem [shape: f32[1,256], index: 7, kind: input, shape index: {}]
  %s8 = inlined_call_operand.vmem [shape: f32[5,32], index: 8, kind: input, shape index: {}]
  %s9 = inlined_call_operand.vmem [shape: f32[1,32], index: 9, kind: input, shape index: {}]
  %s10 = inlined_call_operand.vmem [shape: f32[256,128], index: 10, kind: input, shape index: {}]
  %s11 = inlined_call_operand.vmem [shape: f32[32,128], index: 11, kind: input, shape index: {}]
  %s12 = inlined_call_operand.vmem [shape: f32[1,128], index: 12, kind: input, shape index: {}]
  %s13 = inlined_call_operand.vmem [shape: f32[128,32], index: 13, kind: input, shape index: {}]
  %s14 = inlined_call_operand.vmem [shape: f32[1,32], index: 14, kind: input, shape index: {}]
  %s15 = inlined_call_operand.vmem [shape: f32[32,3], index: 15, kind: input, shape index: {}]
  %s16 = inlined_call_operand.vmem [shape: f32[1,3], index: 16, kind: input, shape index: {}]
  %s17 = inlined_call_operand.hbm [shape: f32[2,1,3], index: 17, kind: output, shape index: {}]
  %s18 = sld [smem:[#allocation0]]
  $region122: #{value_network_forward.1} parent=0
    _
  %s20 = ssub.s32 1, %s18
  %s21 = scalar_select 0, %s20, %s18
  $region1: #{value_network_forward.1} parent=0
    #allocation5 [shape = 'u8[1024]{0}', space=vmem, size = 0x400, scoped, tag = 'output window, operand 0']
    #allocation6 [shape = 's32[2]{0}', space=sflag, size = 0x8, scoped, tag = 'scoped memory for value_network_forward.1']
    %22 = vsyncpa [#allocation6], 0
    %s23 = scalar_lea.sflag [#allocation6], 1
    %24 = vsyncpa %s23, 0
    loop: start=0, step=1, limit=4
    $region2: #{value_network_forward.1} parent=1 // loop_pre_header
      _
    $region3: #{value_network_forward.1} parent=1 // loop_header
      %s26 = sphi 0, %s30
      %p27 = scmp.ge.s32.totalorder %s26, 4
      %s36 = sphi 0, %s38
      %s39 = sphi 0, %s36
      %s40 = sphi 0, %s39
      %s56 = sphi 0, %s40
      %s62 = sphi 0, %s64
      %s65 = sphi 0, %s62
      %s66 = sphi 0, %s65
      %s82 = sphi 0, %s66
      %s86 = sphi 0, %s86
      %s88 = sphi 0, %s86
      %s89 = sphi 0, %s88
      %s103 = sphi 0, %s89
      %s107 = sphi 0, %s107
      %s109 = sphi 0, %s107
      %s110 = sphi 0, %s109
      %s124 = sphi 0, %s110
      %s128 = sphi 0, %s128
      %s130 = sphi 0, %s128
      %s131 = sphi 0, %s130
      %s145 = sphi 0, %s131
      %s149 = sphi 0, %s149
      %s151 = sphi 0, %s149
      %s152 = sphi 0, %s151
      %s166 = sphi 0, %s152
      %s170 = sphi 0, %s170
      %s172 = sphi 0, %s170
      %s173 = sphi 0, %s172
      %s187 = sphi 0, %s173
      %s191 = sphi 0, %s191
      %s193 = sphi 0, %s191
      %s194 = sphi 0, %s193
      %s208 = sphi 0, %s194
      %s212 = sphi 0, %s212
      %s214 = sphi 0, %s212
      %s215 = sphi 0, %s214
      %s229 = sphi 0, %s215
      %s233 = sphi 0, %s233
      %s235 = sphi 0, %s233
      %s236 = sphi 0, %s235
      %s250 = sphi 0, %s236
      %s254 = sphi 0, %s254
      %s256 = sphi 0, %s254
      %s257 = sphi 0, %s256
      %s271 = sphi 0, %s257
      %s275 = sphi 0, %s275
      %s277 = sphi 0, %s275
      %s278 = sphi 0, %s277
      %s292 = sphi 0, %s278
      %s296 = sphi 0, %s296
      %s298 = sphi 0, %s296
      %s299 = sphi 0, %s298
      %s313 = sphi 0, %s299
      %s317 = sphi 0, %s317
      %s319 = sphi 0, %s317
      %s320 = sphi 0, %s319
      %s334 = sphi 0, %s320
      %s338 = sphi 0, %s338
      %s340 = sphi 0, %s338
      %s341 = sphi 0, %s340
      %s355 = sphi 0, %s341
      %s359 = sphi 0, %s359
      %s361 = sphi 0, %s359
      %s362 = sphi 0, %s361
      %s376 = sphi 0, %s362
      %s380 = sphi 0, %s380
      %s382 = sphi 0, %s380
      %s383 = sphi 0, %s382
      %s397 = sphi 0, %s383
      %s403 = sphi 0, %s405
      %s406 = sphi 0, %s403
      %s407 = sphi 0, %s406
      %s423 = sphi 0, %s407
    $region4: #{value_network_forward.1} parent=1 // loop_header_branch
      %29 = sbr.rel (%p27) target = $region8
    $region5: #{value_network_forward.1} parent=1 // loop_body
      %s31 = ssub.s32 %s26, 1
      %s32 = ssub.s32 %s26, 2
      %s33 = sadd.s32 %s26, 1
      %s34 = ssub.s32 %s26, %s33
      %p35 = scmp.eq.s32.totalorder %s34, 0
      %s37 = sadd.s32 %s36, 1
      %s38 = scalar_select %p35, %s36, %s37
      %p41 = pneg %p35
      %p42 = scmp.eq.s32.totalorder %s26, 1
      %p43 = por %p41, %p42
      %p44 = scmp.ne.s32.totalorder %s36, %s39
      %p45 = scmp.eq.s32.totalorder %s26, 0
      %p46 = por %p44, %p45
      %p47 = scmp.ne.s32.totalorder %s36, %s39
      %p48 = scmp.eq.s32.totalorder %s31, 1
      %p49 = por %p47, %p48
      %p50 = scmp.ne.s32.totalorder %s39, %s40
      %p51 = scmp.eq.s32.totalorder %s31, 0
      %p52 = por %p50, %p51
      %p53 = scmp.ne.s32.totalorder %s39, %s40
      %p54 = scmp.eq.s32.totalorder %s32, 1
      %p55 = por %p53, %p54
      %p57 = scmp.ne.s32.totalorder %s40, %s56
      %p58 = scmp.eq.s32.totalorder %s32, 0
      %p59 = por %p57, %p58
      %s60 = ssub.s32 %s26, %s33
      %p61 = scmp.eq.s32.totalorder %s60, 0
      %s63 = sadd.s32 %s62, 1
      %s64 = scalar_select %p61, %s62, %s63
      %p67 = pneg %p61
      %p68 = scmp.eq.s32.totalorder %s26, 1
      %p69 = por %p67, %p68
      %p70 = scmp.ne.s32.totalorder %s62, %s65
      %p71 = scmp.eq.s32.totalorder %s26, 0
      %p72 = por %p70, %p71
      %p73 = scmp.ne.s32.totalorder %s62, %s65
      %p74 = scmp.eq.s32.totalorder %s31, 1
      %p75 = por %p73, %p74
      %p76 = scmp.ne.s32.totalorder %s65, %s66
      %p77 = scmp.eq.s32.totalorder %s31, 0
      %p78 = por %p76, %p77
      %p79 = scmp.ne.s32.totalorder %s65, %s66
      %p80 = scmp.eq.s32.totalorder %s32, 1
      %p81 = por %p79, %p80
      %p83 = scmp.ne.s32.totalorder %s66, %s82
      %p84 = scmp.eq.s32.totalorder %s32, 0
      %p85 = por %p83, %p84
      %s87 = sadd.s32 %s86, 1
      %p90 = scmp.eq.s32.totalorder %s26, 1
      %p91 = scmp.ne.s32.totalorder %s86, %s88
      %p92 = scmp.eq.s32.totalorder %s26, 0
      %p93 = por %p91, %p92
      %p94 = scmp.ne.s32.totalorder %s86, %s88
      %p95 = scmp.eq.s32.totalorder %s31, 1
      %p96 = por %p94, %p95
      %p97 = scmp.ne.s32.totalorder %s88, %s89
      %p98 = scmp.eq.s32.totalorder %s31, 0
      %p99 = por %p97, %p98
      %p100 = scmp.ne.s32.totalorder %s88, %s89
      %p101 = scmp.eq.s32.totalorder %s32, 1
      %p102 = por %p100, %p101
      %p104 = scmp.ne.s32.totalorder %s89, %s103
      %p105 = scmp.eq.s32.totalorder %s32, 0
      %p106 = por %p104, %p105
      %s108 = sadd.s32 %s107, 1
      %p111 = scmp.eq.s32.totalorder %s26, 1
      %p112 = scmp.ne.s32.totalorder %s107, %s109
      %p113 = scmp.eq.s32.totalorder %s26, 0
      %p114 = por %p112, %p113
      %p115 = scmp.ne.s32.totalorder %s107, %s109
      %p116 = scmp.eq.s32.totalorder %s31, 1
      %p117 = por %p115, %p116
      %p118 = scmp.ne.s32.totalorder %s109, %s110
      %p119 = scmp.eq.s32.totalorder %s31, 0
      %p120 = por %p118, %p119
      %p121 = scmp.ne.s32.totalorder %s109, %s110
      %p122 = scmp.eq.s32.totalorder %s32, 1
      %p123 = por %p121, %p122
      %p125 = scmp.ne.s32.totalorder %s110, %s124
      %p126 = scmp.eq.s32.totalorder %s32, 0
      %p127 = por %p125, %p126
      %s129 = sadd.s32 %s128, 1
      %p132 = scmp.eq.s32.totalorder %s26, 1
      %p133 = scmp.ne.s32.totalorder %s128, %s130
      %p134 = scmp.eq.s32.totalorder %s26, 0
      %p135 = por %p133, %p134
      %p136 = scmp.ne.s32.totalorder %s128, %s130
      %p137 = scmp.eq.s32.totalorder %s31, 1
      %p138 = por %p136, %p137
      %p139 = scmp.ne.s32.totalorder %s130, %s131
      %p140 = scmp.eq.s32.totalorder %s31, 0
      %p141 = por %p139, %p140
      %p142 = scmp.ne.s32.totalorder %s130, %s131
      %p143 = scmp.eq.s32.totalorder %s32, 1
      %p144 = por %p142, %p143
      %p146 = scmp.ne.s32.totalorder %s131, %s145
      %p147 = scmp.eq.s32.totalorder %s32, 0
      %p148 = por %p146, %p147
      %s150 = sadd.s32 %s149, 1
      %p153 = scmp.eq.s32.totalorder %s26, 1
      %p154 = scmp.ne.s32.totalorder %s149, %s151
      %p155 = scmp.eq.s32.totalorder %s26, 0
      %p156 = por %p154, %p155
      %p157 = scmp.ne.s32.totalorder %s149, %s151
      %p158 = scmp.eq.s32.totalorder %s31, 1
      %p159 = por %p157, %p158
      %p160 = scmp.ne.s32.totalorder %s151, %s152
      %p161 = scmp.eq.s32.totalorder %s31, 0
      %p162 = por %p160, %p161
      %p163 = scmp.ne.s32.totalorder %s151, %s152
      %p164 = scmp.eq.s32.totalorder %s32, 1
      %p165 = por %p163, %p164
      %p167 = scmp.ne.s32.totalorder %s152, %s166
      %p168 = scmp.eq.s32.totalorder %s32, 0
      %p169 = por %p167, %p168
      %s171 = sadd.s32 %s170, 1
      %p174 = scmp.eq.s32.totalorder %s26, 1
      %p175 = scmp.ne.s32.totalorder %s170, %s172
      %p176 = scmp.eq.s32.totalorder %s26, 0
      %p177 = por %p175, %p176
      %p178 = scmp.ne.s32.totalorder %s170, %s172
      %p179 = scmp.eq.s32.totalorder %s31, 1
      %p180 = por %p178, %p179
      %p181 = scmp.ne.s32.totalorder %s172, %s173
      %p182 = scmp.eq.s32.totalorder %s31, 0
      %p183 = por %p181, %p182
      %p184 = scmp.ne.s32.totalorder %s172, %s173
      %p185 = scmp.eq.s32.totalorder %s32, 1
      %p186 = por %p184, %p185
      %p188 = scmp.ne.s32.totalorder %s173, %s187
      %p189 = scmp.eq.s32.totalorder %s32, 0
      %p190 = por %p188, %p189
      %s192 = sadd.s32 %s191, 1
      %p195 = scmp.eq.s32.totalorder %s26, 1
      %p196 = scmp.ne.s32.totalorder %s191, %s193
      %p197 = scmp.eq.s32.totalorder %s26, 0
      %p198 = por %p196, %p197
      %p199 = scmp.ne.s32.totalorder %s191, %s193
      %p200 = scmp.eq.s32.totalorder %s31, 1
      %p201 = por %p199, %p200
      %p202 = scmp.ne.s32.totalorder %s193, %s194
      %p203 = scmp.eq.s32.totalorder %s31, 0
      %p204 = por %p202, %p203
      %p205 = scmp.ne.s32.totalorder %s193, %s194
      %p206 = scmp.eq.s32.totalorder %s32, 1
      %p207 = por %p205, %p206
      %p209 = scmp.ne.s32.totalorder %s194, %s208
      %p210 = scmp.eq.s32.totalorder %s32, 0
      %p211 = por %p209, %p210
      %s213 = sadd.s32 %s212, 1
      %p216 = scmp.eq.s32.totalorder %s26, 1
      %p217 = scmp.ne.s32.totalorder %s212, %s214
      %p218 = scmp.eq.s32.totalorder %s26, 0
      %p219 = por %p217, %p218
      %p220 = scmp.ne.s32.totalorder %s212, %s214
      %p221 = scmp.eq.s32.totalorder %s31, 1
      %p222 = por %p220, %p221
      %p223 = scmp.ne.s32.totalorder %s214, %s215
      %p224 = scmp.eq.s32.totalorder %s31, 0
      %p225 = por %p223, %p224
      %p226 = scmp.ne.s32.totalorder %s214, %s215
      %p227 = scmp.eq.s32.totalorder %s32, 1
      %p228 = por %p226, %p227
      %p230 = scmp.ne.s32.totalorder %s215, %s229
      %p231 = scmp.eq.s32.totalorder %s32, 0
      %p232 = por %p230, %p231
      %s234 = sadd.s32 %s233, 1
      %p237 = scmp.eq.s32.totalorder %s26, 1
      %p238 = scmp.ne.s32.totalorder %s233, %s235
      %p239 = scmp.eq.s32.totalorder %s26, 0
      %p240 = por %p238, %p239
      %p241 = scmp.ne.s32.totalorder %s233, %s235
      %p242 = scmp.eq.s32.totalorder %s31, 1
      %p243 = por %p241, %p242
      %p244 = scmp.ne.s32.totalorder %s235, %s236
      %p245 = scmp.eq.s32.totalorder %s31, 0
      %p246 = por %p244, %p245
      %p247 = scmp.ne.s32.totalorder %s235, %s236
      %p248 = scmp.eq.s32.totalorder %s32, 1
      %p249 = por %p247, %p248
      %p251 = scmp.ne.s32.totalorder %s236, %s250
      %p252 = scmp.eq.s32.totalorder %s32, 0
      %p253 = por %p251, %p252
      %s255 = sadd.s32 %s254, 1
      %p258 = scmp.eq.s32.totalorder %s26, 1
      %p259 = scmp.ne.s32.totalorder %s254, %s256
      %p260 = scmp.eq.s32.totalorder %s26, 0
      %p261 = por %p259, %p260
      %p262 = scmp.ne.s32.totalorder %s254, %s256
      %p263 = scmp.eq.s32.totalorder %s31, 1
      %p264 = por %p262, %p263
      %p265 = scmp.ne.s32.totalorder %s256, %s257
      %p266 = scmp.eq.s32.totalorder %s31, 0
      %p267 = por %p265, %p266
      %p268 = scmp.ne.s32.totalorder %s256, %s257
      %p269 = scmp.eq.s32.totalorder %s32, 1
      %p270 = por %p268, %p269
      %p272 = scmp.ne.s32.totalorder %s257, %s271
      %p273 = scmp.eq.s32.totalorder %s32, 0
      %p274 = por %p272, %p273
      %s276 = sadd.s32 %s275, 1
      %p279 = scmp.eq.s32.totalorder %s26, 1
      %p280 = scmp.ne.s32.totalorder %s275, %s277
      %p281 = scmp.eq.s32.totalorder %s26, 0
      %p282 = por %p280, %p281
      %p283 = scmp.ne.s32.totalorder %s275, %s277
      %p284 = scmp.eq.s32.totalorder %s31, 1
      %p285 = por %p283, %p284
      %p286 = scmp.ne.s32.totalorder %s277, %s278
      %p287 = scmp.eq.s32.totalorder %s31, 0
      %p288 = por %p286, %p287
      %p289 = scmp.ne.s32.totalorder %s277, %s278
      %p290 = scmp.eq.s32.totalorder %s32, 1
      %p291 = por %p289, %p290
      %p293 = scmp.ne.s32.totalorder %s278, %s292
      %p294 = scmp.eq.s32.totalorder %s32, 0
      %p295 = por %p293, %p294
      %s297 = sadd.s32 %s296, 1
      %p300 = scmp.eq.s32.totalorder %s26, 1
      %p301 = scmp.ne.s32.totalorder %s296, %s298
      %p302 = scmp.eq.s32.totalorder %s26, 0
      %p303 = por %p301, %p302
      %p304 = scmp.ne.s32.totalorder %s296, %s298
      %p305 = scmp.eq.s32.totalorder %s31, 1
      %p306 = por %p304, %p305
      %p307 = scmp.ne.s32.totalorder %s298, %s299
      %p308 = scmp.eq.s32.totalorder %s31, 0
      %p309 = por %p307, %p308
      %p310 = scmp.ne.s32.totalorder %s298, %s299
      %p311 = scmp.eq.s32.totalorder %s32, 1
      %p312 = por %p310, %p311
      %p314 = scmp.ne.s32.totalorder %s299, %s313
      %p315 = scmp.eq.s32.totalorder %s32, 0
      %p316 = por %p314, %p315
      %s318 = sadd.s32 %s317, 1
      %p321 = scmp.eq.s32.totalorder %s26, 1
      %p322 = scmp.ne.s32.totalorder %s317, %s319
      %p323 = scmp.eq.s32.totalorder %s26, 0
      %p324 = por %p322, %p323
      %p325 = scmp.ne.s32.totalorder %s317, %s319
      %p326 = scmp.eq.s32.totalorder %s31, 1
      %p327 = por %p325, %p326
      %p328 = scmp.ne.s32.totalorder %s319, %s320
      %p329 = scmp.eq.s32.totalorder %s31, 0
      %p330 = por %p328, %p329
      %p331 = scmp.ne.s32.totalorder %s319, %s320
      %p332 = scmp.eq.s32.totalorder %s32, 1
      %p333 = por %p331, %p332
      %p335 = scmp.ne.s32.totalorder %s320, %s334
      %p336 = scmp.eq.s32.totalorder %s32, 0
      %p337 = por %p335, %p336
      %s339 = sadd.s32 %s338, 1
      %p342 = scmp.eq.s32.totalorder %s26, 1
      %p343 = scmp.ne.s32.totalorder %s338, %s340
      %p344 = scmp.eq.s32.totalorder %s26, 0
      %p345 = por %p343, %p344
      %p346 = scmp.ne.s32.totalorder %s338, %s340
      %p347 = scmp.eq.s32.totalorder %s31, 1
      %p348 = por %p346, %p347
      %p349 = scmp.ne.s32.totalorder %s340, %s341
      %p350 = scmp.eq.s32.totalorder %s31, 0
      %p351 = por %p349, %p350
      %p352 = scmp.ne.s32.totalorder %s340, %s341
      %p353 = scmp.eq.s32.totalorder %s32, 1
      %p354 = por %p352, %p353
      %p356 = scmp.ne.s32.totalorder %s341, %s355
      %p357 = scmp.eq.s32.totalorder %s32, 0
      %p358 = por %p356, %p357
      %s360 = sadd.s32 %s359, 1
      %p363 = scmp.eq.s32.totalorder %s26, 1
      %p364 = scmp.ne.s32.totalorder %s359, %s361
      %p365 = scmp.eq.s32.totalorder %s26, 0
      %p366 = por %p364, %p365
      %p367 = scmp.ne.s32.totalorder %s359, %s361
      %p368 = scmp.eq.s32.totalorder %s31, 1
      %p369 = por %p367, %p368
      %p370 = scmp.ne.s32.totalorder %s361, %s362
      %p371 = scmp.eq.s32.totalorder %s31, 0
      %p372 = por %p370, %p371
      %p373 = scmp.ne.s32.totalorder %s361, %s362
      %p374 = scmp.eq.s32.totalorder %s32, 1
      %p375 = por %p373, %p374
      %p377 = scmp.ne.s32.totalorder %s362, %s376
      %p378 = scmp.eq.s32.totalorder %s32, 0
      %p379 = por %p377, %p378
      %s381 = sadd.s32 %s380, 1
      %p384 = scmp.eq.s32.totalorder %s26, 1
      %p385 = scmp.ne.s32.totalorder %s380, %s382
      %p386 = scmp.eq.s32.totalorder %s26, 0
      %p387 = por %p385, %p386
      %p388 = scmp.ne.s32.totalorder %s380, %s382
      %p389 = scmp.eq.s32.totalorder %s31, 1
      %p390 = por %p388, %p389
      %p391 = scmp.ne.s32.totalorder %s382, %s383
      %p392 = scmp.eq.s32.totalorder %s31, 0
      %p393 = por %p391, %p392
      %p394 = scmp.ne.s32.totalorder %s382, %s383
      %p395 = scmp.eq.s32.totalorder %s32, 1
      %p396 = por %p394, %p395
      %p398 = scmp.ne.s32.totalorder %s383, %s397
      %p399 = scmp.eq.s32.totalorder %s32, 0
      %p400 = por %p398, %p399
      %s401 = ssub.s32 %s26, %s33
      %p402 = scmp.eq.s32.totalorder %s401, 0
      %s404 = sadd.s32 %s403, 1
      %s405 = scalar_select %p402, %s403, %s404
      %p408 = pneg %p402
      %p409 = scmp.eq.s32.totalorder %s26, 1
      %p410 = por %p408, %p409
      %p411 = scmp.ne.s32.totalorder %s403, %s406
      %p412 = scmp.eq.s32.totalorder %s26, 0
      %p413 = por %p411, %p412
      %p414 = scmp.ne.s32.totalorder %s403, %s406
      %p415 = scmp.eq.s32.totalorder %s31, 1
      %p416 = por %p414, %p415
      %p417 = scmp.ne.s32.totalorder %s406, %s407
      %p418 = scmp.eq.s32.totalorder %s31, 0
      %p419 = por %p417, %p418
      %p420 = scmp.ne.s32.totalorder %s406, %s407
      %p421 = scmp.eq.s32.totalorder %s32, 1
      %p422 = por %p420, %p421
      %p424 = scmp.ne.s32.totalorder %s407, %s423
      %p425 = scmp.eq.s32.totalorder %s32, 0
      %p426 = por %p424, %p425
      %p427 = scmp.le.s32.totalorder 1, %s26
      %p428 = scmp.lt.s32.totalorder %s26, 3
      %p429 = pnand %p427, %p428
      %p430 = pneg %p429
      // Predicated region
      $region9: #{value_network_forward.1} parent=5 // pred_check
        _
      $region10: #{value_network_forward.1} parent=5 // pred_check_branch
        %432 = sbr.rel (%p429) target = $region12
      $region11: #{value_network_forward.1} parent=5 // pred_region
        %s433 = ssub.s32 %s26, 1
        // Predicated region
        $region13: #{value_network_forward.1} parent=11 // pred_check
          %p434 = pneg %p99
        $region14: #{value_network_forward.1} parent=11 // pred_check_branch
          %436 = sbr.rel (%p434) target = $region16
        $region15: #{value_network_forward.1} parent=11 // pred_region
          _
        $region16: #{value_network_forward.1} parent=11 // pred_fallthru
          _
        // Predicated region
        $region17: #{value_network_forward.1} parent=11 // pred_check
          %p437 = pneg %p120
        $region18: #{value_network_forward.1} parent=11 // pred_check_branch
          %439 = sbr.rel (%p437) target = $region20
        $region19: #{value_network_forward.1} parent=11 // pred_region
          _
        $region20: #{value_network_forward.1} parent=11 // pred_fallthru
          _
        // Predicated region
        $region21: #{value_network_forward.1} parent=11 // pred_check
          %p440 = pneg %p141
        $region22: #{value_network_forward.1} parent=11 // pred_check_branch
          %442 = sbr.rel (%p440) target = $region24
        $region23: #{value_network_forward.1} parent=11 // pred_region
          _
        $region24: #{value_network_forward.1} parent=11 // pred_fallthru
          _
        // Predicated region
        $region25: #{value_network_forward.1} parent=11 // pred_check
          %p443 = pneg %p162
        $region26: #{value_network_forward.1} parent=11 // pred_check_branch
          %445 = sbr.rel (%p443) target = $region28
        $region27: #{value_network_forward.1} parent=11 // pred_region
          _
        $region28: #{value_network_forward.1} parent=11 // pred_fallthru
          _
        // Predicated region
        $region29: #{value_network_forward.1} parent=11 // pred_check
          %p446 = pneg %p183
        $region30: #{value_network_forward.1} parent=11 // pred_check_branch
          %448 = sbr.rel (%p446) target = $region32
        $region31: #{value_network_forward.1} parent=11 // pred_region
          _
        $region32: #{value_network_forward.1} parent=11 // pred_fallthru
          _
        // Predicated region
        $region33: #{value_network_forward.1} parent=11 // pred_check
          %p449 = pneg %p204
        $region34: #{value_network_forward.1} parent=11 // pred_check_branch
          %451 = sbr.rel (%p449) target = $region36
        $region35: #{value_network_forward.1} parent=11 // pred_region
          _
        $region36: #{value_network_forward.1} parent=11 // pred_fallthru
          _
        // Predicated region
        $region37: #{value_network_forward.1} parent=11 // pred_check
          %p452 = pneg %p225
        $region38: #{value_network_forward.1} parent=11 // pred_check_branch
          %454 = sbr.rel (%p452) target = $region40
        $region39: #{value_network_forward.1} parent=11 // pred_region
          _
        $region40: #{value_network_forward.1} parent=11 // pred_fallthru
          _
        // Predicated region
        $region41: #{value_network_forward.1} parent=11 // pred_check
          %p455 = pneg %p246
        $region42: #{value_network_forward.1} parent=11 // pred_check_branch
          %457 = sbr.rel (%p455) target = $region44
        $region43: #{value_network_forward.1} parent=11 // pred_region
          _
        $region44: #{value_network_forward.1} parent=11 // pred_fallthru
          _
        // Predicated region
        $region45: #{value_network_forward.1} parent=11 // pred_check
          %p458 = pneg %p267
        $region46: #{value_network_forward.1} parent=11 // pred_check_branch
          %460 = sbr.rel (%p458) target = $region48
        $region47: #{value_network_forward.1} parent=11 // pred_region
          _
        $region48: #{value_network_forward.1} parent=11 // pred_fallthru
          _
        // Predicated region
        $region49: #{value_network_forward.1} parent=11 // pred_check
          %p461 = pneg %p288
        $region50: #{value_network_forward.1} parent=11 // pred_check_branch
          %463 = sbr.rel (%p461) target = $region52
        $region51: #{value_network_forward.1} parent=11 // pred_region
          _
        $region52: #{value_network_forward.1} parent=11 // pred_fallthru
          _
        // Predicated region
        $region53: #{value_network_forward.1} parent=11 // pred_check
          %p464 = pneg %p309
        $region54: #{value_network_forward.1} parent=11 // pred_check_branch
          %466 = sbr.rel (%p464) target = $region56
        $region55: #{value_network_forward.1} parent=11 // pred_region
          _
        $region56: #{value_network_forward.1} parent=11 // pred_fallthru
          _
        // Predicated region
        $region57: #{value_network_forward.1} parent=11 // pred_check
          %p467 = pneg %p330
        $region58: #{value_network_forward.1} parent=11 // pred_check_branch
          %469 = sbr.rel (%p467) target = $region60
        $region59: #{value_network_forward.1} parent=11 // pred_region
          _
        $region60: #{value_network_forward.1} parent=11 // pred_fallthru
          _
        // Predicated region
        $region61: #{value_network_forward.1} parent=11 // pred_check
          %p470 = pneg %p351
        $region62: #{value_network_forward.1} parent=11 // pred_check_branch
          %472 = sbr.rel (%p470) target = $region64
        $region63: #{value_network_forward.1} parent=11 // pred_region
          _
        $region64: #{value_network_forward.1} parent=11 // pred_fallthru
          _
        // Predicated region
        $region65: #{value_network_forward.1} parent=11 // pred_check
          %p473 = pneg %p372
        $region66: #{value_network_forward.1} parent=11 // pred_check_branch
          %475 = sbr.rel (%p473) target = $region68
        $region67: #{value_network_forward.1} parent=11 // pred_region
          _
        $region68: #{value_network_forward.1} parent=11 // pred_fallthru
          _
        // Predicated region
        $region69: #{value_network_forward.1} parent=11 // pred_check
          %p476 = pneg %p393
        $region70: #{value_network_forward.1} parent=11 // pred_check_branch
          %478 = sbr.rel (%p476) target = $region72
        $region71: #{value_network_forward.1} parent=11 // pred_region
          _
        $region72: #{value_network_forward.1} parent=11 // pred_fallthru
          _
      $region12: #{value_network_forward.1} parent=5 // pred_fallthru
        _
      %p479 = scmp.lt.s32.totalorder %s26, 2
      // Predicated region
      $region73: #{value_network_forward.1} parent=5 // pred_check
        %p480 = pneg %p479
      $region74: #{value_network_forward.1} parent=5 // pred_check_branch
        %482 = sbr.rel (%p480) target = $region76
      $region75: #{value_network_forward.1} parent=5 // pred_region
        // Predicated region
        $region77: #{value_network_forward.1} parent=75 // pred_check
          %p483 = pneg %p46
        $region78: #{value_network_forward.1} parent=75 // pred_check_branch
          %485 = sbr.rel (%p483) target = $region80
        $region79: #{value_network_forward.1} parent=75 // pred_region
          %p486 = scmp.lt.s32.totalorder %s26, 1
          %s487 = scalar_select %p486, %s26, 1
          %s488 = smul.addr %s487, 222
          %s489 = smul.addr %s488, 8
          %s490 = scalar_lea.vmem %s0, %s489
        $region80: #{value_network_forward.1} parent=75 // pred_fallthru
          _
        // Predicated region
        $region81: #{value_network_forward.1} parent=75 // pred_check
          %p491 = pneg %p72
        $region82: #{value_network_forward.1} parent=75 // pred_check_branch
          %493 = sbr.rel (%p491) target = $region84
        $region83: #{value_network_forward.1} parent=75 // pred_region
          %p494 = scmp.lt.s32.totalorder %s26, 1
          %s495 = scalar_select %p494, %s26, 1
          %s496 = scalar_lea.vmem %s1, %s495
        $region84: #{value_network_forward.1} parent=75 // pred_fallthru
          _
      $region76: #{value_network_forward.1} parent=5 // pred_fallthru
        _
      %p497 = scmp.le.s32.totalorder 1, %s26
      %p498 = scmp.lt.s32.totalorder %s26, 3
      %p499 = pnand %p497, %p498
      %p500 = pneg %p499
      // Predicated region
      $region85: #{value_network_forward.1} parent=5 // pred_check
        _
      $region86: #{value_network_forward.1} parent=5 // pred_check_branch
        %502 = sbr.rel (%p499) target = $region88
      $region87: #{value_network_forward.1} parent=5 // pred_region
        %s503 = ssub.s32 %s26, 1
        %p504 = scmp.lt.s32.totalorder %s31, 1
        %s505 = scalar_select %p504, %s31, 1
        %s506 = smul.addr %s505, 222
        %s507 = smul.addr %s506, 8
        %s508 = scalar_lea.vmem %s0, %s507
        %p509 = pneg %p52
        %p510 = pneg %p49
        %p511 = scmp.lt.s32.totalorder %s31, 1
        %s512 = scalar_select %p511, %s31, 1
        %s513 = scalar_lea.vmem %s1, %s512
        %p514 = pneg %p78
        %p515 = pneg %p75
        %p516 = pneg %p99
        %p517 = pneg %p96
        %p518 = pneg %p120
        %p519 = pneg %p117
        %p520 = pneg %p141
        %p521 = pneg %p138
        %p522 = pneg %p162
        %p523 = pneg %p159
        %p524 = pneg %p183
        %p525 = pneg %p180
        %p526 = pneg %p204
        %p527 = pneg %p201
        %p528 = pneg %p225
        %p529 = pneg %p222
        %p530 = pneg %p246
        %p531 = pneg %p243
        %p532 = pneg %p267
        %p533 = pneg %p264
        %p534 = pneg %p288
        %p535 = pneg %p285
        %p536 = pneg %p309
        %p537 = pneg %p306
        %p538 = pneg %p330
        %p539 = pneg %p327
        %p540 = pneg %p351
        %p541 = pneg %p348
        %p542 = pneg %p372
        %p543 = pneg %p369
        %p544 = pneg %p393
        %p545 = pneg %p390
        %p546 = pneg %p419
        %p547 = pneg %p416
        %s548 = sand.u32 %s406, 1
        %s549 = scalar_lea.sflag [#allocation6], %s548
        %s550 = sand.u32 %s406, 1
        %s551 = scalar_lea.vmem [#allocation5], %s550
        %p552 = scmp.lt.s32.totalorder %s31, 1
        %s553 = scalar_select %p552, %s31, 1
        %s554 = smul.addr %s553, 222
        %s555 = smul.addr %s554, 8
        %s556 = scalar_lea.vmem %s0, %s555
        %p557 = scmp.lt.s32.totalorder %s31, 1
        %s558 = scalar_select %p557, %s31, 1
        %s559 = scalar_lea.vmem %s1, %s558
        %v560 = vlaneseq
        %v561 = vshrl.u32 %v560, 7
        %v562 = vadd.s32 %v561, 8
        %v563 = vlaneseq
        %v564 = vand.u32 %v563, 127
        %v565 = vmul.u32 %v561, 2
        %v566 = vmul.u32 %v562, 2
        %vm567 = vcmp.eq.s32.totalorder %v564, %v565
        %vm568 = vcmp.eq.s32.totalorder %v564, %v566
        %v569 = vsel %vm567, 1, 0
        %v570 = vsel %vm568, 1, 0
        %v571 = vcvt.s32.f32 %v569
        %v572 = vcvt.s32.f32 %v570
        %v573 = vadd.s32 %v565, 1
        %v574 = vadd.s32 %v566, 1
        %vm575 = vcmp.eq.s32.totalorder %v564, %v573
        %vm576 = vcmp.eq.s32.totalorder %v564, %v574
        %v577 = vsel %vm575, 1, 0
        %v578 = vsel %vm576, 1, 0
        %v579 = vcvt.s32.f32 %v577
        %v580 = vcvt.s32.f32 %v578
        loop: start=0, step=1, limit=17
        $region89: #{value_network_forward.1} parent=87 // loop_pre_header
          _
        $region90: #{value_network_forward.1} parent=87 // loop_header
          %s582 = sphi 0, %s586
          %p583 = scmp.ge.s32.totalorder %s582, 17
        $region91: #{value_network_forward.1} parent=87 // loop_header_branch
          %585 = sbr.rel (%p583) target = $region95
        $region92: #{value_network_forward.1} parent=87 // loop_body
          %s587 = smul.u32 %s582, 2
          %s588 = smul.u32 %s587, 24
          %s589 = scalar_lea.vmem %s556, %s588
          %v590 = vld [vmem:[%s589] sm:$0xff]
          %v591 = vld [vmem:[%s589 + $0x8] sm:$0xff]
          %v592 = vld [vmem:[%s589 + $0x10] sm:$0x1]
          %v593 = vld [vmem:[%s2] sm:$0xf]
          %s594 = sadd.s32 %s588, 888
          %s595 = scalar_lea.vmem %s556, %s594
          %v596 = vld [vmem:[%s595] sm:$0xff]
          %v597 = vld [vmem:[%s595 + $0x8] sm:$0xff]
          %v598 = vld [vmem:[%s595 + $0x10] sm:$0x1]
          %s599 = scalar_lea.vmem %s2, 4
          %v600 = vld [vmem:[%s599] sm:$0xf]
          %vm601 = vcmask 31744
          %v603 = vsel %vm601, %v596, 0
          %v606 = vsel %vm601, %v597, 0
          %v609 = vsel %vm601, %v598, 0
          %vm611 = vcmask 1043456
          %v613 = vsel %vm611, %v600, 0
          %615 = vmatprep.subr.mxu0 0.0
          %616 = vmatpush1.msra.mxu0 0.0
          %617 = vmatprep.subr.mxu0 0.0
          %618 = vmatpush1.msra.mxu0 0.0
          %619 = vmatprep.subr.mxu0 0.0
          %620 = vmatpush1.msra.mxu0 0.0
          %621 = vmatprep.subr.mxu0 0.0
          %622 = vmatpush1.msra.mxu0 0.0
          %623 = vmatprep.subr.mxu0 0.0
          %624 = vmatpush1.msra.mxu0 0.0
          %625 = vmatprep.subr.mxu0 0.0
          %626 = vmatpush1.msra.mxu0 0.0
          %627 = vmatprep.subr.mxu0 0.0
          %628 = vmatpush1.msra.mxu0 0.0
          %629 = vmatprep.subr.mxu0 0.0
          %630 = vmatpush1.msra.mxu0 0.0
          %631 = vmatprep.subr.mxu0 0.0
          %632 = vmatpush1.msra.mxu0 0.0
          %633 = vmatprep.subr.mxu0 0.0
          %634 = vmatpush1.msra.mxu0 0.0
          %635 = vmatprep.subr.mxu0 0.0
          %636 = vmatpush1.msra.mxu0 0.0
          %637 = vmatprep.subr.mxu0 0.0
          %638 = vmatpush1.msra.mxu0 0.0
          %639 = vmatprep.subr.mxu0 0.0
          %640 = vmatpush1.msra.mxu0 0.0
          %641 = vmatprep.subr.mxu0 0.0
          %642 = vmatpush1.msra.mxu0 0.0
          %643 = vmatprep.subr.mxu0 0.0
          %644 = vmatpush1.msra.mxu0 0.0
          %645 = vmatprep.subr.mxu0 0.0
          %646 = vmatpush1.msra.mxu0 %v613
          %647 = vmatprep.subr.mxu0 0.0
          %648 = vmatpush2.msra.mxu0 0.0
          %649 = vmatprep.subr.mxu0 0.0
          %650 = vmatpush2.msra.mxu0 0.0
          %651 = vmatprep.subr.mxu0 0.0
          %652 = vmatpush2.msra.mxu0 0.0
          %653 = vmatprep.subr.mxu0 0.0
          %654 = vmatpush2.msra.mxu0 0.0
          %655 = vmatprep.subr.mxu0 0.0
          %656 = vmatpush2.msra.mxu0 0.0
          %657 = vmatprep.subr.mxu0 0.0
          %658 = vmatpush2.msra.mxu0 0.0
          %659 = vmatprep.subr.mxu0 0.0
          %660 = vmatpush2.msra.mxu0 0.0
          %661 = vmatprep.subr.mxu0 0.0
          %662 = vmatpush2.msra.mxu0 0.0
          %663 = vmatprep.subr.mxu0 0.0
          %664 = vmatpush2.msra.mxu0 0.0
          %665 = vmatprep.subr.mxu0 0.0
          %666 = vmatpush2.msra.mxu0 0.0
          %667 = vmatprep.subr.mxu0 0.0
          %668 = vmatpush2.msra.mxu0 0.0
          %669 = vmatprep.subr.mxu0 0.0
          %670 = vmatpush2.msra.mxu0 0.0
          %671 = vmatprep.subr.mxu0 0.0
          %672 = vmatpush2.msra.mxu0 0.0
          %673 = vmatprep.subr.mxu0 0.0
          %674 = vmatpush2.msra.mxu0 0.0
          %675 = vmatprep.subr.mxu0 0.0
          %676 = vmatpush2.msra.mxu0 0.0
          %677 = vmatprep.subr.mxu0 0.0
          %678 = vmatpush2.msra.mxu0 0.0
          %679 = vmatprep.mubr.f32.mxu0 0.0
          %680 = vmatmul.mubr.f32.gmra.mxu0 %v603
          %v681 = vpop.f32.mrf.mxu0
          %v682 = vadd.f32 0.0, %v681
          %v683 = vpop.f32.mrf.mxu0
          %684 = vmatprep.mubr.f32.mxu0 0.0
          %685 = vmatmul.mubr.f32.gmra.mxu0 %v606
          %v686 = vpop.f32.mrf.mxu0
          %v687 = vadd.f32 0.0, %v686
          %v688 = vpop.f32.mrf.mxu0
          %689 = vmatprep.mubr.f32.mxu0 0.0
          %690 = vmatmul.mubr.f32.gmra.mxu0 %v609
          %v691 = vpop.f32.mrf.mxu0
          %v692 = vadd.f32 0.0, %v691
          %v693 = vpop.f32.mrf.mxu0
          %694 = vdwg.mxu0
          %v696 = vsel %vm601, %v590, 0
          %v699 = vsel %vm601, %v591, 0
          %v702 = vsel %vm601, %v592, 0
          %v705 = vsel %vm611, %v593, 0
          %707 = vmatprep.subr.mxu0 0.0
          %708 = vmatpush1.msra.mxu0 0.0
          %709 = vmatprep.subr.mxu0 0.0
          %710 = vmatpush1.msra.mxu0 0.0
          %711 = vmatprep.subr.mxu0 0.0
          %712 = vmatpush1.msra.mxu0 0.0
          %713 = vmatprep.subr.mxu0 0.0
          %714 = vmatpush1.msra.mxu0 0.0
          %715 = vmatprep.subr.mxu0 0.0
          %716 = vmatpush1.msra.mxu0 0.0
          %717 = vmatprep.subr.mxu0 0.0
          %718 = vmatpush1.msra.mxu0 0.0
          %719 = vmatprep.subr.mxu0 0.0
          %720 = vmatpush1.msra.mxu0 0.0
          %721 = vmatprep.subr.mxu0 0.0
          %722 = vmatpush1.msra.mxu0 0.0
          %723 = vmatprep.subr.mxu0 0.0
          %724 = vmatpush1.msra.mxu0 0.0
          %725 = vmatprep.subr.mxu0 0.0
          %726 = vmatpush1.msra.mxu0 0.0
          %727 = vmatprep.subr.mxu0 0.0
          %728 = vmatpush1.msra.mxu0 0.0
          %729 = vmatprep.subr.mxu0 0.0
          %730 = vmatpush1.msra.mxu0 0.0
          %731 = vmatprep.subr.mxu0 0.0
          %732 = vmatpush1.msra.mxu0 0.0
          %733 = vmatprep.subr.mxu0 0.0
          %734 = vmatpush1.msra.mxu0 0.0
          %735 = vmatprep.subr.mxu0 0.0
          %736 = vmatpush1.msra.mxu0 0.0
          %737 = vmatprep.subr.mxu0 0.0
          %738 = vmatpush1.msra.mxu0 %v705
          %739 = vmatprep.subr.mxu0 0.0
          %740 = vmatpush2.msra.mxu0 0.0
          %741 = vmatprep.subr.mxu0 0.0
          %742 = vmatpush2.msra.mxu0 0.0
          %743 = vmatprep.subr.mxu0 0.0
          %744 = vmatpush2.msra.mxu0 0.0
          %745 = vmatprep.subr.mxu0 0.0
          %746 = vmatpush2.msra.mxu0 0.0
          %747 = vmatprep.subr.mxu0 0.0
          %748 = vmatpush2.msra.mxu0 0.0
          %749 = vmatprep.subr.mxu0 0.0
          %750 = vmatpush2.msra.mxu0 0.0
          %751 = vmatprep.subr.mxu0 0.0
          %752 = vmatpush2.msra.mxu0 0.0
          %753 = vmatprep.subr.mxu0 0.0
          %754 = vmatpush2.msra.mxu0 0.0
          %755 = vmatprep.subr.mxu0 0.0
          %756 = vmatpush2.msra.mxu0 0.0
          %757 = vmatprep.subr.mxu0 0.0
          %758 = vmatpush2.msra.mxu0 0.0
          %759 = vmatprep.subr.mxu0 0.0
          %760 = vmatpush2.msra.mxu0 0.0
          %761 = vmatprep.subr.mxu0 0.0
          %762 = vmatpush2.msra.mxu0 0.0
          %763 = vmatprep.subr.mxu0 0.0
          %764 = vmatpush2.msra.mxu0 0.0
          %765 = vmatprep.subr.mxu0 0.0
          %766 = vmatpush2.msra.mxu0 0.0
          %767 = vmatprep.subr.mxu0 0.0
          %768 = vmatpush2.msra.mxu0 0.0
          %769 = vmatprep.subr.mxu0 0.0
          %770 = vmatpush2.msra.mxu0 0.0
          %771 = vmatprep.mubr.f32.mxu0 0.0
          %772 = vmatmul.mubr.f32.gmra.mxu0 %v696
          %v773 = vpop.f32.mrf.mxu0
          %v774 = vadd.f32 %v682, %v773
          %v775 = vpop.f32.mrf.mxu0
          %776 = vmatprep.mubr.f32.mxu0 0.0
          %777 = vmatmul.mubr.f32.gmra.mxu0 %v699
          %v778 = vpop.f32.mrf.mxu0
          %v779 = vadd.f32 %v687, %v778
          %v780 = vpop.f32.mrf.mxu0
          %781 = vmatprep.mubr.f32.mxu0 0.0
          %782 = vmatmul.mubr.f32.gmra.mxu0 %v702
          %v783 = vpop.f32.mrf.mxu0
          %v784 = vadd.f32 %v692, %v783
          %v785 = vpop.f32.mrf.mxu0
          %786 = vdwg.mxu0
          %v787 = vld [vmem:[%s589 + $0x1] sm:$0xff]
          %v788 = vld [vmem:[%s589 + $0x9] sm:$0xff]
          %v789 = vld [vmem:[%s589 + $0x11] sm:$0x1]
          %s790 = scalar_lea.vmem %s2, 8
          %v791 = vld [vmem:[%s790] sm:$0xf]
          %v793 = vsel %vm601, %v787, 0
          %v796 = vsel %vm601, %v788, 0
          %v799 = vsel %vm601, %v789, 0
          %v802 = vsel %vm611, %v791, 0
          %804 = vmatprep.subr.mxu0 0.0
          %805 = vmatpush1.msra.mxu0 0.0
          %806 = vmatprep.subr.mxu0 0.0
          %807 = vmatpush1.msra.mxu0 0.0
          %808 = vmatprep.subr.mxu0 0.0
          %809 = vmatpush1.msra.mxu0 0.0
          %810 = vmatprep.subr.mxu0 0.0
          %811 = vmatpush1.msra.mxu0 0.0
          %812 = vmatprep.subr.mxu0 0.0
          %813 = vmatpush1.msra.mxu0 0.0
          %814 = vmatprep.subr.mxu0 0.0
          %815 = vmatpush1.msra.mxu0 0.0
          %816 = vmatprep.subr.mxu0 0.0
          %817 = vmatpush1.msra.mxu0 0.0
          %818 = vmatprep.subr.mxu0 0.0
          %819 = vmatpush1.msra.mxu0 0.0
          %820 = vmatprep.subr.mxu0 0.0
          %821 = vmatpush1.msra.mxu0 0.0
          %822 = vmatprep.subr.mxu0 0.0
          %823 = vmatpush1.msra.mxu0 0.0
          %824 = vmatprep.subr.mxu0 0.0
          %825 = vmatpush1.msra.mxu0 0.0
          %826 = vmatprep.subr.mxu0 0.0
          %827 = vmatpush1.msra.mxu0 0.0
          %828 = vmatprep.subr.mxu0 0.0
          %829 = vmatpush1.msra.mxu0 0.0
          %830 = vmatprep.subr.mxu0 0.0
          %831 = vmatpush1.msra.mxu0 0.0
          %832 = vmatprep.subr.mxu0 0.0
          %833 = vmatpush1.msra.mxu0 0.0
          %834 = vmatprep.subr.mxu0 0.0
          %835 = vmatpush1.msra.mxu0 %v802
          %836 = vmatprep.subr.mxu0 0.0
          %837 = vmatpush2.msra.mxu0 0.0
          %838 = vmatprep.subr.mxu0 0.0
          %839 = vmatpush2.msra.mxu0 0.0
          %840 = vmatprep.subr.mxu0 0.0
          %841 = vmatpush2.msra.mxu0 0.0
          %842 = vmatprep.subr.mxu0 0.0
          %843 = vmatpush2.msra.mxu0 0.0
          %844 = vmatprep.subr.mxu0 0.0
          %845 = vmatpush2.msra.mxu0 0.0
          %846 = vmatprep.subr.mxu0 0.0
          %847 = vmatpush2.msra.mxu0 0.0
          %848 = vmatprep.subr.mxu0 0.0
          %849 = vmatpush2.msra.mxu0 0.0
          %850 = vmatprep.subr.mxu0 0.0
          %851 = vmatpush2.msra.mxu0 0.0
          %852 = vmatprep.subr.mxu0 0.0
          %853 = vmatpush2.msra.mxu0 0.0
          %854 = vmatprep.subr.mxu0 0.0
          %855 = vmatpush2.msra.mxu0 0.0
          %856 = vmatprep.subr.mxu0 0.0
          %857 = vmatpush2.msra.mxu0 0.0
          %858 = vmatprep.subr.mxu0 0.0
          %859 = vmatpush2.msra.mxu0 0.0
          %860 = vmatprep.subr.mxu0 0.0
          %861 = vmatpush2.msra.mxu0 0.0
          %862 = vmatprep.subr.mxu0 0.0
          %863 = vmatpush2.msra.mxu0 0.0
          %864 = vmatprep.subr.mxu0 0.0
          %865 = vmatpush2.msra.mxu0 0.0
          %866 = vmatprep.subr.mxu0 0.0
          %867 = vmatpush2.msra.mxu0 0.0
          %868 = vmatprep.mubr.f32.mxu0 0.0
          %869 = vmatmul.mubr.f32.gmra.mxu0 %v793
          %v870 = vpop.f32.mrf.mxu0
          %v871 = vadd.f32 0.0, %v870
          %v872 = vpop.f32.mrf.mxu0
          %873 = vmatprep.mubr.f32.mxu0 0.0
          %874 = vmatmul.mubr.f32.gmra.mxu0 %v796
          %v875 = vpop.f32.mrf.mxu0
          %v876 = vadd.f32 0.0, %v875
          %v877 = vpop.f32.mrf.mxu0
          %878 = vmatprep.mubr.f32.mxu0 0.0
          %879 = vmatmul.mubr.f32.gmra.mxu0 %v799
          %v880 = vpop.f32.mrf.mxu0
          %v881 = vadd.f32 0.0, %v880
          %v882 = vpop.f32.mrf.mxu0
          %883 = vdwg.mxu0
          %v884 = vadd.f32 %v774, %v871
          %v885 = vadd.f32 %v779, %v876
          %v886 = vadd.f32 %v784, %v881
          %v887 = vld [vmem:[%s595 + $0x1] sm:$0xff]
          %v888 = vld [vmem:[%s595 + $0x9] sm:$0xff]
          %v889 = vld [vmem:[%s595 + $0x11] sm:$0x1]
          %s890 = scalar_lea.vmem %s2, 12
          %v891 = vld [vmem:[%s890] sm:$0xf]
          %v893 = vsel %vm601, %v887, 0
          %v896 = vsel %vm601, %v888, 0
          %v899 = vsel %vm601, %v889, 0
          %v902 = vsel %vm611, %v891, 0
          %904 = vmatprep.subr.mxu0 0.0
          %905 = vmatpush1.msra.mxu0 0.0
          %906 = vmatprep.subr.mxu0 0.0
          %907 = vmatpush1.msra.mxu0 0.0
          %908 = vmatprep.subr.mxu0 0.0
          %909 = vmatpush1.msra.mxu0 0.0
          %910 = vmatprep.subr.mxu0 0.0
          %911 = vmatpush1.msra.mxu0 0.0
          %912 = vmatprep.subr.mxu0 0.0
          %913 = vmatpush1.msra.mxu0 0.0
          %914 = vmatprep.subr.mxu0 0.0
          %915 = vmatpush1.msra.mxu0 0.0
          %916 = vmatprep.subr.mxu0 0.0
          %917 = vmatpush1.msra.mxu0 0.0
          %918 = vmatprep.subr.mxu0 0.0
          %919 = vmatpush1.msra.mxu0 0.0
          %920 = vmatprep.subr.mxu0 0.0
          %921 = vmatpush1.msra.mxu0 0.0
          %922 = vmatprep.subr.mxu0 0.0
          %923 = vmatpush1.msra.mxu0 0.0
          %924 = vmatprep.subr.mxu0 0.0
          %925 = vmatpush1.msra.mxu0 0.0
          %926 = vmatprep.subr.mxu0 0.0
          %927 = vmatpush1.msra.mxu0 0.0
          %928 = vmatprep.subr.mxu0 0.0
          %929 = vmatpush1.msra.mxu0 0.0
          %930 = vmatprep.subr.mxu0 0.0
          %931 = vmatpush1.msra.mxu0 0.0
          %932 = vmatprep.subr.mxu0 0.0
          %933 = vmatpush1.msra.mxu0 0.0
          %934 = vmatprep.subr.mxu0 0.0
          %935 = vmatpush1.msra.mxu0 %v902
          %936 = vmatprep.subr.mxu0 0.0
          %937 = vmatpush2.msra.mxu0 0.0
          %938 = vmatprep.subr.mxu0 0.0
          %939 = vmatpush2.msra.mxu0 0.0
          %940 = vmatprep.subr.mxu0 0.0
          %941 = vmatpush2.msra.mxu0 0.0
          %942 = vmatprep.subr.mxu0 0.0
          %943 = vmatpush2.msra.mxu0 0.0
          %944 = vmatprep.subr.mxu0 0.0
          %945 = vmatpush2.msra.mxu0 0.0
          %946 = vmatprep.subr.mxu0 0.0
          %947 = vmatpush2.msra.mxu0 0.0
          %948 = vmatprep.subr.mxu0 0.0
          %949 = vmatpush2.msra.mxu0 0.0
          %950 = vmatprep.subr.mxu0 0.0
          %951 = vmatpush2.msra.mxu0 0.0
          %952 = vmatprep.subr.mxu0 0.0
          %953 = vmatpush2.msra.mxu0 0.0
          %954 = vmatprep.subr.mxu0 0.0
          %955 = vmatpush2.msra.mxu0 0.0
          %956 = vmatprep.subr.mxu0 0.0
          %957 = vmatpush2.msra.mxu0 0.0
          %958 = vmatprep.subr.mxu0 0.0
          %959 = vmatpush2.msra.mxu0 0.0
          %960 = vmatprep.subr.mxu0 0.0
          %961 = vmatpush2.msra.mxu0 0.0
          %962 = vmatprep.subr.mxu0 0.0
          %963 = vmatpush2.msra.mxu0 0.0
          %964 = vmatprep.subr.mxu0 0.0
          %965 = vmatpush2.msra.mxu0 0.0
          %966 = vmatprep.subr.mxu0 0.0
          %967 = vmatpush2.msra.mxu0 0.0
          %968 = vmatprep.mubr.f32.mxu0 0.0
          %969 = vmatmul.mubr.f32.gmra.mxu0 %v893
          %v970 = vpop.f32.mrf.mxu0
          %v971 = vadd.f32 0.0, %v970
          %v972 = vpop.f32.mrf.mxu0
          %973 = vmatprep.mubr.f32.mxu0 0.0
          %974 = vmatmul.mubr.f32.gmra.mxu0 %v896
          %v975 = vpop.f32.mrf.mxu0
          %v976 = vadd.f32 0.0, %v975
          %v977 = vpop.f32.mrf.mxu0
          %978 = vmatprep.mubr.f32.mxu0 0.0
          %979 = vmatmul.mubr.f32.gmra.mxu0 %v899
          %v980 = vpop.f32.mrf.mxu0
          %v981 = vadd.f32 0.0, %v980
          %v982 = vpop.f32.mrf.mxu0
          %983 = vdwg.mxu0
          %v984 = vadd.f32 %v884, %v971
          %v985 = vadd.f32 %v885, %v976
          %v986 = vadd.f32 %v886, %v981
          %v987 = vld [vmem:[%s589 + $0x2] sm:$0xff]
          %v988 = vld [vmem:[%s589 + $0xa] sm:$0xff]
          %v989 = vld [vmem:[%s589 + $0x12] sm:$0x1]
          %s990 = scalar_lea.vmem %s2, 16
          %v991 = vld [vmem:[%s990] sm:$0xf]
          %v993 = vsel %vm601, %v987, 0
          %v996 = vsel %vm601, %v988, 0
          %v999 = vsel %vm601, %v989, 0
          %v1002 = vsel %vm611, %v991, 0
          %1004 = vmatprep.subr.mxu0 0.0
          %1005 = vmatpush1.msra.mxu0 0.0
          %1006 = vmatprep.subr.mxu0 0.0
          %1007 = vmatpush1.msra.mxu0 0.0
          %1008 = vmatprep.subr.mxu0 0.0
          %1009 = vmatpush1.msra.mxu0 0.0
          %1010 = vmatprep.subr.mxu0 0.0
          %1011 = vmatpush1.msra.mxu0 0.0
          %1012 = vmatprep.subr.mxu0 0.0
          %1013 = vmatpush1.msra.mxu0 0.0
          %1014 = vmatprep.subr.mxu0 0.0
          %1015 = vmatpush1.msra.mxu0 0.0
          %1016 = vmatprep.subr.mxu0 0.0
          %1017 = vmatpush1.msra.mxu0 0.0
          %1018 = vmatprep.subr.mxu0 0.0
          %1019 = vmatpush1.msra.mxu0 0.0
          %1020 = vmatprep.subr.mxu0 0.0
          %1021 = vmatpush1.msra.mxu0 0.0
          %1022 = vmatprep.subr.mxu0 0.0
          %1023 = vmatpush1.msra.mxu0 0.0
          %1024 = vmatprep.subr.mxu0 0.0
          %1025 = vmatpush1.msra.mxu0 0.0
          %1026 = vmatprep.subr.mxu0 0.0
          %1027 = vmatpush1.msra.mxu0 0.0
          %1028 = vmatprep.subr.mxu0 0.0
          %1029 = vmatpush1.msra.mxu0 0.0
          %1030 = vmatprep.subr.mxu0 0.0
          %1031 = vmatpush1.msra.mxu0 0.0
          %1032 = vmatprep.subr.mxu0 0.0
          %1033 = vmatpush1.msra.mxu0 0.0
          %1034 = vmatprep.subr.mxu0 0.0
          %1035 = vmatpush1.msra.mxu0 %v1002
          %1036 = vmatprep.subr.mxu0 0.0
          %1037 = vmatpush2.msra.mxu0 0.0
          %1038 = vmatprep.subr.mxu0 0.0
          %1039 = vmatpush2.msra.mxu0 0.0
          %1040 = vmatprep.subr.mxu0 0.0
          %1041 = vmatpush2.msra.mxu0 0.0
          %1042 = vmatprep.subr.mxu0 0.0
          %1043 = vmatpush2.msra.mxu0 0.0
          %1044 = vmatprep.subr.mxu0 0.0
          %1045 = vmatpush2.msra.mxu0 0.0
          %1046 = vmatprep.subr.mxu0 0.0
          %1047 = vmatpush2.msra.mxu0 0.0
          %1048 = vmatprep.subr.mxu0 0.0
          %1049 = vmatpush2.msra.mxu0 0.0
          %1050 = vmatprep.subr.mxu0 0.0
          %1051 = vmatpush2.msra.mxu0 0.0
          %1052 = vmatprep.subr.mxu0 0.0
          %1053 = vmatpush2.msra.mxu0 0.0
          %1054 = vmatprep.subr.mxu0 0.0
          %1055 = vmatpush2.msra.mxu0 0.0
          %1056 = vmatprep.subr.mxu0 0.0
          %1057 = vmatpush2.msra.mxu0 0.0
          %1058 = vmatprep.subr.mxu0 0.0
          %1059 = vmatpush2.msra.mxu0 0.0
          %1060 = vmatprep.subr.mxu0 0.0
          %1061 = vmatpush2.msra.mxu0 0.0
          %1062 = vmatprep.subr.mxu0 0.0
          %1063 = vmatpush2.msra.mxu0 0.0
          %1064 = vmatprep.subr.mxu0 0.0
          %1065 = vmatpush2.msra.mxu0 0.0
          %1066 = vmatprep.subr.mxu0 0.0
          %1067 = vmatpush2.msra.mxu0 0.0
          %1068 = vmatprep.mubr.f32.mxu0 0.0
          %1069 = vmatmul.mubr.f32.gmra.mxu0 %v993
          %v1070 = vpop.f32.mrf.mxu0
          %v1071 = vadd.f32 0.0, %v1070
          %v1072 = vpop.f32.mrf.mxu0
          %1073 = vmatprep.mubr.f32.mxu0 0.0
          %1074 = vmatmul.mubr.f32.gmra.mxu0 %v996
          %v1075 = vpop.f32.mrf.mxu0
          %v1076 = vadd.f32 0.0, %v1075
          %v1077 = vpop.f32.mrf.mxu0
          %1078 = vmatprep.mubr.f32.mxu0 0.0
          %1079 = vmatmul.mubr.f32.gmra.mxu0 %v999
          %v1080 = vpop.f32.mrf.mxu0
          %v1081 = vadd.f32 0.0, %v1080
          %v1082 = vpop.f32.mrf.mxu0
          %1083 = vdwg.mxu0
          %v1084 = vadd.f32 %v984, %v1071
          %v1085 = vadd.f32 %v985, %v1076
          %v1086 = vadd.f32 %v986, %v1081
          %s1087 = sadd.s32 %s587, 1
          %s1088 = smul.u32 %s1087, 24
          %s1089 = scalar_lea.vmem %s556, %s1088
          %v1090 = vld [vmem:[%s1089] sm:$0xff]
          %v1091 = vld [vmem:[%s1089 + $0x8] sm:$0xff]
          %v1092 = vld [vmem:[%s1089 + $0x10] sm:$0x1]
          %s1093 = scalar_lea.vmem %s2, 20
          %v1094 = vld [vmem:[%s1093] sm:$0xf]
          %v1096 = vsel %vm601, %v1090, 0
          %v1099 = vsel %vm601, %v1091, 0
          %v1102 = vsel %vm601, %v1092, 0
          %v1105 = vsel %vm611, %v1094, 0
          %1107 = vmatprep.subr.mxu0 0.0
          %1108 = vmatpush1.msra.mxu0 0.0
          %1109 = vmatprep.subr.mxu0 0.0
          %1110 = vmatpush1.msra.mxu0 0.0
          %1111 = vmatprep.subr.mxu0 0.0
          %1112 = vmatpush1.msra.mxu0 0.0
          %1113 = vmatprep.subr.mxu0 0.0
          %1114 = vmatpush1.msra.mxu0 0.0
          %1115 = vmatprep.subr.mxu0 0.0
          %1116 = vmatpush1.msra.mxu0 0.0
          %1117 = vmatprep.subr.mxu0 0.0
          %1118 = vmatpush1.msra.mxu0 0.0
          %1119 = vmatprep.subr.mxu0 0.0
          %1120 = vmatpush1.msra.mxu0 0.0
          %1121 = vmatprep.subr.mxu0 0.0
          %1122 = vmatpush1.msra.mxu0 0.0
          %1123 = vmatprep.subr.mxu0 0.0
          %1124 = vmatpush1.msra.mxu0 0.0
          %1125 = vmatprep.subr.mxu0 0.0
          %1126 = vmatpush1.msra.mxu0 0.0
          %1127 = vmatprep.subr.mxu0 0.0
          %1128 = vmatpush1.msra.mxu0 0.0
          %1129 = vmatprep.subr.mxu0 0.0
          %1130 = vmatpush1.msra.mxu0 0.0
          %1131 = vmatprep.subr.mxu0 0.0
          %1132 = vmatpush1.msra.mxu0 0.0
          %1133 = vmatprep.subr.mxu0 0.0
          %1134 = vmatpush1.msra.mxu0 0.0
          %1135 = vmatprep.subr.mxu0 0.0
          %1136 = vmatpush1.msra.mxu0 0.0
          %1137 = vmatprep.subr.mxu0 0.0
          %1138 = vmatpush1.msra.mxu0 %v1105
          %1139 = vmatprep.subr.mxu0 0.0
          %1140 = vmatpush2.msra.mxu0 0.0
          %1141 = vmatprep.subr.mxu0 0.0
          %1142 = vmatpush2.msra.mxu0 0.0
          %1143 = vmatprep.subr.mxu0 0.0
          %1144 = vmatpush2.msra.mxu0 0.0
          %1145 = vmatprep.subr.mxu0 0.0
          %1146 = vmatpush2.msra.mxu0 0.0
          %1147 = vmatprep.subr.mxu0 0.0
          %1148 = vmatpush2.msra.mxu0 0.0
          %1149 = vmatprep.subr.mxu0 0.0
          %1150 = vmatpush2.msra.mxu0 0.0
          %1151 = vmatprep.subr.mxu0 0.0
          %1152 = vmatpush2.msra.mxu0 0.0
          %1153 = vmatprep.subr.mxu0 0.0
          %1154 = vmatpush2.msra.mxu0 0.0
          %1155 = vmatprep.subr.mxu0 0.0
          %1156 = vmatpush2.msra.mxu0 0.0
          %1157 = vmatprep.subr.mxu0 0.0
          %1158 = vmatpush2.msra.mxu0 0.0
          %1159 = vmatprep.subr.mxu0 0.0
          %1160 = vmatpush2.msra.mxu0 0.0
          %1161 = vmatprep.subr.mxu0 0.0
          %1162 = vmatpush2.msra.mxu0 0.0
          %1163 = vmatprep.subr.mxu0 0.0
          %1164 = vmatpush2.msra.mxu0 0.0
          %1165 = vmatprep.subr.mxu0 0.0
          %1166 = vmatpush2.msra.mxu0 0.0
          %1167 = vmatprep.subr.mxu0 0.0
          %1168 = vmatpush2.msra.mxu0 0.0
          %1169 = vmatprep.subr.mxu0 0.0
          %1170 = vmatpush2.msra.mxu0 0.0
          %1171 = vmatprep.mubr.f32.mxu0 0.0
          %1172 = vmatmul.mubr.f32.gmra.mxu0 %v1096
          %v1173 = vpop.f32.mrf.mxu0
          %v1174 = vadd.f32 0.0, %v1173
          %v1175 = vpop.f32.mrf.mxu0
          %1176 = vmatprep.mubr.f32.mxu0 0.0
          %1177 = vmatmul.mubr.f32.gmra.mxu0 %v1099
          %v1178 = vpop.f32.mrf.mxu0
          %v1179 = vadd.f32 0.0, %v1178
          %v1180 = vpop.f32.mrf.mxu0
          %1181 = vmatprep.mubr.f32.mxu0 0.0
          %1182 = vmatmul.mubr.f32.gmra.mxu0 %v1102
          %v1183 = vpop.f32.mrf.mxu0
          %v1184 = vadd.f32 0.0, %v1183
          %v1185 = vpop.f32.mrf.mxu0
          %1186 = vdwg.mxu0
          %v1187 = vadd.f32 %v1084, %v1174
          %v1188 = vadd.f32 %v1085, %v1179
          %v1189 = vadd.f32 %v1086, %v1184
          %s1190 = sadd.s32 %s1088, 888
          %s1191 = scalar_lea.vmem %s556, %s1190
          %v1192 = vld [vmem:[%s1191] sm:$0xff]
          %v1193 = vld [vmem:[%s1191 + $0x8] sm:$0xff]
          %v1194 = vld [vmem:[%s1191 + $0x10] sm:$0x1]
          %s1195 = scalar_lea.vmem %s2, 24
          %v1196 = vld [vmem:[%s1195] sm:$0xf]
          %v1198 = vsel %vm601, %v1192, 0
          %v1201 = vsel %vm601, %v1193, 0
          %v1204 = vsel %vm601, %v1194, 0
          %v1207 = vsel %vm611, %v1196, 0
          %1209 = vmatprep.subr.mxu0 0.0
          %1210 = vmatpush1.msra.mxu0 0.0
          %1211 = vmatprep.subr.mxu0 0.0
          %1212 = vmatpush1.msra.mxu0 0.0
          %1213 = vmatprep.subr.mxu0 0.0
          %1214 = vmatpush1.msra.mxu0 0.0
          %1215 = vmatprep.subr.mxu0 0.0
          %1216 = vmatpush1.msra.mxu0 0.0
          %1217 = vmatprep.subr.mxu0 0.0
          %1218 = vmatpush1.msra.mxu0 0.0
          %1219 = vmatprep.subr.mxu0 0.0
          %1220 = vmatpush1.msra.mxu0 0.0
          %1221 = vmatprep.subr.mxu0 0.0
          %1222 = vmatpush1.msra.mxu0 0.0
          %1223 = vmatprep.subr.mxu0 0.0
          %1224 = vmatpush1.msra.mxu0 0.0
          %1225 = vmatprep.subr.mxu0 0.0
          %1226 = vmatpush1.msra.mxu0 0.0
          %1227 = vmatprep.subr.mxu0 0.0
          %1228 = vmatpush1.msra.mxu0 0.0
          %1229 = vmatprep.subr.mxu0 0.0
          %1230 = vmatpush1.msra.mxu0 0.0
          %1231 = vmatprep.subr.mxu0 0.0
          %1232 = vmatpush1.msra.mxu0 0.0
          %1233 = vmatprep.subr.mxu0 0.0
          %1234 = vmatpush1.msra.mxu0 0.0
          %1235 = vmatprep.subr.mxu0 0.0
          %1236 = vmatpush1.msra.mxu0 0.0
          %1237 = vmatprep.subr.mxu0 0.0
          %1238 = vmatpush1.msra.mxu0 0.0
          %1239 = vmatprep.subr.mxu0 0.0
          %1240 = vmatpush1.msra.mxu0 %v1207
          %1241 = vmatprep.subr.mxu0 0.0
          %1242 = vmatpush2.msra.mxu0 0.0
          %1243 = vmatprep.subr.mxu0 0.0
          %1244 = vmatpush2.msra.mxu0 0.0
          %1245 = vmatprep.subr.mxu0 0.0
          %1246 = vmatpush2.msra.mxu0 0.0
          %1247 = vmatprep.subr.mxu0 0.0
          %1248 = vmatpush2.msra.mxu0 0.0
          %1249 = vmatprep.subr.mxu0 0.0
          %1250 = vmatpush2.msra.mxu0 0.0
          %1251 = vmatprep.subr.mxu0 0.0
          %1252 = vmatpush2.msra.mxu0 0.0
          %1253 = vmatprep.subr.mxu0 0.0
          %1254 = vmatpush2.msra.mxu0 0.0
          %1255 = vmatprep.subr.mxu0 0.0
          %1256 = vmatpush2.msra.mxu0 0.0
          %1257 = vmatprep.subr.mxu0 0.0
          %1258 = vmatpush2.msra.mxu0 0.0
          %1259 = vmatprep.subr.mxu0 0.0
          %1260 = vmatpush2.msra.mxu0 0.0
          %1261 = vmatprep.subr.mxu0 0.0
          %1262 = vmatpush2.msra.mxu0 0.0
          %1263 = vmatprep.subr.mxu0 0.0
          %1264 = vmatpush2.msra.mxu0 0.0
          %1265 = vmatprep.subr.mxu0 0.0
          %1266 = vmatpush2.msra.mxu0 0.0
          %1267 = vmatprep.subr.mxu0 0.0
          %1268 = vmatpush2.msra.mxu0 0.0
          %1269 = vmatprep.subr.mxu0 0.0
          %1270 = vmatpush2.msra.mxu0 0.0
          %1271 = vmatprep.subr.mxu0 0.0
          %1272 = vmatpush2.msra.mxu0 0.0
          %1273 = vmatprep.mubr.f32.mxu0 0.0
          %1274 = vmatmul.mubr.f32.gmra.mxu0 %v1198
          %v1275 = vpop.f32.mrf.mxu0
          %v1276 = vadd.f32 0.0, %v1275
          %v1277 = vpop.f32.mrf.mxu0
          %1278 = vmatprep.mubr.f32.mxu0 0.0
          %1279 = vmatmul.mubr.f32.gmra.mxu0 %v1201
          %v1280 = vpop.f32.mrf.mxu0
          %v1281 = vadd.f32 0.0, %v1280
          %v1282 = vpop.f32.mrf.mxu0
          %1283 = vmatprep.mubr.f32.mxu0 0.0
          %1284 = vmatmul.mubr.f32.gmra.mxu0 %v1204
          %v1285 = vpop.f32.mrf.mxu0
          %v1286 = vadd.f32 0.0, %v1285
          %v1287 = vpop.f32.mrf.mxu0
          %1288 = vdwg.mxu0
          %v1289 = vadd.f32 %v1187, %v1276
          %v1290 = vadd.f32 %v1188, %v1281
          %v1291 = vadd.f32 %v1189, %v1286
          %v1292 = vld [vmem:[%s1089 + $0x1] sm:$0xff]
          %v1293 = vld [vmem:[%s1089 + $0x9] sm:$0xff]
          %v1294 = vld [vmem:[%s1089 + $0x11] sm:$0x1]
          %s1295 = scalar_lea.vmem %s2, 28
          %v1296 = vld [vmem:[%s1295] sm:$0xf]
          %v1298 = vsel %vm601, %v1292, 0
          %v1301 = vsel %vm601, %v1293, 0
          %v1304 = vsel %vm601, %v1294, 0
          %v1307 = vsel %vm611, %v1296, 0
          %1309 = vmatprep.subr.mxu0 0.0
          %1310 = vmatpush1.msra.mxu0 0.0
          %1311 = vmatprep.subr.mxu0 0.0
          %1312 = vmatpush1.msra.mxu0 0.0
          %1313 = vmatprep.subr.mxu0 0.0
          %1314 = vmatpush1.msra.mxu0 0.0
          %1315 = vmatprep.subr.mxu0 0.0
          %1316 = vmatpush1.msra.mxu0 0.0
          %1317 = vmatprep.subr.mxu0 0.0
          %1318 = vmatpush1.msra.mxu0 0.0
          %1319 = vmatprep.subr.mxu0 0.0
          %1320 = vmatpush1.msra.mxu0 0.0
          %1321 = vmatprep.subr.mxu0 0.0
          %1322 = vmatpush1.msra.mxu0 0.0
          %1323 = vmatprep.subr.mxu0 0.0
          %1324 = vmatpush1.msra.mxu0 0.0
          %1325 = vmatprep.subr.mxu0 0.0
          %1326 = vmatpush1.msra.mxu0 0.0
          %1327 = vmatprep.subr.mxu0 0.0
          %1328 = vmatpush1.msra.mxu0 0.0
          %1329 = vmatprep.subr.mxu0 0.0
          %1330 = vmatpush1.msra.mxu0 0.0
          %1331 = vmatprep.subr.mxu0 0.0
          %1332 = vmatpush1.msra.mxu0 0.0
          %1333 = vmatprep.subr.mxu0 0.0
          %1334 = vmatpush1.msra.mxu0 0.0
          %1335 = vmatprep.subr.mxu0 0.0
          %1336 = vmatpush1.msra.mxu0 0.0
          %1337 = vmatprep.subr.mxu0 0.0
          %1338 = vmatpush1.msra.mxu0 0.0
          %1339 = vmatprep.subr.mxu0 0.0
          %1340 = vmatpush1.msra.mxu0 %v1307
          %1341 = vmatprep.subr.mxu0 0.0
          %1342 = vmatpush2.msra.mxu0 0.0
          %1343 = vmatprep.subr.mxu0 0.0
          %1344 = vmatpush2.msra.mxu0 0.0
          %1345 = vmatprep.subr.mxu0 0.0
          %1346 = vmatpush2.msra.mxu0 0.0
          %1347 = vmatprep.subr.mxu0 0.0
          %1348 = vmatpush2.msra.mxu0 0.0
          %1349 = vmatprep.subr.mxu0 0.0
          %1350 = vmatpush2.msra.mxu0 0.0
          %1351 = vmatprep.subr.mxu0 0.0
          %1352 = vmatpush2.msra.mxu0 0.0
          %1353 = vmatprep.subr.mxu0 0.0
          %1354 = vmatpush2.msra.mxu0 0.0
          %1355 = vmatprep.subr.mxu0 0.0
          %1356 = vmatpush2.msra.mxu0 0.0
          %1357 = vmatprep.subr.mxu0 0.0
          %1358 = vmatpush2.msra.mxu0 0.0
          %1359 = vmatprep.subr.mxu0 0.0
          %1360 = vmatpush2.msra.mxu0 0.0
          %1361 = vmatprep.subr.mxu0 0.0
          %1362 = vmatpush2.msra.mxu0 0.0
          %1363 = vmatprep.subr.mxu0 0.0
          %1364 = vmatpush2.msra.mxu0 0.0
          %1365 = vmatprep.subr.mxu0 0.0
          %1366 = vmatpush2.msra.mxu0 0.0
          %1367 = vmatprep.subr.mxu0 0.0
          %1368 = vmatpush2.msra.mxu0 0.0
          %1369 = vmatprep.subr.mxu0 0.0
          %1370 = vmatpush2.msra.mxu0 0.0
          %1371 = vmatprep.subr.mxu0 0.0
          %1372 = vmatpush2.msra.mxu0 0.0
          %1373 = vmatprep.mubr.f32.mxu0 0.0
          %1374 = vmatmul.mubr.f32.gmra.mxu0 %v1298
          %v1375 = vpop.f32.mrf.mxu0
          %v1376 = vadd.f32 0.0, %v1375
          %v1377 = vpop.f32.mrf.mxu0
          %1378 = vmatprep.mubr.f32.mxu0 0.0
          %1379 = vmatmul.mubr.f32.gmra.mxu0 %v1301
          %v1380 = vpop.f32.mrf.mxu0
          %v1381 = vadd.f32 0.0, %v1380
          %v1382 = vpop.f32.mrf.mxu0
          %1383 = vmatprep.mubr.f32.mxu0 0.0
          %1384 = vmatmul.mubr.f32.gmra.mxu0 %v1304
          %v1385 = vpop.f32.mrf.mxu0
          %v1386 = vadd.f32 0.0, %v1385
          %v1387 = vpop.f32.mrf.mxu0
          %1388 = vdwg.mxu0
          %v1389 = vadd.f32 %v1289, %v1376
          %v1390 = vadd.f32 %v1290, %v1381
          %v1391 = vadd.f32 %v1291, %v1386
          %v1392 = vld [vmem:[%s1191 + $0x1] sm:$0xff]
          %v1393 = vld [vmem:[%s1191 + $0x9] sm:$0xff]
          %v1394 = vld [vmem:[%s1191 + $0x11] sm:$0x1]
          %s1395 = scalar_lea.vmem %s2, 32
          %v1396 = vld [vmem:[%s1395] sm:$0xf]
          %v1398 = vsel %vm601, %v1392, 0
          %v1401 = vsel %vm601, %v1393, 0
          %v1404 = vsel %vm601, %v1394, 0
          %v1407 = vsel %vm611, %v1396, 0
          %1409 = vmatprep.subr.mxu0 0.0
          %1410 = vmatpush1.msra.mxu0 0.0
          %1411 = vmatprep.subr.mxu0 0.0
          %1412 = vmatpush1.msra.mxu0 0.0
          %1413 = vmatprep.subr.mxu0 0.0
          %1414 = vmatpush1.msra.mxu0 0.0
          %1415 = vmatprep.subr.mxu0 0.0
          %1416 = vmatpush1.msra.mxu0 0.0
          %1417 = vmatprep.subr.mxu0 0.0
          %1418 = vmatpush1.msra.mxu0 0.0
          %1419 = vmatprep.subr.mxu0 0.0
          %1420 = vmatpush1.msra.mxu0 0.0
          %1421 = vmatprep.subr.mxu0 0.0
          %1422 = vmatpush1.msra.mxu0 0.0
          %1423 = vmatprep.subr.mxu0 0.0
          %1424 = vmatpush1.msra.mxu0 0.0
          %1425 = vmatprep.subr.mxu0 0.0
          %1426 = vmatpush1.msra.mxu0 0.0
          %1427 = vmatprep.subr.mxu0 0.0
          %1428 = vmatpush1.msra.mxu0 0.0
          %1429 = vmatprep.subr.mxu0 0.0
          %1430 = vmatpush1.msra.mxu0 0.0
          %1431 = vmatprep.subr.mxu0 0.0
          %1432 = vmatpush1.msra.mxu0 0.0
          %1433 = vmatprep.subr.mxu0 0.0
          %1434 = vmatpush1.msra.mxu0 0.0
          %1435 = vmatprep.subr.mxu0 0.0
          %1436 = vmatpush1.msra.mxu0 0.0
          %1437 = vmatprep.subr.mxu0 0.0
          %1438 = vmatpush1.msra.mxu0 0.0
          %1439 = vmatprep.subr.mxu0 0.0
          %1440 = vmatpush1.msra.mxu0 %v1407
          %1441 = vmatprep.subr.mxu0 0.0
          %1442 = vmatpush2.msra.mxu0 0.0
          %1443 = vmatprep.subr.mxu0 0.0
          %1444 = vmatpush2.msra.mxu0 0.0
          %1445 = vmatprep.subr.mxu0 0.0
          %1446 = vmatpush2.msra.mxu0 0.0
          %1447 = vmatprep.subr.mxu0 0.0
          %1448 = vmatpush2.msra.mxu0 0.0
          %1449 = vmatprep.subr.mxu0 0.0
          %1450 = vmatpush2.msra.mxu0 0.0
          %1451 = vmatprep.subr.mxu0 0.0
          %1452 = vmatpush2.msra.mxu0 0.0
          %1453 = vmatprep.subr.mxu0 0.0
          %1454 = vmatpush2.msra.mxu0 0.0
          %1455 = vmatprep.subr.mxu0 0.0
          %1456 = vmatpush2.msra.mxu0 0.0
          %1457 = vmatprep.subr.mxu0 0.0
          %1458 = vmatpush2.msra.mxu0 0.0
          %1459 = vmatprep.subr.mxu0 0.0
          %1460 = vmatpush2.msra.mxu0 0.0
          %1461 = vmatprep.subr.mxu0 0.0
          %1462 = vmatpush2.msra.mxu0 0.0
          %1463 = vmatprep.subr.mxu0 0.0
          %1464 = vmatpush2.msra.mxu0 0.0
          %1465 = vmatprep.subr.mxu0 0.0
          %1466 = vmatpush2.msra.mxu0 0.0
          %1467 = vmatprep.subr.mxu0 0.0
          %1468 = vmatpush2.msra.mxu0 0.0
          %1469 = vmatprep.subr.mxu0 0.0
          %1470 = vmatpush2.msra.mxu0 0.0
          %1471 = vmatprep.subr.mxu0 0.0
          %1472 = vmatpush2.msra.mxu0 0.0
          %1473 = vmatprep.mubr.f32.mxu0 0.0
          %1474 = vmatmul.mubr.f32.gmra.mxu0 %v1398
          %v1475 = vpop.f32.mrf.mxu0
          %v1476 = vadd.f32 0.0, %v1475
          %v1477 = vpop.f32.mrf.mxu0
          %1478 = vmatprep.mubr.f32.mxu0 0.0
          %1479 = vmatmul.mubr.f32.gmra.mxu0 %v1401
          %v1480 = vpop.f32.mrf.mxu0
          %v1481 = vadd.f32 0.0, %v1480
          %v1482 = vpop.f32.mrf.mxu0
          %1483 = vmatprep.mubr.f32.mxu0 0.0
          %1484 = vmatmul.mubr.f32.gmra.mxu0 %v1404
          %v1485 = vpop.f32.mrf.mxu0
          %v1486 = vadd.f32 0.0, %v1485
          %v1487 = vpop.f32.mrf.mxu0
          %1488 = vdwg.mxu0
          %v1489 = vadd.f32 %v1389, %v1476
          %v1490 = vadd.f32 %v1390, %v1481
          %v1491 = vadd.f32 %v1391, %v1486
          %v1492 = vld [vmem:[%s1089 + $0x2] sm:$0xff]
          %v1493 = vld [vmem:[%s1089 + $0xa] sm:$0xff]
          %v1494 = vld [vmem:[%s1089 + $0x12] sm:$0x1]
          %s1495 = scalar_lea.vmem %s2, 36
          %v1496 = vld [vmem:[%s1495] sm:$0xf]
          %v1498 = vsel %vm601, %v1492, 0
          %v1501 = vsel %vm601, %v1493, 0
          %v1504 = vsel %vm601, %v1494, 0
          %v1507 = vsel %vm611, %v1496, 0
          %1509 = vmatprep.subr.mxu0 0.0
          %1510 = vmatpush1.msra.mxu0 0.0
          %1511 = vmatprep.subr.mxu0 0.0
          %1512 = vmatpush1.msra.mxu0 0.0
          %1513 = vmatprep.subr.mxu0 0.0
          %1514 = vmatpush1.msra.mxu0 0.0
          %1515 = vmatprep.subr.mxu0 0.0
          %1516 = vmatpush1.msra.mxu0 0.0
          %1517 = vmatprep.subr.mxu0 0.0
          %1518 = vmatpush1.msra.mxu0 0.0
          %1519 = vmatprep.subr.mxu0 0.0
          %1520 = vmatpush1.msra.mxu0 0.0
          %1521 = vmatprep.subr.mxu0 0.0
          %1522 = vmatpush1.msra.mxu0 0.0
          %1523 = vmatprep.subr.mxu0 0.0
          %1524 = vmatpush1.msra.mxu0 0.0
          %1525 = vmatprep.subr.mxu0 0.0
          %1526 = vmatpush1.msra.mxu0 0.0
          %1527 = vmatprep.subr.mxu0 0.0
          %1528 = vmatpush1.msra.mxu0 0.0
          %1529 = vmatprep.subr.mxu0 0.0
          %1530 = vmatpush1.msra.mxu0 0.0
          %1531 = vmatprep.subr.mxu0 0.0
          %1532 = vmatpush1.msra.mxu0 0.0
          %1533 = vmatprep.subr.mxu0 0.0
          %1534 = vmatpush1.msra.mxu0 0.0
          %1535 = vmatprep.subr.mxu0 0.0
          %1536 = vmatpush1.msra.mxu0 0.0
          %1537 = vmatprep.subr.mxu0 0.0
          %1538 = vmatpush1.msra.mxu0 0.0
          %1539 = vmatprep.subr.mxu0 0.0
          %1540 = vmatpush1.msra.mxu0 %v1507
          %1541 = vmatprep.subr.mxu0 0.0
          %1542 = vmatpush2.msra.mxu0 0.0
          %1543 = vmatprep.subr.mxu0 0.0
          %1544 = vmatpush2.msra.mxu0 0.0
          %1545 = vmatprep.subr.mxu0 0.0
          %1546 = vmatpush2.msra.mxu0 0.0
          %1547 = vmatprep.subr.mxu0 0.0
          %1548 = vmatpush2.msra.mxu0 0.0
          %1549 = vmatprep.subr.mxu0 0.0
          %1550 = vmatpush2.msra.mxu0 0.0
          %1551 = vmatprep.subr.mxu0 0.0
          %1552 = vmatpush2.msra.mxu0 0.0
          %1553 = vmatprep.subr.mxu0 0.0
          %1554 = vmatpush2.msra.mxu0 0.0
          %1555 = vmatprep.subr.mxu0 0.0
          %1556 = vmatpush2.msra.mxu0 0.0
          %1557 = vmatprep.subr.mxu0 0.0
          %1558 = vmatpush2.msra.mxu0 0.0
          %1559 = vmatprep.subr.mxu0 0.0
          %1560 = vmatpush2.msra.mxu0 0.0
          %1561 = vmatprep.subr.mxu0 0.0
          %1562 = vmatpush2.msra.mxu0 0.0
          %1563 = vmatprep.subr.mxu0 0.0
          %1564 = vmatpush2.msra.mxu0 0.0
          %1565 = vmatprep.subr.mxu0 0.0
          %1566 = vmatpush2.msra.mxu0 0.0
          %1567 = vmatprep.subr.mxu0 0.0
          %1568 = vmatpush2.msra.mxu0 0.0
          %1569 = vmatprep.subr.mxu0 0.0
          %1570 = vmatpush2.msra.mxu0 0.0
          %1571 = vmatprep.subr.mxu0 0.0
          %1572 = vmatpush2.msra.mxu0 0.0
          %1573 = vmatprep.mubr.f32.mxu0 0.0
          %1574 = vmatmul.mubr.f32.gmra.mxu0 %v1498
          %v1575 = vpop.f32.mrf.mxu0
          %v1576 = vadd.f32 0.0, %v1575
          %v1577 = vpop.f32.mrf.mxu0
          %1578 = vmatprep.mubr.f32.mxu0 0.0
          %1579 = vmatmul.mubr.f32.gmra.mxu0 %v1501
          %v1580 = vpop.f32.mrf.mxu0
          %v1581 = vadd.f32 0.0, %v1580
          %v1582 = vpop.f32.mrf.mxu0
          %1583 = vmatprep.mubr.f32.mxu0 0.0
          %1584 = vmatmul.mubr.f32.gmra.mxu0 %v1504
          %v1585 = vpop.f32.mrf.mxu0
          %v1586 = vadd.f32 0.0, %v1585
          %v1587 = vpop.f32.mrf.mxu0
          %1588 = vdwg.mxu0
          %v1589 = vadd.f32 %v1489, %v1576
          %v1590 = vadd.f32 %v1490, %v1581
          %v1591 = vadd.f32 %v1491, %v1586
          %s1592 = sadd.s32 %s587, 2
          %s1593 = smul.u32 %s1592, 24
          %s1594 = scalar_lea.vmem %s556, %s1593
          %v1595 = vld [vmem:[%s1594] sm:$0xff]
          %v1596 = vld [vmem:[%s1594 + $0x8] sm:$0xff]
          %v1597 = vld [vmem:[%s1594 + $0x10] sm:$0x1]
          %s1598 = scalar_lea.vmem %s2, 40
          %v1599 = vld [vmem:[%s1598] sm:$0xf]
          %v1601 = vsel %vm601, %v1595, 0
          %v1604 = vsel %vm601, %v1596, 0
          %v1607 = vsel %vm601, %v1597, 0
          %v1610 = vsel %vm611, %v1599, 0
          %1612 = vmatprep.subr.mxu0 0.0
          %1613 = vmatpush1.msra.mxu0 0.0
          %1614 = vmatprep.subr.mxu0 0.0
          %1615 = vmatpush1.msra.mxu0 0.0
          %1616 = vmatprep.subr.mxu0 0.0
          %1617 = vmatpush1.msra.mxu0 0.0
          %1618 = vmatprep.subr.mxu0 0.0
          %1619 = vmatpush1.msra.mxu0 0.0
          %1620 = vmatprep.subr.mxu0 0.0
          %1621 = vmatpush1.msra.mxu0 0.0
          %1622 = vmatprep.subr.mxu0 0.0
          %1623 = vmatpush1.msra.mxu0 0.0
          %1624 = vmatprep.subr.mxu0 0.0
          %1625 = vmatpush1.msra.mxu0 0.0
          %1626 = vmatprep.subr.mxu0 0.0
          %1627 = vmatpush1.msra.mxu0 0.0
          %1628 = vmatprep.subr.mxu0 0.0
          %1629 = vmatpush1.msra.mxu0 0.0
          %1630 = vmatprep.subr.mxu0 0.0
          %1631 = vmatpush1.msra.mxu0 0.0
          %1632 = vmatprep.subr.mxu0 0.0
          %1633 = vmatpush1.msra.mxu0 0.0
          %1634 = vmatprep.subr.mxu0 0.0
          %1635 = vmatpush1.msra.mxu0 0.0
          %1636 = vmatprep.subr.mxu0 0.0
          %1637 = vmatpush1.msra.mxu0 0.0
          %1638 = vmatprep.subr.mxu0 0.0
          %1639 = vmatpush1.msra.mxu0 0.0
          %1640 = vmatprep.subr.mxu0 0.0
          %1641 = vmatpush1.msra.mxu0 0.0
          %1642 = vmatprep.subr.mxu0 0.0
          %1643 = vmatpush1.msra.mxu0 %v1610
          %1644 = vmatprep.subr.mxu0 0.0
          %1645 = vmatpush2.msra.mxu0 0.0
          %1646 = vmatprep.subr.mxu0 0.0
          %1647 = vmatpush2.msra.mxu0 0.0
          %1648 = vmatprep.subr.mxu0 0.0
          %1649 = vmatpush2.msra.mxu0 0.0
          %1650 = vmatprep.subr.mxu0 0.0
          %1651 = vmatpush2.msra.mxu0 0.0
          %1652 = vmatprep.subr.mxu0 0.0
          %1653 = vmatpush2.msra.mxu0 0.0
          %1654 = vmatprep.subr.mxu0 0.0
          %1655 = vmatpush2.msra.mxu0 0.0
          %1656 = vmatprep.subr.mxu0 0.0
          %1657 = vmatpush2.msra.mxu0 0.0
          %1658 = vmatprep.subr.mxu0 0.0
          %1659 = vmatpush2.msra.mxu0 0.0
          %1660 = vmatprep.subr.mxu0 0.0
          %1661 = vmatpush2.msra.mxu0 0.0
          %1662 = vmatprep.subr.mxu0 0.0
          %1663 = vmatpush2.msra.mxu0 0.0
          %1664 = vmatprep.subr.mxu0 0.0
          %1665 = vmatpush2.msra.mxu0 0.0
          %1666 = vmatprep.subr.mxu0 0.0
          %1667 = vmatpush2.msra.mxu0 0.0
          %1668 = vmatprep.subr.mxu0 0.0
          %1669 = vmatpush2.msra.mxu0 0.0
          %1670 = vmatprep.subr.mxu0 0.0
          %1671 = vmatpush2.msra.mxu0 0.0
          %1672 = vmatprep.subr.mxu0 0.0
          %1673 = vmatpush2.msra.mxu0 0.0
          %1674 = vmatprep.subr.mxu0 0.0
          %1675 = vmatpush2.msra.mxu0 0.0
          %1676 = vmatprep.mubr.f32.mxu0 0.0
          %1677 = vmatmul.mubr.f32.gmra.mxu0 %v1601
          %v1678 = vpop.f32.mrf.mxu0
          %v1679 = vadd.f32 0.0, %v1678
          %v1680 = vpop.f32.mrf.mxu0
          %1681 = vmatprep.mubr.f32.mxu0 0.0
          %1682 = vmatmul.mubr.f32.gmra.mxu0 %v1604
          %v1683 = vpop.f32.mrf.mxu0
          %v1684 = vadd.f32 0.0, %v1683
          %v1685 = vpop.f32.mrf.mxu0
          %1686 = vmatprep.mubr.f32.mxu0 0.0
          %1687 = vmatmul.mubr.f32.gmra.mxu0 %v1607
          %v1688 = vpop.f32.mrf.mxu0
          %v1689 = vadd.f32 0.0, %v1688
          %v1690 = vpop.f32.mrf.mxu0
          %1691 = vdwg.mxu0
          %v1692 = vadd.f32 %v1589, %v1679
          %v1693 = vadd.f32 %v1590, %v1684
          %v1694 = vadd.f32 %v1591, %v1689
          %s1695 = sadd.s32 %s1593, 888
          %s1696 = scalar_lea.vmem %s556, %s1695
          %v1697 = vld [vmem:[%s1696] sm:$0xff]
          %v1698 = vld [vmem:[%s1696 + $0x8] sm:$0xff]
          %v1699 = vld [vmem:[%s1696 + $0x10] sm:$0x1]
          %s1700 = scalar_lea.vmem %s2, 44
          %v1701 = vld [vmem:[%s1700] sm:$0xf]
          %v1703 = vsel %vm601, %v1697, 0
          %v1706 = vsel %vm601, %v1698, 0
          %v1709 = vsel %vm601, %v1699, 0
          %v1712 = vsel %vm611, %v1701, 0
          %1714 = vmatprep.subr.mxu0 0.0
          %1715 = vmatpush1.msra.mxu0 0.0
          %1716 = vmatprep.subr.mxu0 0.0
          %1717 = vmatpush1.msra.mxu0 0.0
          %1718 = vmatprep.subr.mxu0 0.0
          %1719 = vmatpush1.msra.mxu0 0.0
          %1720 = vmatprep.subr.mxu0 0.0
          %1721 = vmatpush1.msra.mxu0 0.0
          %1722 = vmatprep.subr.mxu0 0.0
          %1723 = vmatpush1.msra.mxu0 0.0
          %1724 = vmatprep.subr.mxu0 0.0
          %1725 = vmatpush1.msra.mxu0 0.0
          %1726 = vmatprep.subr.mxu0 0.0
          %1727 = vmatpush1.msra.mxu0 0.0
          %1728 = vmatprep.subr.mxu0 0.0
          %1729 = vmatpush1.msra.mxu0 0.0
          %1730 = vmatprep.subr.mxu0 0.0
          %1731 = vmatpush1.msra.mxu0 0.0
          %1732 = vmatprep.subr.mxu0 0.0
          %1733 = vmatpush1.msra.mxu0 0.0
          %1734 = vmatprep.subr.mxu0 0.0
          %1735 = vmatpush1.msra.mxu0 0.0
          %1736 = vmatprep.subr.mxu0 0.0
          %1737 = vmatpush1.msra.mxu0 0.0
          %1738 = vmatprep.subr.mxu0 0.0
          %1739 = vmatpush1.msra.mxu0 0.0
          %1740 = vmatprep.subr.mxu0 0.0
          %1741 = vmatpush1.msra.mxu0 0.0
          %1742 = vmatprep.subr.mxu0 0.0
          %1743 = vmatpush1.msra.mxu0 0.0
          %1744 = vmatprep.subr.mxu0 0.0
          %1745 = vmatpush1.msra.mxu0 %v1712
          %1746 = vmatprep.subr.mxu0 0.0
          %1747 = vmatpush2.msra.mxu0 0.0
          %1748 = vmatprep.subr.mxu0 0.0
          %1749 = vmatpush2.msra.mxu0 0.0
          %1750 = vmatprep.subr.mxu0 0.0
          %1751 = vmatpush2.msra.mxu0 0.0
          %1752 = vmatprep.subr.mxu0 0.0
          %1753 = vmatpush2.msra.mxu0 0.0
          %1754 = vmatprep.subr.mxu0 0.0
          %1755 = vmatpush2.msra.mxu0 0.0
          %1756 = vmatprep.subr.mxu0 0.0
          %1757 = vmatpush2.msra.mxu0 0.0
          %1758 = vmatprep.subr.mxu0 0.0
          %1759 = vmatpush2.msra.mxu0 0.0
          %1760 = vmatprep.subr.mxu0 0.0
          %1761 = vmatpush2.msra.mxu0 0.0
          %1762 = vmatprep.subr.mxu0 0.0
          %1763 = vmatpush2.msra.mxu0 0.0
          %1764 = vmatprep.subr.mxu0 0.0
          %1765 = vmatpush2.msra.mxu0 0.0
          %1766 = vmatprep.subr.mxu0 0.0
          %1767 = vmatpush2.msra.mxu0 0.0
          %1768 = vmatprep.subr.mxu0 0.0
          %1769 = vmatpush2.msra.mxu0 0.0
          %1770 = vmatprep.subr.mxu0 0.0
          %1771 = vmatpush2.msra.mxu0 0.0
          %1772 = vmatprep.subr.mxu0 0.0
          %1773 = vmatpush2.msra.mxu0 0.0
          %1774 = vmatprep.subr.mxu0 0.0
          %1775 = vmatpush2.msra.mxu0 0.0
          %1776 = vmatprep.subr.mxu0 0.0
          %1777 = vmatpush2.msra.mxu0 0.0
          %1778 = vmatprep.mubr.f32.mxu0 0.0
          %1779 = vmatmul.mubr.f32.gmra.mxu0 %v1703
          %v1780 = vpop.f32.mrf.mxu0
          %v1781 = vadd.f32 0.0, %v1780
          %v1782 = vpop.f32.mrf.mxu0
          %1783 = vmatprep.mubr.f32.mxu0 0.0
          %1784 = vmatmul.mubr.f32.gmra.mxu0 %v1706
          %v1785 = vpop.f32.mrf.mxu0
          %v1786 = vadd.f32 0.0, %v1785
          %v1787 = vpop.f32.mrf.mxu0
          %1788 = vmatprep.mubr.f32.mxu0 0.0
          %1789 = vmatmul.mubr.f32.gmra.mxu0 %v1709
          %v1790 = vpop.f32.mrf.mxu0
          %v1791 = vadd.f32 0.0, %v1790
          %v1792 = vpop.f32.mrf.mxu0
          %1793 = vdwg.mxu0
          %v1794 = vadd.f32 %v1692, %v1781
          %v1795 = vadd.f32 %v1693, %v1786
          %v1796 = vadd.f32 %v1694, %v1791
          %v1797 = vld [vmem:[%s1594 + $0x1] sm:$0xff]
          %v1798 = vld [vmem:[%s1594 + $0x9] sm:$0xff]
          %v1799 = vld [vmem:[%s1594 + $0x11] sm:$0x1]
          %s1800 = scalar_lea.vmem %s2, 48
          %v1801 = vld [vmem:[%s1800] sm:$0xf]
          %v1803 = vsel %vm601, %v1797, 0
          %v1806 = vsel %vm601, %v1798, 0
          %v1809 = vsel %vm601, %v1799, 0
          %v1812 = vsel %vm611, %v1801, 0
          %1814 = vmatprep.subr.mxu0 0.0
          %1815 = vmatpush1.msra.mxu0 0.0
          %1816 = vmatprep.subr.mxu0 0.0
          %1817 = vmatpush1.msra.mxu0 0.0
          %1818 = vmatprep.subr.mxu0 0.0
          %1819 = vmatpush1.msra.mxu0 0.0
          %1820 = vmatprep.subr.mxu0 0.0
          %1821 = vmatpush1.msra.mxu0 0.0
          %1822 = vmatprep.subr.mxu0 0.0
          %1823 = vmatpush1.msra.mxu0 0.0
          %1824 = vmatprep.subr.mxu0 0.0
          %1825 = vmatpush1.msra.mxu0 0.0
          %1826 = vmatprep.subr.mxu0 0.0
          %1827 = vmatpush1.msra.mxu0 0.0
          %1828 = vmatprep.subr.mxu0 0.0
          %1829 = vmatpush1.msra.mxu0 0.0
          %1830 = vmatprep.subr.mxu0 0.0
          %1831 = vmatpush1.msra.mxu0 0.0
          %1832 = vmatprep.subr.mxu0 0.0
          %1833 = vmatpush1.msra.mxu0 0.0
          %1834 = vmatprep.subr.mxu0 0.0
          %1835 = vmatpush1.msra.mxu0 0.0
          %1836 = vmatprep.subr.mxu0 0.0
          %1837 = vmatpush1.msra.mxu0 0.0
          %1838 = vmatprep.subr.mxu0 0.0
          %1839 = vmatpush1.msra.mxu0 0.0
          %1840 = vmatprep.subr.mxu0 0.0
          %1841 = vmatpush1.msra.mxu0 0.0
          %1842 = vmatprep.subr.mxu0 0.0
          %1843 = vmatpush1.msra.mxu0 0.0
          %1844 = vmatprep.subr.mxu0 0.0
          %1845 = vmatpush1.msra.mxu0 %v1812
          %1846 = vmatprep.subr.mxu0 0.0
          %1847 = vmatpush2.msra.mxu0 0.0
          %1848 = vmatprep.subr.mxu0 0.0
          %1849 = vmatpush2.msra.mxu0 0.0
          %1850 = vmatprep.subr.mxu0 0.0
          %1851 = vmatpush2.msra.mxu0 0.0
          %1852 = vmatprep.subr.mxu0 0.0
          %1853 = vmatpush2.msra.mxu0 0.0
          %1854 = vmatprep.subr.mxu0 0.0
          %1855 = vmatpush2.msra.mxu0 0.0
          %1856 = vmatprep.subr.mxu0 0.0
          %1857 = vmatpush2.msra.mxu0 0.0
          %1858 = vmatprep.subr.mxu0 0.0
          %1859 = vmatpush2.msra.mxu0 0.0
          %1860 = vmatprep.subr.mxu0 0.0
          %1861 = vmatpush2.msra.mxu0 0.0
          %1862 = vmatprep.subr.mxu0 0.0
          %1863 = vmatpush2.msra.mxu0 0.0
          %1864 = vmatprep.subr.mxu0 0.0
          %1865 = vmatpush2.msra.mxu0 0.0
          %1866 = vmatprep.subr.mxu0 0.0
          %1867 = vmatpush2.msra.mxu0 0.0
          %1868 = vmatprep.subr.mxu0 0.0
          %1869 = vmatpush2.msra.mxu0 0.0
          %1870 = vmatprep.subr.mxu0 0.0
          %1871 = vmatpush2.msra.mxu0 0.0
          %1872 = vmatprep.subr.mxu0 0.0
          %1873 = vmatpush2.msra.mxu0 0.0
          %1874 = vmatprep.subr.mxu0 0.0
          %1875 = vmatpush2.msra.mxu0 0.0
          %1876 = vmatprep.subr.mxu0 0.0
          %1877 = vmatpush2.msra.mxu0 0.0
          %1878 = vmatprep.mubr.f32.mxu0 0.0
          %1879 = vmatmul.mubr.f32.gmra.mxu0 %v1803
          %v1880 = vpop.f32.mrf.mxu0
          %v1881 = vadd.f32 0.0, %v1880
          %v1882 = vpop.f32.mrf.mxu0
          %1883 = vmatprep.mubr.f32.mxu0 0.0
          %1884 = vmatmul.mubr.f32.gmra.mxu0 %v1806
          %v1885 = vpop.f32.mrf.mxu0
          %v1886 = vadd.f32 0.0, %v1885
          %v1887 = vpop.f32.mrf.mxu0
          %1888 = vmatprep.mubr.f32.mxu0 0.0
          %1889 = vmatmul.mubr.f32.gmra.mxu0 %v1809
          %v1890 = vpop.f32.mrf.mxu0
          %v1891 = vadd.f32 0.0, %v1890
          %v1892 = vpop.f32.mrf.mxu0
          %1893 = vdwg.mxu0
          %v1894 = vadd.f32 %v1794, %v1881
          %v1895 = vadd.f32 %v1795, %v1886
          %v1896 = vadd.f32 %v1796, %v1891
          %v1897 = vld [vmem:[%s1696 + $0x1] sm:$0xff]
          %v1898 = vld [vmem:[%s1696 + $0x9] sm:$0xff]
          %v1899 = vld [vmem:[%s1696 + $0x11] sm:$0x1]
          %s1900 = scalar_lea.vmem %s2, 52
          %v1901 = vld [vmem:[%s1900] sm:$0xf]
          %v1903 = vsel %vm601, %v1897, 0
          %v1906 = vsel %vm601, %v1898, 0
          %v1909 = vsel %vm601, %v1899, 0
          %v1912 = vsel %vm611, %v1901, 0
          %1914 = vmatprep.subr.mxu0 0.0
          %1915 = vmatpush1.msra.mxu0 0.0
          %1916 = vmatprep.subr.mxu0 0.0
          %1917 = vmatpush1.msra.mxu0 0.0
          %1918 = vmatprep.subr.mxu0 0.0
          %1919 = vmatpush1.msra.mxu0 0.0
          %1920 = vmatprep.subr.mxu0 0.0
          %1921 = vmatpush1.msra.mxu0 0.0
          %1922 = vmatprep.subr.mxu0 0.0
          %1923 = vmatpush1.msra.mxu0 0.0
          %1924 = vmatprep.subr.mxu0 0.0
          %1925 = vmatpush1.msra.mxu0 0.0
          %1926 = vmatprep.subr.mxu0 0.0
          %1927 = vmatpush1.msra.mxu0 0.0
          %1928 = vmatprep.subr.mxu0 0.0
          %1929 = vmatpush1.msra.mxu0 0.0
          %1930 = vmatprep.subr.mxu0 0.0
          %1931 = vmatpush1.msra.mxu0 0.0
          %1932 = vmatprep.subr.mxu0 0.0
          %1933 = vmatpush1.msra.mxu0 0.0
          %1934 = vmatprep.subr.mxu0 0.0
          %1935 = vmatpush1.msra.mxu0 0.0
          %1936 = vmatprep.subr.mxu0 0.0
          %1937 = vmatpush1.msra.mxu0 0.0
          %1938 = vmatprep.subr.mxu0 0.0
          %1939 = vmatpush1.msra.mxu0 0.0
          %1940 = vmatprep.subr.mxu0 0.0
          %1941 = vmatpush1.msra.mxu0 0.0
          %1942 = vmatprep.subr.mxu0 0.0
          %1943 = vmatpush1.msra.mxu0 0.0
          %1944 = vmatprep.subr.mxu0 0.0
          %1945 = vmatpush1.msra.mxu0 %v1912
          %1946 = vmatprep.subr.mxu0 0.0
          %1947 = vmatpush2.msra.mxu0 0.0
          %1948 = vmatprep.subr.mxu0 0.0
          %1949 = vmatpush2.msra.mxu0 0.0
          %1950 = vmatprep.subr.mxu0 0.0
          %1951 = vmatpush2.msra.mxu0 0.0
          %1952 = vmatprep.subr.mxu0 0.0
          %1953 = vmatpush2.msra.mxu0 0.0
          %1954 = vmatprep.subr.mxu0 0.0
          %1955 = vmatpush2.msra.mxu0 0.0
          %1956 = vmatprep.subr.mxu0 0.0
          %1957 = vmatpush2.msra.mxu0 0.0
          %1958 = vmatprep.subr.mxu0 0.0
          %1959 = vmatpush2.msra.mxu0 0.0
          %1960 = vmatprep.subr.mxu0 0.0
          %1961 = vmatpush2.msra.mxu0 0.0
          %1962 = vmatprep.subr.mxu0 0.0
          %1963 = vmatpush2.msra.mxu0 0.0
          %1964 = vmatprep.subr.mxu0 0.0
          %1965 = vmatpush2.msra.mxu0 0.0
          %1966 = vmatprep.subr.mxu0 0.0
          %1967 = vmatpush2.msra.mxu0 0.0
          %1968 = vmatprep.subr.mxu0 0.0
          %1969 = vmatpush2.msra.mxu0 0.0
          %1970 = vmatprep.subr.mxu0 0.0
          %1971 = vmatpush2.msra.mxu0 0.0
          %1972 = vmatprep.subr.mxu0 0.0
          %1973 = vmatpush2.msra.mxu0 0.0
          %1974 = vmatprep.subr.mxu0 0.0
          %1975 = vmatpush2.msra.mxu0 0.0
          %1976 = vmatprep.subr.mxu0 0.0
          %1977 = vmatpush2.msra.mxu0 0.0
          %1978 = vmatprep.mubr.f32.mxu0 0.0
          %1979 = vmatmul.mubr.f32.gmra.mxu0 %v1903
          %v1980 = vpop.f32.mrf.mxu0
          %v1981 = vadd.f32 0.0, %v1980
          %v1982 = vpop.f32.mrf.mxu0
          %1983 = vmatprep.mubr.f32.mxu0 0.0
          %1984 = vmatmul.mubr.f32.gmra.mxu0 %v1906
          %v1985 = vpop.f32.mrf.mxu0
          %v1986 = vadd.f32 0.0, %v1985
          %v1987 = vpop.f32.mrf.mxu0
          %1988 = vmatprep.mubr.f32.mxu0 0.0
          %1989 = vmatmul.mubr.f32.gmra.mxu0 %v1909
          %v1990 = vpop.f32.mrf.mxu0
          %v1991 = vadd.f32 0.0, %v1990
          %v1992 = vpop.f32.mrf.mxu0
          %1993 = vdwg.mxu0
          %v1994 = vadd.f32 %v1894, %v1981
          %v1995 = vadd.f32 %v1895, %v1986
          %v1996 = vadd.f32 %v1896, %v1991
          %v1997 = vld [vmem:[%s1594 + $0x2] sm:$0xff]
          %v1998 = vld [vmem:[%s1594 + $0xa] sm:$0xff]
          %v1999 = vld [vmem:[%s1594 + $0x12] sm:$0x1]
          %s2000 = scalar_lea.vmem %s2, 56
          %v2001 = vld [vmem:[%s2000] sm:$0xf]
          %v2003 = vsel %vm601, %v1997, 0
          %v2006 = vsel %vm601, %v1998, 0
          %v2009 = vsel %vm601, %v1999, 0
          %v2012 = vsel %vm611, %v2001, 0
          %2014 = vmatprep.subr.mxu0 0.0
          %2015 = vmatpush1.msra.mxu0 0.0
          %2016 = vmatprep.subr.mxu0 0.0
          %2017 = vmatpush1.msra.mxu0 0.0
          %2018 = vmatprep.subr.mxu0 0.0
          %2019 = vmatpush1.msra.mxu0 0.0
          %2020 = vmatprep.subr.mxu0 0.0
          %2021 = vmatpush1.msra.mxu0 0.0
          %2022 = vmatprep.subr.mxu0 0.0
          %2023 = vmatpush1.msra.mxu0 0.0
          %2024 = vmatprep.subr.mxu0 0.0
          %2025 = vmatpush1.msra.mxu0 0.0
          %2026 = vmatprep.subr.mxu0 0.0
          %2027 = vmatpush1.msra.mxu0 0.0
          %2028 = vmatprep.subr.mxu0 0.0
          %2029 = vmatpush1.msra.mxu0 0.0
          %2030 = vmatprep.subr.mxu0 0.0
          %2031 = vmatpush1.msra.mxu0 0.0
          %2032 = vmatprep.subr.mxu0 0.0
          %2033 = vmatpush1.msra.mxu0 0.0
          %2034 = vmatprep.subr.mxu0 0.0
          %2035 = vmatpush1.msra.mxu0 0.0
          %2036 = vmatprep.subr.mxu0 0.0
          %2037 = vmatpush1.msra.mxu0 0.0
          %2038 = vmatprep.subr.mxu0 0.0
          %2039 = vmatpush1.msra.mxu0 0.0
          %2040 = vmatprep.subr.mxu0 0.0
          %2041 = vmatpush1.msra.mxu0 0.0
          %2042 = vmatprep.subr.mxu0 0.0
          %2043 = vmatpush1.msra.mxu0 0.0
          %2044 = vmatprep.subr.mxu0 0.0
          %2045 = vmatpush1.msra.mxu0 %v2012
          %2046 = vmatprep.subr.mxu0 0.0
          %2047 = vmatpush2.msra.mxu0 0.0
          %2048 = vmatprep.subr.mxu0 0.0
          %2049 = vmatpush2.msra.mxu0 0.0
          %2050 = vmatprep.subr.mxu0 0.0
          %2051 = vmatpush2.msra.mxu0 0.0
          %2052 = vmatprep.subr.mxu0 0.0
          %2053 = vmatpush2.msra.mxu0 0.0
          %2054 = vmatprep.subr.mxu0 0.0
          %2055 = vmatpush2.msra.mxu0 0.0
          %2056 = vmatprep.subr.mxu0 0.0
          %2057 = vmatpush2.msra.mxu0 0.0
          %2058 = vmatprep.subr.mxu0 0.0
          %2059 = vmatpush2.msra.mxu0 0.0
          %2060 = vmatprep.subr.mxu0 0.0
          %2061 = vmatpush2.msra.mxu0 0.0
          %2062 = vmatprep.subr.mxu0 0.0
          %2063 = vmatpush2.msra.mxu0 0.0
          %2064 = vmatprep.subr.mxu0 0.0
          %2065 = vmatpush2.msra.mxu0 0.0
          %2066 = vmatprep.subr.mxu0 0.0
          %2067 = vmatpush2.msra.mxu0 0.0
          %2068 = vmatprep.subr.mxu0 0.0
          %2069 = vmatpush2.msra.mxu0 0.0
          %2070 = vmatprep.subr.mxu0 0.0
          %2071 = vmatpush2.msra.mxu0 0.0
          %2072 = vmatprep.subr.mxu0 0.0
          %2073 = vmatpush2.msra.mxu0 0.0
          %2074 = vmatprep.subr.mxu0 0.0
          %2075 = vmatpush2.msra.mxu0 0.0
          %2076 = vmatprep.subr.mxu0 0.0
          %2077 = vmatpush2.msra.mxu0 0.0
          %2078 = vmatprep.mubr.f32.mxu0 0.0
          %2079 = vmatmul.mubr.f32.gmra.mxu0 %v2003
          %v2080 = vpop.f32.mrf.mxu0
          %v2081 = vadd.f32 0.0, %v2080
          %v2082 = vpop.f32.mrf.mxu0
          %2083 = vmatprep.mubr.f32.mxu0 0.0
          %2084 = vmatmul.mubr.f32.gmra.mxu0 %v2006
          %v2085 = vpop.f32.mrf.mxu0
          %v2086 = vadd.f32 0.0, %v2085
          %v2087 = vpop.f32.mrf.mxu0
          %2088 = vmatprep.mubr.f32.mxu0 0.0
          %2089 = vmatmul.mubr.f32.gmra.mxu0 %v2009
          %v2090 = vpop.f32.mrf.mxu0
          %v2091 = vadd.f32 0.0, %v2090
          %v2092 = vpop.f32.mrf.mxu0
          %2093 = vdwg.mxu0
          %v2094 = vadd.f32 %v1994, %v2081
          %v2095 = vadd.f32 %v1995, %v2086
          %v2096 = vadd.f32 %v1996, %v2091
          %s2097 = sadd.s32 %s587, 3
          %s2098 = smul.u32 %s2097, 24
          %s2099 = scalar_lea.vmem %s556, %s2098
          %v2100 = vld [vmem:[%s2099] sm:$0xff]
          %v2101 = vld [vmem:[%s2099 + $0x8] sm:$0xff]
          %v2102 = vld [vmem:[%s2099 + $0x10] sm:$0x1]
          %s2103 = scalar_lea.vmem %s2, 60
          %v2104 = vld [vmem:[%s2103] sm:$0xf]
          %v2106 = vsel %vm601, %v2100, 0
          %v2109 = vsel %vm601, %v2101, 0
          %v2112 = vsel %vm601, %v2102, 0
          %v2115 = vsel %vm611, %v2104, 0
          %2117 = vmatprep.subr.mxu0 0.0
          %2118 = vmatpush1.msra.mxu0 0.0
          %2119 = vmatprep.subr.mxu0 0.0
          %2120 = vmatpush1.msra.mxu0 0.0
          %2121 = vmatprep.subr.mxu0 0.0
          %2122 = vmatpush1.msra.mxu0 0.0
          %2123 = vmatprep.subr.mxu0 0.0
          %2124 = vmatpush1.msra.mxu0 0.0
          %2125 = vmatprep.subr.mxu0 0.0
          %2126 = vmatpush1.msra.mxu0 0.0
          %2127 = vmatprep.subr.mxu0 0.0
          %2128 = vmatpush1.msra.mxu0 0.0
          %2129 = vmatprep.subr.mxu0 0.0
          %2130 = vmatpush1.msra.mxu0 0.0
          %2131 = vmatprep.subr.mxu0 0.0
          %2132 = vmatpush1.msra.mxu0 0.0
          %2133 = vmatprep.subr.mxu0 0.0
          %2134 = vmatpush1.msra.mxu0 0.0
          %2135 = vmatprep.subr.mxu0 0.0
          %2136 = vmatpush1.msra.mxu0 0.0
          %2137 = vmatprep.subr.mxu0 0.0
          %2138 = vmatpush1.msra.mxu0 0.0
          %2139 = vmatprep.subr.mxu0 0.0
          %2140 = vmatpush1.msra.mxu0 0.0
          %2141 = vmatprep.subr.mxu0 0.0
          %2142 = vmatpush1.msra.mxu0 0.0
          %2143 = vmatprep.subr.mxu0 0.0
          %2144 = vmatpush1.msra.mxu0 0.0
          %2145 = vmatprep.subr.mxu0 0.0
          %2146 = vmatpush1.msra.mxu0 0.0
          %2147 = vmatprep.subr.mxu0 0.0
          %2148 = vmatpush1.msra.mxu0 %v2115
          %2149 = vmatprep.subr.mxu0 0.0
          %2150 = vmatpush2.msra.mxu0 0.0
          %2151 = vmatprep.subr.mxu0 0.0
          %2152 = vmatpush2.msra.mxu0 0.0
          %2153 = vmatprep.subr.mxu0 0.0
          %2154 = vmatpush2.msra.mxu0 0.0
          %2155 = vmatprep.subr.mxu0 0.0
          %2156 = vmatpush2.msra.mxu0 0.0
          %2157 = vmatprep.subr.mxu0 0.0
          %2158 = vmatpush2.msra.mxu0 0.0
          %2159 = vmatprep.subr.mxu0 0.0
          %2160 = vmatpush2.msra.mxu0 0.0
          %2161 = vmatprep.subr.mxu0 0.0
          %2162 = vmatpush2.msra.mxu0 0.0
          %2163 = vmatprep.subr.mxu0 0.0
          %2164 = vmatpush2.msra.mxu0 0.0
          %2165 = vmatprep.subr.mxu0 0.0
          %2166 = vmatpush2.msra.mxu0 0.0
          %2167 = vmatprep.subr.mxu0 0.0
          %2168 = vmatpush2.msra.mxu0 0.0
          %2169 = vmatprep.subr.mxu0 0.0
          %2170 = vmatpush2.msra.mxu0 0.0
          %2171 = vmatprep.subr.mxu0 0.0
          %2172 = vmatpush2.msra.mxu0 0.0
          %2173 = vmatprep.subr.mxu0 0.0
          %2174 = vmatpush2.msra.mxu0 0.0
          %2175 = vmatprep.subr.mxu0 0.0
          %2176 = vmatpush2.msra.mxu0 0.0
          %2177 = vmatprep.subr.mxu0 0.0
          %2178 = vmatpush2.msra.mxu0 0.0
          %2179 = vmatprep.subr.mxu0 0.0
          %2180 = vmatpush2.msra.mxu0 0.0
          %2181 = vmatprep.mubr.f32.mxu0 0.0
          %2182 = vmatmul.mubr.f32.gmra.mxu0 %v2106
          %v2183 = vpop.f32.mrf.mxu0
          %v2184 = vadd.f32 0.0, %v2183
          %v2185 = vpop.f32.mrf.mxu0
          %2186 = vmatprep.mubr.f32.mxu0 0.0
          %2187 = vmatmul.mubr.f32.gmra.mxu0 %v2109
          %v2188 = vpop.f32.mrf.mxu0
          %v2189 = vadd.f32 0.0, %v2188
          %v2190 = vpop.f32.mrf.mxu0
          %2191 = vmatprep.mubr.f32.mxu0 0.0
          %2192 = vmatmul.mubr.f32.gmra.mxu0 %v2112
          %v2193 = vpop.f32.mrf.mxu0
          %v2194 = vadd.f32 0.0, %v2193
          %v2195 = vpop.f32.mrf.mxu0
          %2196 = vdwg.mxu0
          %v2197 = vadd.f32 %v2094, %v2184
          %v2198 = vadd.f32 %v2095, %v2189
          %v2199 = vadd.f32 %v2096, %v2194
          %s2200 = sadd.s32 %s2098, 888
          %s2201 = scalar_lea.vmem %s556, %s2200
          %v2202 = vld [vmem:[%s2201] sm:$0xff]
          %v2203 = vld [vmem:[%s2201 + $0x8] sm:$0xff]
          %v2204 = vld [vmem:[%s2201 + $0x10] sm:$0x1]
          %s2205 = scalar_lea.vmem %s2, 64
          %v2206 = vld [vmem:[%s2205] sm:$0xf]
          %v2208 = vsel %vm601, %v2202, 0
          %v2211 = vsel %vm601, %v2203, 0
          %v2214 = vsel %vm601, %v2204, 0
          %v2217 = vsel %vm611, %v2206, 0
          %2219 = vmatprep.subr.mxu0 0.0
          %2220 = vmatpush1.msra.mxu0 0.0
          %2221 = vmatprep.subr.mxu0 0.0
          %2222 = vmatpush1.msra.mxu0 0.0
          %2223 = vmatprep.subr.mxu0 0.0
          %2224 = vmatpush1.msra.mxu0 0.0
          %2225 = vmatprep.subr.mxu0 0.0
          %2226 = vmatpush1.msra.mxu0 0.0
          %2227 = vmatprep.subr.mxu0 0.0
          %2228 = vmatpush1.msra.mxu0 0.0
          %2229 = vmatprep.subr.mxu0 0.0
          %2230 = vmatpush1.msra.mxu0 0.0
          %2231 = vmatprep.subr.mxu0 0.0
          %2232 = vmatpush1.msra.mxu0 0.0
          %2233 = vmatprep.subr.mxu0 0.0
          %2234 = vmatpush1.msra.mxu0 0.0
          %2235 = vmatprep.subr.mxu0 0.0
          %2236 = vmatpush1.msra.mxu0 0.0
          %2237 = vmatprep.subr.mxu0 0.0
          %2238 = vmatpush1.msra.mxu0 0.0
          %2239 = vmatprep.subr.mxu0 0.0
          %2240 = vmatpush1.msra.mxu0 0.0
          %2241 = vmatprep.subr.mxu0 0.0
          %2242 = vmatpush1.msra.mxu0 0.0
          %2243 = vmatprep.subr.mxu0 0.0
          %2244 = vmatpush1.msra.mxu0 0.0
          %2245 = vmatprep.subr.mxu0 0.0
          %2246 = vmatpush1.msra.mxu0 0.0
          %2247 = vmatprep.subr.mxu0 0.0
          %2248 = vmatpush1.msra.mxu0 0.0
          %2249 = vmatprep.subr.mxu0 0.0
          %2250 = vmatpush1.msra.mxu0 %v2217
          %2251 = vmatprep.subr.mxu0 0.0
          %2252 = vmatpush2.msra.mxu0 0.0
          %2253 = vmatprep.subr.mxu0 0.0
          %2254 = vmatpush2.msra.mxu0 0.0
          %2255 = vmatprep.subr.mxu0 0.0
          %2256 = vmatpush2.msra.mxu0 0.0
          %2257 = vmatprep.subr.mxu0 0.0
          %2258 = vmatpush2.msra.mxu0 0.0
          %2259 = vmatprep.subr.mxu0 0.0
          %2260 = vmatpush2.msra.mxu0 0.0
          %2261 = vmatprep.subr.mxu0 0.0
          %2262 = vmatpush2.msra.mxu0 0.0
          %2263 = vmatprep.subr.mxu0 0.0
          %2264 = vmatpush2.msra.mxu0 0.0
          %2265 = vmatprep.subr.mxu0 0.0
          %2266 = vmatpush2.msra.mxu0 0.0
          %2267 = vmatprep.subr.mxu0 0.0
          %2268 = vmatpush2.msra.mxu0 0.0
          %2269 = vmatprep.subr.mxu0 0.0
          %2270 = vmatpush2.msra.mxu0 0.0
          %2271 = vmatprep.subr.mxu0 0.0
          %2272 = vmatpush2.msra.mxu0 0.0
          %2273 = vmatprep.subr.mxu0 0.0
          %2274 = vmatpush2.msra.mxu0 0.0
          %2275 = vmatprep.subr.mxu0 0.0
          %2276 = vmatpush2.msra.mxu0 0.0
          %2277 = vmatprep.subr.mxu0 0.0
          %2278 = vmatpush2.msra.mxu0 0.0
          %2279 = vmatprep.subr.mxu0 0.0
          %2280 = vmatpush2.msra.mxu0 0.0
          %2281 = vmatprep.subr.mxu0 0.0
          %2282 = vmatpush2.msra.mxu0 0.0
          %2283 = vmatprep.mubr.f32.mxu0 0.0
          %2284 = vmatmul.mubr.f32.gmra.mxu0 %v2208
          %v2285 = vpop.f32.mrf.mxu0
          %v2286 = vadd.f32 0.0, %v2285
          %v2287 = vpop.f32.mrf.mxu0
          %2288 = vmatprep.mubr.f32.mxu0 0.0
          %2289 = vmatmul.mubr.f32.gmra.mxu0 %v2211
          %v2290 = vpop.f32.mrf.mxu0
          %v2291 = vadd.f32 0.0, %v2290
          %v2292 = vpop.f32.mrf.mxu0
          %2293 = vmatprep.mubr.f32.mxu0 0.0
          %2294 = vmatmul.mubr.f32.gmra.mxu0 %v2214
          %v2295 = vpop.f32.mrf.mxu0
          %v2296 = vadd.f32 0.0, %v2295
          %v2297 = vpop.f32.mrf.mxu0
          %2298 = vdwg.mxu0
          %v2299 = vadd.f32 %v2197, %v2286
          %v2300 = vadd.f32 %v2198, %v2291
          %v2301 = vadd.f32 %v2199, %v2296
          %v2302 = vld [vmem:[%s2099 + $0x1] sm:$0xff]
          %v2303 = vld [vmem:[%s2099 + $0x9] sm:$0xff]
          %v2304 = vld [vmem:[%s2099 + $0x11] sm:$0x1]
          %s2305 = scalar_lea.vmem %s2, 68
          %v2306 = vld [vmem:[%s2305] sm:$0xf]
          %v2308 = vsel %vm601, %v2302, 0
          %v2311 = vsel %vm601, %v2303, 0
          %v2314 = vsel %vm601, %v2304, 0
          %v2317 = vsel %vm611, %v2306, 0
          %2319 = vmatprep.subr.mxu0 0.0
          %2320 = vmatpush1.msra.mxu0 0.0
          %2321 = vmatprep.subr.mxu0 0.0
          %2322 = vmatpush1.msra.mxu0 0.0
          %2323 = vmatprep.subr.mxu0 0.0
          %2324 = vmatpush1.msra.mxu0 0.0
          %2325 = vmatprep.subr.mxu0 0.0
          %2326 = vmatpush1.msra.mxu0 0.0
          %2327 = vmatprep.subr.mxu0 0.0
          %2328 = vmatpush1.msra.mxu0 0.0
          %2329 = vmatprep.subr.mxu0 0.0
          %2330 = vmatpush1.msra.mxu0 0.0
          %2331 = vmatprep.subr.mxu0 0.0
          %2332 = vmatpush1.msra.mxu0 0.0
          %2333 = vmatprep.subr.mxu0 0.0
          %2334 = vmatpush1.msra.mxu0 0.0
          %2335 = vmatprep.subr.mxu0 0.0
          %2336 = vmatpush1.msra.mxu0 0.0
          %2337 = vmatprep.subr.mxu0 0.0
          %2338 = vmatpush1.msra.mxu0 0.0
          %2339 = vmatprep.subr.mxu0 0.0
          %2340 = vmatpush1.msra.mxu0 0.0
          %2341 = vmatprep.subr.mxu0 0.0
          %2342 = vmatpush1.msra.mxu0 0.0
          %2343 = vmatprep.subr.mxu0 0.0
          %2344 = vmatpush1.msra.mxu0 0.0
          %2345 = vmatprep.subr.mxu0 0.0
          %2346 = vmatpush1.msra.mxu0 0.0
          %2347 = vmatprep.subr.mxu0 0.0
          %2348 = vmatpush1.msra.mxu0 0.0
          %2349 = vmatprep.subr.mxu0 0.0
          %2350 = vmatpush1.msra.mxu0 %v2317
          %2351 = vmatprep.subr.mxu0 0.0
          %2352 = vmatpush2.msra.mxu0 0.0
          %2353 = vmatprep.subr.mxu0 0.0
          %2354 = vmatpush2.msra.mxu0 0.0
          %2355 = vmatprep.subr.mxu0 0.0
          %2356 = vmatpush2.msra.mxu0 0.0
          %2357 = vmatprep.subr.mxu0 0.0
          %2358 = vmatpush2.msra.mxu0 0.0
          %2359 = vmatprep.subr.mxu0 0.0
          %2360 = vmatpush2.msra.mxu0 0.0
          %2361 = vmatprep.subr.mxu0 0.0
          %2362 = vmatpush2.msra.mxu0 0.0
          %2363 = vmatprep.subr.mxu0 0.0
          %2364 = vmatpush2.msra.mxu0 0.0
          %2365 = vmatprep.subr.mxu0 0.0
          %2366 = vmatpush2.msra.mxu0 0.0
          %2367 = vmatprep.subr.mxu0 0.0
          %2368 = vmatpush2.msra.mxu0 0.0
          %2369 = vmatprep.subr.mxu0 0.0
          %2370 = vmatpush2.msra.mxu0 0.0
          %2371 = vmatprep.subr.mxu0 0.0
          %2372 = vmatpush2.msra.mxu0 0.0
          %2373 = vmatprep.subr.mxu0 0.0
          %2374 = vmatpush2.msra.mxu0 0.0
          %2375 = vmatprep.subr.mxu0 0.0
          %2376 = vmatpush2.msra.mxu0 0.0
          %2377 = vmatprep.subr.mxu0 0.0
          %2378 = vmatpush2.msra.mxu0 0.0
          %2379 = vmatprep.subr.mxu0 0.0
          %2380 = vmatpush2.msra.mxu0 0.0
          %2381 = vmatprep.subr.mxu0 0.0
          %2382 = vmatpush2.msra.mxu0 0.0
          %2383 = vmatprep.mubr.f32.mxu0 0.0
          %2384 = vmatmul.mubr.f32.gmra.mxu0 %v2308
          %v2385 = vpop.f32.mrf.mxu0
          %v2386 = vadd.f32 0.0, %v2385
          %v2387 = vpop.f32.mrf.mxu0
          %2388 = vmatprep.mubr.f32.mxu0 0.0
          %2389 = vmatmul.mubr.f32.gmra.mxu0 %v2311
          %v2390 = vpop.f32.mrf.mxu0
          %v2391 = vadd.f32 0.0, %v2390
          %v2392 = vpop.f32.mrf.mxu0
          %2393 = vmatprep.mubr.f32.mxu0 0.0
          %2394 = vmatmul.mubr.f32.gmra.mxu0 %v2314
          %v2395 = vpop.f32.mrf.mxu0
          %v2396 = vadd.f32 0.0, %v2395
          %v2397 = vpop.f32.mrf.mxu0
          %2398 = vdwg.mxu0
          %v2399 = vadd.f32 %v2299, %v2386
          %v2400 = vadd.f32 %v2300, %v2391
          %v2401 = vadd.f32 %v2301, %v2396
          %v2402 = vld [vmem:[%s2201 + $0x1] sm:$0xff]
          %v2403 = vld [vmem:[%s2201 + $0x9] sm:$0xff]
          %v2404 = vld [vmem:[%s2201 + $0x11] sm:$0x1]
          %s2405 = scalar_lea.vmem %s2, 72
          %v2406 = vld [vmem:[%s2405] sm:$0xf]
          %v2408 = vsel %vm601, %v2402, 0
          %v2411 = vsel %vm601, %v2403, 0
          %v2414 = vsel %vm601, %v2404, 0
          %v2417 = vsel %vm611, %v2406, 0
          %2419 = vmatprep.subr.mxu0 0.0
          %2420 = vmatpush1.msra.mxu0 0.0
          %2421 = vmatprep.subr.mxu0 0.0
          %2422 = vmatpush1.msra.mxu0 0.0
          %2423 = vmatprep.subr.mxu0 0.0
          %2424 = vmatpush1.msra.mxu0 0.0
          %2425 = vmatprep.subr.mxu0 0.0
          %2426 = vmatpush1.msra.mxu0 0.0
          %2427 = vmatprep.subr.mxu0 0.0
          %2428 = vmatpush1.msra.mxu0 0.0
          %2429 = vmatprep.subr.mxu0 0.0
          %2430 = vmatpush1.msra.mxu0 0.0
          %2431 = vmatprep.subr.mxu0 0.0
          %2432 = vmatpush1.msra.mxu0 0.0
          %2433 = vmatprep.subr.mxu0 0.0
          %2434 = vmatpush1.msra.mxu0 0.0
          %2435 = vmatprep.subr.mxu0 0.0
          %2436 = vmatpush1.msra.mxu0 0.0
          %2437 = vmatprep.subr.mxu0 0.0
          %2438 = vmatpush1.msra.mxu0 0.0
          %2439 = vmatprep.subr.mxu0 0.0
          %2440 = vmatpush1.msra.mxu0 0.0
          %2441 = vmatprep.subr.mxu0 0.0
          %2442 = vmatpush1.msra.mxu0 0.0
          %2443 = vmatprep.subr.mxu0 0.0
          %2444 = vmatpush1.msra.mxu0 0.0
          %2445 = vmatprep.subr.mxu0 0.0
          %2446 = vmatpush1.msra.mxu0 0.0
          %2447 = vmatprep.subr.mxu0 0.0
          %2448 = vmatpush1.msra.mxu0 0.0
          %2449 = vmatprep.subr.mxu0 0.0
          %2450 = vmatpush1.msra.mxu0 %v2417
          %2451 = vmatprep.subr.mxu0 0.0
          %2452 = vmatpush2.msra.mxu0 0.0
          %2453 = vmatprep.subr.mxu0 0.0
          %2454 = vmatpush2.msra.mxu0 0.0
          %2455 = vmatprep.subr.mxu0 0.0
          %2456 = vmatpush2.msra.mxu0 0.0
          %2457 = vmatprep.subr.mxu0 0.0
          %2458 = vmatpush2.msra.mxu0 0.0
          %2459 = vmatprep.subr.mxu0 0.0
          %2460 = vmatpush2.msra.mxu0 0.0
          %2461 = vmatprep.subr.mxu0 0.0
          %2462 = vmatpush2.msra.mxu0 0.0
          %2463 = vmatprep.subr.mxu0 0.0
          %2464 = vmatpush2.msra.mxu0 0.0
          %2465 = vmatprep.subr.mxu0 0.0
          %2466 = vmatpush2.msra.mxu0 0.0
          %2467 = vmatprep.subr.mxu0 0.0
          %2468 = vmatpush2.msra.mxu0 0.0
          %2469 = vmatprep.subr.mxu0 0.0
          %2470 = vmatpush2.msra.mxu0 0.0
          %2471 = vmatprep.subr.mxu0 0.0
          %2472 = vmatpush2.msra.mxu0 0.0
          %2473 = vmatprep.subr.mxu0 0.0
          %2474 = vmatpush2.msra.mxu0 0.0
          %2475 = vmatprep.subr.mxu0 0.0
          %2476 = vmatpush2.msra.mxu0 0.0
          %2477 = vmatprep.subr.mxu0 0.0
          %2478 = vmatpush2.msra.mxu0 0.0
          %2479 = vmatprep.subr.mxu0 0.0
          %2480 = vmatpush2.msra.mxu0 0.0
          %2481 = vmatprep.subr.mxu0 0.0
          %2482 = vmatpush2.msra.mxu0 0.0
          %2483 = vmatprep.mubr.f32.mxu0 0.0
          %2484 = vmatmul.mubr.f32.gmra.mxu0 %v2408
          %v2485 = vpop.f32.mrf.mxu0
          %v2486 = vadd.f32 0.0, %v2485
          %v2487 = vpop.f32.mrf.mxu0
          %2488 = vmatprep.mubr.f32.mxu0 0.0
          %2489 = vmatmul.mubr.f32.gmra.mxu0 %v2411
          %v2490 = vpop.f32.mrf.mxu0
          %v2491 = vadd.f32 0.0, %v2490
          %v2492 = vpop.f32.mrf.mxu0
          %2493 = vmatprep.mubr.f32.mxu0 0.0
          %2494 = vmatmul.mubr.f32.gmra.mxu0 %v2414
          %v2495 = vpop.f32.mrf.mxu0
          %v2496 = vadd.f32 0.0, %v2495
          %v2497 = vpop.f32.mrf.mxu0
          %2498 = vdwg.mxu0
          %v2499 = vadd.f32 %v2399, %v2486
          %v2500 = vadd.f32 %v2400, %v2491
          %v2501 = vadd.f32 %v2401, %v2496
          %v2502 = vld [vmem:[%s2099 + $0x2] sm:$0xff]
          %v2503 = vld [vmem:[%s2099 + $0xa] sm:$0xff]
          %v2504 = vld [vmem:[%s2099 + $0x12] sm:$0x1]
          %s2505 = scalar_lea.vmem %s2, 76
          %v2506 = vld [vmem:[%s2505] sm:$0xf]
          %v2508 = vsel %vm601, %v2502, 0
          %v2511 = vsel %vm601, %v2503, 0
          %v2514 = vsel %vm601, %v2504, 0
          %v2517 = vsel %vm611, %v2506, 0
          %2519 = vmatprep.subr.mxu0 0.0
          %2520 = vmatpush1.msra.mxu0 0.0
          %2521 = vmatprep.subr.mxu0 0.0
          %2522 = vmatpush1.msra.mxu0 0.0
          %2523 = vmatprep.subr.mxu0 0.0
          %2524 = vmatpush1.msra.mxu0 0.0
          %2525 = vmatprep.subr.mxu0 0.0
          %2526 = vmatpush1.msra.mxu0 0.0
          %2527 = vmatprep.subr.mxu0 0.0
          %2528 = vmatpush1.msra.mxu0 0.0
          %2529 = vmatprep.subr.mxu0 0.0
          %2530 = vmatpush1.msra.mxu0 0.0
          %2531 = vmatprep.subr.mxu0 0.0
          %2532 = vmatpush1.msra.mxu0 0.0
          %2533 = vmatprep.subr.mxu0 0.0
          %2534 = vmatpush1.msra.mxu0 0.0
          %2535 = vmatprep.subr.mxu0 0.0
          %2536 = vmatpush1.msra.mxu0 0.0
          %2537 = vmatprep.subr.mxu0 0.0
          %2538 = vmatpush1.msra.mxu0 0.0
          %2539 = vmatprep.subr.mxu0 0.0
          %2540 = vmatpush1.msra.mxu0 0.0
          %2541 = vmatprep.subr.mxu0 0.0
          %2542 = vmatpush1.msra.mxu0 0.0
          %2543 = vmatprep.subr.mxu0 0.0
          %2544 = vmatpush1.msra.mxu0 0.0
          %2545 = vmatprep.subr.mxu0 0.0
          %2546 = vmatpush1.msra.mxu0 0.0
          %2547 = vmatprep.subr.mxu0 0.0
          %2548 = vmatpush1.msra.mxu0 0.0
          %2549 = vmatprep.subr.mxu0 0.0
          %2550 = vmatpush1.msra.mxu0 %v2517
          %2551 = vmatprep.subr.mxu0 0.0
          %2552 = vmatpush2.msra.mxu0 0.0
          %2553 = vmatprep.subr.mxu0 0.0
          %2554 = vmatpush2.msra.mxu0 0.0
          %2555 = vmatprep.subr.mxu0 0.0
          %2556 = vmatpush2.msra.mxu0 0.0
          %2557 = vmatprep.subr.mxu0 0.0
          %2558 = vmatpush2.msra.mxu0 0.0
          %2559 = vmatprep.subr.mxu0 0.0
          %2560 = vmatpush2.msra.mxu0 0.0
          %2561 = vmatprep.subr.mxu0 0.0
          %2562 = vmatpush2.msra.mxu0 0.0
          %2563 = vmatprep.subr.mxu0 0.0
          %2564 = vmatpush2.msra.mxu0 0.0
          %2565 = vmatprep.subr.mxu0 0.0
          %2566 = vmatpush2.msra.mxu0 0.0
          %2567 = vmatprep.subr.mxu0 0.0
          %2568 = vmatpush2.msra.mxu0 0.0
          %2569 = vmatprep.subr.mxu0 0.0
          %2570 = vmatpush2.msra.mxu0 0.0
          %2571 = vmatprep.subr.mxu0 0.0
          %2572 = vmatpush2.msra.mxu0 0.0
          %2573 = vmatprep.subr.mxu0 0.0
          %2574 = vmatpush2.msra.mxu0 0.0
          %2575 = vmatprep.subr.mxu0 0.0
          %2576 = vmatpush2.msra.mxu0 0.0
          %2577 = vmatprep.subr.mxu0 0.0
          %2578 = vmatpush2.msra.mxu0 0.0
          %2579 = vmatprep.subr.mxu0 0.0
          %2580 = vmatpush2.msra.mxu0 0.0
          %2581 = vmatprep.subr.mxu0 0.0
          %2582 = vmatpush2.msra.mxu0 0.0
          %2583 = vmatprep.mubr.f32.mxu0 0.0
          %2584 = vmatmul.mubr.f32.gmra.mxu0 %v2508
          %v2585 = vpop.f32.mrf.mxu0
          %v2586 = vadd.f32 0.0, %v2585
          %v2587 = vpop.f32.mrf.mxu0
          %2588 = vmatprep.mubr.f32.mxu0 0.0
          %2589 = vmatmul.mubr.f32.gmra.mxu0 %v2511
          %v2590 = vpop.f32.mrf.mxu0
          %v2591 = vadd.f32 0.0, %v2590
          %v2592 = vpop.f32.mrf.mxu0
          %2593 = vmatprep.mubr.f32.mxu0 0.0
          %2594 = vmatmul.mubr.f32.gmra.mxu0 %v2514
          %v2595 = vpop.f32.mrf.mxu0
          %v2596 = vadd.f32 0.0, %v2595
          %v2597 = vpop.f32.mrf.mxu0
          %2598 = vdwg.mxu0
          %v2599 = vadd.f32 %v2499, %v2586
          %v2600 = vadd.f32 %v2500, %v2591
          %v2601 = vadd.f32 %v2501, %v2596
          %s2602 = sadd.s32 %s587, 4
          %s2603 = smul.u32 %s2602, 24
          %s2604 = scalar_lea.vmem %s556, %s2603
          %v2605 = vld [vmem:[%s2604] sm:$0xff]
          %v2606 = vld [vmem:[%s2604 + $0x8] sm:$0xff]
          %v2607 = vld [vmem:[%s2604 + $0x10] sm:$0x1]
          %s2608 = scalar_lea.vmem %s2, 80
          %v2609 = vld [vmem:[%s2608] sm:$0xf]
          %v2611 = vsel %vm601, %v2605, 0
          %v2614 = vsel %vm601, %v2606, 0
          %v2617 = vsel %vm601, %v2607, 0
          %v2620 = vsel %vm611, %v2609, 0
          %2622 = vmatprep.subr.mxu0 0.0
          %2623 = vmatpush1.msra.mxu0 0.0
          %2624 = vmatprep.subr.mxu0 0.0
          %2625 = vmatpush1.msra.mxu0 0.0
          %2626 = vmatprep.subr.mxu0 0.0
          %2627 = vmatpush1.msra.mxu0 0.0
          %2628 = vmatprep.subr.mxu0 0.0
          %2629 = vmatpush1.msra.mxu0 0.0
          %2630 = vmatprep.subr.mxu0 0.0
          %2631 = vmatpush1.msra.mxu0 0.0
          %2632 = vmatprep.subr.mxu0 0.0
          %2633 = vmatpush1.msra.mxu0 0.0
          %2634 = vmatprep.subr.mxu0 0.0
          %2635 = vmatpush1.msra.mxu0 0.0
          %2636 = vmatprep.subr.mxu0 0.0
          %2637 = vmatpush1.msra.mxu0 0.0
          %2638 = vmatprep.subr.mxu0 0.0
          %2639 = vmatpush1.msra.mxu0 0.0
          %2640 = vmatprep.subr.mxu0 0.0
          %2641 = vmatpush1.msra.mxu0 0.0
          %2642 = vmatprep.subr.mxu0 0.0
          %2643 = vmatpush1.msra.mxu0 0.0
          %2644 = vmatprep.subr.mxu0 0.0
          %2645 = vmatpush1.msra.mxu0 0.0
          %2646 = vmatprep.subr.mxu0 0.0
          %2647 = vmatpush1.msra.mxu0 0.0
          %2648 = vmatprep.subr.mxu0 0.0
          %2649 = vmatpush1.msra.mxu0 0.0
          %2650 = vmatprep.subr.mxu0 0.0
          %2651 = vmatpush1.msra.mxu0 0.0
          %2652 = vmatprep.subr.mxu0 0.0
          %2653 = vmatpush1.msra.mxu0 %v2620
          %2654 = vmatprep.subr.mxu0 0.0
          %2655 = vmatpush2.msra.mxu0 0.0
          %2656 = vmatprep.subr.mxu0 0.0
          %2657 = vmatpush2.msra.mxu0 0.0
          %2658 = vmatprep.subr.mxu0 0.0
          %2659 = vmatpush2.msra.mxu0 0.0
          %2660 = vmatprep.subr.mxu0 0.0
          %2661 = vmatpush2.msra.mxu0 0.0
          %2662 = vmatprep.subr.mxu0 0.0
          %2663 = vmatpush2.msra.mxu0 0.0
          %2664 = vmatprep.subr.mxu0 0.0
          %2665 = vmatpush2.msra.mxu0 0.0
          %2666 = vmatprep.subr.mxu0 0.0
          %2667 = vmatpush2.msra.mxu0 0.0
          %2668 = vmatprep.subr.mxu0 0.0
          %2669 = vmatpush2.msra.mxu0 0.0
          %2670 = vmatprep.subr.mxu0 0.0
          %2671 = vmatpush2.msra.mxu0 0.0
          %2672 = vmatprep.subr.mxu0 0.0
          %2673 = vmatpush2.msra.mxu0 0.0
          %2674 = vmatprep.subr.mxu0 0.0
          %2675 = vmatpush2.msra.mxu0 0.0
          %2676 = vmatprep.subr.mxu0 0.0
          %2677 = vmatpush2.msra.mxu0 0.0
          %2678 = vmatprep.subr.mxu0 0.0
          %2679 = vmatpush2.msra.mxu0 0.0
          %2680 = vmatprep.subr.mxu0 0.0
          %2681 = vmatpush2.msra.mxu0 0.0
          %2682 = vmatprep.subr.mxu0 0.0
          %2683 = vmatpush2.msra.mxu0 0.0
          %2684 = vmatprep.subr.mxu0 0.0
          %2685 = vmatpush2.msra.mxu0 0.0
          %2686 = vmatprep.mubr.f32.mxu0 0.0
          %2687 = vmatmul.mubr.f32.gmra.mxu0 %v2611
          %v2688 = vpop.f32.mrf.mxu0
          %v2689 = vadd.f32 0.0, %v2688
          %v2690 = vpop.f32.mrf.mxu0
          %2691 = vmatprep.mubr.f32.mxu0 0.0
          %2692 = vmatmul.mubr.f32.gmra.mxu0 %v2614
          %v2693 = vpop.f32.mrf.mxu0
          %v2694 = vadd.f32 0.0, %v2693
          %v2695 = vpop.f32.mrf.mxu0
          %2696 = vmatprep.mubr.f32.mxu0 0.0
          %2697 = vmatmul.mubr.f32.gmra.mxu0 %v2617
          %v2698 = vpop.f32.mrf.mxu0
          %v2699 = vadd.f32 0.0, %v2698
          %v2700 = vpop.f32.mrf.mxu0
          %2701 = vdwg.mxu0
          %v2702 = vadd.f32 %v2599, %v2689
          %v2703 = vadd.f32 %v2600, %v2694
          %v2704 = vadd.f32 %v2601, %v2699
          %s2705 = sadd.s32 %s2603, 888
          %s2706 = scalar_lea.vmem %s556, %s2705
          %v2707 = vld [vmem:[%s2706] sm:$0xff]
          %v2708 = vld [vmem:[%s2706 + $0x8] sm:$0xff]
          %v2709 = vld [vmem:[%s2706 + $0x10] sm:$0x1]
          %s2710 = scalar_lea.vmem %s2, 84
          %v2711 = vld [vmem:[%s2710] sm:$0xf]
          %v2713 = vsel %vm601, %v2707, 0
          %v2716 = vsel %vm601, %v2708, 0
          %v2719 = vsel %vm601, %v2709, 0
          %v2722 = vsel %vm611, %v2711, 0
          %2724 = vmatprep.subr.mxu0 0.0
          %2725 = vmatpush1.msra.mxu0 0.0
          %2726 = vmatprep.subr.mxu0 0.0
          %2727 = vmatpush1.msra.mxu0 0.0
          %2728 = vmatprep.subr.mxu0 0.0
          %2729 = vmatpush1.msra.mxu0 0.0
          %2730 = vmatprep.subr.mxu0 0.0
          %2731 = vmatpush1.msra.mxu0 0.0
          %2732 = vmatprep.subr.mxu0 0.0
          %2733 = vmatpush1.msra.mxu0 0.0
          %2734 = vmatprep.subr.mxu0 0.0
          %2735 = vmatpush1.msra.mxu0 0.0
          %2736 = vmatprep.subr.mxu0 0.0
          %2737 = vmatpush1.msra.mxu0 0.0
          %2738 = vmatprep.subr.mxu0 0.0
          %2739 = vmatpush1.msra.mxu0 0.0
          %2740 = vmatprep.subr.mxu0 0.0
          %2741 = vmatpush1.msra.mxu0 0.0
          %2742 = vmatprep.subr.mxu0 0.0
          %2743 = vmatpush1.msra.mxu0 0.0
          %2744 = vmatprep.subr.mxu0 0.0
          %2745 = vmatpush1.msra.mxu0 0.0
          %2746 = vmatprep.subr.mxu0 0.0
          %2747 = vmatpush1.msra.mxu0 0.0
          %2748 = vmatprep.subr.mxu0 0.0
          %2749 = vmatpush1.msra.mxu0 0.0
          %2750 = vmatprep.subr.mxu0 0.0
          %2751 = vmatpush1.msra.mxu0 0.0
          %2752 = vmatprep.subr.mxu0 0.0
          %2753 = vmatpush1.msra.mxu0 0.0
          %2754 = vmatprep.subr.mxu0 0.0
          %2755 = vmatpush1.msra.mxu0 %v2722
          %2756 = vmatprep.subr.mxu0 0.0
          %2757 = vmatpush2.msra.mxu0 0.0
          %2758 = vmatprep.subr.mxu0 0.0
          %2759 = vmatpush2.msra.mxu0 0.0
          %2760 = vmatprep.subr.mxu0 0.0
          %2761 = vmatpush2.msra.mxu0 0.0
          %2762 = vmatprep.subr.mxu0 0.0
          %2763 = vmatpush2.msra.mxu0 0.0
          %2764 = vmatprep.subr.mxu0 0.0
          %2765 = vmatpush2.msra.mxu0 0.0
          %2766 = vmatprep.subr.mxu0 0.0
          %2767 = vmatpush2.msra.mxu0 0.0
          %2768 = vmatprep.subr.mxu0 0.0
          %2769 = vmatpush2.msra.mxu0 0.0
          %2770 = vmatprep.subr.mxu0 0.0
          %2771 = vmatpush2.msra.mxu0 0.0
          %2772 = vmatprep.subr.mxu0 0.0
          %2773 = vmatpush2.msra.mxu0 0.0
          %2774 = vmatprep.subr.mxu0 0.0
          %2775 = vmatpush2.msra.mxu0 0.0
          %2776 = vmatprep.subr.mxu0 0.0
          %2777 = vmatpush2.msra.mxu0 0.0
          %2778 = vmatprep.subr.mxu0 0.0
          %2779 = vmatpush2.msra.mxu0 0.0
          %2780 = vmatprep.subr.mxu0 0.0
          %2781 = vmatpush2.msra.mxu0 0.0
          %2782 = vmatprep.subr.mxu0 0.0
          %2783 = vmatpush2.msra.mxu0 0.0
          %2784 = vmatprep.subr.mxu0 0.0
          %2785 = vmatpush2.msra.mxu0 0.0
          %2786 = vmatprep.subr.mxu0 0.0
          %2787 = vmatpush2.msra.mxu0 0.0
          %2788 = vmatprep.mubr.f32.mxu0 0.0
          %2789 = vmatmul.mubr.f32.gmra.mxu0 %v2713
          %v2790 = vpop.f32.mrf.mxu0
          %v2791 = vadd.f32 0.0, %v2790
          %v2792 = vpop.f32.mrf.mxu0
          %2793 = vmatprep.mubr.f32.mxu0 0.0
          %2794 = vmatmul.mubr.f32.gmra.mxu0 %v2716
          %v2795 = vpop.f32.mrf.mxu0
          %v2796 = vadd.f32 0.0, %v2795
          %v2797 = vpop.f32.mrf.mxu0
          %2798 = vmatprep.mubr.f32.mxu0 0.0
          %2799 = vmatmul.mubr.f32.gmra.mxu0 %v2719
          %v2800 = vpop.f32.mrf.mxu0
          %v2801 = vadd.f32 0.0, %v2800
          %v2802 = vpop.f32.mrf.mxu0
          %2803 = vdwg.mxu0
          %v2804 = vadd.f32 %v2702, %v2791
          %v2805 = vadd.f32 %v2703, %v2796
          %v2806 = vadd.f32 %v2704, %v2801
          %v2807 = vld [vmem:[%s2604 + $0x1] sm:$0xff]
          %v2808 = vld [vmem:[%s2604 + $0x9] sm:$0xff]
          %v2809 = vld [vmem:[%s2604 + $0x11] sm:$0x1]
          %s2810 = scalar_lea.vmem %s2, 88
          %v2811 = vld [vmem:[%s2810] sm:$0xf]
          %v2813 = vsel %vm601, %v2807, 0
          %v2816 = vsel %vm601, %v2808, 0
          %v2819 = vsel %vm601, %v2809, 0
          %v2822 = vsel %vm611, %v2811, 0
          %2824 = vmatprep.subr.mxu0 0.0
          %2825 = vmatpush1.msra.mxu0 0.0
          %2826 = vmatprep.subr.mxu0 0.0
          %2827 = vmatpush1.msra.mxu0 0.0
          %2828 = vmatprep.subr.mxu0 0.0
          %2829 = vmatpush1.msra.mxu0 0.0
          %2830 = vmatprep.subr.mxu0 0.0
          %2831 = vmatpush1.msra.mxu0 0.0
          %2832 = vmatprep.subr.mxu0 0.0
          %2833 = vmatpush1.msra.mxu0 0.0
          %2834 = vmatprep.subr.mxu0 0.0
          %2835 = vmatpush1.msra.mxu0 0.0
          %2836 = vmatprep.subr.mxu0 0.0
          %2837 = vmatpush1.msra.mxu0 0.0
          %2838 = vmatprep.subr.mxu0 0.0
          %2839 = vmatpush1.msra.mxu0 0.0
          %2840 = vmatprep.subr.mxu0 0.0
          %2841 = vmatpush1.msra.mxu0 0.0
          %2842 = vmatprep.subr.mxu0 0.0
          %2843 = vmatpush1.msra.mxu0 0.0
          %2844 = vmatprep.subr.mxu0 0.0
          %2845 = vmatpush1.msra.mxu0 0.0
          %2846 = vmatprep.subr.mxu0 0.0
          %2847 = vmatpush1.msra.mxu0 0.0
          %2848 = vmatprep.subr.mxu0 0.0
          %2849 = vmatpush1.msra.mxu0 0.0
          %2850 = vmatprep.subr.mxu0 0.0
          %2851 = vmatpush1.msra.mxu0 0.0
          %2852 = vmatprep.subr.mxu0 0.0
          %2853 = vmatpush1.msra.mxu0 0.0
          %2854 = vmatprep.subr.mxu0 0.0
          %2855 = vmatpush1.msra.mxu0 %v2822
          %2856 = vmatprep.subr.mxu0 0.0
          %2857 = vmatpush2.msra.mxu0 0.0
          %2858 = vmatprep.subr.mxu0 0.0
          %2859 = vmatpush2.msra.mxu0 0.0
          %2860 = vmatprep.subr.mxu0 0.0
          %2861 = vmatpush2.msra.mxu0 0.0
          %2862 = vmatprep.subr.mxu0 0.0
          %2863 = vmatpush2.msra.mxu0 0.0
          %2864 = vmatprep.subr.mxu0 0.0
          %2865 = vmatpush2.msra.mxu0 0.0
          %2866 = vmatprep.subr.mxu0 0.0
          %2867 = vmatpush2.msra.mxu0 0.0
          %2868 = vmatprep.subr.mxu0 0.0
          %2869 = vmatpush2.msra.mxu0 0.0
          %2870 = vmatprep.subr.mxu0 0.0
          %2871 = vmatpush2.msra.mxu0 0.0
          %2872 = vmatprep.subr.mxu0 0.0
          %2873 = vmatpush2.msra.mxu0 0.0
          %2874 = vmatprep.subr.mxu0 0.0
          %2875 = vmatpush2.msra.mxu0 0.0
          %2876 = vmatprep.subr.mxu0 0.0
          %2877 = vmatpush2.msra.mxu0 0.0
          %2878 = vmatprep.subr.mxu0 0.0
          %2879 = vmatpush2.msra.mxu0 0.0
          %2880 = vmatprep.subr.mxu0 0.0
          %2881 = vmatpush2.msra.mxu0 0.0
          %2882 = vmatprep.subr.mxu0 0.0
          %2883 = vmatpush2.msra.mxu0 0.0
          %2884 = vmatprep.subr.mxu0 0.0
          %2885 = vmatpush2.msra.mxu0 0.0
          %2886 = vmatprep.subr.mxu0 0.0
          %2887 = vmatpush2.msra.mxu0 0.0
          %2888 = vmatprep.mubr.f32.mxu0 0.0
          %2889 = vmatmul.mubr.f32.gmra.mxu0 %v2813
          %v2890 = vpop.f32.mrf.mxu0
          %v2891 = vadd.f32 0.0, %v2890
          %v2892 = vpop.f32.mrf.mxu0
          %2893 = vmatprep.mubr.f32.mxu0 0.0
          %2894 = vmatmul.mubr.f32.gmra.mxu0 %v2816
          %v2895 = vpop.f32.mrf.mxu0
          %v2896 = vadd.f32 0.0, %v2895
          %v2897 = vpop.f32.mrf.mxu0
          %2898 = vmatprep.mubr.f32.mxu0 0.0
          %2899 = vmatmul.mubr.f32.gmra.mxu0 %v2819
          %v2900 = vpop.f32.mrf.mxu0
          %v2901 = vadd.f32 0.0, %v2900
          %v2902 = vpop.f32.mrf.mxu0
          %2903 = vdwg.mxu0
          %v2904 = vadd.f32 %v2804, %v2891
          %v2905 = vadd.f32 %v2805, %v2896
          %v2906 = vadd.f32 %v2806, %v2901
          %v2907 = vld [vmem:[%s2706 + $0x1] sm:$0xff]
          %v2908 = vld [vmem:[%s2706 + $0x9] sm:$0xff]
          %v2909 = vld [vmem:[%s2706 + $0x11] sm:$0x1]
          %s2910 = scalar_lea.vmem %s2, 92
          %v2911 = vld [vmem:[%s2910] sm:$0xf]
          %v2913 = vsel %vm601, %v2907, 0
          %v2916 = vsel %vm601, %v2908, 0
          %v2919 = vsel %vm601, %v2909, 0
          %v2922 = vsel %vm611, %v2911, 0
          %2924 = vmatprep.subr.mxu0 0.0
          %2925 = vmatpush1.msra.mxu0 0.0
          %2926 = vmatprep.subr.mxu0 0.0
          %2927 = vmatpush1.msra.mxu0 0.0
          %2928 = vmatprep.subr.mxu0 0.0
          %2929 = vmatpush1.msra.mxu0 0.0
          %2930 = vmatprep.subr.mxu0 0.0
          %2931 = vmatpush1.msra.mxu0 0.0
          %2932 = vmatprep.subr.mxu0 0.0
          %2933 = vmatpush1.msra.mxu0 0.0
          %2934 = vmatprep.subr.mxu0 0.0
          %2935 = vmatpush1.msra.mxu0 0.0
          %2936 = vmatprep.subr.mxu0 0.0
          %2937 = vmatpush1.msra.mxu0 0.0
          %2938 = vmatprep.subr.mxu0 0.0
          %2939 = vmatpush1.msra.mxu0 0.0
          %2940 = vmatprep.subr.mxu0 0.0
          %2941 = vmatpush1.msra.mxu0 0.0
          %2942 = vmatprep.subr.mxu0 0.0
          %2943 = vmatpush1.msra.mxu0 0.0
          %2944 = vmatprep.subr.mxu0 0.0
          %2945 = vmatpush1.msra.mxu0 0.0
          %2946 = vmatprep.subr.mxu0 0.0
          %2947 = vmatpush1.msra.mxu0 0.0
          %2948 = vmatprep.subr.mxu0 0.0
          %2949 = vmatpush1.msra.mxu0 0.0
          %2950 = vmatprep.subr.mxu0 0.0
          %2951 = vmatpush1.msra.mxu0 0.0
          %2952 = vmatprep.subr.mxu0 0.0
          %2953 = vmatpush1.msra.mxu0 0.0
          %2954 = vmatprep.subr.mxu0 0.0
          %2955 = vmatpush1.msra.mxu0 %v2922
          %2956 = vmatprep.subr.mxu0 0.0
          %2957 = vmatpush2.msra.mxu0 0.0
          %2958 = vmatprep.subr.mxu0 0.0
          %2959 = vmatpush2.msra.mxu0 0.0
          %2960 = vmatprep.subr.mxu0 0.0
          %2961 = vmatpush2.msra.mxu0 0.0
          %2962 = vmatprep.subr.mxu0 0.0
          %2963 = vmatpush2.msra.mxu0 0.0
          %2964 = vmatprep.subr.mxu0 0.0
          %2965 = vmatpush2.msra.mxu0 0.0
          %2966 = vmatprep.subr.mxu0 0.0
          %2967 = vmatpush2.msra.mxu0 0.0
          %2968 = vmatprep.subr.mxu0 0.0
          %2969 = vmatpush2.msra.mxu0 0.0
          %2970 = vmatprep.subr.mxu0 0.0
          %2971 = vmatpush2.msra.mxu0 0.0
          %2972 = vmatprep.subr.mxu0 0.0
          %2973 = vmatpush2.msra.mxu0 0.0
          %2974 = vmatprep.subr.mxu0 0.0
          %2975 = vmatpush2.msra.mxu0 0.0
          %2976 = vmatprep.subr.mxu0 0.0
          %2977 = vmatpush2.msra.mxu0 0.0
          %2978 = vmatprep.subr.mxu0 0.0
          %2979 = vmatpush2.msra.mxu0 0.0
          %2980 = vmatprep.subr.mxu0 0.0
          %2981 = vmatpush2.msra.mxu0 0.0
          %2982 = vmatprep.subr.mxu0 0.0
          %2983 = vmatpush2.msra.mxu0 0.0
          %2984 = vmatprep.subr.mxu0 0.0
          %2985 = vmatpush2.msra.mxu0 0.0
          %2986 = vmatprep.subr.mxu0 0.0
          %2987 = vmatpush2.msra.mxu0 0.0
          %2988 = vmatprep.mubr.f32.mxu0 0.0
          %2989 = vmatmul.mubr.f32.gmra.mxu0 %v2913
          %v2990 = vpop.f32.mrf.mxu0
          %v2991 = vadd.f32 0.0, %v2990
          %v2992 = vpop.f32.mrf.mxu0
          %2993 = vmatprep.mubr.f32.mxu0 0.0
          %2994 = vmatmul.mubr.f32.gmra.mxu0 %v2916
          %v2995 = vpop.f32.mrf.mxu0
          %v2996 = vadd.f32 0.0, %v2995
          %v2997 = vpop.f32.mrf.mxu0
          %2998 = vmatprep.mubr.f32.mxu0 0.0
          %2999 = vmatmul.mubr.f32.gmra.mxu0 %v2919
          %v3000 = vpop.f32.mrf.mxu0
          %v3001 = vadd.f32 0.0, %v3000
          %v3002 = vpop.f32.mrf.mxu0
          %3003 = vdwg.mxu0
          %v3004 = vadd.f32 %v2904, %v2991
          %v3005 = vadd.f32 %v2905, %v2996
          %v3006 = vadd.f32 %v2906, %v3001
          %v3007 = vld [vmem:[%s2604 + $0x2] sm:$0xff]
          %v3008 = vld [vmem:[%s2604 + $0xa] sm:$0xff]
          %v3009 = vld [vmem:[%s2604 + $0x12] sm:$0x1]
          %s3010 = scalar_lea.vmem %s2, 96
          %v3011 = vld [vmem:[%s3010] sm:$0xf]
          %v3013 = vsel %vm601, %v3007, 0
          %v3016 = vsel %vm601, %v3008, 0
          %v3019 = vsel %vm601, %v3009, 0
          %v3022 = vsel %vm611, %v3011, 0
          %3024 = vmatprep.subr.mxu0 0.0
          %3025 = vmatpush1.msra.mxu0 0.0
          %3026 = vmatprep.subr.mxu0 0.0
          %3027 = vmatpush1.msra.mxu0 0.0
          %3028 = vmatprep.subr.mxu0 0.0
          %3029 = vmatpush1.msra.mxu0 0.0
          %3030 = vmatprep.subr.mxu0 0.0
          %3031 = vmatpush1.msra.mxu0 0.0
          %3032 = vmatprep.subr.mxu0 0.0
          %3033 = vmatpush1.msra.mxu0 0.0
          %3034 = vmatprep.subr.mxu0 0.0
          %3035 = vmatpush1.msra.mxu0 0.0
          %3036 = vmatprep.subr.mxu0 0.0
          %3037 = vmatpush1.msra.mxu0 0.0
          %3038 = vmatprep.subr.mxu0 0.0
          %3039 = vmatpush1.msra.mxu0 0.0
          %3040 = vmatprep.subr.mxu0 0.0
          %3041 = vmatpush1.msra.mxu0 0.0
          %3042 = vmatprep.subr.mxu0 0.0
          %3043 = vmatpush1.msra.mxu0 0.0
          %3044 = vmatprep.subr.mxu0 0.0
          %3045 = vmatpush1.msra.mxu0 0.0
          %3046 = vmatprep.subr.mxu0 0.0
          %3047 = vmatpush1.msra.mxu0 0.0
          %3048 = vmatprep.subr.mxu0 0.0
          %3049 = vmatpush1.msra.mxu0 0.0
          %3050 = vmatprep.subr.mxu0 0.0
          %3051 = vmatpush1.msra.mxu0 0.0
          %3052 = vmatprep.subr.mxu0 0.0
          %3053 = vmatpush1.msra.mxu0 0.0
          %3054 = vmatprep.subr.mxu0 0.0
          %3055 = vmatpush1.msra.mxu0 %v3022
          %3056 = vmatprep.subr.mxu0 0.0
          %3057 = vmatpush2.msra.mxu0 0.0
          %3058 = vmatprep.subr.mxu0 0.0
          %3059 = vmatpush2.msra.mxu0 0.0
          %3060 = vmatprep.subr.mxu0 0.0
          %3061 = vmatpush2.msra.mxu0 0.0
          %3062 = vmatprep.subr.mxu0 0.0
          %3063 = vmatpush2.msra.mxu0 0.0
          %3064 = vmatprep.subr.mxu0 0.0
          %3065 = vmatpush2.msra.mxu0 0.0
          %3066 = vmatprep.subr.mxu0 0.0
          %3067 = vmatpush2.msra.mxu0 0.0
          %3068 = vmatprep.subr.mxu0 0.0
          %3069 = vmatpush2.msra.mxu0 0.0
          %3070 = vmatprep.subr.mxu0 0.0
          %3071 = vmatpush2.msra.mxu0 0.0
          %3072 = vmatprep.subr.mxu0 0.0
          %3073 = vmatpush2.msra.mxu0 0.0
          %3074 = vmatprep.subr.mxu0 0.0
          %3075 = vmatpush2.msra.mxu0 0.0
          %3076 = vmatprep.subr.mxu0 0.0
          %3077 = vmatpush2.msra.mxu0 0.0
          %3078 = vmatprep.subr.mxu0 0.0
          %3079 = vmatpush2.msra.mxu0 0.0
          %3080 = vmatprep.subr.mxu0 0.0
          %3081 = vmatpush2.msra.mxu0 0.0
          %3082 = vmatprep.subr.mxu0 0.0
          %3083 = vmatpush2.msra.mxu0 0.0
          %3084 = vmatprep.subr.mxu0 0.0
          %3085 = vmatpush2.msra.mxu0 0.0
          %3086 = vmatprep.subr.mxu0 0.0
          %3087 = vmatpush2.msra.mxu0 0.0
          %3088 = vmatprep.mubr.f32.mxu0 0.0
          %3089 = vmatmul.mubr.f32.gmra.mxu0 %v3013
          %v3090 = vpop.f32.mrf.mxu0
          %v3091 = vadd.f32 0.0, %v3090
          %v3092 = vpop.f32.mrf.mxu0
          %3093 = vmatprep.mubr.f32.mxu0 0.0
          %3094 = vmatmul.mubr.f32.gmra.mxu0 %v3016
          %v3095 = vpop.f32.mrf.mxu0
          %v3096 = vadd.f32 0.0, %v3095
          %v3097 = vpop.f32.mrf.mxu0
          %3098 = vmatprep.mubr.f32.mxu0 0.0
          %3099 = vmatmul.mubr.f32.gmra.mxu0 %v3019
          %v3100 = vpop.f32.mrf.mxu0
          %v3101 = vadd.f32 0.0, %v3100
          %v3102 = vpop.f32.mrf.mxu0
          %3103 = vdwg.mxu0
          %v3104 = vadd.f32 %v3004, %v3091
          %v3105 = vadd.f32 %v3005, %v3096
          %v3106 = vadd.f32 %v3006, %v3101
          %v3107 = vld [vmem:[%s3] sm:$0x1]
          %v3109 = vlaneseq
          %v3110 = vshrl.u32 %v3109, 7
          %v3111 = vsub.s32 0, %v3110
          %v3112 = vrot.slane %v3107, %v3111
          %v3114 = vadd.f32 %v3104, %v3112
          %v3115 = vadd.f32 %v3105, %v3112
          %v3116 = vadd.f32 %v3106, %v3112
          %v3117 = vmax.f32 %v3114, 0.0
          %v3118 = vmax.f32 %v3115, 0.0
          %v3119 = vmax.f32 %v3116, 0.0
          %vm3120 = vcmask 138240
          %v3122 = vsel %vm3120, %v571, 0
          %v3125 = vsel %vm3120, %v572, 0
          %vm3127 = vcmask 1040384
          %v3129 = vsel %vm3127, %v3119, 0
          %3131 = vmatprep.subr.mxu0 0.0
          %3132 = vmatpush1.msra.mxu0 0.0
          %3133 = vmatprep.subr.mxu0 0.0
          %3134 = vmatpush1.msra.mxu0 0.0
          %3135 = vmatprep.subr.mxu0 0.0
          %3136 = vmatpush1.msra.mxu0 0.0
          %3137 = vmatprep.subr.mxu0 0.0
          %3138 = vmatpush1.msra.mxu0 0.0
          %3139 = vmatprep.subr.mxu0 0.0
          %3140 = vmatpush1.msra.mxu0 0.0
          %3141 = vmatprep.subr.mxu0 0.0
          %3142 = vmatpush1.msra.mxu0 0.0
          %3143 = vmatprep.subr.mxu0 0.0
          %3144 = vmatpush1.msra.mxu0 0.0
          %3145 = vmatprep.subr.mxu0 0.0
          %3146 = vmatpush1.msra.mxu0 0.0
          %3147 = vmatprep.subr.mxu0 0.0
          %3148 = vmatpush1.msra.mxu0 0.0
          %3149 = vmatprep.subr.mxu0 0.0
          %3150 = vmatpush1.msra.mxu0 0.0
          %3151 = vmatprep.subr.mxu0 0.0
          %3152 = vmatpush1.msra.mxu0 0.0
          %3153 = vmatprep.subr.mxu0 0.0
          %3154 = vmatpush1.msra.mxu0 0.0
          %3155 = vmatprep.subr.mxu0 0.0
          %3156 = vmatpush1.msra.mxu0 0.0
          %3157 = vmatprep.subr.mxu0 0.0
          %3158 = vmatpush1.msra.mxu0 %v3129
          %3159 = vmatprep.subr.mxu0 0.0
          %3160 = vmatpush1.msra.mxu0 %v3118
          %3161 = vmatprep.subr.mxu0 0.0
          %3162 = vmatpush1.msra.mxu0 %v3117
          %3163 = vmatprep.subr.mxu0 0.0
          %3164 = vmatpush2.msra.mxu0 0.0
          %3165 = vmatprep.subr.mxu0 0.0
          %3166 = vmatpush2.msra.mxu0 0.0
          %3167 = vmatprep.subr.mxu0 0.0
          %3168 = vmatpush2.msra.mxu0 0.0
          %3169 = vmatprep.subr.mxu0 0.0
          %3170 = vmatpush2.msra.mxu0 0.0
          %3171 = vmatprep.subr.mxu0 0.0
          %3172 = vmatpush2.msra.mxu0 0.0
          %3173 = vmatprep.subr.mxu0 0.0
          %3174 = vmatpush2.msra.mxu0 0.0
          %3175 = vmatprep.subr.mxu0 0.0
          %3176 = vmatpush2.msra.mxu0 0.0
          %3177 = vmatprep.subr.mxu0 0.0
          %3178 = vmatpush2.msra.mxu0 0.0
          %3179 = vmatprep.subr.mxu0 0.0
          %3180 = vmatpush2.msra.mxu0 0.0
          %3181 = vmatprep.subr.mxu0 0.0
          %3182 = vmatpush2.msra.mxu0 0.0
          %3183 = vmatprep.subr.mxu0 0.0
          %3184 = vmatpush2.msra.mxu0 0.0
          %3185 = vmatprep.subr.mxu0 0.0
          %3186 = vmatpush2.msra.mxu0 0.0
          %3187 = vmatprep.subr.mxu0 0.0
          %3188 = vmatpush2.msra.mxu0 0.0
          %3189 = vmatprep.subr.mxu0 0.0
          %3190 = vmatpush2.msra.mxu0 0.0
          %3191 = vmatprep.subr.mxu0 0.0
          %3192 = vmatpush2.msra.mxu0 0.0
          %3193 = vmatprep.subr.mxu0 0.0
          %3194 = vmatpush2.msra.mxu0 0.0
          %3195 = vmatprep.mubr.f32.mxu0 0.0
          %3196 = vmatmul.mubr.f32.gmra.mxu0 %v3122
          %v3197 = vpop.f32.mrf.mxu0
          %v3198 = vadd.f32 0.0, %v3197
          %v3199 = vpop.f32.mrf.mxu0
          %3200 = vmatprep.mubr.f32.mxu0 0.0
          %3201 = vmatmul.mubr.f32.gmra.mxu0 %v3125
          %v3202 = vpop.f32.mrf.mxu0
          %v3203 = vadd.f32 0.0, %v3202
          %v3204 = vpop.f32.mrf.mxu0
          %3205 = vdwg.mxu0
          %s3206 = smul.u32 %s582, 16
          %s3207 = scalar_lea.vmem [#allocation2], %s3206
          %vm3208 = vcmask 130048
          %3209 = vst.msk [vmem:[%s3207] sm:$0xff] %vm3208, %v3198
          %vm3210 = vcmask 122880
          %3211 = vst.msk [vmem:[%s3207 + $0x8] sm:$0x1] %vm3210, %v3203
          %v3213 = vsel %vm3120, %v579, 0
          %v3216 = vsel %vm3120, %v580, 0
          %3218 = vmatprep.subr.mxu0 0.0
          %3219 = vmatpush1.msra.mxu0 0.0
          %3220 = vmatprep.subr.mxu0 0.0
          %3221 = vmatpush1.msra.mxu0 0.0
          %3222 = vmatprep.subr.mxu0 0.0
          %3223 = vmatpush1.msra.mxu0 0.0
          %3224 = vmatprep.subr.mxu0 0.0
          %3225 = vmatpush1.msra.mxu0 0.0
          %3226 = vmatprep.subr.mxu0 0.0
          %3227 = vmatpush1.msra.mxu0 0.0
          %3228 = vmatprep.subr.mxu0 0.0
          %3229 = vmatpush1.msra.mxu0 0.0
          %3230 = vmatprep.subr.mxu0 0.0
          %3231 = vmatpush1.msra.mxu0 0.0
          %3232 = vmatprep.subr.mxu0 0.0
          %3233 = vmatpush1.msra.mxu0 0.0
          %3234 = vmatprep.subr.mxu0 0.0
          %3235 = vmatpush1.msra.mxu0 0.0
          %3236 = vmatprep.subr.mxu0 0.0
          %3237 = vmatpush1.msra.mxu0 0.0
          %3238 = vmatprep.subr.mxu0 0.0
          %3239 = vmatpush1.msra.mxu0 0.0
          %3240 = vmatprep.subr.mxu0 0.0
          %3241 = vmatpush1.msra.mxu0 0.0
          %3242 = vmatprep.subr.mxu0 0.0
          %3243 = vmatpush1.msra.mxu0 0.0
          %3244 = vmatprep.subr.mxu0 0.0
          %3245 = vmatpush1.msra.mxu0 %v3129
          %3246 = vmatprep.subr.mxu0 0.0
          %3247 = vmatpush1.msra.mxu0 %v3118
          %3248 = vmatprep.subr.mxu0 0.0
          %3249 = vmatpush1.msra.mxu0 %v3117
          %3250 = vmatprep.subr.mxu0 0.0
          %3251 = vmatpush2.msra.mxu0 0.0
          %3252 = vmatprep.subr.mxu0 0.0
          %3253 = vmatpush2.msra.mxu0 0.0
          %3254 = vmatprep.subr.mxu0 0.0
          %3255 = vmatpush2.msra.mxu0 0.0
          %3256 = vmatprep.subr.mxu0 0.0
          %3257 = vmatpush2.msra.mxu0 0.0
          %3258 = vmatprep.subr.mxu0 0.0
          %3259 = vmatpush2.msra.mxu0 0.0
          %3260 = vmatprep.subr.mxu0 0.0
          %3261 = vmatpush2.msra.mxu0 0.0
          %3262 = vmatprep.subr.mxu0 0.0
          %3263 = vmatpush2.msra.mxu0 0.0
          %3264 = vmatprep.subr.mxu0 0.0
          %3265 = vmatpush2.msra.mxu0 0.0
          %3266 = vmatprep.subr.mxu0 0.0
          %3267 = vmatpush2.msra.mxu0 0.0
          %3268 = vmatprep.subr.mxu0 0.0
          %3269 = vmatpush2.msra.mxu0 0.0
          %3270 = vmatprep.subr.mxu0 0.0
          %3271 = vmatpush2.msra.mxu0 0.0
          %3272 = vmatprep.subr.mxu0 0.0
          %3273 = vmatpush2.msra.mxu0 0.0
          %3274 = vmatprep.subr.mxu0 0.0
          %3275 = vmatpush2.msra.mxu0 0.0
          %3276 = vmatprep.subr.mxu0 0.0
          %3277 = vmatpush2.msra.mxu0 0.0
          %3278 = vmatprep.subr.mxu0 0.0
          %3279 = vmatpush2.msra.mxu0 0.0
          %3280 = vmatprep.subr.mxu0 0.0
          %3281 = vmatpush2.msra.mxu0 0.0
          %3282 = vmatprep.mubr.f32.mxu0 0.0
          %3283 = vmatmul.mubr.f32.gmra.mxu0 %v3213
          %v3284 = vpop.f32.mrf.mxu0
          %v3285 = vadd.f32 0.0, %v3284
          %v3286 = vpop.f32.mrf.mxu0
          %3287 = vmatprep.mubr.f32.mxu0 0.0
          %3288 = vmatmul.mubr.f32.gmra.mxu0 %v3216
          %v3289 = vpop.f32.mrf.mxu0
          %v3290 = vadd.f32 0.0, %v3289
          %v3291 = vpop.f32.mrf.mxu0
          %3292 = vdwg.mxu0
          %s3293 = sadd.s32 %s3206, 272
          %s3294 = scalar_lea.vmem [#allocation2], %s3293
          %3295 = vst.msk [vmem:[%s3294] sm:$0xff] %vm3208, %v3285
          %3296 = vst.msk [vmem:[%s3294 + $0x8] sm:$0x1] %vm3210, %v3290
        $region93: #{value_network_forward.1} parent=87 // loop_footer
          %s586 = sadd.s32 1, %s582
        $region94: #{value_network_forward.1} parent=87 // loop_footer_branch
          %581 = sbr.rel target = $region90
        $region95: #{value_network_forward.1} parent=87 // loop_exit
          _
        loop: start=0, step=1, limit=7
        $region96: #{value_network_forward.1} parent=87 // loop_pre_header
          _
        $region97: #{value_network_forward.1} parent=87 // loop_header
          %s3298 = sphi 0, %s3302
          %p3299 = scmp.ge.s32.totalorder %s3298, 7
        $region98: #{value_network_forward.1} parent=87 // loop_header_branch
          %3301 = sbr.rel (%p3299) target = $region102
        $region99: #{value_network_forward.1} parent=87 // loop_body
          %s3303 = smul.u32 %s3298, 2
          %s3304 = smul.u32 %s3303, 16
          %s3305 = scalar_lea.vmem [#allocation2], %s3304
          %v3306 = vld [vmem:[%s3305] sm:$0x7f]
          %v3307 = vld [vmem:[%s4] sm:$0xff]
          %v3308 = vld [vmem:[%s4 + $0x8] sm:$0xff]
          %s3309 = sadd.s32 %s3304, 272
          %s3310 = scalar_lea.vmem [#allocation2], %s3309
          %v3311 = vld [vmem:[%s3310] sm:$0x7f]
          %s3312 = scalar_lea.vmem %s4, 16
          %v3313 = vld [vmem:[%s3312] sm:$0xff]
          %v3314 = vld [vmem:[%s3312 + $0x8] sm:$0xff]
          %vm3315 = vcmask 130048
          %v3317 = vsel %vm3315, %v3311, 0
          %3319 = vmatprep.subr.mxu0 0.0
          %3320 = vmatpush1.msra.mxu0 0.0
          %3321 = vmatprep.subr.mxu0 0.0
          %3322 = vmatpush1.msra.mxu0 0.0
          %3323 = vmatprep.subr.mxu0 0.0
          %3324 = vmatpush1.msra.mxu0 0.0
          %3325 = vmatprep.subr.mxu0 0.0
          %3326 = vmatpush1.msra.mxu0 0.0
          %3327 = vmatprep.subr.mxu0 0.0
          %3328 = vmatpush1.msra.mxu0 0.0
          %3329 = vmatprep.subr.mxu0 0.0
          %3330 = vmatpush1.msra.mxu0 0.0
          %3331 = vmatprep.subr.mxu0 0.0
          %3332 = vmatpush1.msra.mxu0 0.0
          %3333 = vmatprep.subr.mxu0 0.0
          %3334 = vmatpush1.msra.mxu0 0.0
          %3335 = vmatprep.subr.mxu0 0.0
          %3336 = vmatpush1.msra.mxu0 0.0
          %3337 = vmatprep.subr.mxu0 0.0
          %3338 = vmatpush1.msra.mxu0 0.0
          %3339 = vmatprep.subr.mxu0 0.0
          %3340 = vmatpush1.msra.mxu0 0.0
          %3341 = vmatprep.subr.mxu0 0.0
          %3342 = vmatpush1.msra.mxu0 0.0
          %3343 = vmatprep.subr.mxu0 0.0
          %3344 = vmatpush1.msra.mxu0 0.0
          %3345 = vmatprep.subr.mxu0 0.0
          %3346 = vmatpush1.msra.mxu0 0.0
          %3347 = vmatprep.subr.mxu0 0.0
          %3348 = vmatpush1.msra.mxu0 %v3314
          %3349 = vmatprep.subr.mxu0 0.0
          %3350 = vmatpush1.msra.mxu0 %v3313
          %3351 = vmatprep.subr.mxu0 0.0
          %3352 = vmatpush2.msra.mxu0 0.0
          %3353 = vmatprep.subr.mxu0 0.0
          %3354 = vmatpush2.msra.mxu0 0.0
          %3355 = vmatprep.subr.mxu0 0.0
          %3356 = vmatpush2.msra.mxu0 0.0
          %3357 = vmatprep.subr.mxu0 0.0
          %3358 = vmatpush2.msra.mxu0 0.0
          %3359 = vmatprep.subr.mxu0 0.0
          %3360 = vmatpush2.msra.mxu0 0.0
          %3361 = vmatprep.subr.mxu0 0.0
          %3362 = vmatpush2.msra.mxu0 0.0
          %3363 = vmatprep.subr.mxu0 0.0
          %3364 = vmatpush2.msra.mxu0 0.0
          %3365 = vmatprep.subr.mxu0 0.0
          %3366 = vmatpush2.msra.mxu0 0.0
          %3367 = vmatprep.subr.mxu0 0.0
          %3368 = vmatpush2.msra.mxu0 0.0
          %3369 = vmatprep.subr.mxu0 0.0
          %3370 = vmatpush2.msra.mxu0 0.0
          %3371 = vmatprep.subr.mxu0 0.0
          %3372 = vmatpush2.msra.mxu0 0.0
          %3373 = vmatprep.subr.mxu0 0.0
          %3374 = vmatpush2.msra.mxu0 0.0
          %3375 = vmatprep.subr.mxu0 0.0
          %3376 = vmatpush2.msra.mxu0 0.0
          %3377 = vmatprep.subr.mxu0 0.0
          %3378 = vmatpush2.msra.mxu0 0.0
          %3379 = vmatprep.subr.mxu0 0.0
          %3380 = vmatpush2.msra.mxu0 0.0
          %3381 = vmatprep.subr.mxu0 0.0
          %3382 = vmatpush2.msra.mxu0 0.0
          %3383 = vmatprep.mubr.f32.mxu0 0.0
          %3384 = vmatmul.mubr.f32.gmra.mxu0 %v3317
          %v3385 = vpop.f32.mrf.mxu0
          %v3386 = vadd.f32 0.0, %v3385
          %v3387 = vpop.f32.mrf.mxu0
          %3388 = vdwg.mxu0
          %v3390 = vsel %vm3315, %v3306, 0
          %3392 = vmatprep.subr.mxu0 0.0
          %3393 = vmatpush1.msra.mxu0 0.0
          %3394 = vmatprep.subr.mxu0 0.0
          %3395 = vmatpush1.msra.mxu0 0.0
          %3396 = vmatprep.subr.mxu0 0.0
          %3397 = vmatpush1.msra.mxu0 0.0
          %3398 = vmatprep.subr.mxu0 0.0
          %3399 = vmatpush1.msra.mxu0 0.0
          %3400 = vmatprep.subr.mxu0 0.0
          %3401 = vmatpush1.msra.mxu0 0.0
          %3402 = vmatprep.subr.mxu0 0.0
          %3403 = vmatpush1.msra.mxu0 0.0
          %3404 = vmatprep.subr.mxu0 0.0
          %3405 = vmatpush1.msra.mxu0 0.0
          %3406 = vmatprep.subr.mxu0 0.0
          %3407 = vmatpush1.msra.mxu0 0.0
          %3408 = vmatprep.subr.mxu0 0.0
          %3409 = vmatpush1.msra.mxu0 0.0
          %3410 = vmatprep.subr.mxu0 0.0
          %3411 = vmatpush1.msra.mxu0 0.0
          %3412 = vmatprep.subr.mxu0 0.0
          %3413 = vmatpush1.msra.mxu0 0.0
          %3414 = vmatprep.subr.mxu0 0.0
          %3415 = vmatpush1.msra.mxu0 0.0
          %3416 = vmatprep.subr.mxu0 0.0
          %3417 = vmatpush1.msra.mxu0 0.0
          %3418 = vmatprep.subr.mxu0 0.0
          %3419 = vmatpush1.msra.mxu0 0.0
          %3420 = vmatprep.subr.mxu0 0.0
          %3421 = vmatpush1.msra.mxu0 %v3308
          %3422 = vmatprep.subr.mxu0 0.0
          %3423 = vmatpush1.msra.mxu0 %v3307
          %3424 = vmatprep.subr.mxu0 0.0
          %3425 = vmatpush2.msra.mxu0 0.0
          %3426 = vmatprep.subr.mxu0 0.0
          %3427 = vmatpush2.msra.mxu0 0.0
          %3428 = vmatprep.subr.mxu0 0.0
          %3429 = vmatpush2.msra.mxu0 0.0
          %3430 = vmatprep.subr.mxu0 0.0
          %3431 = vmatpush2.msra.mxu0 0.0
          %3432 = vmatprep.subr.mxu0 0.0
          %3433 = vmatpush2.msra.mxu0 0.0
          %3434 = vmatprep.subr.mxu0 0.0
          %3435 = vmatpush2.msra.mxu0 0.0
          %3436 = vmatprep.subr.mxu0 0.0
          %3437 = vmatpush2.msra.mxu0 0.0
          %3438 = vmatprep.subr.mxu0 0.0
          %3439 = vmatpush2.msra.mxu0 0.0
          %3440 = vmatprep.subr.mxu0 0.0
          %3441 = vmatpush2.msra.mxu0 0.0
          %3442 = vmatprep.subr.mxu0 0.0
          %3443 = vmatpush2.msra.mxu0 0.0
          %3444 = vmatprep.subr.mxu0 0.0
          %3445 = vmatpush2.msra.mxu0 0.0
          %3446 = vmatprep.subr.mxu0 0.0
          %3447 = vmatpush2.msra.mxu0 0.0
          %3448 = vmatprep.subr.mxu0 0.0
          %3449 = vmatpush2.msra.mxu0 0.0
          %3450 = vmatprep.subr.mxu0 0.0
          %3451 = vmatpush2.msra.mxu0 0.0
          %3452 = vmatprep.subr.mxu0 0.0
          %3453 = vmatpush2.msra.mxu0 0.0
          %3454 = vmatprep.subr.mxu0 0.0
          %3455 = vmatpush2.msra.mxu0 0.0
          %3456 = vmatprep.mubr.f32.mxu0 0.0
          %3457 = vmatmul.mubr.f32.gmra.mxu0 %v3390
          %v3458 = vpop.f32.mrf.mxu0
          %v3459 = vadd.f32 %v3386, %v3458
          %v3460 = vpop.f32.mrf.mxu0
          %3461 = vdwg.mxu0
          %v3462 = vld [vmem:[%s3305 + $0x1] sm:$0x7f]
          %s3463 = scalar_lea.vmem %s4, 32
          %v3464 = vld [vmem:[%s3463] sm:$0xff]
          %v3465 = vld [vmem:[%s3463 + $0x8] sm:$0xff]
          %v3467 = vsel %vm3315, %v3462, 0
          %3469 = vmatprep.subr.mxu0 0.0
          %3470 = vmatpush1.msra.mxu0 0.0
          %3471 = vmatprep.subr.mxu0 0.0
          %3472 = vmatpush1.msra.mxu0 0.0
          %3473 = vmatprep.subr.mxu0 0.0
          %3474 = vmatpush1.msra.mxu0 0.0
          %3475 = vmatprep.subr.mxu0 0.0
          %3476 = vmatpush1.msra.mxu0 0.0
          %3477 = vmatprep.subr.mxu0 0.0
          %3478 = vmatpush1.msra.mxu0 0.0
          %3479 = vmatprep.subr.mxu0 0.0
          %3480 = vmatpush1.msra.mxu0 0.0
          %3481 = vmatprep.subr.mxu0 0.0
          %3482 = vmatpush1.msra.mxu0 0.0
          %3483 = vmatprep.subr.mxu0 0.0
          %3484 = vmatpush1.msra.mxu0 0.0
          %3485 = vmatprep.subr.mxu0 0.0
          %3486 = vmatpush1.msra.mxu0 0.0
          %3487 = vmatprep.subr.mxu0 0.0
          %3488 = vmatpush1.msra.mxu0 0.0
          %3489 = vmatprep.subr.mxu0 0.0
          %3490 = vmatpush1.msra.mxu0 0.0
          %3491 = vmatprep.subr.mxu0 0.0
          %3492 = vmatpush1.msra.mxu0 0.0
          %3493 = vmatprep.subr.mxu0 0.0
          %3494 = vmatpush1.msra.mxu0 0.0
          %3495 = vmatprep.subr.mxu0 0.0
          %3496 = vmatpush1.msra.mxu0 0.0
          %3497 = vmatprep.subr.mxu0 0.0
          %3498 = vmatpush1.msra.mxu0 %v3465
          %3499 = vmatprep.subr.mxu0 0.0
          %3500 = vmatpush1.msra.mxu0 %v3464
          %3501 = vmatprep.subr.mxu0 0.0
          %3502 = vmatpush2.msra.mxu0 0.0
          %3503 = vmatprep.subr.mxu0 0.0
          %3504 = vmatpush2.msra.mxu0 0.0
          %3505 = vmatprep.subr.mxu0 0.0
          %3506 = vmatpush2.msra.mxu0 0.0
          %3507 = vmatprep.subr.mxu0 0.0
          %3508 = vmatpush2.msra.mxu0 0.0
          %3509 = vmatprep.subr.mxu0 0.0
          %3510 = vmatpush2.msra.mxu0 0.0
          %3511 = vmatprep.subr.mxu0 0.0
          %3512 = vmatpush2.msra.mxu0 0.0
          %3513 = vmatprep.subr.mxu0 0.0
          %3514 = vmatpush2.msra.mxu0 0.0
          %3515 = vmatprep.subr.mxu0 0.0
          %3516 = vmatpush2.msra.mxu0 0.0
          %3517 = vmatprep.subr.mxu0 0.0
          %3518 = vmatpush2.msra.mxu0 0.0
          %3519 = vmatprep.subr.mxu0 0.0
          %3520 = vmatpush2.msra.mxu0 0.0
          %3521 = vmatprep.subr.mxu0 0.0
          %3522 = vmatpush2.msra.mxu0 0.0
          %3523 = vmatprep.subr.mxu0 0.0
          %3524 = vmatpush2.msra.mxu0 0.0
          %3525 = vmatprep.subr.mxu0 0.0
          %3526 = vmatpush2.msra.mxu0 0.0
          %3527 = vmatprep.subr.mxu0 0.0
          %3528 = vmatpush2.msra.mxu0 0.0
          %3529 = vmatprep.subr.mxu0 0.0
          %3530 = vmatpush2.msra.mxu0 0.0
          %3531 = vmatprep.subr.mxu0 0.0
          %3532 = vmatpush2.msra.mxu0 0.0
          %3533 = vmatprep.mubr.f32.mxu0 0.0
          %3534 = vmatmul.mubr.f32.gmra.mxu0 %v3467
          %v3535 = vpop.f32.mrf.mxu0
          %v3536 = vadd.f32 0.0, %v3535
          %v3537 = vpop.f32.mrf.mxu0
          %3538 = vdwg.mxu0
          %v3539 = vadd.f32 %v3459, %v3536
          %v3540 = vld [vmem:[%s3310 + $0x1] sm:$0x7f]
          %s3541 = scalar_lea.vmem %s4, 48
          %v3542 = vld [vmem:[%s3541] sm:$0xff]
          %v3543 = vld [vmem:[%s3541 + $0x8] sm:$0xff]
          %v3545 = vsel %vm3315, %v3540, 0
          %3547 = vmatprep.subr.mxu0 0.0
          %3548 = vmatpush1.msra.mxu0 0.0
          %3549 = vmatprep.subr.mxu0 0.0
          %3550 = vmatpush1.msra.mxu0 0.0
          %3551 = vmatprep.subr.mxu0 0.0
          %3552 = vmatpush1.msra.mxu0 0.0
          %3553 = vmatprep.subr.mxu0 0.0
          %3554 = vmatpush1.msra.mxu0 0.0
          %3555 = vmatprep.subr.mxu0 0.0
          %3556 = vmatpush1.msra.mxu0 0.0
          %3557 = vmatprep.subr.mxu0 0.0
          %3558 = vmatpush1.msra.mxu0 0.0
          %3559 = vmatprep.subr.mxu0 0.0
          %3560 = vmatpush1.msra.mxu0 0.0
          %3561 = vmatprep.subr.mxu0 0.0
          %3562 = vmatpush1.msra.mxu0 0.0
          %3563 = vmatprep.subr.mxu0 0.0
          %3564 = vmatpush1.msra.mxu0 0.0
          %3565 = vmatprep.subr.mxu0 0.0
          %3566 = vmatpush1.msra.mxu0 0.0
          %3567 = vmatprep.subr.mxu0 0.0
          %3568 = vmatpush1.msra.mxu0 0.0
          %3569 = vmatprep.subr.mxu0 0.0
          %3570 = vmatpush1.msra.mxu0 0.0
          %3571 = vmatprep.subr.mxu0 0.0
          %3572 = vmatpush1.msra.mxu0 0.0
          %3573 = vmatprep.subr.mxu0 0.0
          %3574 = vmatpush1.msra.mxu0 0.0
          %3575 = vmatprep.subr.mxu0 0.0
          %3576 = vmatpush1.msra.mxu0 %v3543
          %3577 = vmatprep.subr.mxu0 0.0
          %3578 = vmatpush1.msra.mxu0 %v3542
          %3579 = vmatprep.subr.mxu0 0.0
          %3580 = vmatpush2.msra.mxu0 0.0
          %3581 = vmatprep.subr.mxu0 0.0
          %3582 = vmatpush2.msra.mxu0 0.0
          %3583 = vmatprep.subr.mxu0 0.0
          %3584 = vmatpush2.msra.mxu0 0.0
          %3585 = vmatprep.subr.mxu0 0.0
          %3586 = vmatpush2.msra.mxu0 0.0
          %3587 = vmatprep.subr.mxu0 0.0
          %3588 = vmatpush2.msra.mxu0 0.0
          %3589 = vmatprep.subr.mxu0 0.0
          %3590 = vmatpush2.msra.mxu0 0.0
          %3591 = vmatprep.subr.mxu0 0.0
          %3592 = vmatpush2.msra.mxu0 0.0
          %3593 = vmatprep.subr.mxu0 0.0
          %3594 = vmatpush2.msra.mxu0 0.0
          %3595 = vmatprep.subr.mxu0 0.0
          %3596 = vmatpush2.msra.mxu0 0.0
          %3597 = vmatprep.subr.mxu0 0.0
          %3598 = vmatpush2.msra.mxu0 0.0
          %3599 = vmatprep.subr.mxu0 0.0
          %3600 = vmatpush2.msra.mxu0 0.0
          %3601 = vmatprep.subr.mxu0 0.0
          %3602 = vmatpush2.msra.mxu0 0.0
          %3603 = vmatprep.subr.mxu0 0.0
          %3604 = vmatpush2.msra.mxu0 0.0
          %3605 = vmatprep.subr.mxu0 0.0
          %3606 = vmatpush2.msra.mxu0 0.0
          %3607 = vmatprep.subr.mxu0 0.0
          %3608 = vmatpush2.msra.mxu0 0.0
          %3609 = vmatprep.subr.mxu0 0.0
          %3610 = vmatpush2.msra.mxu0 0.0
          %3611 = vmatprep.mubr.f32.mxu0 0.0
          %3612 = vmatmul.mubr.f32.gmra.mxu0 %v3545
          %v3613 = vpop.f32.mrf.mxu0
          %v3614 = vadd.f32 0.0, %v3613
          %v3615 = vpop.f32.mrf.mxu0
          %3616 = vdwg.mxu0
          %v3617 = vadd.f32 %v3539, %v3614
          %v3618 = vld [vmem:[%s3305 + $0x2] sm:$0x7f]
          %s3619 = scalar_lea.vmem %s4, 64
          %v3620 = vld [vmem:[%s3619] sm:$0xff]
          %v3621 = vld [vmem:[%s3619 + $0x8] sm:$0xff]
          %v3623 = vsel %vm3315, %v3618, 0
          %3625 = vmatprep.subr.mxu0 0.0
          %3626 = vmatpush1.msra.mxu0 0.0
          %3627 = vmatprep.subr.mxu0 0.0
          %3628 = vmatpush1.msra.mxu0 0.0
          %3629 = vmatprep.subr.mxu0 0.0
          %3630 = vmatpush1.msra.mxu0 0.0
          %3631 = vmatprep.subr.mxu0 0.0
          %3632 = vmatpush1.msra.mxu0 0.0
          %3633 = vmatprep.subr.mxu0 0.0
          %3634 = vmatpush1.msra.mxu0 0.0
          %3635 = vmatprep.subr.mxu0 0.0
          %3636 = vmatpush1.msra.mxu0 0.0
          %3637 = vmatprep.subr.mxu0 0.0
          %3638 = vmatpush1.msra.mxu0 0.0
          %3639 = vmatprep.subr.mxu0 0.0
          %3640 = vmatpush1.msra.mxu0 0.0
          %3641 = vmatprep.subr.mxu0 0.0
          %3642 = vmatpush1.msra.mxu0 0.0
          %3643 = vmatprep.subr.mxu0 0.0
          %3644 = vmatpush1.msra.mxu0 0.0
          %3645 = vmatprep.subr.mxu0 0.0
          %3646 = vmatpush1.msra.mxu0 0.0
          %3647 = vmatprep.subr.mxu0 0.0
          %3648 = vmatpush1.msra.mxu0 0.0
          %3649 = vmatprep.subr.mxu0 0.0
          %3650 = vmatpush1.msra.mxu0 0.0
          %3651 = vmatprep.subr.mxu0 0.0
          %3652 = vmatpush1.msra.mxu0 0.0
          %3653 = vmatprep.subr.mxu0 0.0
          %3654 = vmatpush1.msra.mxu0 %v3621
          %3655 = vmatprep.subr.mxu0 0.0
          %3656 = vmatpush1.msra.mxu0 %v3620
          %3657 = vmatprep.subr.mxu0 0.0
          %3658 = vmatpush2.msra.mxu0 0.0
          %3659 = vmatprep.subr.mxu0 0.0
          %3660 = vmatpush2.msra.mxu0 0.0
          %3661 = vmatprep.subr.mxu0 0.0
          %3662 = vmatpush2.msra.mxu0 0.0
          %3663 = vmatprep.subr.mxu0 0.0
          %3664 = vmatpush2.msra.mxu0 0.0
          %3665 = vmatprep.subr.mxu0 0.0
          %3666 = vmatpush2.msra.mxu0 0.0
          %3667 = vmatprep.subr.mxu0 0.0
          %3668 = vmatpush2.msra.mxu0 0.0
          %3669 = vmatprep.subr.mxu0 0.0
          %3670 = vmatpush2.msra.mxu0 0.0
          %3671 = vmatprep.subr.mxu0 0.0
          %3672 = vmatpush2.msra.mxu0 0.0
          %3673 = vmatprep.subr.mxu0 0.0
          %3674 = vmatpush2.msra.mxu0 0.0
          %3675 = vmatprep.subr.mxu0 0.0
          %3676 = vmatpush2.msra.mxu0 0.0
          %3677 = vmatprep.subr.mxu0 0.0
          %3678 = vmatpush2.msra.mxu0 0.0
          %3679 = vmatprep.subr.mxu0 0.0
          %3680 = vmatpush2.msra.mxu0 0.0
          %3681 = vmatprep.subr.mxu0 0.0
          %3682 = vmatpush2.msra.mxu0 0.0
          %3683 = vmatprep.subr.mxu0 0.0
          %3684 = vmatpush2.msra.mxu0 0.0
          %3685 = vmatprep.subr.mxu0 0.0
          %3686 = vmatpush2.msra.mxu0 0.0
          %3687 = vmatprep.subr.mxu0 0.0
          %3688 = vmatpush2.msra.mxu0 0.0
          %3689 = vmatprep.mubr.f32.mxu0 0.0
          %3690 = vmatmul.mubr.f32.gmra.mxu0 %v3623
          %v3691 = vpop.f32.mrf.mxu0
          %v3692 = vadd.f32 0.0, %v3691
          %v3693 = vpop.f32.mrf.mxu0
          %3694 = vdwg.mxu0
          %v3695 = vadd.f32 %v3617, %v3692
          %s3696 = sadd.s32 %s3303, 1
          %s3697 = smul.u32 %s3696, 16
          %s3698 = scalar_lea.vmem [#allocation2], %s3697
          %v3699 = vld [vmem:[%s3698] sm:$0x7f]
          %s3700 = scalar_lea.vmem %s4, 80
          %v3701 = vld [vmem:[%s3700] sm:$0xff]
          %v3702 = vld [vmem:[%s3700 + $0x8] sm:$0xff]
          %v3704 = vsel %vm3315, %v3699, 0
          %3706 = vmatprep.subr.mxu0 0.0
          %3707 = vmatpush1.msra.mxu0 0.0
          %3708 = vmatprep.subr.mxu0 0.0
          %3709 = vmatpush1.msra.mxu0 0.0
          %3710 = vmatprep.subr.mxu0 0.0
          %3711 = vmatpush1.msra.mxu0 0.0
          %3712 = vmatprep.subr.mxu0 0.0
          %3713 = vmatpush1.msra.mxu0 0.0
          %3714 = vmatprep.subr.mxu0 0.0
          %3715 = vmatpush1.msra.mxu0 0.0
          %3716 = vmatprep.subr.mxu0 0.0
          %3717 = vmatpush1.msra.mxu0 0.0
          %3718 = vmatprep.subr.mxu0 0.0
          %3719 = vmatpush1.msra.mxu0 0.0
          %3720 = vmatprep.subr.mxu0 0.0
          %3721 = vmatpush1.msra.mxu0 0.0
          %3722 = vmatprep.subr.mxu0 0.0
          %3723 = vmatpush1.msra.mxu0 0.0
          %3724 = vmatprep.subr.mxu0 0.0
          %3725 = vmatpush1.msra.mxu0 0.0
          %3726 = vmatprep.subr.mxu0 0.0
          %3727 = vmatpush1.msra.mxu0 0.0
          %3728 = vmatprep.subr.mxu0 0.0
          %3729 = vmatpush1.msra.mxu0 0.0
          %3730 = vmatprep.subr.mxu0 0.0
          %3731 = vmatpush1.msra.mxu0 0.0
          %3732 = vmatprep.subr.mxu0 0.0
          %3733 = vmatpush1.msra.mxu0 0.0
          %3734 = vmatprep.subr.mxu0 0.0
          %3735 = vmatpush1.msra.mxu0 %v3702
          %3736 = vmatprep.subr.mxu0 0.0
          %3737 = vmatpush1.msra.mxu0 %v3701
          %3738 = vmatprep.subr.mxu0 0.0
          %3739 = vmatpush2.msra.mxu0 0.0
          %3740 = vmatprep.subr.mxu0 0.0
          %3741 = vmatpush2.msra.mxu0 0.0
          %3742 = vmatprep.subr.mxu0 0.0
          %3743 = vmatpush2.msra.mxu0 0.0
          %3744 = vmatprep.subr.mxu0 0.0
          %3745 = vmatpush2.msra.mxu0 0.0
          %3746 = vmatprep.subr.mxu0 0.0
          %3747 = vmatpush2.msra.mxu0 0.0
          %3748 = vmatprep.subr.mxu0 0.0
          %3749 = vmatpush2.msra.mxu0 0.0
          %3750 = vmatprep.subr.mxu0 0.0
          %3751 = vmatpush2.msra.mxu0 0.0
          %3752 = vmatprep.subr.mxu0 0.0
          %3753 = vmatpush2.msra.mxu0 0.0
          %3754 = vmatprep.subr.mxu0 0.0
          %3755 = vmatpush2.msra.mxu0 0.0
          %3756 = vmatprep.subr.mxu0 0.0
          %3757 = vmatpush2.msra.mxu0 0.0
          %3758 = vmatprep.subr.mxu0 0.0
          %3759 = vmatpush2.msra.mxu0 0.0
          %3760 = vmatprep.subr.mxu0 0.0
          %3761 = vmatpush2.msra.mxu0 0.0
          %3762 = vmatprep.subr.mxu0 0.0
          %3763 = vmatpush2.msra.mxu0 0.0
          %3764 = vmatprep.subr.mxu0 0.0
          %3765 = vmatpush2.msra.mxu0 0.0
          %3766 = vmatprep.subr.mxu0 0.0
          %3767 = vmatpush2.msra.mxu0 0.0
          %3768 = vmatprep.subr.mxu0 0.0
          %3769 = vmatpush2.msra.mxu0 0.0
          %3770 = vmatprep.mubr.f32.mxu0 0.0
          %3771 = vmatmul.mubr.f32.gmra.mxu0 %v3704
          %v3772 = vpop.f32.mrf.mxu0
          %v3773 = vadd.f32 0.0, %v3772
          %v3774 = vpop.f32.mrf.mxu0
          %3775 = vdwg.mxu0
          %v3776 = vadd.f32 %v3695, %v3773
          %s3777 = sadd.s32 %s3697, 272
          %s3778 = scalar_lea.vmem [#allocation2], %s3777
          %v3779 = vld [vmem:[%s3778] sm:$0x7f]
          %s3780 = scalar_lea.vmem %s4, 96
          %v3781 = vld [vmem:[%s3780] sm:$0xff]
          %v3782 = vld [vmem:[%s3780 + $0x8] sm:$0xff]
          %v3784 = vsel %vm3315, %v3779, 0
          %3786 = vmatprep.subr.mxu0 0.0
          %3787 = vmatpush1.msra.mxu0 0.0
          %3788 = vmatprep.subr.mxu0 0.0
          %3789 = vmatpush1.msra.mxu0 0.0
          %3790 = vmatprep.subr.mxu0 0.0
          %3791 = vmatpush1.msra.mxu0 0.0
          %3792 = vmatprep.subr.mxu0 0.0
          %3793 = vmatpush1.msra.mxu0 0.0
          %3794 = vmatprep.subr.mxu0 0.0
          %3795 = vmatpush1.msra.mxu0 0.0
          %3796 = vmatprep.subr.mxu0 0.0
          %3797 = vmatpush1.msra.mxu0 0.0
          %3798 = vmatprep.subr.mxu0 0.0
          %3799 = vmatpush1.msra.mxu0 0.0
          %3800 = vmatprep.subr.mxu0 0.0
          %3801 = vmatpush1.msra.mxu0 0.0
          %3802 = vmatprep.subr.mxu0 0.0
          %3803 = vmatpush1.msra.mxu0 0.0
          %3804 = vmatprep.subr.mxu0 0.0
          %3805 = vmatpush1.msra.mxu0 0.0
          %3806 = vmatprep.subr.mxu0 0.0
          %3807 = vmatpush1.msra.mxu0 0.0
          %3808 = vmatprep.subr.mxu0 0.0
          %3809 = vmatpush1.msra.mxu0 0.0
          %3810 = vmatprep.subr.mxu0 0.0
          %3811 = vmatpush1.msra.mxu0 0.0
          %3812 = vmatprep.subr.mxu0 0.0
          %3813 = vmatpush1.msra.mxu0 0.0
          %3814 = vmatprep.subr.mxu0 0.0
          %3815 = vmatpush1.msra.mxu0 %v3782
          %3816 = vmatprep.subr.mxu0 0.0
          %3817 = vmatpush1.msra.mxu0 %v3781
          %3818 = vmatprep.subr.mxu0 0.0
          %3819 = vmatpush2.msra.mxu0 0.0
          %3820 = vmatprep.subr.mxu0 0.0
          %3821 = vmatpush2.msra.mxu0 0.0
          %3822 = vmatprep.subr.mxu0 0.0
          %3823 = vmatpush2.msra.mxu0 0.0
          %3824 = vmatprep.subr.mxu0 0.0
          %3825 = vmatpush2.msra.mxu0 0.0
          %3826 = vmatprep.subr.mxu0 0.0
          %3827 = vmatpush2.msra.mxu0 0.0
          %3828 = vmatprep.subr.mxu0 0.0
          %3829 = vmatpush2.msra.mxu0 0.0
          %3830 = vmatprep.subr.mxu0 0.0
          %3831 = vmatpush2.msra.mxu0 0.0
          %3832 = vmatprep.subr.mxu0 0.0
          %3833 = vmatpush2.msra.mxu0 0.0
          %3834 = vmatprep.subr.mxu0 0.0
          %3835 = vmatpush2.msra.mxu0 0.0
          %3836 = vmatprep.subr.mxu0 0.0
          %3837 = vmatpush2.msra.mxu0 0.0
          %3838 = vmatprep.subr.mxu0 0.0
          %3839 = vmatpush2.msra.mxu0 0.0
          %3840 = vmatprep.subr.mxu0 0.0
          %3841 = vmatpush2.msra.mxu0 0.0
          %3842 = vmatprep.subr.mxu0 0.0
          %3843 = vmatpush2.msra.mxu0 0.0
          %3844 = vmatprep.subr.mxu0 0.0
          %3845 = vmatpush2.msra.mxu0 0.0
          %3846 = vmatprep.subr.mxu0 0.0
          %3847 = vmatpush2.msra.mxu0 0.0
          %3848 = vmatprep.subr.mxu0 0.0
          %3849 = vmatpush2.msra.mxu0 0.0
          %3850 = vmatprep.mubr.f32.mxu0 0.0
          %3851 = vmatmul.mubr.f32.gmra.mxu0 %v3784
          %v3852 = vpop.f32.mrf.mxu0
          %v3853 = vadd.f32 0.0, %v3852
          %v3854 = vpop.f32.mrf.mxu0
          %3855 = vdwg.mxu0
          %v3856 = vadd.f32 %v3776, %v3853
          %v3857 = vld [vmem:[%s3698 + $0x1] sm:$0x7f]
          %s3858 = scalar_lea.vmem %s4, 112
          %v3859 = vld [vmem:[%s3858] sm:$0xff]
          %v3860 = vld [vmem:[%s3858 + $0x8] sm:$0xff]
          %v3862 = vsel %vm3315, %v3857, 0
          %3864 = vmatprep.subr.mxu0 0.0
          %3865 = vmatpush1.msra.mxu0 0.0
          %3866 = vmatprep.subr.mxu0 0.0
          %3867 = vmatpush1.msra.mxu0 0.0
          %3868 = vmatprep.subr.mxu0 0.0
          %3869 = vmatpush1.msra.mxu0 0.0
          %3870 = vmatprep.subr.mxu0 0.0
          %3871 = vmatpush1.msra.mxu0 0.0
          %3872 = vmatprep.subr.mxu0 0.0
          %3873 = vmatpush1.msra.mxu0 0.0
          %3874 = vmatprep.subr.mxu0 0.0
          %3875 = vmatpush1.msra.mxu0 0.0
          %3876 = vmatprep.subr.mxu0 0.0
          %3877 = vmatpush1.msra.mxu0 0.0
          %3878 = vmatprep.subr.mxu0 0.0
          %3879 = vmatpush1.msra.mxu0 0.0
          %3880 = vmatprep.subr.mxu0 0.0
          %3881 = vmatpush1.msra.mxu0 0.0
          %3882 = vmatprep.subr.mxu0 0.0
          %3883 = vmatpush1.msra.mxu0 0.0
          %3884 = vmatprep.subr.mxu0 0.0
          %3885 = vmatpush1.msra.mxu0 0.0
          %3886 = vmatprep.subr.mxu0 0.0
          %3887 = vmatpush1.msra.mxu0 0.0
          %3888 = vmatprep.subr.mxu0 0.0
          %3889 = vmatpush1.msra.mxu0 0.0
          %3890 = vmatprep.subr.mxu0 0.0
          %3891 = vmatpush1.msra.mxu0 0.0
          %3892 = vmatprep.subr.mxu0 0.0
          %3893 = vmatpush1.msra.mxu0 %v3860
          %3894 = vmatprep.subr.mxu0 0.0
          %3895 = vmatpush1.msra.mxu0 %v3859
          %3896 = vmatprep.subr.mxu0 0.0
          %3897 = vmatpush2.msra.mxu0 0.0
          %3898 = vmatprep.subr.mxu0 0.0
          %3899 = vmatpush2.msra.mxu0 0.0
          %3900 = vmatprep.subr.mxu0 0.0
          %3901 = vmatpush2.msra.mxu0 0.0
          %3902 = vmatprep.subr.mxu0 0.0
          %3903 = vmatpush2.msra.mxu0 0.0
          %3904 = vmatprep.subr.mxu0 0.0
          %3905 = vmatpush2.msra.mxu0 0.0
          %3906 = vmatprep.subr.mxu0 0.0
          %3907 = vmatpush2.msra.mxu0 0.0
          %3908 = vmatprep.subr.mxu0 0.0
          %3909 = vmatpush2.msra.mxu0 0.0
          %3910 = vmatprep.subr.mxu0 0.0
          %3911 = vmatpush2.msra.mxu0 0.0
          %3912 = vmatprep.subr.mxu0 0.0
          %3913 = vmatpush2.msra.mxu0 0.0
          %3914 = vmatprep.subr.mxu0 0.0
          %3915 = vmatpush2.msra.mxu0 0.0
          %3916 = vmatprep.subr.mxu0 0.0
          %3917 = vmatpush2.msra.mxu0 0.0
          %3918 = vmatprep.subr.mxu0 0.0
          %3919 = vmatpush2.msra.mxu0 0.0
          %3920 = vmatprep.subr.mxu0 0.0
          %3921 = vmatpush2.msra.mxu0 0.0
          %3922 = vmatprep.subr.mxu0 0.0
          %3923 = vmatpush2.msra.mxu0 0.0
          %3924 = vmatprep.subr.mxu0 0.0
          %3925 = vmatpush2.msra.mxu0 0.0
          %3926 = vmatprep.subr.mxu0 0.0
          %3927 = vmatpush2.msra.mxu0 0.0
          %3928 = vmatprep.mubr.f32.mxu0 0.0
          %3929 = vmatmul.mubr.f32.gmra.mxu0 %v3862
          %v3930 = vpop.f32.mrf.mxu0
          %v3931 = vadd.f32 0.0, %v3930
          %v3932 = vpop.f32.mrf.mxu0
          %3933 = vdwg.mxu0
          %v3934 = vadd.f32 %v3856, %v3931
          %v3935 = vld [vmem:[%s3778 + $0x1] sm:$0x7f]
          %s3936 = scalar_lea.vmem %s4, 128
          %v3937 = vld [vmem:[%s3936] sm:$0xff]
          %v3938 = vld [vmem:[%s3936 + $0x8] sm:$0xff]
          %v3940 = vsel %vm3315, %v3935, 0
          %3942 = vmatprep.subr.mxu0 0.0
          %3943 = vmatpush1.msra.mxu0 0.0
          %3944 = vmatprep.subr.mxu0 0.0
          %3945 = vmatpush1.msra.mxu0 0.0
          %3946 = vmatprep.subr.mxu0 0.0
          %3947 = vmatpush1.msra.mxu0 0.0
          %3948 = vmatprep.subr.mxu0 0.0
          %3949 = vmatpush1.msra.mxu0 0.0
          %3950 = vmatprep.subr.mxu0 0.0
          %3951 = vmatpush1.msra.mxu0 0.0
          %3952 = vmatprep.subr.mxu0 0.0
          %3953 = vmatpush1.msra.mxu0 0.0
          %3954 = vmatprep.subr.mxu0 0.0
          %3955 = vmatpush1.msra.mxu0 0.0
          %3956 = vmatprep.subr.mxu0 0.0
          %3957 = vmatpush1.msra.mxu0 0.0
          %3958 = vmatprep.subr.mxu0 0.0
          %3959 = vmatpush1.msra.mxu0 0.0
          %3960 = vmatprep.subr.mxu0 0.0
          %3961 = vmatpush1.msra.mxu0 0.0
          %3962 = vmatprep.subr.mxu0 0.0
          %3963 = vmatpush1.msra.mxu0 0.0
          %3964 = vmatprep.subr.mxu0 0.0
          %3965 = vmatpush1.msra.mxu0 0.0
          %3966 = vmatprep.subr.mxu0 0.0
          %3967 = vmatpush1.msra.mxu0 0.0
          %3968 = vmatprep.subr.mxu0 0.0
          %3969 = vmatpush1.msra.mxu0 0.0
          %3970 = vmatprep.subr.mxu0 0.0
          %3971 = vmatpush1.msra.mxu0 %v3938
          %3972 = vmatprep.subr.mxu0 0.0
          %3973 = vmatpush1.msra.mxu0 %v3937
          %3974 = vmatprep.subr.mxu0 0.0
          %3975 = vmatpush2.msra.mxu0 0.0
          %3976 = vmatprep.subr.mxu0 0.0
          %3977 = vmatpush2.msra.mxu0 0.0
          %3978 = vmatprep.subr.mxu0 0.0
          %3979 = vmatpush2.msra.mxu0 0.0
          %3980 = vmatprep.subr.mxu0 0.0
          %3981 = vmatpush2.msra.mxu0 0.0
          %3982 = vmatprep.subr.mxu0 0.0
          %3983 = vmatpush2.msra.mxu0 0.0
          %3984 = vmatprep.subr.mxu0 0.0
          %3985 = vmatpush2.msra.mxu0 0.0
          %3986 = vmatprep.subr.mxu0 0.0
          %3987 = vmatpush2.msra.mxu0 0.0
          %3988 = vmatprep.subr.mxu0 0.0
          %3989 = vmatpush2.msra.mxu0 0.0
          %3990 = vmatprep.subr.mxu0 0.0
          %3991 = vmatpush2.msra.mxu0 0.0
          %3992 = vmatprep.subr.mxu0 0.0
          %3993 = vmatpush2.msra.mxu0 0.0
          %3994 = vmatprep.subr.mxu0 0.0
          %3995 = vmatpush2.msra.mxu0 0.0
          %3996 = vmatprep.subr.mxu0 0.0
          %3997 = vmatpush2.msra.mxu0 0.0
          %3998 = vmatprep.subr.mxu0 0.0
          %3999 = vmatpush2.msra.mxu0 0.0
          %4000 = vmatprep.subr.mxu0 0.0
          %4001 = vmatpush2.msra.mxu0 0.0
          %4002 = vmatprep.subr.mxu0 0.0
          %4003 = vmatpush2.msra.mxu0 0.0
          %4004 = vmatprep.subr.mxu0 0.0
          %4005 = vmatpush2.msra.mxu0 0.0
          %4006 = vmatprep.mubr.f32.mxu0 0.0
          %4007 = vmatmul.mubr.f32.gmra.mxu0 %v3940
          %v4008 = vpop.f32.mrf.mxu0
          %v4009 = vadd.f32 0.0, %v4008
          %v4010 = vpop.f32.mrf.mxu0
          %4011 = vdwg.mxu0
          %v4012 = vadd.f32 %v3934, %v4009
          %v4013 = vld [vmem:[%s3698 + $0x2] sm:$0x7f]
          %s4014 = scalar_lea.vmem %s4, 144
          %v4015 = vld [vmem:[%s4014] sm:$0xff]
          %v4016 = vld [vmem:[%s4014 + $0x8] sm:$0xff]
          %v4018 = vsel %vm3315, %v4013, 0
          %4020 = vmatprep.subr.mxu0 0.0
          %4021 = vmatpush1.msra.mxu0 0.0
          %4022 = vmatprep.subr.mxu0 0.0
          %4023 = vmatpush1.msra.mxu0 0.0
          %4024 = vmatprep.subr.mxu0 0.0
          %4025 = vmatpush1.msra.mxu0 0.0
          %4026 = vmatprep.subr.mxu0 0.0
          %4027 = vmatpush1.msra.mxu0 0.0
          %4028 = vmatprep.subr.mxu0 0.0
          %4029 = vmatpush1.msra.mxu0 0.0
          %4030 = vmatprep.subr.mxu0 0.0
          %4031 = vmatpush1.msra.mxu0 0.0
          %4032 = vmatprep.subr.mxu0 0.0
          %4033 = vmatpush1.msra.mxu0 0.0
          %4034 = vmatprep.subr.mxu0 0.0
          %4035 = vmatpush1.msra.mxu0 0.0
          %4036 = vmatprep.subr.mxu0 0.0
          %4037 = vmatpush1.msra.mxu0 0.0
          %4038 = vmatprep.subr.mxu0 0.0
          %4039 = vmatpush1.msra.mxu0 0.0
          %4040 = vmatprep.subr.mxu0 0.0
          %4041 = vmatpush1.msra.mxu0 0.0
          %4042 = vmatprep.subr.mxu0 0.0
          %4043 = vmatpush1.msra.mxu0 0.0
          %4044 = vmatprep.subr.mxu0 0.0
          %4045 = vmatpush1.msra.mxu0 0.0
          %4046 = vmatprep.subr.mxu0 0.0
          %4047 = vmatpush1.msra.mxu0 0.0
          %4048 = vmatprep.subr.mxu0 0.0
          %4049 = vmatpush1.msra.mxu0 %v4016
          %4050 = vmatprep.subr.mxu0 0.0
          %4051 = vmatpush1.msra.mxu0 %v4015
          %4052 = vmatprep.subr.mxu0 0.0
          %4053 = vmatpush2.msra.mxu0 0.0
          %4054 = vmatprep.subr.mxu0 0.0
          %4055 = vmatpush2.msra.mxu0 0.0
          %4056 = vmatprep.subr.mxu0 0.0
          %4057 = vmatpush2.msra.mxu0 0.0
          %4058 = vmatprep.subr.mxu0 0.0
          %4059 = vmatpush2.msra.mxu0 0.0
          %4060 = vmatprep.subr.mxu0 0.0
          %4061 = vmatpush2.msra.mxu0 0.0
          %4062 = vmatprep.subr.mxu0 0.0
          %4063 = vmatpush2.msra.mxu0 0.0
          %4064 = vmatprep.subr.mxu0 0.0
          %4065 = vmatpush2.msra.mxu0 0.0
          %4066 = vmatprep.subr.mxu0 0.0
          %4067 = vmatpush2.msra.mxu0 0.0
          %4068 = vmatprep.subr.mxu0 0.0
          %4069 = vmatpush2.msra.mxu0 0.0
          %4070 = vmatprep.subr.mxu0 0.0
          %4071 = vmatpush2.msra.mxu0 0.0
          %4072 = vmatprep.subr.mxu0 0.0
          %4073 = vmatpush2.msra.mxu0 0.0
          %4074 = vmatprep.subr.mxu0 0.0
          %4075 = vmatpush2.msra.mxu0 0.0
          %4076 = vmatprep.subr.mxu0 0.0
          %4077 = vmatpush2.msra.mxu0 0.0
          %4078 = vmatprep.subr.mxu0 0.0
          %4079 = vmatpush2.msra.mxu0 0.0
          %4080 = vmatprep.subr.mxu0 0.0
          %4081 = vmatpush2.msra.mxu0 0.0
          %4082 = vmatprep.subr.mxu0 0.0
          %4083 = vmatpush2.msra.mxu0 0.0
          %4084 = vmatprep.mubr.f32.mxu0 0.0
          %4085 = vmatmul.mubr.f32.gmra.mxu0 %v4018
          %v4086 = vpop.f32.mrf.mxu0
          %v4087 = vadd.f32 0.0, %v4086
          %v4088 = vpop.f32.mrf.mxu0
          %4089 = vdwg.mxu0
          %v4090 = vadd.f32 %v4012, %v4087
          %s4091 = sadd.s32 %s3303, 2
          %s4092 = smul.u32 %s4091, 16
          %s4093 = scalar_lea.vmem [#allocation2], %s4092
          %v4094 = vld [vmem:[%s4093] sm:$0x7f]
          %s4095 = scalar_lea.vmem %s4, 160
          %v4096 = vld [vmem:[%s4095] sm:$0xff]
          %v4097 = vld [vmem:[%s4095 + $0x8] sm:$0xff]
          %v4099 = vsel %vm3315, %v4094, 0
          %4101 = vmatprep.subr.mxu0 0.0
          %4102 = vmatpush1.msra.mxu0 0.0
          %4103 = vmatprep.subr.mxu0 0.0
          %4104 = vmatpush1.msra.mxu0 0.0
          %4105 = vmatprep.subr.mxu0 0.0
          %4106 = vmatpush1.msra.mxu0 0.0
          %4107 = vmatprep.subr.mxu0 0.0
          %4108 = vmatpush1.msra.mxu0 0.0
          %4109 = vmatprep.subr.mxu0 0.0
          %4110 = vmatpush1.msra.mxu0 0.0
          %4111 = vmatprep.subr.mxu0 0.0
          %4112 = vmatpush1.msra.mxu0 0.0
          %4113 = vmatprep.subr.mxu0 0.0
          %4114 = vmatpush1.msra.mxu0 0.0
          %4115 = vmatprep.subr.mxu0 0.0
          %4116 = vmatpush1.msra.mxu0 0.0
          %4117 = vmatprep.subr.mxu0 0.0
          %4118 = vmatpush1.msra.mxu0 0.0
          %4119 = vmatprep.subr.mxu0 0.0
          %4120 = vmatpush1.msra.mxu0 0.0
          %4121 = vmatprep.subr.mxu0 0.0
          %4122 = vmatpush1.msra.mxu0 0.0
          %4123 = vmatprep.subr.mxu0 0.0
          %4124 = vmatpush1.msra.mxu0 0.0
          %4125 = vmatprep.subr.mxu0 0.0
          %4126 = vmatpush1.msra.mxu0 0.0
          %4127 = vmatprep.subr.mxu0 0.0
          %4128 = vmatpush1.msra.mxu0 0.0
          %4129 = vmatprep.subr.mxu0 0.0
          %4130 = vmatpush1.msra.mxu0 %v4097
          %4131 = vmatprep.subr.mxu0 0.0
          %4132 = vmatpush1.msra.mxu0 %v4096
          %4133 = vmatprep.subr.mxu0 0.0
          %4134 = vmatpush2.msra.mxu0 0.0
          %4135 = vmatprep.subr.mxu0 0.0
          %4136 = vmatpush2.msra.mxu0 0.0
          %4137 = vmatprep.subr.mxu0 0.0
          %4138 = vmatpush2.msra.mxu0 0.0
          %4139 = vmatprep.subr.mxu0 0.0
          %4140 = vmatpush2.msra.mxu0 0.0
          %4141 = vmatprep.subr.mxu0 0.0
          %4142 = vmatpush2.msra.mxu0 0.0
          %4143 = vmatprep.subr.mxu0 0.0
          %4144 = vmatpush2.msra.mxu0 0.0
          %4145 = vmatprep.subr.mxu0 0.0
          %4146 = vmatpush2.msra.mxu0 0.0
          %4147 = vmatprep.subr.mxu0 0.0
          %4148 = vmatpush2.msra.mxu0 0.0
          %4149 = vmatprep.subr.mxu0 0.0
          %4150 = vmatpush2.msra.mxu0 0.0
          %4151 = vmatprep.subr.mxu0 0.0
          %4152 = vmatpush2.msra.mxu0 0.0
          %4153 = vmatprep.subr.mxu0 0.0
          %4154 = vmatpush2.msra.mxu0 0.0
          %4155 = vmatprep.subr.mxu0 0.0
          %4156 = vmatpush2.msra.mxu0 0.0
          %4157 = vmatprep.subr.mxu0 0.0
          %4158 = vmatpush2.msra.mxu0 0.0
          %4159 = vmatprep.subr.mxu0 0.0
          %4160 = vmatpush2.msra.mxu0 0.0
          %4161 = vmatprep.subr.mxu0 0.0
          %4162 = vmatpush2.msra.mxu0 0.0
          %4163 = vmatprep.subr.mxu0 0.0
          %4164 = vmatpush2.msra.mxu0 0.0
          %4165 = vmatprep.mubr.f32.mxu0 0.0
          %4166 = vmatmul.mubr.f32.gmra.mxu0 %v4099
          %v4167 = vpop.f32.mrf.mxu0
          %v4168 = vadd.f32 0.0, %v4167
          %v4169 = vpop.f32.mrf.mxu0
          %4170 = vdwg.mxu0
          %v4171 = vadd.f32 %v4090, %v4168
          %s4172 = sadd.s32 %s4092, 272
          %s4173 = scalar_lea.vmem [#allocation2], %s4172
          %v4174 = vld [vmem:[%s4173] sm:$0x7f]
          %s4175 = scalar_lea.vmem %s4, 176
          %v4176 = vld [vmem:[%s4175] sm:$0xff]
          %v4177 = vld [vmem:[%s4175 + $0x8] sm:$0xff]
          %v4179 = vsel %vm3315, %v4174, 0
          %4181 = vmatprep.subr.mxu0 0.0
          %4182 = vmatpush1.msra.mxu0 0.0
          %4183 = vmatprep.subr.mxu0 0.0
          %4184 = vmatpush1.msra.mxu0 0.0
          %4185 = vmatprep.subr.mxu0 0.0
          %4186 = vmatpush1.msra.mxu0 0.0
          %4187 = vmatprep.subr.mxu0 0.0
          %4188 = vmatpush1.msra.mxu0 0.0
          %4189 = vmatprep.subr.mxu0 0.0
          %4190 = vmatpush1.msra.mxu0 0.0
          %4191 = vmatprep.subr.mxu0 0.0
          %4192 = vmatpush1.msra.mxu0 0.0
          %4193 = vmatprep.subr.mxu0 0.0
          %4194 = vmatpush1.msra.mxu0 0.0
          %4195 = vmatprep.subr.mxu0 0.0
          %4196 = vmatpush1.msra.mxu0 0.0
          %4197 = vmatprep.subr.mxu0 0.0
          %4198 = vmatpush1.msra.mxu0 0.0
          %4199 = vmatprep.subr.mxu0 0.0
          %4200 = vmatpush1.msra.mxu0 0.0
          %4201 = vmatprep.subr.mxu0 0.0
          %4202 = vmatpush1.msra.mxu0 0.0
          %4203 = vmatprep.subr.mxu0 0.0
          %4204 = vmatpush1.msra.mxu0 0.0
          %4205 = vmatprep.subr.mxu0 0.0
          %4206 = vmatpush1.msra.mxu0 0.0
          %4207 = vmatprep.subr.mxu0 0.0
          %4208 = vmatpush1.msra.mxu0 0.0
          %4209 = vmatprep.subr.mxu0 0.0
          %4210 = vmatpush1.msra.mxu0 %v4177
          %4211 = vmatprep.subr.mxu0 0.0
          %4212 = vmatpush1.msra.mxu0 %v4176
          %4213 = vmatprep.subr.mxu0 0.0
          %4214 = vmatpush2.msra.mxu0 0.0
          %4215 = vmatprep.subr.mxu0 0.0
          %4216 = vmatpush2.msra.mxu0 0.0
          %4217 = vmatprep.subr.mxu0 0.0
          %4218 = vmatpush2.msra.mxu0 0.0
          %4219 = vmatprep.subr.mxu0 0.0
          %4220 = vmatpush2.msra.mxu0 0.0
          %4221 = vmatprep.subr.mxu0 0.0
          %4222 = vmatpush2.msra.mxu0 0.0
          %4223 = vmatprep.subr.mxu0 0.0
          %4224 = vmatpush2.msra.mxu0 0.0
          %4225 = vmatprep.subr.mxu0 0.0
          %4226 = vmatpush2.msra.mxu0 0.0
          %4227 = vmatprep.subr.mxu0 0.0
          %4228 = vmatpush2.msra.mxu0 0.0
          %4229 = vmatprep.subr.mxu0 0.0
          %4230 = vmatpush2.msra.mxu0 0.0
          %4231 = vmatprep.subr.mxu0 0.0
          %4232 = vmatpush2.msra.mxu0 0.0
          %4233 = vmatprep.subr.mxu0 0.0
          %4234 = vmatpush2.msra.mxu0 0.0
          %4235 = vmatprep.subr.mxu0 0.0
          %4236 = vmatpush2.msra.mxu0 0.0
          %4237 = vmatprep.subr.mxu0 0.0
          %4238 = vmatpush2.msra.mxu0 0.0
          %4239 = vmatprep.subr.mxu0 0.0
          %4240 = vmatpush2.msra.mxu0 0.0
          %4241 = vmatprep.subr.mxu0 0.0
          %4242 = vmatpush2.msra.mxu0 0.0
          %4243 = vmatprep.subr.mxu0 0.0
          %4244 = vmatpush2.msra.mxu0 0.0
          %4245 = vmatprep.mubr.f32.mxu0 0.0
          %4246 = vmatmul.mubr.f32.gmra.mxu0 %v4179
          %v4247 = vpop.f32.mrf.mxu0
          %v4248 = vadd.f32 0.0, %v4247
          %v4249 = vpop.f32.mrf.mxu0
          %4250 = vdwg.mxu0
          %v4251 = vadd.f32 %v4171, %v4248
          %v4252 = vld [vmem:[%s4093 + $0x1] sm:$0x7f]
          %s4253 = scalar_lea.vmem %s4, 192
          %v4254 = vld [vmem:[%s4253] sm:$0xff]
          %v4255 = vld [vmem:[%s4253 + $0x8] sm:$0xff]
          %v4257 = vsel %vm3315, %v4252, 0
          %4259 = vmatprep.subr.mxu0 0.0
          %4260 = vmatpush1.msra.mxu0 0.0
          %4261 = vmatprep.subr.mxu0 0.0
          %4262 = vmatpush1.msra.mxu0 0.0
          %4263 = vmatprep.subr.mxu0 0.0
          %4264 = vmatpush1.msra.mxu0 0.0
          %4265 = vmatprep.subr.mxu0 0.0
          %4266 = vmatpush1.msra.mxu0 0.0
          %4267 = vmatprep.subr.mxu0 0.0
          %4268 = vmatpush1.msra.mxu0 0.0
          %4269 = vmatprep.subr.mxu0 0.0
          %4270 = vmatpush1.msra.mxu0 0.0
          %4271 = vmatprep.subr.mxu0 0.0
          %4272 = vmatpush1.msra.mxu0 0.0
          %4273 = vmatprep.subr.mxu0 0.0
          %4274 = vmatpush1.msra.mxu0 0.0
          %4275 = vmatprep.subr.mxu0 0.0
          %4276 = vmatpush1.msra.mxu0 0.0
          %4277 = vmatprep.subr.mxu0 0.0
          %4278 = vmatpush1.msra.mxu0 0.0
          %4279 = vmatprep.subr.mxu0 0.0
          %4280 = vmatpush1.msra.mxu0 0.0
          %4281 = vmatprep.subr.mxu0 0.0
          %4282 = vmatpush1.msra.mxu0 0.0
          %4283 = vmatprep.subr.mxu0 0.0
          %4284 = vmatpush1.msra.mxu0 0.0
          %4285 = vmatprep.subr.mxu0 0.0
          %4286 = vmatpush1.msra.mxu0 0.0
          %4287 = vmatprep.subr.mxu0 0.0
          %4288 = vmatpush1.msra.mxu0 %v4255
          %4289 = vmatprep.subr.mxu0 0.0
          %4290 = vmatpush1.msra.mxu0 %v4254
          %4291 = vmatprep.subr.mxu0 0.0
          %4292 = vmatpush2.msra.mxu0 0.0
          %4293 = vmatprep.subr.mxu0 0.0
          %4294 = vmatpush2.msra.mxu0 0.0
          %4295 = vmatprep.subr.mxu0 0.0
          %4296 = vmatpush2.msra.mxu0 0.0
          %4297 = vmatprep.subr.mxu0 0.0
          %4298 = vmatpush2.msra.mxu0 0.0
          %4299 = vmatprep.subr.mxu0 0.0
          %4300 = vmatpush2.msra.mxu0 0.0
          %4301 = vmatprep.subr.mxu0 0.0
          %4302 = vmatpush2.msra.mxu0 0.0
          %4303 = vmatprep.subr.mxu0 0.0
          %4304 = vmatpush2.msra.mxu0 0.0
          %4305 = vmatprep.subr.mxu0 0.0
          %4306 = vmatpush2.msra.mxu0 0.0
          %4307 = vmatprep.subr.mxu0 0.0
          %4308 = vmatpush2.msra.mxu0 0.0
          %4309 = vmatprep.subr.mxu0 0.0
          %4310 = vmatpush2.msra.mxu0 0.0
          %4311 = vmatprep.subr.mxu0 0.0
          %4312 = vmatpush2.msra.mxu0 0.0
          %4313 = vmatprep.subr.mxu0 0.0
          %4314 = vmatpush2.msra.mxu0 0.0
          %4315 = vmatprep.subr.mxu0 0.0
          %4316 = vmatpush2.msra.mxu0 0.0
          %4317 = vmatprep.subr.mxu0 0.0
          %4318 = vmatpush2.msra.mxu0 0.0
          %4319 = vmatprep.subr.mxu0 0.0
          %4320 = vmatpush2.msra.mxu0 0.0
          %4321 = vmatprep.subr.mxu0 0.0
          %4322 = vmatpush2.msra.mxu0 0.0
          %4323 = vmatprep.mubr.f32.mxu0 0.0
          %4324 = vmatmul.mubr.f32.gmra.mxu0 %v4257
          %v4325 = vpop.f32.mrf.mxu0
          %v4326 = vadd.f32 0.0, %v4325
          %v4327 = vpop.f32.mrf.mxu0
          %4328 = vdwg.mxu0
          %v4329 = vadd.f32 %v4251, %v4326
          %v4330 = vld [vmem:[%s4173 + $0x1] sm:$0x7f]
          %s4331 = scalar_lea.vmem %s4, 208
          %v4332 = vld [vmem:[%s4331] sm:$0xff]
          %v4333 = vld [vmem:[%s4331 + $0x8] sm:$0xff]
          %v4335 = vsel %vm3315, %v4330, 0
          %4337 = vmatprep.subr.mxu0 0.0
          %4338 = vmatpush1.msra.mxu0 0.0
          %4339 = vmatprep.subr.mxu0 0.0
          %4340 = vmatpush1.msra.mxu0 0.0
          %4341 = vmatprep.subr.mxu0 0.0
          %4342 = vmatpush1.msra.mxu0 0.0
          %4343 = vmatprep.subr.mxu0 0.0
          %4344 = vmatpush1.msra.mxu0 0.0
          %4345 = vmatprep.subr.mxu0 0.0
          %4346 = vmatpush1.msra.mxu0 0.0
          %4347 = vmatprep.subr.mxu0 0.0
          %4348 = vmatpush1.msra.mxu0 0.0
          %4349 = vmatprep.subr.mxu0 0.0
          %4350 = vmatpush1.msra.mxu0 0.0
          %4351 = vmatprep.subr.mxu0 0.0
          %4352 = vmatpush1.msra.mxu0 0.0
          %4353 = vmatprep.subr.mxu0 0.0
          %4354 = vmatpush1.msra.mxu0 0.0
          %4355 = vmatprep.subr.mxu0 0.0
          %4356 = vmatpush1.msra.mxu0 0.0
          %4357 = vmatprep.subr.mxu0 0.0
          %4358 = vmatpush1.msra.mxu0 0.0
          %4359 = vmatprep.subr.mxu0 0.0
          %4360 = vmatpush1.msra.mxu0 0.0
          %4361 = vmatprep.subr.mxu0 0.0
          %4362 = vmatpush1.msra.mxu0 0.0
          %4363 = vmatprep.subr.mxu0 0.0
          %4364 = vmatpush1.msra.mxu0 0.0
          %4365 = vmatprep.subr.mxu0 0.0
          %4366 = vmatpush1.msra.mxu0 %v4333
          %4367 = vmatprep.subr.mxu0 0.0
          %4368 = vmatpush1.msra.mxu0 %v4332
          %4369 = vmatprep.subr.mxu0 0.0
          %4370 = vmatpush2.msra.mxu0 0.0
          %4371 = vmatprep.subr.mxu0 0.0
          %4372 = vmatpush2.msra.mxu0 0.0
          %4373 = vmatprep.subr.mxu0 0.0
          %4374 = vmatpush2.msra.mxu0 0.0
          %4375 = vmatprep.subr.mxu0 0.0
          %4376 = vmatpush2.msra.mxu0 0.0
          %4377 = vmatprep.subr.mxu0 0.0
          %4378 = vmatpush2.msra.mxu0 0.0
          %4379 = vmatprep.subr.mxu0 0.0
          %4380 = vmatpush2.msra.mxu0 0.0
          %4381 = vmatprep.subr.mxu0 0.0
          %4382 = vmatpush2.msra.mxu0 0.0
          %4383 = vmatprep.subr.mxu0 0.0
          %4384 = vmatpush2.msra.mxu0 0.0
          %4385 = vmatprep.subr.mxu0 0.0
          %4386 = vmatpush2.msra.mxu0 0.0
          %4387 = vmatprep.subr.mxu0 0.0
          %4388 = vmatpush2.msra.mxu0 0.0
          %4389 = vmatprep.subr.mxu0 0.0
          %4390 = vmatpush2.msra.mxu0 0.0
          %4391 = vmatprep.subr.mxu0 0.0
          %4392 = vmatpush2.msra.mxu0 0.0
          %4393 = vmatprep.subr.mxu0 0.0
          %4394 = vmatpush2.msra.mxu0 0.0
          %4395 = vmatprep.subr.mxu0 0.0
          %4396 = vmatpush2.msra.mxu0 0.0
          %4397 = vmatprep.subr.mxu0 0.0
          %4398 = vmatpush2.msra.mxu0 0.0
          %4399 = vmatprep.subr.mxu0 0.0
          %4400 = vmatpush2.msra.mxu0 0.0
          %4401 = vmatprep.mubr.f32.mxu0 0.0
          %4402 = vmatmul.mubr.f32.gmra.mxu0 %v4335
          %v4403 = vpop.f32.mrf.mxu0
          %v4404 = vadd.f32 0.0, %v4403
          %v4405 = vpop.f32.mrf.mxu0
          %4406 = vdwg.mxu0
          %v4407 = vadd.f32 %v4329, %v4404
          %v4408 = vld [vmem:[%s4093 + $0x2] sm:$0x7f]
          %s4409 = scalar_lea.vmem %s4, 224
          %v4410 = vld [vmem:[%s4409] sm:$0xff]
          %v4411 = vld [vmem:[%s4409 + $0x8] sm:$0xff]
          %v4413 = vsel %vm3315, %v4408, 0
          %4415 = vmatprep.subr.mxu0 0.0
          %4416 = vmatpush1.msra.mxu0 0.0
          %4417 = vmatprep.subr.mxu0 0.0
          %4418 = vmatpush1.msra.mxu0 0.0
          %4419 = vmatprep.subr.mxu0 0.0
          %4420 = vmatpush1.msra.mxu0 0.0
          %4421 = vmatprep.subr.mxu0 0.0
          %4422 = vmatpush1.msra.mxu0 0.0
          %4423 = vmatprep.subr.mxu0 0.0
          %4424 = vmatpush1.msra.mxu0 0.0
          %4425 = vmatprep.subr.mxu0 0.0
          %4426 = vmatpush1.msra.mxu0 0.0
          %4427 = vmatprep.subr.mxu0 0.0
          %4428 = vmatpush1.msra.mxu0 0.0
          %4429 = vmatprep.subr.mxu0 0.0
          %4430 = vmatpush1.msra.mxu0 0.0
          %4431 = vmatprep.subr.mxu0 0.0
          %4432 = vmatpush1.msra.mxu0 0.0
          %4433 = vmatprep.subr.mxu0 0.0
          %4434 = vmatpush1.msra.mxu0 0.0
          %4435 = vmatprep.subr.mxu0 0.0
          %4436 = vmatpush1.msra.mxu0 0.0
          %4437 = vmatprep.subr.mxu0 0.0
          %4438 = vmatpush1.msra.mxu0 0.0
          %4439 = vmatprep.subr.mxu0 0.0
          %4440 = vmatpush1.msra.mxu0 0.0
          %4441 = vmatprep.subr.mxu0 0.0
          %4442 = vmatpush1.msra.mxu0 0.0
          %4443 = vmatprep.subr.mxu0 0.0
          %4444 = vmatpush1.msra.mxu0 %v4411
          %4445 = vmatprep.subr.mxu0 0.0
          %4446 = vmatpush1.msra.mxu0 %v4410
          %4447 = vmatprep.subr.mxu0 0.0
          %4448 = vmatpush2.msra.mxu0 0.0
          %4449 = vmatprep.subr.mxu0 0.0
          %4450 = vmatpush2.msra.mxu0 0.0
          %4451 = vmatprep.subr.mxu0 0.0
          %4452 = vmatpush2.msra.mxu0 0.0
          %4453 = vmatprep.subr.mxu0 0.0
          %4454 = vmatpush2.msra.mxu0 0.0
          %4455 = vmatprep.subr.mxu0 0.0
          %4456 = vmatpush2.msra.mxu0 0.0
          %4457 = vmatprep.subr.mxu0 0.0
          %4458 = vmatpush2.msra.mxu0 0.0
          %4459 = vmatprep.subr.mxu0 0.0
          %4460 = vmatpush2.msra.mxu0 0.0
          %4461 = vmatprep.subr.mxu0 0.0
          %4462 = vmatpush2.msra.mxu0 0.0
          %4463 = vmatprep.subr.mxu0 0.0
          %4464 = vmatpush2.msra.mxu0 0.0
          %4465 = vmatprep.subr.mxu0 0.0
          %4466 = vmatpush2.msra.mxu0 0.0
          %4467 = vmatprep.subr.mxu0 0.0
          %4468 = vmatpush2.msra.mxu0 0.0
          %4469 = vmatprep.subr.mxu0 0.0
          %4470 = vmatpush2.msra.mxu0 0.0
          %4471 = vmatprep.subr.mxu0 0.0
          %4472 = vmatpush2.msra.mxu0 0.0
          %4473 = vmatprep.subr.mxu0 0.0
          %4474 = vmatpush2.msra.mxu0 0.0
          %4475 = vmatprep.subr.mxu0 0.0
          %4476 = vmatpush2.msra.mxu0 0.0
          %4477 = vmatprep.subr.mxu0 0.0
          %4478 = vmatpush2.msra.mxu0 0.0
          %4479 = vmatprep.mubr.f32.mxu0 0.0
          %4480 = vmatmul.mubr.f32.gmra.mxu0 %v4413
          %v4481 = vpop.f32.mrf.mxu0
          %v4482 = vadd.f32 0.0, %v4481
          %v4483 = vpop.f32.mrf.mxu0
          %4484 = vdwg.mxu0
          %v4485 = vadd.f32 %v4407, %v4482
          %s4486 = sadd.s32 %s3303, 3
          %s4487 = smul.u32 %s4486, 16
          %s4488 = scalar_lea.vmem [#allocation2], %s4487
          %v4489 = vld [vmem:[%s4488] sm:$0x7f]
          %s4490 = scalar_lea.vmem %s4, 240
          %v4491 = vld [vmem:[%s4490] sm:$0xff]
          %v4492 = vld [vmem:[%s4490 + $0x8] sm:$0xff]
          %v4494 = vsel %vm3315, %v4489, 0
          %4496 = vmatprep.subr.mxu0 0.0
          %4497 = vmatpush1.msra.mxu0 0.0
          %4498 = vmatprep.subr.mxu0 0.0
          %4499 = vmatpush1.msra.mxu0 0.0
          %4500 = vmatprep.subr.mxu0 0.0
          %4501 = vmatpush1.msra.mxu0 0.0
          %4502 = vmatprep.subr.mxu0 0.0
          %4503 = vmatpush1.msra.mxu0 0.0
          %4504 = vmatprep.subr.mxu0 0.0
          %4505 = vmatpush1.msra.mxu0 0.0
          %4506 = vmatprep.subr.mxu0 0.0
          %4507 = vmatpush1.msra.mxu0 0.0
          %4508 = vmatprep.subr.mxu0 0.0
          %4509 = vmatpush1.msra.mxu0 0.0
          %4510 = vmatprep.subr.mxu0 0.0
          %4511 = vmatpush1.msra.mxu0 0.0
          %4512 = vmatprep.subr.mxu0 0.0
          %4513 = vmatpush1.msra.mxu0 0.0
          %4514 = vmatprep.subr.mxu0 0.0
          %4515 = vmatpush1.msra.mxu0 0.0
          %4516 = vmatprep.subr.mxu0 0.0
          %4517 = vmatpush1.msra.mxu0 0.0
          %4518 = vmatprep.subr.mxu0 0.0
          %4519 = vmatpush1.msra.mxu0 0.0
          %4520 = vmatprep.subr.mxu0 0.0
          %4521 = vmatpush1.msra.mxu0 0.0
          %4522 = vmatprep.subr.mxu0 0.0
          %4523 = vmatpush1.msra.mxu0 0.0
          %4524 = vmatprep.subr.mxu0 0.0
          %4525 = vmatpush1.msra.mxu0 %v4492
          %4526 = vmatprep.subr.mxu0 0.0
          %4527 = vmatpush1.msra.mxu0 %v4491
          %4528 = vmatprep.subr.mxu0 0.0
          %4529 = vmatpush2.msra.mxu0 0.0
          %4530 = vmatprep.subr.mxu0 0.0
          %4531 = vmatpush2.msra.mxu0 0.0
          %4532 = vmatprep.subr.mxu0 0.0
          %4533 = vmatpush2.msra.mxu0 0.0
          %4534 = vmatprep.subr.mxu0 0.0
          %4535 = vmatpush2.msra.mxu0 0.0
          %4536 = vmatprep.subr.mxu0 0.0
          %4537 = vmatpush2.msra.mxu0 0.0
          %4538 = vmatprep.subr.mxu0 0.0
          %4539 = vmatpush2.msra.mxu0 0.0
          %4540 = vmatprep.subr.mxu0 0.0
          %4541 = vmatpush2.msra.mxu0 0.0
          %4542 = vmatprep.subr.mxu0 0.0
          %4543 = vmatpush2.msra.mxu0 0.0
          %4544 = vmatprep.subr.mxu0 0.0
          %4545 = vmatpush2.msra.mxu0 0.0
          %4546 = vmatprep.subr.mxu0 0.0
          %4547 = vmatpush2.msra.mxu0 0.0
          %4548 = vmatprep.subr.mxu0 0.0
          %4549 = vmatpush2.msra.mxu0 0.0
          %4550 = vmatprep.subr.mxu0 0.0
          %4551 = vmatpush2.msra.mxu0 0.0
          %4552 = vmatprep.subr.mxu0 0.0
          %4553 = vmatpush2.msra.mxu0 0.0
          %4554 = vmatprep.subr.mxu0 0.0
          %4555 = vmatpush2.msra.mxu0 0.0
          %4556 = vmatprep.subr.mxu0 0.0
          %4557 = vmatpush2.msra.mxu0 0.0
          %4558 = vmatprep.subr.mxu0 0.0
          %4559 = vmatpush2.msra.mxu0 0.0
          %4560 = vmatprep.mubr.f32.mxu0 0.0
          %4561 = vmatmul.mubr.f32.gmra.mxu0 %v4494
          %v4562 = vpop.f32.mrf.mxu0
          %v4563 = vadd.f32 0.0, %v4562
          %v4564 = vpop.f32.mrf.mxu0
          %4565 = vdwg.mxu0
          %v4566 = vadd.f32 %v4485, %v4563
          %s4567 = sadd.s32 %s4487, 272
          %s4568 = scalar_lea.vmem [#allocation2], %s4567
          %v4569 = vld [vmem:[%s4568] sm:$0x7f]
          %s4570 = scalar_lea.vmem %s4, 256
          %v4571 = vld [vmem:[%s4570] sm:$0xff]
          %v4572 = vld [vmem:[%s4570 + $0x8] sm:$0xff]
          %v4574 = vsel %vm3315, %v4569, 0
          %4576 = vmatprep.subr.mxu0 0.0
          %4577 = vmatpush1.msra.mxu0 0.0
          %4578 = vmatprep.subr.mxu0 0.0
          %4579 = vmatpush1.msra.mxu0 0.0
          %4580 = vmatprep.subr.mxu0 0.0
          %4581 = vmatpush1.msra.mxu0 0.0
          %4582 = vmatprep.subr.mxu0 0.0
          %4583 = vmatpush1.msra.mxu0 0.0
          %4584 = vmatprep.subr.mxu0 0.0
          %4585 = vmatpush1.msra.mxu0 0.0
          %4586 = vmatprep.subr.mxu0 0.0
          %4587 = vmatpush1.msra.mxu0 0.0
          %4588 = vmatprep.subr.mxu0 0.0
          %4589 = vmatpush1.msra.mxu0 0.0
          %4590 = vmatprep.subr.mxu0 0.0
          %4591 = vmatpush1.msra.mxu0 0.0
          %4592 = vmatprep.subr.mxu0 0.0
          %4593 = vmatpush1.msra.mxu0 0.0
          %4594 = vmatprep.subr.mxu0 0.0
          %4595 = vmatpush1.msra.mxu0 0.0
          %4596 = vmatprep.subr.mxu0 0.0
          %4597 = vmatpush1.msra.mxu0 0.0
          %4598 = vmatprep.subr.mxu0 0.0
          %4599 = vmatpush1.msra.mxu0 0.0
          %4600 = vmatprep.subr.mxu0 0.0
          %4601 = vmatpush1.msra.mxu0 0.0
          %4602 = vmatprep.subr.mxu0 0.0
          %4603 = vmatpush1.msra.mxu0 0.0
          %4604 = vmatprep.subr.mxu0 0.0
          %4605 = vmatpush1.msra.mxu0 %v4572
          %4606 = vmatprep.subr.mxu0 0.0
          %4607 = vmatpush1.msra.mxu0 %v4571
          %4608 = vmatprep.subr.mxu0 0.0
          %4609 = vmatpush2.msra.mxu0 0.0
          %4610 = vmatprep.subr.mxu0 0.0
          %4611 = vmatpush2.msra.mxu0 0.0
          %4612 = vmatprep.subr.mxu0 0.0
          %4613 = vmatpush2.msra.mxu0 0.0
          %4614 = vmatprep.subr.mxu0 0.0
          %4615 = vmatpush2.msra.mxu0 0.0
          %4616 = vmatprep.subr.mxu0 0.0
          %4617 = vmatpush2.msra.mxu0 0.0
          %4618 = vmatprep.subr.mxu0 0.0
          %4619 = vmatpush2.msra.mxu0 0.0
          %4620 = vmatprep.subr.mxu0 0.0
          %4621 = vmatpush2.msra.mxu0 0.0
          %4622 = vmatprep.subr.mxu0 0.0
          %4623 = vmatpush2.msra.mxu0 0.0
          %4624 = vmatprep.subr.mxu0 0.0
          %4625 = vmatpush2.msra.mxu0 0.0
          %4626 = vmatprep.subr.mxu0 0.0
          %4627 = vmatpush2.msra.mxu0 0.0
          %4628 = vmatprep.subr.mxu0 0.0
          %4629 = vmatpush2.msra.mxu0 0.0
          %4630 = vmatprep.subr.mxu0 0.0
          %4631 = vmatpush2.msra.mxu0 0.0
          %4632 = vmatprep.subr.mxu0 0.0
          %4633 = vmatpush2.msra.mxu0 0.0
          %4634 = vmatprep.subr.mxu0 0.0
          %4635 = vmatpush2.msra.mxu0 0.0
          %4636 = vmatprep.subr.mxu0 0.0
          %4637 = vmatpush2.msra.mxu0 0.0
          %4638 = vmatprep.subr.mxu0 0.0
          %4639 = vmatpush2.msra.mxu0 0.0
          %4640 = vmatprep.mubr.f32.mxu0 0.0
          %4641 = vmatmul.mubr.f32.gmra.mxu0 %v4574
          %v4642 = vpop.f32.mrf.mxu0
          %v4643 = vadd.f32 0.0, %v4642
          %v4644 = vpop.f32.mrf.mxu0
          %4645 = vdwg.mxu0
          %v4646 = vadd.f32 %v4566, %v4643
          %v4647 = vld [vmem:[%s4488 + $0x1] sm:$0x7f]
          %s4648 = scalar_lea.vmem %s4, 272
          %v4649 = vld [vmem:[%s4648] sm:$0xff]
          %v4650 = vld [vmem:[%s4648 + $0x8] sm:$0xff]
          %v4652 = vsel %vm3315, %v4647, 0
          %4654 = vmatprep.subr.mxu0 0.0
          %4655 = vmatpush1.msra.mxu0 0.0
          %4656 = vmatprep.subr.mxu0 0.0
          %4657 = vmatpush1.msra.mxu0 0.0
          %4658 = vmatprep.subr.mxu0 0.0
          %4659 = vmatpush1.msra.mxu0 0.0
          %4660 = vmatprep.subr.mxu0 0.0
          %4661 = vmatpush1.msra.mxu0 0.0
          %4662 = vmatprep.subr.mxu0 0.0
          %4663 = vmatpush1.msra.mxu0 0.0
          %4664 = vmatprep.subr.mxu0 0.0
          %4665 = vmatpush1.msra.mxu0 0.0
          %4666 = vmatprep.subr.mxu0 0.0
          %4667 = vmatpush1.msra.mxu0 0.0
          %4668 = vmatprep.subr.mxu0 0.0
          %4669 = vmatpush1.msra.mxu0 0.0
          %4670 = vmatprep.subr.mxu0 0.0
          %4671 = vmatpush1.msra.mxu0 0.0
          %4672 = vmatprep.subr.mxu0 0.0
          %4673 = vmatpush1.msra.mxu0 0.0
          %4674 = vmatprep.subr.mxu0 0.0
          %4675 = vmatpush1.msra.mxu0 0.0
          %4676 = vmatprep.subr.mxu0 0.0
          %4677 = vmatpush1.msra.mxu0 0.0
          %4678 = vmatprep.subr.mxu0 0.0
          %4679 = vmatpush1.msra.mxu0 0.0
          %4680 = vmatprep.subr.mxu0 0.0
          %4681 = vmatpush1.msra.mxu0 0.0
          %4682 = vmatprep.subr.mxu0 0.0
          %4683 = vmatpush1.msra.mxu0 %v4650
          %4684 = vmatprep.subr.mxu0 0.0
          %4685 = vmatpush1.msra.mxu0 %v4649
          %4686 = vmatprep.subr.mxu0 0.0
          %4687 = vmatpush2.msra.mxu0 0.0
          %4688 = vmatprep.subr.mxu0 0.0
          %4689 = vmatpush2.msra.mxu0 0.0
          %4690 = vmatprep.subr.mxu0 0.0
          %4691 = vmatpush2.msra.mxu0 0.0
          %4692 = vmatprep.subr.mxu0 0.0
          %4693 = vmatpush2.msra.mxu0 0.0
          %4694 = vmatprep.subr.mxu0 0.0
          %4695 = vmatpush2.msra.mxu0 0.0
          %4696 = vmatprep.subr.mxu0 0.0
          %4697 = vmatpush2.msra.mxu0 0.0
          %4698 = vmatprep.subr.mxu0 0.0
          %4699 = vmatpush2.msra.mxu0 0.0
          %4700 = vmatprep.subr.mxu0 0.0
          %4701 = vmatpush2.msra.mxu0 0.0
          %4702 = vmatprep.subr.mxu0 0.0
          %4703 = vmatpush2.msra.mxu0 0.0
          %4704 = vmatprep.subr.mxu0 0.0
          %4705 = vmatpush2.msra.mxu0 0.0
          %4706 = vmatprep.subr.mxu0 0.0
          %4707 = vmatpush2.msra.mxu0 0.0
          %4708 = vmatprep.subr.mxu0 0.0
          %4709 = vmatpush2.msra.mxu0 0.0
          %4710 = vmatprep.subr.mxu0 0.0
          %4711 = vmatpush2.msra.mxu0 0.0
          %4712 = vmatprep.subr.mxu0 0.0
          %4713 = vmatpush2.msra.mxu0 0.0
          %4714 = vmatprep.subr.mxu0 0.0
          %4715 = vmatpush2.msra.mxu0 0.0
          %4716 = vmatprep.subr.mxu0 0.0
          %4717 = vmatpush2.msra.mxu0 0.0
          %4718 = vmatprep.mubr.f32.mxu0 0.0
          %4719 = vmatmul.mubr.f32.gmra.mxu0 %v4652
          %v4720 = vpop.f32.mrf.mxu0
          %v4721 = vadd.f32 0.0, %v4720
          %v4722 = vpop.f32.mrf.mxu0
          %4723 = vdwg.mxu0
          %v4724 = vadd.f32 %v4646, %v4721
          %v4725 = vld [vmem:[%s4568 + $0x1] sm:$0x7f]
          %s4726 = scalar_lea.vmem %s4, 288
          %v4727 = vld [vmem:[%s4726] sm:$0xff]
          %v4728 = vld [vmem:[%s4726 + $0x8] sm:$0xff]
          %v4730 = vsel %vm3315, %v4725, 0
          %4732 = vmatprep.subr.mxu0 0.0
          %4733 = vmatpush1.msra.mxu0 0.0
          %4734 = vmatprep.subr.mxu0 0.0
          %4735 = vmatpush1.msra.mxu0 0.0
          %4736 = vmatprep.subr.mxu0 0.0
          %4737 = vmatpush1.msra.mxu0 0.0
          %4738 = vmatprep.subr.mxu0 0.0
          %4739 = vmatpush1.msra.mxu0 0.0
          %4740 = vmatprep.subr.mxu0 0.0
          %4741 = vmatpush1.msra.mxu0 0.0
          %4742 = vmatprep.subr.mxu0 0.0
          %4743 = vmatpush1.msra.mxu0 0.0
          %4744 = vmatprep.subr.mxu0 0.0
          %4745 = vmatpush1.msra.mxu0 0.0
          %4746 = vmatprep.subr.mxu0 0.0
          %4747 = vmatpush1.msra.mxu0 0.0
          %4748 = vmatprep.subr.mxu0 0.0
          %4749 = vmatpush1.msra.mxu0 0.0
          %4750 = vmatprep.subr.mxu0 0.0
          %4751 = vmatpush1.msra.mxu0 0.0
          %4752 = vmatprep.subr.mxu0 0.0
          %4753 = vmatpush1.msra.mxu0 0.0
          %4754 = vmatprep.subr.mxu0 0.0
          %4755 = vmatpush1.msra.mxu0 0.0
          %4756 = vmatprep.subr.mxu0 0.0
          %4757 = vmatpush1.msra.mxu0 0.0
          %4758 = vmatprep.subr.mxu0 0.0
          %4759 = vmatpush1.msra.mxu0 0.0
          %4760 = vmatprep.subr.mxu0 0.0
          %4761 = vmatpush1.msra.mxu0 %v4728
          %4762 = vmatprep.subr.mxu0 0.0
          %4763 = vmatpush1.msra.mxu0 %v4727
          %4764 = vmatprep.subr.mxu0 0.0
          %4765 = vmatpush2.msra.mxu0 0.0
          %4766 = vmatprep.subr.mxu0 0.0
          %4767 = vmatpush2.msra.mxu0 0.0
          %4768 = vmatprep.subr.mxu0 0.0
          %4769 = vmatpush2.msra.mxu0 0.0
          %4770 = vmatprep.subr.mxu0 0.0
          %4771 = vmatpush2.msra.mxu0 0.0
          %4772 = vmatprep.subr.mxu0 0.0
          %4773 = vmatpush2.msra.mxu0 0.0
          %4774 = vmatprep.subr.mxu0 0.0
          %4775 = vmatpush2.msra.mxu0 0.0
          %4776 = vmatprep.subr.mxu0 0.0
          %4777 = vmatpush2.msra.mxu0 0.0
          %4778 = vmatprep.subr.mxu0 0.0
          %4779 = vmatpush2.msra.mxu0 0.0
          %4780 = vmatprep.subr.mxu0 0.0
          %4781 = vmatpush2.msra.mxu0 0.0
          %4782 = vmatprep.subr.mxu0 0.0
          %4783 = vmatpush2.msra.mxu0 0.0
          %4784 = vmatprep.subr.mxu0 0.0
          %4785 = vmatpush2.msra.mxu0 0.0
          %4786 = vmatprep.subr.mxu0 0.0
          %4787 = vmatpush2.msra.mxu0 0.0
          %4788 = vmatprep.subr.mxu0 0.0
          %4789 = vmatpush2.msra.mxu0 0.0
          %4790 = vmatprep.subr.mxu0 0.0
          %4791 = vmatpush2.msra.mxu0 0.0
          %4792 = vmatprep.subr.mxu0 0.0
          %4793 = vmatpush2.msra.mxu0 0.0
          %4794 = vmatprep.subr.mxu0 0.0
          %4795 = vmatpush2.msra.mxu0 0.0
          %4796 = vmatprep.mubr.f32.mxu0 0.0
          %4797 = vmatmul.mubr.f32.gmra.mxu0 %v4730
          %v4798 = vpop.f32.mrf.mxu0
          %v4799 = vadd.f32 0.0, %v4798
          %v4800 = vpop.f32.mrf.mxu0
          %4801 = vdwg.mxu0
          %v4802 = vadd.f32 %v4724, %v4799
          %v4803 = vld [vmem:[%s4488 + $0x2] sm:$0x7f]
          %s4804 = scalar_lea.vmem %s4, 304
          %v4805 = vld [vmem:[%s4804] sm:$0xff]
          %v4806 = vld [vmem:[%s4804 + $0x8] sm:$0xff]
          %v4808 = vsel %vm3315, %v4803, 0
          %4810 = vmatprep.subr.mxu0 0.0
          %4811 = vmatpush1.msra.mxu0 0.0
          %4812 = vmatprep.subr.mxu0 0.0
          %4813 = vmatpush1.msra.mxu0 0.0
          %4814 = vmatprep.subr.mxu0 0.0
          %4815 = vmatpush1.msra.mxu0 0.0
          %4816 = vmatprep.subr.mxu0 0.0
          %4817 = vmatpush1.msra.mxu0 0.0
          %4818 = vmatprep.subr.mxu0 0.0
          %4819 = vmatpush1.msra.mxu0 0.0
          %4820 = vmatprep.subr.mxu0 0.0
          %4821 = vmatpush1.msra.mxu0 0.0
          %4822 = vmatprep.subr.mxu0 0.0
          %4823 = vmatpush1.msra.mxu0 0.0
          %4824 = vmatprep.subr.mxu0 0.0
          %4825 = vmatpush1.msra.mxu0 0.0
          %4826 = vmatprep.subr.mxu0 0.0
          %4827 = vmatpush1.msra.mxu0 0.0
          %4828 = vmatprep.subr.mxu0 0.0
          %4829 = vmatpush1.msra.mxu0 0.0
          %4830 = vmatprep.subr.mxu0 0.0
          %4831 = vmatpush1.msra.mxu0 0.0
          %4832 = vmatprep.subr.mxu0 0.0
          %4833 = vmatpush1.msra.mxu0 0.0
          %4834 = vmatprep.subr.mxu0 0.0
          %4835 = vmatpush1.msra.mxu0 0.0
          %4836 = vmatprep.subr.mxu0 0.0
          %4837 = vmatpush1.msra.mxu0 0.0
          %4838 = vmatprep.subr.mxu0 0.0
          %4839 = vmatpush1.msra.mxu0 %v4806
          %4840 = vmatprep.subr.mxu0 0.0
          %4841 = vmatpush1.msra.mxu0 %v4805
          %4842 = vmatprep.subr.mxu0 0.0
          %4843 = vmatpush2.msra.mxu0 0.0
          %4844 = vmatprep.subr.mxu0 0.0
          %4845 = vmatpush2.msra.mxu0 0.0
          %4846 = vmatprep.subr.mxu0 0.0
          %4847 = vmatpush2.msra.mxu0 0.0
          %4848 = vmatprep.subr.mxu0 0.0
          %4849 = vmatpush2.msra.mxu0 0.0
          %4850 = vmatprep.subr.mxu0 0.0
          %4851 = vmatpush2.msra.mxu0 0.0
          %4852 = vmatprep.subr.mxu0 0.0
          %4853 = vmatpush2.msra.mxu0 0.0
          %4854 = vmatprep.subr.mxu0 0.0
          %4855 = vmatpush2.msra.mxu0 0.0
          %4856 = vmatprep.subr.mxu0 0.0
          %4857 = vmatpush2.msra.mxu0 0.0
          %4858 = vmatprep.subr.mxu0 0.0
          %4859 = vmatpush2.msra.mxu0 0.0
          %4860 = vmatprep.subr.mxu0 0.0
          %4861 = vmatpush2.msra.mxu0 0.0
          %4862 = vmatprep.subr.mxu0 0.0
          %4863 = vmatpush2.msra.mxu0 0.0
          %4864 = vmatprep.subr.mxu0 0.0
          %4865 = vmatpush2.msra.mxu0 0.0
          %4866 = vmatprep.subr.mxu0 0.0
          %4867 = vmatpush2.msra.mxu0 0.0
          %4868 = vmatprep.subr.mxu0 0.0
          %4869 = vmatpush2.msra.mxu0 0.0
          %4870 = vmatprep.subr.mxu0 0.0
          %4871 = vmatpush2.msra.mxu0 0.0
          %4872 = vmatprep.subr.mxu0 0.0
          %4873 = vmatpush2.msra.mxu0 0.0
          %4874 = vmatprep.mubr.f32.mxu0 0.0
          %4875 = vmatmul.mubr.f32.gmra.mxu0 %v4808
          %v4876 = vpop.f32.mrf.mxu0
          %v4877 = vadd.f32 0.0, %v4876
          %v4878 = vpop.f32.mrf.mxu0
          %4879 = vdwg.mxu0
          %v4880 = vadd.f32 %v4802, %v4877
          %s4881 = sadd.s32 %s3303, 4
          %s4882 = smul.u32 %s4881, 16
          %s4883 = scalar_lea.vmem [#allocation2], %s4882
          %v4884 = vld [vmem:[%s4883] sm:$0x7f]
          %s4885 = scalar_lea.vmem %s4, 320
          %v4886 = vld [vmem:[%s4885] sm:$0xff]
          %v4887 = vld [vmem:[%s4885 + $0x8] sm:$0xff]
          %v4889 = vsel %vm3315, %v4884, 0
          %4891 = vmatprep.subr.mxu0 0.0
          %4892 = vmatpush1.msra.mxu0 0.0
          %4893 = vmatprep.subr.mxu0 0.0
          %4894 = vmatpush1.msra.mxu0 0.0
          %4895 = vmatprep.subr.mxu0 0.0
          %4896 = vmatpush1.msra.mxu0 0.0
          %4897 = vmatprep.subr.mxu0 0.0
          %4898 = vmatpush1.msra.mxu0 0.0
          %4899 = vmatprep.subr.mxu0 0.0
          %4900 = vmatpush1.msra.mxu0 0.0
          %4901 = vmatprep.subr.mxu0 0.0
          %4902 = vmatpush1.msra.mxu0 0.0
          %4903 = vmatprep.subr.mxu0 0.0
          %4904 = vmatpush1.msra.mxu0 0.0
          %4905 = vmatprep.subr.mxu0 0.0
          %4906 = vmatpush1.msra.mxu0 0.0
          %4907 = vmatprep.subr.mxu0 0.0
          %4908 = vmatpush1.msra.mxu0 0.0
          %4909 = vmatprep.subr.mxu0 0.0
          %4910 = vmatpush1.msra.mxu0 0.0
          %4911 = vmatprep.subr.mxu0 0.0
          %4912 = vmatpush1.msra.mxu0 0.0
          %4913 = vmatprep.subr.mxu0 0.0
          %4914 = vmatpush1.msra.mxu0 0.0
          %4915 = vmatprep.subr.mxu0 0.0
          %4916 = vmatpush1.msra.mxu0 0.0
          %4917 = vmatprep.subr.mxu0 0.0
          %4918 = vmatpush1.msra.mxu0 0.0
          %4919 = vmatprep.subr.mxu0 0.0
          %4920 = vmatpush1.msra.mxu0 %v4887
          %4921 = vmatprep.subr.mxu0 0.0
          %4922 = vmatpush1.msra.mxu0 %v4886
          %4923 = vmatprep.subr.mxu0 0.0
          %4924 = vmatpush2.msra.mxu0 0.0
          %4925 = vmatprep.subr.mxu0 0.0
          %4926 = vmatpush2.msra.mxu0 0.0
          %4927 = vmatprep.subr.mxu0 0.0
          %4928 = vmatpush2.msra.mxu0 0.0
          %4929 = vmatprep.subr.mxu0 0.0
          %4930 = vmatpush2.msra.mxu0 0.0
          %4931 = vmatprep.subr.mxu0 0.0
          %4932 = vmatpush2.msra.mxu0 0.0
          %4933 = vmatprep.subr.mxu0 0.0
          %4934 = vmatpush2.msra.mxu0 0.0
          %4935 = vmatprep.subr.mxu0 0.0
          %4936 = vmatpush2.msra.mxu0 0.0
          %4937 = vmatprep.subr.mxu0 0.0
          %4938 = vmatpush2.msra.mxu0 0.0
          %4939 = vmatprep.subr.mxu0 0.0
          %4940 = vmatpush2.msra.mxu0 0.0
          %4941 = vmatprep.subr.mxu0 0.0
          %4942 = vmatpush2.msra.mxu0 0.0
          %4943 = vmatprep.subr.mxu0 0.0
          %4944 = vmatpush2.msra.mxu0 0.0
          %4945 = vmatprep.subr.mxu0 0.0
          %4946 = vmatpush2.msra.mxu0 0.0
          %4947 = vmatprep.subr.mxu0 0.0
          %4948 = vmatpush2.msra.mxu0 0.0
          %4949 = vmatprep.subr.mxu0 0.0
          %4950 = vmatpush2.msra.mxu0 0.0
          %4951 = vmatprep.subr.mxu0 0.0
          %4952 = vmatpush2.msra.mxu0 0.0
          %4953 = vmatprep.subr.mxu0 0.0
          %4954 = vmatpush2.msra.mxu0 0.0
          %4955 = vmatprep.mubr.f32.mxu0 0.0
          %4956 = vmatmul.mubr.f32.gmra.mxu0 %v4889
          %v4957 = vpop.f32.mrf.mxu0
          %v4958 = vadd.f32 0.0, %v4957
          %v4959 = vpop.f32.mrf.mxu0
          %4960 = vdwg.mxu0
          %v4961 = vadd.f32 %v4880, %v4958
          %s4962 = sadd.s32 %s4882, 272
          %s4963 = scalar_lea.vmem [#allocation2], %s4962
          %v4964 = vld [vmem:[%s4963] sm:$0x7f]
          %s4965 = scalar_lea.vmem %s4, 336
          %v4966 = vld [vmem:[%s4965] sm:$0xff]
          %v4967 = vld [vmem:[%s4965 + $0x8] sm:$0xff]
          %v4969 = vsel %vm3315, %v4964, 0
          %4971 = vmatprep.subr.mxu0 0.0
          %4972 = vmatpush1.msra.mxu0 0.0
          %4973 = vmatprep.subr.mxu0 0.0
          %4974 = vmatpush1.msra.mxu0 0.0
          %4975 = vmatprep.subr.mxu0 0.0
          %4976 = vmatpush1.msra.mxu0 0.0
          %4977 = vmatprep.subr.mxu0 0.0
          %4978 = vmatpush1.msra.mxu0 0.0
          %4979 = vmatprep.subr.mxu0 0.0
          %4980 = vmatpush1.msra.mxu0 0.0
          %4981 = vmatprep.subr.mxu0 0.0
          %4982 = vmatpush1.msra.mxu0 0.0
          %4983 = vmatprep.subr.mxu0 0.0
          %4984 = vmatpush1.msra.mxu0 0.0
          %4985 = vmatprep.subr.mxu0 0.0
          %4986 = vmatpush1.msra.mxu0 0.0
          %4987 = vmatprep.subr.mxu0 0.0
          %4988 = vmatpush1.msra.mxu0 0.0
          %4989 = vmatprep.subr.mxu0 0.0
          %4990 = vmatpush1.msra.mxu0 0.0
          %4991 = vmatprep.subr.mxu0 0.0
          %4992 = vmatpush1.msra.mxu0 0.0
          %4993 = vmatprep.subr.mxu0 0.0
          %4994 = vmatpush1.msra.mxu0 0.0
          %4995 = vmatprep.subr.mxu0 0.0
          %4996 = vmatpush1.msra.mxu0 0.0
          %4997 = vmatprep.subr.mxu0 0.0
          %4998 = vmatpush1.msra.mxu0 0.0
          %4999 = vmatprep.subr.mxu0 0.0
          %5000 = vmatpush1.msra.mxu0 %v4967
          %5001 = vmatprep.subr.mxu0 0.0
          %5002 = vmatpush1.msra.mxu0 %v4966
          %5003 = vmatprep.subr.mxu0 0.0
          %5004 = vmatpush2.msra.mxu0 0.0
          %5005 = vmatprep.subr.mxu0 0.0
          %5006 = vmatpush2.msra.mxu0 0.0
          %5007 = vmatprep.subr.mxu0 0.0
          %5008 = vmatpush2.msra.mxu0 0.0
          %5009 = vmatprep.subr.mxu0 0.0
          %5010 = vmatpush2.msra.mxu0 0.0
          %5011 = vmatprep.subr.mxu0 0.0
          %5012 = vmatpush2.msra.mxu0 0.0
          %5013 = vmatprep.subr.mxu0 0.0
          %5014 = vmatpush2.msra.mxu0 0.0
          %5015 = vmatprep.subr.mxu0 0.0
          %5016 = vmatpush2.msra.mxu0 0.0
          %5017 = vmatprep.subr.mxu0 0.0
          %5018 = vmatpush2.msra.mxu0 0.0
          %5019 = vmatprep.subr.mxu0 0.0
          %5020 = vmatpush2.msra.mxu0 0.0
          %5021 = vmatprep.subr.mxu0 0.0
          %5022 = vmatpush2.msra.mxu0 0.0
          %5023 = vmatprep.subr.mxu0 0.0
          %5024 = vmatpush2.msra.mxu0 0.0
          %5025 = vmatprep.subr.mxu0 0.0
          %5026 = vmatpush2.msra.mxu0 0.0
          %5027 = vmatprep.subr.mxu0 0.0
          %5028 = vmatpush2.msra.mxu0 0.0
          %5029 = vmatprep.subr.mxu0 0.0
          %5030 = vmatpush2.msra.mxu0 0.0
          %5031 = vmatprep.subr.mxu0 0.0
          %5032 = vmatpush2.msra.mxu0 0.0
          %5033 = vmatprep.subr.mxu0 0.0
          %5034 = vmatpush2.msra.mxu0 0.0
          %5035 = vmatprep.mubr.f32.mxu0 0.0
          %5036 = vmatmul.mubr.f32.gmra.mxu0 %v4969
          %v5037 = vpop.f32.mrf.mxu0
          %v5038 = vadd.f32 0.0, %v5037
          %v5039 = vpop.f32.mrf.mxu0
          %5040 = vdwg.mxu0
          %v5041 = vadd.f32 %v4961, %v5038
          %v5042 = vld [vmem:[%s4883 + $0x1] sm:$0x7f]
          %s5043 = scalar_lea.vmem %s4, 352
          %v5044 = vld [vmem:[%s5043] sm:$0xff]
          %v5045 = vld [vmem:[%s5043 + $0x8] sm:$0xff]
          %v5047 = vsel %vm3315, %v5042, 0
          %5049 = vmatprep.subr.mxu0 0.0
          %5050 = vmatpush1.msra.mxu0 0.0
          %5051 = vmatprep.subr.mxu0 0.0
          %5052 = vmatpush1.msra.mxu0 0.0
          %5053 = vmatprep.subr.mxu0 0.0
          %5054 = vmatpush1.msra.mxu0 0.0
          %5055 = vmatprep.subr.mxu0 0.0
          %5056 = vmatpush1.msra.mxu0 0.0
          %5057 = vmatprep.subr.mxu0 0.0
          %5058 = vmatpush1.msra.mxu0 0.0
          %5059 = vmatprep.subr.mxu0 0.0
          %5060 = vmatpush1.msra.mxu0 0.0
          %5061 = vmatprep.subr.mxu0 0.0
          %5062 = vmatpush1.msra.mxu0 0.0
          %5063 = vmatprep.subr.mxu0 0.0
          %5064 = vmatpush1.msra.mxu0 0.0
          %5065 = vmatprep.subr.mxu0 0.0
          %5066 = vmatpush1.msra.mxu0 0.0
          %5067 = vmatprep.subr.mxu0 0.0
          %5068 = vmatpush1.msra.mxu0 0.0
          %5069 = vmatprep.subr.mxu0 0.0
          %5070 = vmatpush1.msra.mxu0 0.0
          %5071 = vmatprep.subr.mxu0 0.0
          %5072 = vmatpush1.msra.mxu0 0.0
          %5073 = vmatprep.subr.mxu0 0.0
          %5074 = vmatpush1.msra.mxu0 0.0
          %5075 = vmatprep.subr.mxu0 0.0
          %5076 = vmatpush1.msra.mxu0 0.0
          %5077 = vmatprep.subr.mxu0 0.0
          %5078 = vmatpush1.msra.mxu0 %v5045
          %5079 = vmatprep.subr.mxu0 0.0
          %5080 = vmatpush1.msra.mxu0 %v5044
          %5081 = vmatprep.subr.mxu0 0.0
          %5082 = vmatpush2.msra.mxu0 0.0
          %5083 = vmatprep.subr.mxu0 0.0
          %5084 = vmatpush2.msra.mxu0 0.0
          %5085 = vmatprep.subr.mxu0 0.0
          %5086 = vmatpush2.msra.mxu0 0.0
          %5087 = vmatprep.subr.mxu0 0.0
          %5088 = vmatpush2.msra.mxu0 0.0
          %5089 = vmatprep.subr.mxu0 0.0
          %5090 = vmatpush2.msra.mxu0 0.0
          %5091 = vmatprep.subr.mxu0 0.0
          %5092 = vmatpush2.msra.mxu0 0.0
          %5093 = vmatprep.subr.mxu0 0.0
          %5094 = vmatpush2.msra.mxu0 0.0
          %5095 = vmatprep.subr.mxu0 0.0
          %5096 = vmatpush2.msra.mxu0 0.0
          %5097 = vmatprep.subr.mxu0 0.0
          %5098 = vmatpush2.msra.mxu0 0.0
          %5099 = vmatprep.subr.mxu0 0.0
          %5100 = vmatpush2.msra.mxu0 0.0
          %5101 = vmatprep.subr.mxu0 0.0
          %5102 = vmatpush2.msra.mxu0 0.0
          %5103 = vmatprep.subr.mxu0 0.0
          %5104 = vmatpush2.msra.mxu0 0.0
          %5105 = vmatprep.subr.mxu0 0.0
          %5106 = vmatpush2.msra.mxu0 0.0
          %5107 = vmatprep.subr.mxu0 0.0
          %5108 = vmatpush2.msra.mxu0 0.0
          %5109 = vmatprep.subr.mxu0 0.0
          %5110 = vmatpush2.msra.mxu0 0.0
          %5111 = vmatprep.subr.mxu0 0.0
          %5112 = vmatpush2.msra.mxu0 0.0
          %5113 = vmatprep.mubr.f32.mxu0 0.0
          %5114 = vmatmul.mubr.f32.gmra.mxu0 %v5047
          %v5115 = vpop.f32.mrf.mxu0
          %v5116 = vadd.f32 0.0, %v5115
          %v5117 = vpop.f32.mrf.mxu0
          %5118 = vdwg.mxu0
          %v5119 = vadd.f32 %v5041, %v5116
          %v5120 = vld [vmem:[%s4963 + $0x1] sm:$0x7f]
          %s5121 = scalar_lea.vmem %s4, 368
          %v5122 = vld [vmem:[%s5121] sm:$0xff]
          %v5123 = vld [vmem:[%s5121 + $0x8] sm:$0xff]
          %v5125 = vsel %vm3315, %v5120, 0
          %5127 = vmatprep.subr.mxu0 0.0
          %5128 = vmatpush1.msra.mxu0 0.0
          %5129 = vmatprep.subr.mxu0 0.0
          %5130 = vmatpush1.msra.mxu0 0.0
          %5131 = vmatprep.subr.mxu0 0.0
          %5132 = vmatpush1.msra.mxu0 0.0
          %5133 = vmatprep.subr.mxu0 0.0
          %5134 = vmatpush1.msra.mxu0 0.0
          %5135 = vmatprep.subr.mxu0 0.0
          %5136 = vmatpush1.msra.mxu0 0.0
          %5137 = vmatprep.subr.mxu0 0.0
          %5138 = vmatpush1.msra.mxu0 0.0
          %5139 = vmatprep.subr.mxu0 0.0
          %5140 = vmatpush1.msra.mxu0 0.0
          %5141 = vmatprep.subr.mxu0 0.0
          %5142 = vmatpush1.msra.mxu0 0.0
          %5143 = vmatprep.subr.mxu0 0.0
          %5144 = vmatpush1.msra.mxu0 0.0
          %5145 = vmatprep.subr.mxu0 0.0
          %5146 = vmatpush1.msra.mxu0 0.0
          %5147 = vmatprep.subr.mxu0 0.0
          %5148 = vmatpush1.msra.mxu0 0.0
          %5149 = vmatprep.subr.mxu0 0.0
          %5150 = vmatpush1.msra.mxu0 0.0
          %5151 = vmatprep.subr.mxu0 0.0
          %5152 = vmatpush1.msra.mxu0 0.0
          %5153 = vmatprep.subr.mxu0 0.0
          %5154 = vmatpush1.msra.mxu0 0.0
          %5155 = vmatprep.subr.mxu0 0.0
          %5156 = vmatpush1.msra.mxu0 %v5123
          %5157 = vmatprep.subr.mxu0 0.0
          %5158 = vmatpush1.msra.mxu0 %v5122
          %5159 = vmatprep.subr.mxu0 0.0
          %5160 = vmatpush2.msra.mxu0 0.0
          %5161 = vmatprep.subr.mxu0 0.0
          %5162 = vmatpush2.msra.mxu0 0.0
          %5163 = vmatprep.subr.mxu0 0.0
          %5164 = vmatpush2.msra.mxu0 0.0
          %5165 = vmatprep.subr.mxu0 0.0
          %5166 = vmatpush2.msra.mxu0 0.0
          %5167 = vmatprep.subr.mxu0 0.0
          %5168 = vmatpush2.msra.mxu0 0.0
          %5169 = vmatprep.subr.mxu0 0.0
          %5170 = vmatpush2.msra.mxu0 0.0
          %5171 = vmatprep.subr.mxu0 0.0
          %5172 = vmatpush2.msra.mxu0 0.0
          %5173 = vmatprep.subr.mxu0 0.0
          %5174 = vmatpush2.msra.mxu0 0.0
          %5175 = vmatprep.subr.mxu0 0.0
          %5176 = vmatpush2.msra.mxu0 0.0
          %5177 = vmatprep.subr.mxu0 0.0
          %5178 = vmatpush2.msra.mxu0 0.0
          %5179 = vmatprep.subr.mxu0 0.0
          %5180 = vmatpush2.msra.mxu0 0.0
          %5181 = vmatprep.subr.mxu0 0.0
          %5182 = vmatpush2.msra.mxu0 0.0
          %5183 = vmatprep.subr.mxu0 0.0
          %5184 = vmatpush2.msra.mxu0 0.0
          %5185 = vmatprep.subr.mxu0 0.0
          %5186 = vmatpush2.msra.mxu0 0.0
          %5187 = vmatprep.subr.mxu0 0.0
          %5188 = vmatpush2.msra.mxu0 0.0
          %5189 = vmatprep.subr.mxu0 0.0
          %5190 = vmatpush2.msra.mxu0 0.0
          %5191 = vmatprep.mubr.f32.mxu0 0.0
          %5192 = vmatmul.mubr.f32.gmra.mxu0 %v5125
          %v5193 = vpop.f32.mrf.mxu0
          %v5194 = vadd.f32 0.0, %v5193
          %v5195 = vpop.f32.mrf.mxu0
          %5196 = vdwg.mxu0
          %v5197 = vadd.f32 %v5119, %v5194
          %v5198 = vld [vmem:[%s4883 + $0x2] sm:$0x7f]
          %s5199 = scalar_lea.vmem %s4, 384
          %v5200 = vld [vmem:[%s5199] sm:$0xff]
          %v5201 = vld [vmem:[%s5199 + $0x8] sm:$0xff]
          %v5203 = vsel %vm3315, %v5198, 0
          %5205 = vmatprep.subr.mxu0 0.0
          %5206 = vmatpush1.msra.mxu0 0.0
          %5207 = vmatprep.subr.mxu0 0.0
          %5208 = vmatpush1.msra.mxu0 0.0
          %5209 = vmatprep.subr.mxu0 0.0
          %5210 = vmatpush1.msra.mxu0 0.0
          %5211 = vmatprep.subr.mxu0 0.0
          %5212 = vmatpush1.msra.mxu0 0.0
          %5213 = vmatprep.subr.mxu0 0.0
          %5214 = vmatpush1.msra.mxu0 0.0
          %5215 = vmatprep.subr.mxu0 0.0
          %5216 = vmatpush1.msra.mxu0 0.0
          %5217 = vmatprep.subr.mxu0 0.0
          %5218 = vmatpush1.msra.mxu0 0.0
          %5219 = vmatprep.subr.mxu0 0.0
          %5220 = vmatpush1.msra.mxu0 0.0
          %5221 = vmatprep.subr.mxu0 0.0
          %5222 = vmatpush1.msra.mxu0 0.0
          %5223 = vmatprep.subr.mxu0 0.0
          %5224 = vmatpush1.msra.mxu0 0.0
          %5225 = vmatprep.subr.mxu0 0.0
          %5226 = vmatpush1.msra.mxu0 0.0
          %5227 = vmatprep.subr.mxu0 0.0
          %5228 = vmatpush1.msra.mxu0 0.0
          %5229 = vmatprep.subr.mxu0 0.0
          %5230 = vmatpush1.msra.mxu0 0.0
          %5231 = vmatprep.subr.mxu0 0.0
          %5232 = vmatpush1.msra.mxu0 0.0
          %5233 = vmatprep.subr.mxu0 0.0
          %5234 = vmatpush1.msra.mxu0 %v5201
          %5235 = vmatprep.subr.mxu0 0.0
          %5236 = vmatpush1.msra.mxu0 %v5200
          %5237 = vmatprep.subr.mxu0 0.0
          %5238 = vmatpush2.msra.mxu0 0.0
          %5239 = vmatprep.subr.mxu0 0.0
          %5240 = vmatpush2.msra.mxu0 0.0
          %5241 = vmatprep.subr.mxu0 0.0
          %5242 = vmatpush2.msra.mxu0 0.0
          %5243 = vmatprep.subr.mxu0 0.0
          %5244 = vmatpush2.msra.mxu0 0.0
          %5245 = vmatprep.subr.mxu0 0.0
          %5246 = vmatpush2.msra.mxu0 0.0
          %5247 = vmatprep.subr.mxu0 0.0
          %5248 = vmatpush2.msra.mxu0 0.0
          %5249 = vmatprep.subr.mxu0 0.0
          %5250 = vmatpush2.msra.mxu0 0.0
          %5251 = vmatprep.subr.mxu0 0.0
          %5252 = vmatpush2.msra.mxu0 0.0
          %5253 = vmatprep.subr.mxu0 0.0
          %5254 = vmatpush2.msra.mxu0 0.0
          %5255 = vmatprep.subr.mxu0 0.0
          %5256 = vmatpush2.msra.mxu0 0.0
          %5257 = vmatprep.subr.mxu0 0.0
          %5258 = vmatpush2.msra.mxu0 0.0
          %5259 = vmatprep.subr.mxu0 0.0
          %5260 = vmatpush2.msra.mxu0 0.0
          %5261 = vmatprep.subr.mxu0 0.0
          %5262 = vmatpush2.msra.mxu0 0.0
          %5263 = vmatprep.subr.mxu0 0.0
          %5264 = vmatpush2.msra.mxu0 0.0
          %5265 = vmatprep.subr.mxu0 0.0
          %5266 = vmatpush2.msra.mxu0 0.0
          %5267 = vmatprep.subr.mxu0 0.0
          %5268 = vmatpush2.msra.mxu0 0.0
          %5269 = vmatprep.mubr.f32.mxu0 0.0
          %5270 = vmatmul.mubr.f32.gmra.mxu0 %v5203
          %v5271 = vpop.f32.mrf.mxu0
          %v5272 = vadd.f32 0.0, %v5271
          %v5273 = vpop.f32.mrf.mxu0
          %5274 = vdwg.mxu0
          %v5275 = vadd.f32 %v5197, %v5272
          %v5276 = vld [vmem:[%s5] sm:$0x1]
          %v5278 = vlaneseq
          %v5279 = vshrl.u32 %v5278, 7
          %v5280 = vsub.s32 0, %v5279
          %v5281 = vrot.slane %v5276, %v5280
          %v5283 = vadd.f32 %v5275, %v5281
          %v5284 = vmax.f32 %v5283, 0.0
          %vm5285 = vcmask 56320
          %v5287 = vsel %vm5285, %v571, 0
          %vm5289 = vcmask 1046528
          %v5291 = vsel %vm5289, %v5284, 0
          %5293 = vmatprep.subr.mxu0 0.0
          %5294 = vmatpush1.msra.mxu0 0.0
          %5295 = vmatprep.subr.mxu0 0.0
          %5296 = vmatpush1.msra.mxu0 0.0
          %5297 = vmatprep.subr.mxu0 0.0
          %5298 = vmatpush1.msra.mxu0 0.0
          %5299 = vmatprep.subr.mxu0 0.0
          %5300 = vmatpush1.msra.mxu0 0.0
          %5301 = vmatprep.subr.mxu0 0.0
          %5302 = vmatpush1.msra.mxu0 0.0
          %5303 = vmatprep.subr.mxu0 0.0
          %5304 = vmatpush1.msra.mxu0 0.0
          %5305 = vmatprep.subr.mxu0 0.0
          %5306 = vmatpush1.msra.mxu0 0.0
          %5307 = vmatprep.subr.mxu0 0.0
          %5308 = vmatpush1.msra.mxu0 0.0
          %5309 = vmatprep.subr.mxu0 0.0
          %5310 = vmatpush1.msra.mxu0 0.0
          %5311 = vmatprep.subr.mxu0 0.0
          %5312 = vmatpush1.msra.mxu0 0.0
          %5313 = vmatprep.subr.mxu0 0.0
          %5314 = vmatpush1.msra.mxu0 0.0
          %5315 = vmatprep.subr.mxu0 0.0
          %5316 = vmatpush1.msra.mxu0 0.0
          %5317 = vmatprep.subr.mxu0 0.0
          %5318 = vmatpush1.msra.mxu0 0.0
          %5319 = vmatprep.subr.mxu0 0.0
          %5320 = vmatpush1.msra.mxu0 0.0
          %5321 = vmatprep.subr.mxu0 0.0
          %5322 = vmatpush1.msra.mxu0 0.0
          %5323 = vmatprep.subr.mxu0 0.0
          %5324 = vmatpush1.msra.mxu0 %v5291
          %5325 = vmatprep.subr.mxu0 0.0
          %5326 = vmatpush2.msra.mxu0 0.0
          %5327 = vmatprep.subr.mxu0 0.0
          %5328 = vmatpush2.msra.mxu0 0.0
          %5329 = vmatprep.subr.mxu0 0.0
          %5330 = vmatpush2.msra.mxu0 0.0
          %5331 = vmatprep.subr.mxu0 0.0
          %5332 = vmatpush2.msra.mxu0 0.0
          %5333 = vmatprep.subr.mxu0 0.0
          %5334 = vmatpush2.msra.mxu0 0.0
          %5335 = vmatprep.subr.mxu0 0.0
          %5336 = vmatpush2.msra.mxu0 0.0
          %5337 = vmatprep.subr.mxu0 0.0
          %5338 = vmatpush2.msra.mxu0 0.0
          %5339 = vmatprep.subr.mxu0 0.0
          %5340 = vmatpush2.msra.mxu0 0.0
          %5341 = vmatprep.subr.mxu0 0.0
          %5342 = vmatpush2.msra.mxu0 0.0
          %5343 = vmatprep.subr.mxu0 0.0
          %5344 = vmatpush2.msra.mxu0 0.0
          %5345 = vmatprep.subr.mxu0 0.0
          %5346 = vmatpush2.msra.mxu0 0.0
          %5347 = vmatprep.subr.mxu0 0.0
          %5348 = vmatpush2.msra.mxu0 0.0
          %5349 = vmatprep.subr.mxu0 0.0
          %5350 = vmatpush2.msra.mxu0 0.0
          %5351 = vmatprep.subr.mxu0 0.0
          %5352 = vmatpush2.msra.mxu0 0.0
          %5353 = vmatprep.subr.mxu0 0.0
          %5354 = vmatpush2.msra.mxu0 0.0
          %5355 = vmatprep.subr.mxu0 0.0
          %5356 = vmatpush2.msra.mxu0 0.0
          %5357 = vmatprep.mubr.f32.mxu0 0.0
          %5358 = vmatmul.mubr.f32.gmra.mxu0 %v5287
          %v5359 = vpop.f32.mrf.mxu0
          %v5360 = vadd.f32 0.0, %v5359
          %v5361 = vpop.f32.mrf.mxu0
          %5362 = vdwg.mxu0
          %s5363 = smul.u32 %s3298, 4
          %s5364 = scalar_lea.vmem [#allocation3], %s5363
          %vm5365 = vcmask 519168
          %5366 = vst.msk [vmem:[%s5364] sm:$0xf] %vm5365, %v5360
          %v5368 = vsel %vm5285, %v579, 0
          %5370 = vmatprep.subr.mxu0 0.0
          %5371 = vmatpush1.msra.mxu0 0.0
          %5372 = vmatprep.subr.mxu0 0.0
          %5373 = vmatpush1.msra.mxu0 0.0
          %5374 = vmatprep.subr.mxu0 0.0
          %5375 = vmatpush1.msra.mxu0 0.0
          %5376 = vmatprep.subr.mxu0 0.0
          %5377 = vmatpush1.msra.mxu0 0.0
          %5378 = vmatprep.subr.mxu0 0.0
          %5379 = vmatpush1.msra.mxu0 0.0
          %5380 = vmatprep.subr.mxu0 0.0
          %5381 = vmatpush1.msra.mxu0 0.0
          %5382 = vmatprep.subr.mxu0 0.0
          %5383 = vmatpush1.msra.mxu0 0.0
          %5384 = vmatprep.subr.mxu0 0.0
          %5385 = vmatpush1.msra.mxu0 0.0
          %5386 = vmatprep.subr.mxu0 0.0
          %5387 = vmatpush1.msra.mxu0 0.0
          %5388 = vmatprep.subr.mxu0 0.0
          %5389 = vmatpush1.msra.mxu0 0.0
          %5390 = vmatprep.subr.mxu0 0.0
          %5391 = vmatpush1.msra.mxu0 0.0
          %5392 = vmatprep.subr.mxu0 0.0
          %5393 = vmatpush1.msra.mxu0 0.0
          %5394 = vmatprep.subr.mxu0 0.0
          %5395 = vmatpush1.msra.mxu0 0.0
          %5396 = vmatprep.subr.mxu0 0.0
          %5397 = vmatpush1.msra.mxu0 0.0
          %5398 = vmatprep.subr.mxu0 0.0
          %5399 = vmatpush1.msra.mxu0 0.0
          %5400 = vmatprep.subr.mxu0 0.0
          %5401 = vmatpush1.msra.mxu0 %v5291
          %5402 = vmatprep.subr.mxu0 0.0
          %5403 = vmatpush2.msra.mxu0 0.0
          %5404 = vmatprep.subr.mxu0 0.0
          %5405 = vmatpush2.msra.mxu0 0.0
          %5406 = vmatprep.subr.mxu0 0.0
          %5407 = vmatpush2.msra.mxu0 0.0
          %5408 = vmatprep.subr.mxu0 0.0
          %5409 = vmatpush2.msra.mxu0 0.0
          %5410 = vmatprep.subr.mxu0 0.0
          %5411 = vmatpush2.msra.mxu0 0.0
          %5412 = vmatprep.subr.mxu0 0.0
          %5413 = vmatpush2.msra.mxu0 0.0
          %5414 = vmatprep.subr.mxu0 0.0
          %5415 = vmatpush2.msra.mxu0 0.0
          %5416 = vmatprep.subr.mxu0 0.0
          %5417 = vmatpush2.msra.mxu0 0.0
          %5418 = vmatprep.subr.mxu0 0.0
          %5419 = vmatpush2.msra.mxu0 0.0
          %5420 = vmatprep.subr.mxu0 0.0
          %5421 = vmatpush2.msra.mxu0 0.0
          %5422 = vmatprep.subr.mxu0 0.0
          %5423 = vmatpush2.msra.mxu0 0.0
          %5424 = vmatprep.subr.mxu0 0.0
          %5425 = vmatpush2.msra.mxu0 0.0
          %5426 = vmatprep.subr.mxu0 0.0
          %5427 = vmatpush2.msra.mxu0 0.0
          %5428 = vmatprep.subr.mxu0 0.0
          %5429 = vmatpush2.msra.mxu0 0.0
          %5430 = vmatprep.subr.mxu0 0.0
          %5431 = vmatpush2.msra.mxu0 0.0
          %5432 = vmatprep.subr.mxu0 0.0
          %5433 = vmatpush2.msra.mxu0 0.0
          %5434 = vmatprep.mubr.f32.mxu0 0.0
          %5435 = vmatmul.mubr.f32.gmra.mxu0 %v5368
          %v5436 = vpop.f32.mrf.mxu0
          %v5437 = vadd.f32 0.0, %v5436
          %v5438 = vpop.f32.mrf.mxu0
          %5439 = vdwg.mxu0
          %s5440 = sadd.s32 %s5363, 28
          %s5441 = scalar_lea.vmem [#allocation3], %s5440
          %5442 = vst.msk [vmem:[%s5441] sm:$0xf] %vm5365, %v5437
        $region100: #{value_network_forward.1} parent=87 // loop_footer
          %s3302 = sadd.s32 1, %s3298
        $region101: #{value_network_forward.1} parent=87 // loop_footer_branch
          %3297 = sbr.rel target = $region97
        $region102: #{value_network_forward.1} parent=87 // loop_exit
          _
        %v5443 = vlaneseq
        %vm5444 = vcmp.ge.s32.totalorder %v5443, 0
        %vm5445 = vcmp.lt.s32.totalorder %v5443, 256
        %vm5446 = vmand %vm5444, %vm5445
        %5447 = vst.msk [vmem:[#allocation4] sm:$0x3] %vm5446, 0.0
        loop: start=0, step=1, limit=2
        $region103: #{value_network_forward.1} parent=87 // loop_pre_header
          _
        $region104: #{value_network_forward.1} parent=87 // loop_header
          %s5449 = sphi 0, %s5453
          %p5450 = scmp.ge.s32.totalorder %s5449, 2
        $region105: #{value_network_forward.1} parent=87 // loop_header_branch
          %5452 = sbr.rel (%p5450) target = $region109
        $region106: #{value_network_forward.1} parent=87 // loop_body
          %s5454 = smul.u32 %s5449, 2
          %s5455 = smul.u32 %s5454, 4
          %s5456 = scalar_lea.vmem [#allocation3], %s5455
          %v5457 = vld [vmem:[%s5456] sm:$0x3]
          %v5458 = vld [vmem:[%s6] sm:$0xff]
          %v5459 = vld [vmem:[%s6 + $0x8] sm:$0xff]
          %v5460 = vld [vmem:[%s6 + $0x10] sm:$0xff]
          %v5461 = vld [vmem:[%s6 + $0x18] sm:$0xff]
          %v5462 = vld [vmem:[%s6 + $0x20] sm:$0xff]
          %v5463 = vld [vmem:[%s6 + $0x28] sm:$0xff]
          %v5464 = vld [vmem:[%s6 + $0x30] sm:$0xff]
          %v5465 = vld [vmem:[%s6 + $0x38] sm:$0xff]
          %v5466 = vld [vmem:[%s6 + $0x40] sm:$0xff]
          %v5467 = vld [vmem:[%s6 + $0x48] sm:$0xff]
          %v5468 = vld [vmem:[%s6 + $0x50] sm:$0xff]
          %v5469 = vld [vmem:[%s6 + $0x58] sm:$0xff]
          %v5470 = vld [vmem:[%s6 + $0x60] sm:$0xff]
          %v5471 = vld [vmem:[%s6 + $0x68] sm:$0xff]
          %v5472 = vld [vmem:[%s6 + $0x70] sm:$0xff]
          %v5473 = vld [vmem:[%s6 + $0x78] sm:$0xff]
          %s5474 = sadd.s32 %s5455, 28
          %s5475 = scalar_lea.vmem [#allocation3], %s5474
          %v5476 = vld [vmem:[%s5475] sm:$0x3]
          %s5477 = scalar_lea.vmem %s6, 128
          %v5478 = vld [vmem:[%s5477] sm:$0xff]
          %v5479 = vld [vmem:[%s5477 + $0x8] sm:$0xff]
          %v5480 = vld [vmem:[%s5477 + $0x10] sm:$0xff]
          %v5481 = vld [vmem:[%s5477 + $0x18] sm:$0xff]
          %v5482 = vld [vmem:[%s5477 + $0x20] sm:$0xff]
          %v5483 = vld [vmem:[%s5477 + $0x28] sm:$0xff]
          %v5484 = vld [vmem:[%s5477 + $0x30] sm:$0xff]
          %v5485 = vld [vmem:[%s5477 + $0x38] sm:$0xff]
          %v5486 = vld [vmem:[%s5477 + $0x40] sm:$0xff]
          %v5487 = vld [vmem:[%s5477 + $0x48] sm:$0xff]
          %v5488 = vld [vmem:[%s5477 + $0x50] sm:$0xff]
          %v5489 = vld [vmem:[%s5477 + $0x58] sm:$0xff]
          %v5490 = vld [vmem:[%s5477 + $0x60] sm:$0xff]
          %v5491 = vld [vmem:[%s5477 + $0x68] sm:$0xff]
          %v5492 = vld [vmem:[%s5477 + $0x70] sm:$0xff]
          %v5493 = vld [vmem:[%s5477 + $0x78] sm:$0xff]
          %vm5494 = vcmask 523264
          %v5496 = vsel %vm5494, %v5476, 0
          %5498 = vmatprep.subr.mxu0 0.0
          %5499 = vmatpush1.msra.mxu0 0.0
          %5500 = vmatprep.subr.mxu0 0.0
          %5501 = vmatpush1.msra.mxu0 0.0
          %5502 = vmatprep.subr.mxu0 0.0
          %5503 = vmatpush1.msra.mxu0 0.0
          %5504 = vmatprep.subr.mxu0 0.0
          %5505 = vmatpush1.msra.mxu0 0.0
          %5506 = vmatprep.subr.mxu0 0.0
          %5507 = vmatpush1.msra.mxu0 0.0
          %5508 = vmatprep.subr.mxu0 0.0
          %5509 = vmatpush1.msra.mxu0 0.0
          %5510 = vmatprep.subr.mxu0 0.0
          %5511 = vmatpush1.msra.mxu0 0.0
          %5512 = vmatprep.subr.mxu0 0.0
          %5513 = vmatpush1.msra.mxu0 0.0
          %5514 = vmatprep.subr.mxu0 %v5493
          %5515 = vmatpush1.msra.mxu0 %v5492
          %5516 = vmatprep.subr.mxu0 %v5491
          %5517 = vmatpush1.msra.mxu0 %v5490
          %5518 = vmatprep.subr.mxu0 %v5489
          %5519 = vmatpush1.msra.mxu0 %v5488
          %5520 = vmatprep.subr.mxu0 %v5487
          %5521 = vmatpush1.msra.mxu0 %v5486
          %5522 = vmatprep.subr.mxu0 %v5485
          %5523 = vmatpush1.msra.mxu0 %v5484
          %5524 = vmatprep.subr.mxu0 %v5483
          %5525 = vmatpush1.msra.mxu0 %v5482
          %5526 = vmatprep.subr.mxu0 %v5481
          %5527 = vmatpush1.msra.mxu0 %v5480
          %5528 = vmatprep.subr.mxu0 %v5479
          %5529 = vmatpush1.msra.mxu0 %v5478
          %5530 = vmatprep.subr.mxu0 0.0
          %5531 = vmatpush2.msra.mxu0 0.0
          %5532 = vmatprep.subr.mxu0 0.0
          %5533 = vmatpush2.msra.mxu0 0.0
          %5534 = vmatprep.subr.mxu0 0.0
          %5535 = vmatpush2.msra.mxu0 0.0
          %5536 = vmatprep.subr.mxu0 0.0
          %5537 = vmatpush2.msra.mxu0 0.0
          %5538 = vmatprep.subr.mxu0 0.0
          %5539 = vmatpush2.msra.mxu0 0.0
          %5540 = vmatprep.subr.mxu0 0.0
          %5541 = vmatpush2.msra.mxu0 0.0
          %5542 = vmatprep.subr.mxu0 0.0
          %5543 = vmatpush2.msra.mxu0 0.0
          %5544 = vmatprep.subr.mxu0 0.0
          %5545 = vmatpush2.msra.mxu0 0.0
          %5546 = vmatprep.subr.mxu0 0.0
          %5547 = vmatpush2.msra.mxu0 0.0
          %5548 = vmatprep.subr.mxu0 0.0
          %5549 = vmatpush2.msra.mxu0 0.0
          %5550 = vmatprep.subr.mxu0 0.0
          %5551 = vmatpush2.msra.mxu0 0.0
          %5552 = vmatprep.subr.mxu0 0.0
          %5553 = vmatpush2.msra.mxu0 0.0
          %5554 = vmatprep.subr.mxu0 0.0
          %5555 = vmatpush2.msra.mxu0 0.0
          %5556 = vmatprep.subr.mxu0 0.0
          %5557 = vmatpush2.msra.mxu0 0.0
          %5558 = vmatprep.subr.mxu0 0.0
          %5559 = vmatpush2.msra.mxu0 0.0
          %5560 = vmatprep.subr.mxu0 0.0
          %5561 = vmatpush2.msra.mxu0 0.0
          %5562 = vmatprep.mubr.f32.mxu0 0.0
          %5563 = vmatmul.mubr.f32.gmra.mxu0 %v5496
          %v5564 = vpop.f32.mrf.mxu0
          %v5565 = vadd.f32 0.0, %v5564
          %v5566 = vpop.f32.mrf.mxu0
          %v5567 = vadd.f32 0.0, %v5566
          %5568 = vdwg.mxu0
          %v5570 = vsel %vm5494, %v5457, 0
          %5572 = vmatprep.subr.mxu0 0.0
          %5573 = vmatpush1.msra.mxu0 0.0
          %5574 = vmatprep.subr.mxu0 0.0
          %5575 = vmatpush1.msra.mxu0 0.0
          %5576 = vmatprep.subr.mxu0 0.0
          %5577 = vmatpush1.msra.mxu0 0.0
          %5578 = vmatprep.subr.mxu0 0.0
          %5579 = vmatpush1.msra.mxu0 0.0
          %5580 = vmatprep.subr.mxu0 0.0
          %5581 = vmatpush1.msra.mxu0 0.0
          %5582 = vmatprep.subr.mxu0 0.0
          %5583 = vmatpush1.msra.mxu0 0.0
          %5584 = vmatprep.subr.mxu0 0.0
          %5585 = vmatpush1.msra.mxu0 0.0
          %5586 = vmatprep.subr.mxu0 0.0
          %5587 = vmatpush1.msra.mxu0 0.0
          %5588 = vmatprep.subr.mxu0 %v5473
          %5589 = vmatpush1.msra.mxu0 %v5472
          %5590 = vmatprep.subr.mxu0 %v5471
          %5591 = vmatpush1.msra.mxu0 %v5470
          %5592 = vmatprep.subr.mxu0 %v5469
          %5593 = vmatpush1.msra.mxu0 %v5468
          %5594 = vmatprep.subr.mxu0 %v5467
          %5595 = vmatpush1.msra.mxu0 %v5466
          %5596 = vmatprep.subr.mxu0 %v5465
          %5597 = vmatpush1.msra.mxu0 %v5464
          %5598 = vmatprep.subr.mxu0 %v5463
          %5599 = vmatpush1.msra.mxu0 %v5462
          %5600 = vmatprep.subr.mxu0 %v5461
          %5601 = vmatpush1.msra.mxu0 %v5460
          %5602 = vmatprep.subr.mxu0 %v5459
          %5603 = vmatpush1.msra.mxu0 %v5458
          %5604 = vmatprep.subr.mxu0 0.0
          %5605 = vmatpush2.msra.mxu0 0.0
          %5606 = vmatprep.subr.mxu0 0.0
          %5607 = vmatpush2.msra.mxu0 0.0
          %5608 = vmatprep.subr.mxu0 0.0
          %5609 = vmatpush2.msra.mxu0 0.0
          %5610 = vmatprep.subr.mxu0 0.0
          %5611 = vmatpush2.msra.mxu0 0.0
          %5612 = vmatprep.subr.mxu0 0.0
          %5613 = vmatpush2.msra.mxu0 0.0
          %5614 = vmatprep.subr.mxu0 0.0
          %5615 = vmatpush2.msra.mxu0 0.0
          %5616 = vmatprep.subr.mxu0 0.0
          %5617 = vmatpush2.msra.mxu0 0.0
          %5618 = vmatprep.subr.mxu0 0.0
          %5619 = vmatpush2.msra.mxu0 0.0
          %5620 = vmatprep.subr.mxu0 0.0
          %5621 = vmatpush2.msra.mxu0 0.0
          %5622 = vmatprep.subr.mxu0 0.0
          %5623 = vmatpush2.msra.mxu0 0.0
          %5624 = vmatprep.subr.mxu0 0.0
          %5625 = vmatpush2.msra.mxu0 0.0
          %5626 = vmatprep.subr.mxu0 0.0
          %5627 = vmatpush2.msra.mxu0 0.0
          %5628 = vmatprep.subr.mxu0 0.0
          %5629 = vmatpush2.msra.mxu0 0.0
          %5630 = vmatprep.subr.mxu0 0.0
          %5631 = vmatpush2.msra.mxu0 0.0
          %5632 = vmatprep.subr.mxu0 0.0
          %5633 = vmatpush2.msra.mxu0 0.0
          %5634 = vmatprep.subr.mxu0 0.0
          %5635 = vmatpush2.msra.mxu0 0.0
          %5636 = vmatprep.mubr.f32.mxu0 0.0
          %5637 = vmatmul.mubr.f32.gmra.mxu0 %v5570
          %v5638 = vpop.f32.mrf.mxu0
          %v5639 = vadd.f32 %v5565, %v5638
          %v5640 = vpop.f32.mrf.mxu0
          %v5641 = vadd.f32 %v5567, %v5640
          %5642 = vdwg.mxu0
          %v5643 = vld [vmem:[%s5456 + $0x1] sm:$0x3]
          %s5644 = scalar_lea.vmem %s6, 256
          %v5645 = vld [vmem:[%s5644] sm:$0xff]
          %v5646 = vld [vmem:[%s5644 + $0x8] sm:$0xff]
          %v5647 = vld [vmem:[%s5644 + $0x10] sm:$0xff]
          %v5648 = vld [vmem:[%s5644 + $0x18] sm:$0xff]
          %v5649 = vld [vmem:[%s5644 + $0x20] sm:$0xff]
          %v5650 = vld [vmem:[%s5644 + $0x28] sm:$0xff]
          %v5651 = vld [vmem:[%s5644 + $0x30] sm:$0xff]
          %v5652 = vld [vmem:[%s5644 + $0x38] sm:$0xff]
          %v5653 = vld [vmem:[%s5644 + $0x40] sm:$0xff]
          %v5654 = vld [vmem:[%s5644 + $0x48] sm:$0xff]
          %v5655 = vld [vmem:[%s5644 + $0x50] sm:$0xff]
          %v5656 = vld [vmem:[%s5644 + $0x58] sm:$0xff]
          %v5657 = vld [vmem:[%s5644 + $0x60] sm:$0xff]
          %v5658 = vld [vmem:[%s5644 + $0x68] sm:$0xff]
          %v5659 = vld [vmem:[%s5644 + $0x70] sm:$0xff]
          %v5660 = vld [vmem:[%s5644 + $0x78] sm:$0xff]
          %v5662 = vsel %vm5494, %v5643, 0
          %5664 = vmatprep.subr.mxu0 0.0
          %5665 = vmatpush1.msra.mxu0 0.0
          %5666 = vmatprep.subr.mxu0 0.0
          %5667 = vmatpush1.msra.mxu0 0.0
          %5668 = vmatprep.subr.mxu0 0.0
          %5669 = vmatpush1.msra.mxu0 0.0
          %5670 = vmatprep.subr.mxu0 0.0
          %5671 = vmatpush1.msra.mxu0 0.0
          %5672 = vmatprep.subr.mxu0 0.0
          %5673 = vmatpush1.msra.mxu0 0.0
          %5674 = vmatprep.subr.mxu0 0.0
          %5675 = vmatpush1.msra.mxu0 0.0
          %5676 = vmatprep.subr.mxu0 0.0
          %5677 = vmatpush1.msra.mxu0 0.0
          %5678 = vmatprep.subr.mxu0 0.0
          %5679 = vmatpush1.msra.mxu0 0.0
          %5680 = vmatprep.subr.mxu0 %v5660
          %5681 = vmatpush1.msra.mxu0 %v5659
          %5682 = vmatprep.subr.mxu0 %v5658
          %5683 = vmatpush1.msra.mxu0 %v5657
          %5684 = vmatprep.subr.mxu0 %v5656
          %5685 = vmatpush1.msra.mxu0 %v5655
          %5686 = vmatprep.subr.mxu0 %v5654
          %5687 = vmatpush1.msra.mxu0 %v5653
          %5688 = vmatprep.subr.mxu0 %v5652
          %5689 = vmatpush1.msra.mxu0 %v5651
          %5690 = vmatprep.subr.mxu0 %v5650
          %5691 = vmatpush1.msra.mxu0 %v5649
          %5692 = vmatprep.subr.mxu0 %v5648
          %5693 = vmatpush1.msra.mxu0 %v5647
          %5694 = vmatprep.subr.mxu0 %v5646
          %5695 = vmatpush1.msra.mxu0 %v5645
          %5696 = vmatprep.subr.mxu0 0.0
          %5697 = vmatpush2.msra.mxu0 0.0
          %5698 = vmatprep.subr.mxu0 0.0
          %5699 = vmatpush2.msra.mxu0 0.0
          %5700 = vmatprep.subr.mxu0 0.0
          %5701 = vmatpush2.msra.mxu0 0.0
          %5702 = vmatprep.subr.mxu0 0.0
          %5703 = vmatpush2.msra.mxu0 0.0
          %5704 = vmatprep.subr.mxu0 0.0
          %5705 = vmatpush2.msra.mxu0 0.0
          %5706 = vmatprep.subr.mxu0 0.0
          %5707 = vmatpush2.msra.mxu0 0.0
          %5708 = vmatprep.subr.mxu0 0.0
          %5709 = vmatpush2.msra.mxu0 0.0
          %5710 = vmatprep.subr.mxu0 0.0
          %5711 = vmatpush2.msra.mxu0 0.0
          %5712 = vmatprep.subr.mxu0 0.0
          %5713 = vmatpush2.msra.mxu0 0.0
          %5714 = vmatprep.subr.mxu0 0.0
          %5715 = vmatpush2.msra.mxu0 0.0
          %5716 = vmatprep.subr.mxu0 0.0
          %5717 = vmatpush2.msra.mxu0 0.0
          %5718 = vmatprep.subr.mxu0 0.0
          %5719 = vmatpush2.msra.mxu0 0.0
          %5720 = vmatprep.subr.mxu0 0.0
          %5721 = vmatpush2.msra.mxu0 0.0
          %5722 = vmatprep.subr.mxu0 0.0
          %5723 = vmatpush2.msra.mxu0 0.0
          %5724 = vmatprep.subr.mxu0 0.0
          %5725 = vmatpush2.msra.mxu0 0.0
          %5726 = vmatprep.subr.mxu0 0.0
          %5727 = vmatpush2.msra.mxu0 0.0
          %5728 = vmatprep.mubr.f32.mxu0 0.0
          %5729 = vmatmul.mubr.f32.gmra.mxu0 %v5662
          %v5730 = vpop.f32.mrf.mxu0
          %v5731 = vadd.f32 0.0, %v5730
          %v5732 = vpop.f32.mrf.mxu0
          %v5733 = vadd.f32 0.0, %v5732
          %5734 = vdwg.mxu0
          %v5735 = vadd.f32 %v5639, %v5731
          %v5736 = vadd.f32 %v5641, %v5733
          %v5737 = vld [vmem:[%s5475 + $0x1] sm:$0x3]
          %s5738 = scalar_lea.vmem %s6, 384
          %v5739 = vld [vmem:[%s5738] sm:$0xff]
          %v5740 = vld [vmem:[%s5738 + $0x8] sm:$0xff]
          %v5741 = vld [vmem:[%s5738 + $0x10] sm:$0xff]
          %v5742 = vld [vmem:[%s5738 + $0x18] sm:$0xff]
          %v5743 = vld [vmem:[%s5738 + $0x20] sm:$0xff]
          %v5744 = vld [vmem:[%s5738 + $0x28] sm:$0xff]
          %v5745 = vld [vmem:[%s5738 + $0x30] sm:$0xff]
          %v5746 = vld [vmem:[%s5738 + $0x38] sm:$0xff]
          %v5747 = vld [vmem:[%s5738 + $0x40] sm:$0xff]
          %v5748 = vld [vmem:[%s5738 + $0x48] sm:$0xff]
          %v5749 = vld [vmem:[%s5738 + $0x50] sm:$0xff]
          %v5750 = vld [vmem:[%s5738 + $0x58] sm:$0xff]
          %v5751 = vld [vmem:[%s5738 + $0x60] sm:$0xff]
          %v5752 = vld [vmem:[%s5738 + $0x68] sm:$0xff]
          %v5753 = vld [vmem:[%s5738 + $0x70] sm:$0xff]
          %v5754 = vld [vmem:[%s5738 + $0x78] sm:$0xff]
          %v5756 = vsel %vm5494, %v5737, 0
          %5758 = vmatprep.subr.mxu0 0.0
          %5759 = vmatpush1.msra.mxu0 0.0
          %5760 = vmatprep.subr.mxu0 0.0
          %5761 = vmatpush1.msra.mxu0 0.0
          %5762 = vmatprep.subr.mxu0 0.0
          %5763 = vmatpush1.msra.mxu0 0.0
          %5764 = vmatprep.subr.mxu0 0.0
          %5765 = vmatpush1.msra.mxu0 0.0
          %5766 = vmatprep.subr.mxu0 0.0
          %5767 = vmatpush1.msra.mxu0 0.0
          %5768 = vmatprep.subr.mxu0 0.0
          %5769 = vmatpush1.msra.mxu0 0.0
          %5770 = vmatprep.subr.mxu0 0.0
          %5771 = vmatpush1.msra.mxu0 0.0
          %5772 = vmatprep.subr.mxu0 0.0
          %5773 = vmatpush1.msra.mxu0 0.0
          %5774 = vmatprep.subr.mxu0 %v5754
          %5775 = vmatpush1.msra.mxu0 %v5753
          %5776 = vmatprep.subr.mxu0 %v5752
          %5777 = vmatpush1.msra.mxu0 %v5751
          %5778 = vmatprep.subr.mxu0 %v5750
          %5779 = vmatpush1.msra.mxu0 %v5749
          %5780 = vmatprep.subr.mxu0 %v5748
          %5781 = vmatpush1.msra.mxu0 %v5747
          %5782 = vmatprep.subr.mxu0 %v5746
          %5783 = vmatpush1.msra.mxu0 %v5745
          %5784 = vmatprep.subr.mxu0 %v5744
          %5785 = vmatpush1.msra.mxu0 %v5743
          %5786 = vmatprep.subr.mxu0 %v5742
          %5787 = vmatpush1.msra.mxu0 %v5741
          %5788 = vmatprep.subr.mxu0 %v5740
          %5789 = vmatpush1.msra.mxu0 %v5739
          %5790 = vmatprep.subr.mxu0 0.0
          %5791 = vmatpush2.msra.mxu0 0.0
          %5792 = vmatprep.subr.mxu0 0.0
          %5793 = vmatpush2.msra.mxu0 0.0
          %5794 = vmatprep.subr.mxu0 0.0
          %5795 = vmatpush2.msra.mxu0 0.0
          %5796 = vmatprep.subr.mxu0 0.0
          %5797 = vmatpush2.msra.mxu0 0.0
          %5798 = vmatprep.subr.mxu0 0.0
          %5799 = vmatpush2.msra.mxu0 0.0
          %5800 = vmatprep.subr.mxu0 0.0
          %5801 = vmatpush2.msra.mxu0 0.0
          %5802 = vmatprep.subr.mxu0 0.0
          %5803 = vmatpush2.msra.mxu0 0.0
          %5804 = vmatprep.subr.mxu0 0.0
          %5805 = vmatpush2.msra.mxu0 0.0
          %5806 = vmatprep.subr.mxu0 0.0
          %5807 = vmatpush2.msra.mxu0 0.0
          %5808 = vmatprep.subr.mxu0 0.0
          %5809 = vmatpush2.msra.mxu0 0.0
          %5810 = vmatprep.subr.mxu0 0.0
          %5811 = vmatpush2.msra.mxu0 0.0
          %5812 = vmatprep.subr.mxu0 0.0
          %5813 = vmatpush2.msra.mxu0 0.0
          %5814 = vmatprep.subr.mxu0 0.0
          %5815 = vmatpush2.msra.mxu0 0.0
          %5816 = vmatprep.subr.mxu0 0.0
          %5817 = vmatpush2.msra.mxu0 0.0
          %5818 = vmatprep.subr.mxu0 0.0
          %5819 = vmatpush2.msra.mxu0 0.0
          %5820 = vmatprep.subr.mxu0 0.0
          %5821 = vmatpush2.msra.mxu0 0.0
          %5822 = vmatprep.mubr.f32.mxu0 0.0
          %5823 = vmatmul.mubr.f32.gmra.mxu0 %v5756
          %v5824 = vpop.f32.mrf.mxu0
          %v5825 = vadd.f32 0.0, %v5824
          %v5826 = vpop.f32.mrf.mxu0
          %v5827 = vadd.f32 0.0, %v5826
          %5828 = vdwg.mxu0
          %v5829 = vadd.f32 %v5735, %v5825
          %v5830 = vadd.f32 %v5736, %v5827
          %v5831 = vld [vmem:[%s5456 + $0x2] sm:$0x3]
          %s5832 = scalar_lea.vmem %s6, 512
          %v5833 = vld [vmem:[%s5832] sm:$0xff]
          %v5834 = vld [vmem:[%s5832 + $0x8] sm:$0xff]
          %v5835 = vld [vmem:[%s5832 + $0x10] sm:$0xff]
          %v5836 = vld [vmem:[%s5832 + $0x18] sm:$0xff]
          %v5837 = vld [vmem:[%s5832 + $0x20] sm:$0xff]
          %v5838 = vld [vmem:[%s5832 + $0x28] sm:$0xff]
          %v5839 = vld [vmem:[%s5832 + $0x30] sm:$0xff]
          %v5840 = vld [vmem:[%s5832 + $0x38] sm:$0xff]
          %v5841 = vld [vmem:[%s5832 + $0x40] sm:$0xff]
          %v5842 = vld [vmem:[%s5832 + $0x48] sm:$0xff]
          %v5843 = vld [vmem:[%s5832 + $0x50] sm:$0xff]
          %v5844 = vld [vmem:[%s5832 + $0x58] sm:$0xff]
          %v5845 = vld [vmem:[%s5832 + $0x60] sm:$0xff]
          %v5846 = vld [vmem:[%s5832 + $0x68] sm:$0xff]
          %v5847 = vld [vmem:[%s5832 + $0x70] sm:$0xff]
          %v5848 = vld [vmem:[%s5832 + $0x78] sm:$0xff]
          %v5850 = vsel %vm5494, %v5831, 0
          %5852 = vmatprep.subr.mxu0 0.0
          %5853 = vmatpush1.msra.mxu0 0.0
          %5854 = vmatprep.subr.mxu0 0.0
          %5855 = vmatpush1.msra.mxu0 0.0
          %5856 = vmatprep.subr.mxu0 0.0
          %5857 = vmatpush1.msra.mxu0 0.0
          %5858 = vmatprep.subr.mxu0 0.0
          %5859 = vmatpush1.msra.mxu0 0.0
          %5860 = vmatprep.subr.mxu0 0.0
          %5861 = vmatpush1.msra.mxu0 0.0
          %5862 = vmatprep.subr.mxu0 0.0
          %5863 = vmatpush1.msra.mxu0 0.0
          %5864 = vmatprep.subr.mxu0 0.0
          %5865 = vmatpush1.msra.mxu0 0.0
          %5866 = vmatprep.subr.mxu0 0.0
          %5867 = vmatpush1.msra.mxu0 0.0
          %5868 = vmatprep.subr.mxu0 %v5848
          %5869 = vmatpush1.msra.mxu0 %v5847
          %5870 = vmatprep.subr.mxu0 %v5846
          %5871 = vmatpush1.msra.mxu0 %v5845
          %5872 = vmatprep.subr.mxu0 %v5844
          %5873 = vmatpush1.msra.mxu0 %v5843
          %5874 = vmatprep.subr.mxu0 %v5842
          %5875 = vmatpush1.msra.mxu0 %v5841
          %5876 = vmatprep.subr.mxu0 %v5840
          %5877 = vmatpush1.msra.mxu0 %v5839
          %5878 = vmatprep.subr.mxu0 %v5838
          %5879 = vmatpush1.msra.mxu0 %v5837
          %5880 = vmatprep.subr.mxu0 %v5836
          %5881 = vmatpush1.msra.mxu0 %v5835
          %5882 = vmatprep.subr.mxu0 %v5834
          %5883 = vmatpush1.msra.mxu0 %v5833
          %5884 = vmatprep.subr.mxu0 0.0
          %5885 = vmatpush2.msra.mxu0 0.0
          %5886 = vmatprep.subr.mxu0 0.0
          %5887 = vmatpush2.msra.mxu0 0.0
          %5888 = vmatprep.subr.mxu0 0.0
          %5889 = vmatpush2.msra.mxu0 0.0
          %5890 = vmatprep.subr.mxu0 0.0
          %5891 = vmatpush2.msra.mxu0 0.0
          %5892 = vmatprep.subr.mxu0 0.0
          %5893 = vmatpush2.msra.mxu0 0.0
          %5894 = vmatprep.subr.mxu0 0.0
          %5895 = vmatpush2.msra.mxu0 0.0
          %5896 = vmatprep.subr.mxu0 0.0
          %5897 = vmatpush2.msra.mxu0 0.0
          %5898 = vmatprep.subr.mxu0 0.0
          %5899 = vmatpush2.msra.mxu0 0.0
          %5900 = vmatprep.subr.mxu0 0.0
          %5901 = vmatpush2.msra.mxu0 0.0
          %5902 = vmatprep.subr.mxu0 0.0
          %5903 = vmatpush2.msra.mxu0 0.0
          %5904 = vmatprep.subr.mxu0 0.0
          %5905 = vmatpush2.msra.mxu0 0.0
          %5906 = vmatprep.subr.mxu0 0.0
          %5907 = vmatpush2.msra.mxu0 0.0
          %5908 = vmatprep.subr.mxu0 0.0
          %5909 = vmatpush2.msra.mxu0 0.0
          %5910 = vmatprep.subr.mxu0 0.0
          %5911 = vmatpush2.msra.mxu0 0.0
          %5912 = vmatprep.subr.mxu0 0.0
          %5913 = vmatpush2.msra.mxu0 0.0
          %5914 = vmatprep.subr.mxu0 0.0
          %5915 = vmatpush2.msra.mxu0 0.0
          %5916 = vmatprep.mubr.f32.mxu0 0.0
          %5917 = vmatmul.mubr.f32.gmra.mxu0 %v5850
          %v5918 = vpop.f32.mrf.mxu0
          %v5919 = vadd.f32 0.0, %v5918
          %v5920 = vpop.f32.mrf.mxu0
          %v5921 = vadd.f32 0.0, %v5920
          %5922 = vdwg.mxu0
          %v5923 = vadd.f32 %v5829, %v5919
          %v5924 = vadd.f32 %v5830, %v5921
          %s5925 = sadd.s32 %s5454, 1
          %s5926 = smul.u32 %s5925, 4
          %s5927 = scalar_lea.vmem [#allocation3], %s5926
          %v5928 = vld [vmem:[%s5927] sm:$0x3]
          %s5929 = scalar_lea.vmem %s6, 640
          %v5930 = vld [vmem:[%s5929] sm:$0xff]
          %v5931 = vld [vmem:[%s5929 + $0x8] sm:$0xff]
          %v5932 = vld [vmem:[%s5929 + $0x10] sm:$0xff]
          %v5933 = vld [vmem:[%s5929 + $0x18] sm:$0xff]
          %v5934 = vld [vmem:[%s5929 + $0x20] sm:$0xff]
          %v5935 = vld [vmem:[%s5929 + $0x28] sm:$0xff]
          %v5936 = vld [vmem:[%s5929 + $0x30] sm:$0xff]
          %v5937 = vld [vmem:[%s5929 + $0x38] sm:$0xff]
          %v5938 = vld [vmem:[%s5929 + $0x40] sm:$0xff]
          %v5939 = vld [vmem:[%s5929 + $0x48] sm:$0xff]
          %v5940 = vld [vmem:[%s5929 + $0x50] sm:$0xff]
          %v5941 = vld [vmem:[%s5929 + $0x58] sm:$0xff]
          %v5942 = vld [vmem:[%s5929 + $0x60] sm:$0xff]
          %v5943 = vld [vmem:[%s5929 + $0x68] sm:$0xff]
          %v5944 = vld [vmem:[%s5929 + $0x70] sm:$0xff]
          %v5945 = vld [vmem:[%s5929 + $0x78] sm:$0xff]
          %v5947 = vsel %vm5494, %v5928, 0
          %5949 = vmatprep.subr.mxu0 0.0
          %5950 = vmatpush1.msra.mxu0 0.0
          %5951 = vmatprep.subr.mxu0 0.0
          %5952 = vmatpush1.msra.mxu0 0.0
          %5953 = vmatprep.subr.mxu0 0.0
          %5954 = vmatpush1.msra.mxu0 0.0
          %5955 = vmatprep.subr.mxu0 0.0
          %5956 = vmatpush1.msra.mxu0 0.0
          %5957 = vmatprep.subr.mxu0 0.0
          %5958 = vmatpush1.msra.mxu0 0.0
          %5959 = vmatprep.subr.mxu0 0.0
          %5960 = vmatpush1.msra.mxu0 0.0
          %5961 = vmatprep.subr.mxu0 0.0
          %5962 = vmatpush1.msra.mxu0 0.0
          %5963 = vmatprep.subr.mxu0 0.0
          %5964 = vmatpush1.msra.mxu0 0.0
          %5965 = vmatprep.subr.mxu0 %v5945
          %5966 = vmatpush1.msra.mxu0 %v5944
          %5967 = vmatprep.subr.mxu0 %v5943
          %5968 = vmatpush1.msra.mxu0 %v5942
          %5969 = vmatprep.subr.mxu0 %v5941
          %5970 = vmatpush1.msra.mxu0 %v5940
          %5971 = vmatprep.subr.mxu0 %v5939
          %5972 = vmatpush1.msra.mxu0 %v5938
          %5973 = vmatprep.subr.mxu0 %v5937
          %5974 = vmatpush1.msra.mxu0 %v5936
          %5975 = vmatprep.subr.mxu0 %v5935
          %5976 = vmatpush1.msra.mxu0 %v5934
          %5977 = vmatprep.subr.mxu0 %v5933
          %5978 = vmatpush1.msra.mxu0 %v5932
          %5979 = vmatprep.subr.mxu0 %v5931
          %5980 = vmatpush1.msra.mxu0 %v5930
          %5981 = vmatprep.subr.mxu0 0.0
          %5982 = vmatpush2.msra.mxu0 0.0
          %5983 = vmatprep.subr.mxu0 0.0
          %5984 = vmatpush2.msra.mxu0 0.0
          %5985 = vmatprep.subr.mxu0 0.0
          %5986 = vmatpush2.msra.mxu0 0.0
          %5987 = vmatprep.subr.mxu0 0.0
          %5988 = vmatpush2.msra.mxu0 0.0
          %5989 = vmatprep.subr.mxu0 0.0
          %5990 = vmatpush2.msra.mxu0 0.0
          %5991 = vmatprep.subr.mxu0 0.0
          %5992 = vmatpush2.msra.mxu0 0.0
          %5993 = vmatprep.subr.mxu0 0.0
          %5994 = vmatpush2.msra.mxu0 0.0
          %5995 = vmatprep.subr.mxu0 0.0
          %5996 = vmatpush2.msra.mxu0 0.0
          %5997 = vmatprep.subr.mxu0 0.0
          %5998 = vmatpush2.msra.mxu0 0.0
          %5999 = vmatprep.subr.mxu0 0.0
          %6000 = vmatpush2.msra.mxu0 0.0
          %6001 = vmatprep.subr.mxu0 0.0
          %6002 = vmatpush2.msra.mxu0 0.0
          %6003 = vmatprep.subr.mxu0 0.0
          %6004 = vmatpush2.msra.mxu0 0.0
          %6005 = vmatprep.subr.mxu0 0.0
          %6006 = vmatpush2.msra.mxu0 0.0
          %6007 = vmatprep.subr.mxu0 0.0
          %6008 = vmatpush2.msra.mxu0 0.0
          %6009 = vmatprep.subr.mxu0 0.0
          %6010 = vmatpush2.msra.mxu0 0.0
          %6011 = vmatprep.subr.mxu0 0.0
          %6012 = vmatpush2.msra.mxu0 0.0
          %6013 = vmatprep.mubr.f32.mxu0 0.0
          %6014 = vmatmul.mubr.f32.gmra.mxu0 %v5947
          %v6015 = vpop.f32.mrf.mxu0
          %v6016 = vadd.f32 0.0, %v6015
          %v6017 = vpop.f32.mrf.mxu0
          %v6018 = vadd.f32 0.0, %v6017
          %6019 = vdwg.mxu0
          %v6020 = vadd.f32 %v5923, %v6016
          %v6021 = vadd.f32 %v5924, %v6018
          %s6022 = sadd.s32 %s5926, 28
          %s6023 = scalar_lea.vmem [#allocation3], %s6022
          %v6024 = vld [vmem:[%s6023] sm:$0x3]
          %s6025 = scalar_lea.vmem %s6, 768
          %v6026 = vld [vmem:[%s6025] sm:$0xff]
          %v6027 = vld [vmem:[%s6025 + $0x8] sm:$0xff]
          %v6028 = vld [vmem:[%s6025 + $0x10] sm:$0xff]
          %v6029 = vld [vmem:[%s6025 + $0x18] sm:$0xff]
          %v6030 = vld [vmem:[%s6025 + $0x20] sm:$0xff]
          %v6031 = vld [vmem:[%s6025 + $0x28] sm:$0xff]
          %v6032 = vld [vmem:[%s6025 + $0x30] sm:$0xff]
          %v6033 = vld [vmem:[%s6025 + $0x38] sm:$0xff]
          %v6034 = vld [vmem:[%s6025 + $0x40] sm:$0xff]
          %v6035 = vld [vmem:[%s6025 + $0x48] sm:$0xff]
          %v6036 = vld [vmem:[%s6025 + $0x50] sm:$0xff]
          %v6037 = vld [vmem:[%s6025 + $0x58] sm:$0xff]
          %v6038 = vld [vmem:[%s6025 + $0x60] sm:$0xff]
          %v6039 = vld [vmem:[%s6025 + $0x68] sm:$0xff]
          %v6040 = vld [vmem:[%s6025 + $0x70] sm:$0xff]
          %v6041 = vld [vmem:[%s6025 + $0x78] sm:$0xff]
          %v6043 = vsel %vm5494, %v6024, 0
          %6045 = vmatprep.subr.mxu0 0.0
          %6046 = vmatpush1.msra.mxu0 0.0
          %6047 = vmatprep.subr.mxu0 0.0
          %6048 = vmatpush1.msra.mxu0 0.0
          %6049 = vmatprep.subr.mxu0 0.0
          %6050 = vmatpush1.msra.mxu0 0.0
          %6051 = vmatprep.subr.mxu0 0.0
          %6052 = vmatpush1.msra.mxu0 0.0
          %6053 = vmatprep.subr.mxu0 0.0
          %6054 = vmatpush1.msra.mxu0 0.0
          %6055 = vmatprep.subr.mxu0 0.0
          %6056 = vmatpush1.msra.mxu0 0.0
          %6057 = vmatprep.subr.mxu0 0.0
          %6058 = vmatpush1.msra.mxu0 0.0
          %6059 = vmatprep.subr.mxu0 0.0
          %6060 = vmatpush1.msra.mxu0 0.0
          %6061 = vmatprep.subr.mxu0 %v6041
          %6062 = vmatpush1.msra.mxu0 %v6040
          %6063 = vmatprep.subr.mxu0 %v6039
          %6064 = vmatpush1.msra.mxu0 %v6038
          %6065 = vmatprep.subr.mxu0 %v6037
          %6066 = vmatpush1.msra.mxu0 %v6036
          %6067 = vmatprep.subr.mxu0 %v6035
          %6068 = vmatpush1.msra.mxu0 %v6034
          %6069 = vmatprep.subr.mxu0 %v6033
          %6070 = vmatpush1.msra.mxu0 %v6032
          %6071 = vmatprep.subr.mxu0 %v6031
          %6072 = vmatpush1.msra.mxu0 %v6030
          %6073 = vmatprep.subr.mxu0 %v6029
          %6074 = vmatpush1.msra.mxu0 %v6028
          %6075 = vmatprep.subr.mxu0 %v6027
          %6076 = vmatpush1.msra.mxu0 %v6026
          %6077 = vmatprep.subr.mxu0 0.0
          %6078 = vmatpush2.msra.mxu0 0.0
          %6079 = vmatprep.subr.mxu0 0.0
          %6080 = vmatpush2.msra.mxu0 0.0
          %6081 = vmatprep.subr.mxu0 0.0
          %6082 = vmatpush2.msra.mxu0 0.0
          %6083 = vmatprep.subr.mxu0 0.0
          %6084 = vmatpush2.msra.mxu0 0.0
          %6085 = vmatprep.subr.mxu0 0.0
          %6086 = vmatpush2.msra.mxu0 0.0
          %6087 = vmatprep.subr.mxu0 0.0
          %6088 = vmatpush2.msra.mxu0 0.0
          %6089 = vmatprep.subr.mxu0 0.0
          %6090 = vmatpush2.msra.mxu0 0.0
          %6091 = vmatprep.subr.mxu0 0.0
          %6092 = vmatpush2.msra.mxu0 0.0
          %6093 = vmatprep.subr.mxu0 0.0
          %6094 = vmatpush2.msra.mxu0 0.0
          %6095 = vmatprep.subr.mxu0 0.0
          %6096 = vmatpush2.msra.mxu0 0.0
          %6097 = vmatprep.subr.mxu0 0.0
          %6098 = vmatpush2.msra.mxu0 0.0
          %6099 = vmatprep.subr.mxu0 0.0
          %6100 = vmatpush2.msra.mxu0 0.0
          %6101 = vmatprep.subr.mxu0 0.0
          %6102 = vmatpush2.msra.mxu0 0.0
          %6103 = vmatprep.subr.mxu0 0.0
          %6104 = vmatpush2.msra.mxu0 0.0
          %6105 = vmatprep.subr.mxu0 0.0
          %6106 = vmatpush2.msra.mxu0 0.0
          %6107 = vmatprep.subr.mxu0 0.0
          %6108 = vmatpush2.msra.mxu0 0.0
          %6109 = vmatprep.mubr.f32.mxu0 0.0
          %6110 = vmatmul.mubr.f32.gmra.mxu0 %v6043
          %v6111 = vpop.f32.mrf.mxu0
          %v6112 = vadd.f32 0.0, %v6111
          %v6113 = vpop.f32.mrf.mxu0
          %v6114 = vadd.f32 0.0, %v6113
          %6115 = vdwg.mxu0
          %v6116 = vadd.f32 %v6020, %v6112
          %v6117 = vadd.f32 %v6021, %v6114
          %v6118 = vld [vmem:[%s5927 + $0x1] sm:$0x3]
          %s6119 = scalar_lea.vmem %s6, 896
          %v6120 = vld [vmem:[%s6119] sm:$0xff]
          %v6121 = vld [vmem:[%s6119 + $0x8] sm:$0xff]
          %v6122 = vld [vmem:[%s6119 + $0x10] sm:$0xff]
          %v6123 = vld [vmem:[%s6119 + $0x18] sm:$0xff]
          %v6124 = vld [vmem:[%s6119 + $0x20] sm:$0xff]
          %v6125 = vld [vmem:[%s6119 + $0x28] sm:$0xff]
          %v6126 = vld [vmem:[%s6119 + $0x30] sm:$0xff]
          %v6127 = vld [vmem:[%s6119 + $0x38] sm:$0xff]
          %v6128 = vld [vmem:[%s6119 + $0x40] sm:$0xff]
          %v6129 = vld [vmem:[%s6119 + $0x48] sm:$0xff]
          %v6130 = vld [vmem:[%s6119 + $0x50] sm:$0xff]
          %v6131 = vld [vmem:[%s6119 + $0x58] sm:$0xff]
          %v6132 = vld [vmem:[%s6119 + $0x60] sm:$0xff]
          %v6133 = vld [vmem:[%s6119 + $0x68] sm:$0xff]
          %v6134 = vld [vmem:[%s6119 + $0x70] sm:$0xff]
          %v6135 = vld [vmem:[%s6119 + $0x78] sm:$0xff]
          %v6137 = vsel %vm5494, %v6118, 0
          %6139 = vmatprep.subr.mxu0 0.0
          %6140 = vmatpush1.msra.mxu0 0.0
          %6141 = vmatprep.subr.mxu0 0.0
          %6142 = vmatpush1.msra.mxu0 0.0
          %6143 = vmatprep.subr.mxu0 0.0
          %6144 = vmatpush1.msra.mxu0 0.0
          %6145 = vmatprep.subr.mxu0 0.0
          %6146 = vmatpush1.msra.mxu0 0.0
          %6147 = vmatprep.subr.mxu0 0.0
          %6148 = vmatpush1.msra.mxu0 0.0
          %6149 = vmatprep.subr.mxu0 0.0
          %6150 = vmatpush1.msra.mxu0 0.0
          %6151 = vmatprep.subr.mxu0 0.0
          %6152 = vmatpush1.msra.mxu0 0.0
          %6153 = vmatprep.subr.mxu0 0.0
          %6154 = vmatpush1.msra.mxu0 0.0
          %6155 = vmatprep.subr.mxu0 %v6135
          %6156 = vmatpush1.msra.mxu0 %v6134
          %6157 = vmatprep.subr.mxu0 %v6133
          %6158 = vmatpush1.msra.mxu0 %v6132
          %6159 = vmatprep.subr.mxu0 %v6131
          %6160 = vmatpush1.msra.mxu0 %v6130
          %6161 = vmatprep.subr.mxu0 %v6129
          %6162 = vmatpush1.msra.mxu0 %v6128
          %6163 = vmatprep.subr.mxu0 %v6127
          %6164 = vmatpush1.msra.mxu0 %v6126
          %6165 = vmatprep.subr.mxu0 %v6125
          %6166 = vmatpush1.msra.mxu0 %v6124
          %6167 = vmatprep.subr.mxu0 %v6123
          %6168 = vmatpush1.msra.mxu0 %v6122
          %6169 = vmatprep.subr.mxu0 %v6121
          %6170 = vmatpush1.msra.mxu0 %v6120
          %6171 = vmatprep.subr.mxu0 0.0
          %6172 = vmatpush2.msra.mxu0 0.0
          %6173 = vmatprep.subr.mxu0 0.0
          %6174 = vmatpush2.msra.mxu0 0.0
          %6175 = vmatprep.subr.mxu0 0.0
          %6176 = vmatpush2.msra.mxu0 0.0
          %6177 = vmatprep.subr.mxu0 0.0
          %6178 = vmatpush2.msra.mxu0 0.0
          %6179 = vmatprep.subr.mxu0 0.0
          %6180 = vmatpush2.msra.mxu0 0.0
          %6181 = vmatprep.subr.mxu0 0.0
          %6182 = vmatpush2.msra.mxu0 0.0
          %6183 = vmatprep.subr.mxu0 0.0
          %6184 = vmatpush2.msra.mxu0 0.0
          %6185 = vmatprep.subr.mxu0 0.0
          %6186 = vmatpush2.msra.mxu0 0.0
          %6187 = vmatprep.subr.mxu0 0.0
          %6188 = vmatpush2.msra.mxu0 0.0
          %6189 = vmatprep.subr.mxu0 0.0
          %6190 = vmatpush2.msra.mxu0 0.0
          %6191 = vmatprep.subr.mxu0 0.0
          %6192 = vmatpush2.msra.mxu0 0.0
          %6193 = vmatprep.subr.mxu0 0.0
          %6194 = vmatpush2.msra.mxu0 0.0
          %6195 = vmatprep.subr.mxu0 0.0
          %6196 = vmatpush2.msra.mxu0 0.0
          %6197 = vmatprep.subr.mxu0 0.0
          %6198 = vmatpush2.msra.mxu0 0.0
          %6199 = vmatprep.subr.mxu0 0.0
          %6200 = vmatpush2.msra.mxu0 0.0
          %6201 = vmatprep.subr.mxu0 0.0
          %6202 = vmatpush2.msra.mxu0 0.0
          %6203 = vmatprep.mubr.f32.mxu0 0.0
          %6204 = vmatmul.mubr.f32.gmra.mxu0 %v6137
          %v6205 = vpop.f32.mrf.mxu0
          %v6206 = vadd.f32 0.0, %v6205
          %v6207 = vpop.f32.mrf.mxu0
          %v6208 = vadd.f32 0.0, %v6207
          %6209 = vdwg.mxu0
          %v6210 = vadd.f32 %v6116, %v6206
          %v6211 = vadd.f32 %v6117, %v6208
          %v6212 = vld [vmem:[%s6023 + $0x1] sm:$0x3]
          %s6213 = scalar_lea.vmem %s6, 1024
          %v6214 = vld [vmem:[%s6213] sm:$0xff]
          %v6215 = vld [vmem:[%s6213 + $0x8] sm:$0xff]
          %v6216 = vld [vmem:[%s6213 + $0x10] sm:$0xff]
          %v6217 = vld [vmem:[%s6213 + $0x18] sm:$0xff]
          %v6218 = vld [vmem:[%s6213 + $0x20] sm:$0xff]
          %v6219 = vld [vmem:[%s6213 + $0x28] sm:$0xff]
          %v6220 = vld [vmem:[%s6213 + $0x30] sm:$0xff]
          %v6221 = vld [vmem:[%s6213 + $0x38] sm:$0xff]
          %v6222 = vld [vmem:[%s6213 + $0x40] sm:$0xff]
          %v6223 = vld [vmem:[%s6213 + $0x48] sm:$0xff]
          %v6224 = vld [vmem:[%s6213 + $0x50] sm:$0xff]
          %v6225 = vld [vmem:[%s6213 + $0x58] sm:$0xff]
          %v6226 = vld [vmem:[%s6213 + $0x60] sm:$0xff]
          %v6227 = vld [vmem:[%s6213 + $0x68] sm:$0xff]
          %v6228 = vld [vmem:[%s6213 + $0x70] sm:$0xff]
          %v6229 = vld [vmem:[%s6213 + $0x78] sm:$0xff]
          %v6231 = vsel %vm5494, %v6212, 0
          %6233 = vmatprep.subr.mxu0 0.0
          %6234 = vmatpush1.msra.mxu0 0.0
          %6235 = vmatprep.subr.mxu0 0.0
          %6236 = vmatpush1.msra.mxu0 0.0
          %6237 = vmatprep.subr.mxu0 0.0
          %6238 = vmatpush1.msra.mxu0 0.0
          %6239 = vmatprep.subr.mxu0 0.0
          %6240 = vmatpush1.msra.mxu0 0.0
          %6241 = vmatprep.subr.mxu0 0.0
          %6242 = vmatpush1.msra.mxu0 0.0
          %6243 = vmatprep.subr.mxu0 0.0
          %6244 = vmatpush1.msra.mxu0 0.0
          %6245 = vmatprep.subr.mxu0 0.0
          %6246 = vmatpush1.msra.mxu0 0.0
          %6247 = vmatprep.subr.mxu0 0.0
          %6248 = vmatpush1.msra.mxu0 0.0
          %6249 = vmatprep.subr.mxu0 %v6229
          %6250 = vmatpush1.msra.mxu0 %v6228
          %6251 = vmatprep.subr.mxu0 %v6227
          %6252 = vmatpush1.msra.mxu0 %v6226
          %6253 = vmatprep.subr.mxu0 %v6225
          %6254 = vmatpush1.msra.mxu0 %v6224
          %6255 = vmatprep.subr.mxu0 %v6223
          %6256 = vmatpush1.msra.mxu0 %v6222
          %6257 = vmatprep.subr.mxu0 %v6221
          %6258 = vmatpush1.msra.mxu0 %v6220
          %6259 = vmatprep.subr.mxu0 %v6219
          %6260 = vmatpush1.msra.mxu0 %v6218
          %6261 = vmatprep.subr.mxu0 %v6217
          %6262 = vmatpush1.msra.mxu0 %v6216
          %6263 = vmatprep.subr.mxu0 %v6215
          %6264 = vmatpush1.msra.mxu0 %v6214
          %6265 = vmatprep.subr.mxu0 0.0
          %6266 = vmatpush2.msra.mxu0 0.0
          %6267 = vmatprep.subr.mxu0 0.0
          %6268 = vmatpush2.msra.mxu0 0.0
          %6269 = vmatprep.subr.mxu0 0.0
          %6270 = vmatpush2.msra.mxu0 0.0
          %6271 = vmatprep.subr.mxu0 0.0
          %6272 = vmatpush2.msra.mxu0 0.0
          %6273 = vmatprep.subr.mxu0 0.0
          %6274 = vmatpush2.msra.mxu0 0.0
          %6275 = vmatprep.subr.mxu0 0.0
          %6276 = vmatpush2.msra.mxu0 0.0
          %6277 = vmatprep.subr.mxu0 0.0
          %6278 = vmatpush2.msra.mxu0 0.0
          %6279 = vmatprep.subr.mxu0 0.0
          %6280 = vmatpush2.msra.mxu0 0.0
          %6281 = vmatprep.subr.mxu0 0.0
          %6282 = vmatpush2.msra.mxu0 0.0
          %6283 = vmatprep.subr.mxu0 0.0
          %6284 = vmatpush2.msra.mxu0 0.0
          %6285 = vmatprep.subr.mxu0 0.0
          %6286 = vmatpush2.msra.mxu0 0.0
          %6287 = vmatprep.subr.mxu0 0.0
          %6288 = vmatpush2.msra.mxu0 0.0
          %6289 = vmatprep.subr.mxu0 0.0
          %6290 = vmatpush2.msra.mxu0 0.0
          %6291 = vmatprep.subr.mxu0 0.0
          %6292 = vmatpush2.msra.mxu0 0.0
          %6293 = vmatprep.subr.mxu0 0.0
          %6294 = vmatpush2.msra.mxu0 0.0
          %6295 = vmatprep.subr.mxu0 0.0
          %6296 = vmatpush2.msra.mxu0 0.0
          %6297 = vmatprep.mubr.f32.mxu0 0.0
          %6298 = vmatmul.mubr.f32.gmra.mxu0 %v6231
          %v6299 = vpop.f32.mrf.mxu0
          %v6300 = vadd.f32 0.0, %v6299
          %v6301 = vpop.f32.mrf.mxu0
          %v6302 = vadd.f32 0.0, %v6301
          %6303 = vdwg.mxu0
          %v6304 = vadd.f32 %v6210, %v6300
          %v6305 = vadd.f32 %v6211, %v6302
          %v6306 = vld [vmem:[%s5927 + $0x2] sm:$0x3]
          %s6307 = scalar_lea.vmem %s6, 1152
          %v6308 = vld [vmem:[%s6307] sm:$0xff]
          %v6309 = vld [vmem:[%s6307 + $0x8] sm:$0xff]
          %v6310 = vld [vmem:[%s6307 + $0x10] sm:$0xff]
          %v6311 = vld [vmem:[%s6307 + $0x18] sm:$0xff]
          %v6312 = vld [vmem:[%s6307 + $0x20] sm:$0xff]
          %v6313 = vld [vmem:[%s6307 + $0x28] sm:$0xff]
          %v6314 = vld [vmem:[%s6307 + $0x30] sm:$0xff]
          %v6315 = vld [vmem:[%s6307 + $0x38] sm:$0xff]
          %v6316 = vld [vmem:[%s6307 + $0x40] sm:$0xff]
          %v6317 = vld [vmem:[%s6307 + $0x48] sm:$0xff]
          %v6318 = vld [vmem:[%s6307 + $0x50] sm:$0xff]
          %v6319 = vld [vmem:[%s6307 + $0x58] sm:$0xff]
          %v6320 = vld [vmem:[%s6307 + $0x60] sm:$0xff]
          %v6321 = vld [vmem:[%s6307 + $0x68] sm:$0xff]
          %v6322 = vld [vmem:[%s6307 + $0x70] sm:$0xff]
          %v6323 = vld [vmem:[%s6307 + $0x78] sm:$0xff]
          %v6325 = vsel %vm5494, %v6306, 0
          %6327 = vmatprep.subr.mxu0 0.0
          %6328 = vmatpush1.msra.mxu0 0.0
          %6329 = vmatprep.subr.mxu0 0.0
          %6330 = vmatpush1.msra.mxu0 0.0
          %6331 = vmatprep.subr.mxu0 0.0
          %6332 = vmatpush1.msra.mxu0 0.0
          %6333 = vmatprep.subr.mxu0 0.0
          %6334 = vmatpush1.msra.mxu0 0.0
          %6335 = vmatprep.subr.mxu0 0.0
          %6336 = vmatpush1.msra.mxu0 0.0
          %6337 = vmatprep.subr.mxu0 0.0
          %6338 = vmatpush1.msra.mxu0 0.0
          %6339 = vmatprep.subr.mxu0 0.0
          %6340 = vmatpush1.msra.mxu0 0.0
          %6341 = vmatprep.subr.mxu0 0.0
          %6342 = vmatpush1.msra.mxu0 0.0
          %6343 = vmatprep.subr.mxu0 %v6323
          %6344 = vmatpush1.msra.mxu0 %v6322
          %6345 = vmatprep.subr.mxu0 %v6321
          %6346 = vmatpush1.msra.mxu0 %v6320
          %6347 = vmatprep.subr.mxu0 %v6319
          %6348 = vmatpush1.msra.mxu0 %v6318
          %6349 = vmatprep.subr.mxu0 %v6317
          %6350 = vmatpush1.msra.mxu0 %v6316
          %6351 = vmatprep.subr.mxu0 %v6315
          %6352 = vmatpush1.msra.mxu0 %v6314
          %6353 = vmatprep.subr.mxu0 %v6313
          %6354 = vmatpush1.msra.mxu0 %v6312
          %6355 = vmatprep.subr.mxu0 %v6311
          %6356 = vmatpush1.msra.mxu0 %v6310
          %6357 = vmatprep.subr.mxu0 %v6309
          %6358 = vmatpush1.msra.mxu0 %v6308
          %6359 = vmatprep.subr.mxu0 0.0
          %6360 = vmatpush2.msra.mxu0 0.0
          %6361 = vmatprep.subr.mxu0 0.0
          %6362 = vmatpush2.msra.mxu0 0.0
          %6363 = vmatprep.subr.mxu0 0.0
          %6364 = vmatpush2.msra.mxu0 0.0
          %6365 = vmatprep.subr.mxu0 0.0
          %6366 = vmatpush2.msra.mxu0 0.0
          %6367 = vmatprep.subr.mxu0 0.0
          %6368 = vmatpush2.msra.mxu0 0.0
          %6369 = vmatprep.subr.mxu0 0.0
          %6370 = vmatpush2.msra.mxu0 0.0
          %6371 = vmatprep.subr.mxu0 0.0
          %6372 = vmatpush2.msra.mxu0 0.0
          %6373 = vmatprep.subr.mxu0 0.0
          %6374 = vmatpush2.msra.mxu0 0.0
          %6375 = vmatprep.subr.mxu0 0.0
          %6376 = vmatpush2.msra.mxu0 0.0
          %6377 = vmatprep.subr.mxu0 0.0
          %6378 = vmatpush2.msra.mxu0 0.0
          %6379 = vmatprep.subr.mxu0 0.0
          %6380 = vmatpush2.msra.mxu0 0.0
          %6381 = vmatprep.subr.mxu0 0.0
          %6382 = vmatpush2.msra.mxu0 0.0
          %6383 = vmatprep.subr.mxu0 0.0
          %6384 = vmatpush2.msra.mxu0 0.0
          %6385 = vmatprep.subr.mxu0 0.0
          %6386 = vmatpush2.msra.mxu0 0.0
          %6387 = vmatprep.subr.mxu0 0.0
          %6388 = vmatpush2.msra.mxu0 0.0
          %6389 = vmatprep.subr.mxu0 0.0
          %6390 = vmatpush2.msra.mxu0 0.0
          %6391 = vmatprep.mubr.f32.mxu0 0.0
          %6392 = vmatmul.mubr.f32.gmra.mxu0 %v6325
          %v6393 = vpop.f32.mrf.mxu0
          %v6394 = vadd.f32 0.0, %v6393
          %v6395 = vpop.f32.mrf.mxu0
          %v6396 = vadd.f32 0.0, %v6395
          %6397 = vdwg.mxu0
          %v6398 = vadd.f32 %v6304, %v6394
          %v6399 = vadd.f32 %v6305, %v6396
          %s6400 = sadd.s32 %s5454, 2
          %s6401 = smul.u32 %s6400, 4
          %s6402 = scalar_lea.vmem [#allocation3], %s6401
          %v6403 = vld [vmem:[%s6402] sm:$0x3]
          %s6404 = scalar_lea.vmem %s6, 1280
          %v6405 = vld [vmem:[%s6404] sm:$0xff]
          %v6406 = vld [vmem:[%s6404 + $0x8] sm:$0xff]
          %v6407 = vld [vmem:[%s6404 + $0x10] sm:$0xff]
          %v6408 = vld [vmem:[%s6404 + $0x18] sm:$0xff]
          %v6409 = vld [vmem:[%s6404 + $0x20] sm:$0xff]
          %v6410 = vld [vmem:[%s6404 + $0x28] sm:$0xff]
          %v6411 = vld [vmem:[%s6404 + $0x30] sm:$0xff]
          %v6412 = vld [vmem:[%s6404 + $0x38] sm:$0xff]
          %v6413 = vld [vmem:[%s6404 + $0x40] sm:$0xff]
          %v6414 = vld [vmem:[%s6404 + $0x48] sm:$0xff]
          %v6415 = vld [vmem:[%s6404 + $0x50] sm:$0xff]
          %v6416 = vld [vmem:[%s6404 + $0x58] sm:$0xff]
          %v6417 = vld [vmem:[%s6404 + $0x60] sm:$0xff]
          %v6418 = vld [vmem:[%s6404 + $0x68] sm:$0xff]
          %v6419 = vld [vmem:[%s6404 + $0x70] sm:$0xff]
          %v6420 = vld [vmem:[%s6404 + $0x78] sm:$0xff]
          %v6422 = vsel %vm5494, %v6403, 0
          %6424 = vmatprep.subr.mxu0 0.0
          %6425 = vmatpush1.msra.mxu0 0.0
          %6426 = vmatprep.subr.mxu0 0.0
          %6427 = vmatpush1.msra.mxu0 0.0
          %6428 = vmatprep.subr.mxu0 0.0
          %6429 = vmatpush1.msra.mxu0 0.0
          %6430 = vmatprep.subr.mxu0 0.0
          %6431 = vmatpush1.msra.mxu0 0.0
          %6432 = vmatprep.subr.mxu0 0.0
          %6433 = vmatpush1.msra.mxu0 0.0
          %6434 = vmatprep.subr.mxu0 0.0
          %6435 = vmatpush1.msra.mxu0 0.0
          %6436 = vmatprep.subr.mxu0 0.0
          %6437 = vmatpush1.msra.mxu0 0.0
          %6438 = vmatprep.subr.mxu0 0.0
          %6439 = vmatpush1.msra.mxu0 0.0
          %6440 = vmatprep.subr.mxu0 %v6420
          %6441 = vmatpush1.msra.mxu0 %v6419
          %6442 = vmatprep.subr.mxu0 %v6418
          %6443 = vmatpush1.msra.mxu0 %v6417
          %6444 = vmatprep.subr.mxu0 %v6416
          %6445 = vmatpush1.msra.mxu0 %v6415
          %6446 = vmatprep.subr.mxu0 %v6414
          %6447 = vmatpush1.msra.mxu0 %v6413
          %6448 = vmatprep.subr.mxu0 %v6412
          %6449 = vmatpush1.msra.mxu0 %v6411
          %6450 = vmatprep.subr.mxu0 %v6410
          %6451 = vmatpush1.msra.mxu0 %v6409
          %6452 = vmatprep.subr.mxu0 %v6408
          %6453 = vmatpush1.msra.mxu0 %v6407
          %6454 = vmatprep.subr.mxu0 %v6406
          %6455 = vmatpush1.msra.mxu0 %v6405
          %6456 = vmatprep.subr.mxu0 0.0
          %6457 = vmatpush2.msra.mxu0 0.0
          %6458 = vmatprep.subr.mxu0 0.0
          %6459 = vmatpush2.msra.mxu0 0.0
          %6460 = vmatprep.subr.mxu0 0.0
          %6461 = vmatpush2.msra.mxu0 0.0
          %6462 = vmatprep.subr.mxu0 0.0
          %6463 = vmatpush2.msra.mxu0 0.0
          %6464 = vmatprep.subr.mxu0 0.0
          %6465 = vmatpush2.msra.mxu0 0.0
          %6466 = vmatprep.subr.mxu0 0.0
          %6467 = vmatpush2.msra.mxu0 0.0
          %6468 = vmatprep.subr.mxu0 0.0
          %6469 = vmatpush2.msra.mxu0 0.0
          %6470 = vmatprep.subr.mxu0 0.0
          %6471 = vmatpush2.msra.mxu0 0.0
          %6472 = vmatprep.subr.mxu0 0.0
          %6473 = vmatpush2.msra.mxu0 0.0
          %6474 = vmatprep.subr.mxu0 0.0
          %6475 = vmatpush2.msra.mxu0 0.0
          %6476 = vmatprep.subr.mxu0 0.0
          %6477 = vmatpush2.msra.mxu0 0.0
          %6478 = vmatprep.subr.mxu0 0.0
          %6479 = vmatpush2.msra.mxu0 0.0
          %6480 = vmatprep.subr.mxu0 0.0
          %6481 = vmatpush2.msra.mxu0 0.0
          %6482 = vmatprep.subr.mxu0 0.0
          %6483 = vmatpush2.msra.mxu0 0.0
          %6484 = vmatprep.subr.mxu0 0.0
          %6485 = vmatpush2.msra.mxu0 0.0
          %6486 = vmatprep.subr.mxu0 0.0
          %6487 = vmatpush2.msra.mxu0 0.0
          %6488 = vmatprep.mubr.f32.mxu0 0.0
          %6489 = vmatmul.mubr.f32.gmra.mxu0 %v6422
          %v6490 = vpop.f32.mrf.mxu0
          %v6491 = vadd.f32 0.0, %v6490
          %v6492 = vpop.f32.mrf.mxu0
          %v6493 = vadd.f32 0.0, %v6492
          %6494 = vdwg.mxu0
          %v6495 = vadd.f32 %v6398, %v6491
          %v6496 = vadd.f32 %v6399, %v6493
          %s6497 = sadd.s32 %s6401, 28
          %s6498 = scalar_lea.vmem [#allocation3], %s6497
          %v6499 = vld [vmem:[%s6498] sm:$0x3]
          %s6500 = scalar_lea.vmem %s6, 1408
          %v6501 = vld [vmem:[%s6500] sm:$0xff]
          %v6502 = vld [vmem:[%s6500 + $0x8] sm:$0xff]
          %v6503 = vld [vmem:[%s6500 + $0x10] sm:$0xff]
          %v6504 = vld [vmem:[%s6500 + $0x18] sm:$0xff]
          %v6505 = vld [vmem:[%s6500 + $0x20] sm:$0xff]
          %v6506 = vld [vmem:[%s6500 + $0x28] sm:$0xff]
          %v6507 = vld [vmem:[%s6500 + $0x30] sm:$0xff]
          %v6508 = vld [vmem:[%s6500 + $0x38] sm:$0xff]
          %v6509 = vld [vmem:[%s6500 + $0x40] sm:$0xff]
          %v6510 = vld [vmem:[%s6500 + $0x48] sm:$0xff]
          %v6511 = vld [vmem:[%s6500 + $0x50] sm:$0xff]
          %v6512 = vld [vmem:[%s6500 + $0x58] sm:$0xff]
          %v6513 = vld [vmem:[%s6500 + $0x60] sm:$0xff]
          %v6514 = vld [vmem:[%s6500 + $0x68] sm:$0xff]
          %v6515 = vld [vmem:[%s6500 + $0x70] sm:$0xff]
          %v6516 = vld [vmem:[%s6500 + $0x78] sm:$0xff]
          %v6518 = vsel %vm5494, %v6499, 0
          %6520 = vmatprep.subr.mxu0 0.0
          %6521 = vmatpush1.msra.mxu0 0.0
          %6522 = vmatprep.subr.mxu0 0.0
          %6523 = vmatpush1.msra.mxu0 0.0
          %6524 = vmatprep.subr.mxu0 0.0
          %6525 = vmatpush1.msra.mxu0 0.0
          %6526 = vmatprep.subr.mxu0 0.0
          %6527 = vmatpush1.msra.mxu0 0.0
          %6528 = vmatprep.subr.mxu0 0.0
          %6529 = vmatpush1.msra.mxu0 0.0
          %6530 = vmatprep.subr.mxu0 0.0
          %6531 = vmatpush1.msra.mxu0 0.0
          %6532 = vmatprep.subr.mxu0 0.0
          %6533 = vmatpush1.msra.mxu0 0.0
          %6534 = vmatprep.subr.mxu0 0.0
          %6535 = vmatpush1.msra.mxu0 0.0
          %6536 = vmatprep.subr.mxu0 %v6516
          %6537 = vmatpush1.msra.mxu0 %v6515
          %6538 = vmatprep.subr.mxu0 %v6514
          %6539 = vmatpush1.msra.mxu0 %v6513
          %6540 = vmatprep.subr.mxu0 %v6512
          %6541 = vmatpush1.msra.mxu0 %v6511
          %6542 = vmatprep.subr.mxu0 %v6510
          %6543 = vmatpush1.msra.mxu0 %v6509
          %6544 = vmatprep.subr.mxu0 %v6508
          %6545 = vmatpush1.msra.mxu0 %v6507
          %6546 = vmatprep.subr.mxu0 %v6506
          %6547 = vmatpush1.msra.mxu0 %v6505
          %6548 = vmatprep.subr.mxu0 %v6504
          %6549 = vmatpush1.msra.mxu0 %v6503
          %6550 = vmatprep.subr.mxu0 %v6502
          %6551 = vmatpush1.msra.mxu0 %v6501
          %6552 = vmatprep.subr.mxu0 0.0
          %6553 = vmatpush2.msra.mxu0 0.0
          %6554 = vmatprep.subr.mxu0 0.0
          %6555 = vmatpush2.msra.mxu0 0.0
          %6556 = vmatprep.subr.mxu0 0.0
          %6557 = vmatpush2.msra.mxu0 0.0
          %6558 = vmatprep.subr.mxu0 0.0
          %6559 = vmatpush2.msra.mxu0 0.0
          %6560 = vmatprep.subr.mxu0 0.0
          %6561 = vmatpush2.msra.mxu0 0.0
          %6562 = vmatprep.subr.mxu0 0.0
          %6563 = vmatpush2.msra.mxu0 0.0
          %6564 = vmatprep.subr.mxu0 0.0
          %6565 = vmatpush2.msra.mxu0 0.0
          %6566 = vmatprep.subr.mxu0 0.0
          %6567 = vmatpush2.msra.mxu0 0.0
          %6568 = vmatprep.subr.mxu0 0.0
          %6569 = vmatpush2.msra.mxu0 0.0
          %6570 = vmatprep.subr.mxu0 0.0
          %6571 = vmatpush2.msra.mxu0 0.0
          %6572 = vmatprep.subr.mxu0 0.0
          %6573 = vmatpush2.msra.mxu0 0.0
          %6574 = vmatprep.subr.mxu0 0.0
          %6575 = vmatpush2.msra.mxu0 0.0
          %6576 = vmatprep.subr.mxu0 0.0
          %6577 = vmatpush2.msra.mxu0 0.0
          %6578 = vmatprep.subr.mxu0 0.0
          %6579 = vmatpush2.msra.mxu0 0.0
          %6580 = vmatprep.subr.mxu0 0.0
          %6581 = vmatpush2.msra.mxu0 0.0
          %6582 = vmatprep.subr.mxu0 0.0
          %6583 = vmatpush2.msra.mxu0 0.0
          %6584 = vmatprep.mubr.f32.mxu0 0.0
          %6585 = vmatmul.mubr.f32.gmra.mxu0 %v6518
          %v6586 = vpop.f32.mrf.mxu0
          %v6587 = vadd.f32 0.0, %v6586
          %v6588 = vpop.f32.mrf.mxu0
          %v6589 = vadd.f32 0.0, %v6588
          %6590 = vdwg.mxu0
          %v6591 = vadd.f32 %v6495, %v6587
          %v6592 = vadd.f32 %v6496, %v6589
          %v6593 = vld [vmem:[%s6402 + $0x1] sm:$0x3]
          %s6594 = scalar_lea.vmem %s6, 1536
          %v6595 = vld [vmem:[%s6594] sm:$0xff]
          %v6596 = vld [vmem:[%s6594 + $0x8] sm:$0xff]
          %v6597 = vld [vmem:[%s6594 + $0x10] sm:$0xff]
          %v6598 = vld [vmem:[%s6594 + $0x18] sm:$0xff]
          %v6599 = vld [vmem:[%s6594 + $0x20] sm:$0xff]
          %v6600 = vld [vmem:[%s6594 + $0x28] sm:$0xff]
          %v6601 = vld [vmem:[%s6594 + $0x30] sm:$0xff]
          %v6602 = vld [vmem:[%s6594 + $0x38] sm:$0xff]
          %v6603 = vld [vmem:[%s6594 + $0x40] sm:$0xff]
          %v6604 = vld [vmem:[%s6594 + $0x48] sm:$0xff]
          %v6605 = vld [vmem:[%s6594 + $0x50] sm:$0xff]
          %v6606 = vld [vmem:[%s6594 + $0x58] sm:$0xff]
          %v6607 = vld [vmem:[%s6594 + $0x60] sm:$0xff]
          %v6608 = vld [vmem:[%s6594 + $0x68] sm:$0xff]
          %v6609 = vld [vmem:[%s6594 + $0x70] sm:$0xff]
          %v6610 = vld [vmem:[%s6594 + $0x78] sm:$0xff]
          %v6612 = vsel %vm5494, %v6593, 0
          %6614 = vmatprep.subr.mxu0 0.0
          %6615 = vmatpush1.msra.mxu0 0.0
          %6616 = vmatprep.subr.mxu0 0.0
          %6617 = vmatpush1.msra.mxu0 0.0
          %6618 = vmatprep.subr.mxu0 0.0
          %6619 = vmatpush1.msra.mxu0 0.0
          %6620 = vmatprep.subr.mxu0 0.0
          %6621 = vmatpush1.msra.mxu0 0.0
          %6622 = vmatprep.subr.mxu0 0.0
          %6623 = vmatpush1.msra.mxu0 0.0
          %6624 = vmatprep.subr.mxu0 0.0
          %6625 = vmatpush1.msra.mxu0 0.0
          %6626 = vmatprep.subr.mxu0 0.0
          %6627 = vmatpush1.msra.mxu0 0.0
          %6628 = vmatprep.subr.mxu0 0.0
          %6629 = vmatpush1.msra.mxu0 0.0
          %6630 = vmatprep.subr.mxu0 %v6610
          %6631 = vmatpush1.msra.mxu0 %v6609
          %6632 = vmatprep.subr.mxu0 %v6608
          %6633 = vmatpush1.msra.mxu0 %v6607
          %6634 = vmatprep.subr.mxu0 %v6606
          %6635 = vmatpush1.msra.mxu0 %v6605
          %6636 = vmatprep.subr.mxu0 %v6604
          %6637 = vmatpush1.msra.mxu0 %v6603
          %6638 = vmatprep.subr.mxu0 %v6602
          %6639 = vmatpush1.msra.mxu0 %v6601
          %6640 = vmatprep.subr.mxu0 %v6600
          %6641 = vmatpush1.msra.mxu0 %v6599
          %6642 = vmatprep.subr.mxu0 %v6598
          %6643 = vmatpush1.msra.mxu0 %v6597
          %6644 = vmatprep.subr.mxu0 %v6596
          %6645 = vmatpush1.msra.mxu0 %v6595
          %6646 = vmatprep.subr.mxu0 0.0
          %6647 = vmatpush2.msra.mxu0 0.0
          %6648 = vmatprep.subr.mxu0 0.0
          %6649 = vmatpush2.msra.mxu0 0.0
          %6650 = vmatprep.subr.mxu0 0.0
          %6651 = vmatpush2.msra.mxu0 0.0
          %6652 = vmatprep.subr.mxu0 0.0
          %6653 = vmatpush2.msra.mxu0 0.0
          %6654 = vmatprep.subr.mxu0 0.0
          %6655 = vmatpush2.msra.mxu0 0.0
          %6656 = vmatprep.subr.mxu0 0.0
          %6657 = vmatpush2.msra.mxu0 0.0
          %6658 = vmatprep.subr.mxu0 0.0
          %6659 = vmatpush2.msra.mxu0 0.0
          %6660 = vmatprep.subr.mxu0 0.0
          %6661 = vmatpush2.msra.mxu0 0.0
          %6662 = vmatprep.subr.mxu0 0.0
          %6663 = vmatpush2.msra.mxu0 0.0
          %6664 = vmatprep.subr.mxu0 0.0
          %6665 = vmatpush2.msra.mxu0 0.0
          %6666 = vmatprep.subr.mxu0 0.0
          %6667 = vmatpush2.msra.mxu0 0.0
          %6668 = vmatprep.subr.mxu0 0.0
          %6669 = vmatpush2.msra.mxu0 0.0
          %6670 = vmatprep.subr.mxu0 0.0
          %6671 = vmatpush2.msra.mxu0 0.0
          %6672 = vmatprep.subr.mxu0 0.0
          %6673 = vmatpush2.msra.mxu0 0.0
          %6674 = vmatprep.subr.mxu0 0.0
          %6675 = vmatpush2.msra.mxu0 0.0
          %6676 = vmatprep.subr.mxu0 0.0
          %6677 = vmatpush2.msra.mxu0 0.0
          %6678 = vmatprep.mubr.f32.mxu0 0.0
          %6679 = vmatmul.mubr.f32.gmra.mxu0 %v6612
          %v6680 = vpop.f32.mrf.mxu0
          %v6681 = vadd.f32 0.0, %v6680
          %v6682 = vpop.f32.mrf.mxu0
          %v6683 = vadd.f32 0.0, %v6682
          %6684 = vdwg.mxu0
          %v6685 = vadd.f32 %v6591, %v6681
          %v6686 = vadd.f32 %v6592, %v6683
          %v6687 = vld [vmem:[%s6498 + $0x1] sm:$0x3]
          %s6688 = scalar_lea.vmem %s6, 1664
          %v6689 = vld [vmem:[%s6688] sm:$0xff]
          %v6690 = vld [vmem:[%s6688 + $0x8] sm:$0xff]
          %v6691 = vld [vmem:[%s6688 + $0x10] sm:$0xff]
          %v6692 = vld [vmem:[%s6688 + $0x18] sm:$0xff]
          %v6693 = vld [vmem:[%s6688 + $0x20] sm:$0xff]
          %v6694 = vld [vmem:[%s6688 + $0x28] sm:$0xff]
          %v6695 = vld [vmem:[%s6688 + $0x30] sm:$0xff]
          %v6696 = vld [vmem:[%s6688 + $0x38] sm:$0xff]
          %v6697 = vld [vmem:[%s6688 + $0x40] sm:$0xff]
          %v6698 = vld [vmem:[%s6688 + $0x48] sm:$0xff]
          %v6699 = vld [vmem:[%s6688 + $0x50] sm:$0xff]
          %v6700 = vld [vmem:[%s6688 + $0x58] sm:$0xff]
          %v6701 = vld [vmem:[%s6688 + $0x60] sm:$0xff]
          %v6702 = vld [vmem:[%s6688 + $0x68] sm:$0xff]
          %v6703 = vld [vmem:[%s6688 + $0x70] sm:$0xff]
          %v6704 = vld [vmem:[%s6688 + $0x78] sm:$0xff]
          %v6706 = vsel %vm5494, %v6687, 0
          %6708 = vmatprep.subr.mxu0 0.0
          %6709 = vmatpush1.msra.mxu0 0.0
          %6710 = vmatprep.subr.mxu0 0.0
          %6711 = vmatpush1.msra.mxu0 0.0
          %6712 = vmatprep.subr.mxu0 0.0
          %6713 = vmatpush1.msra.mxu0 0.0
          %6714 = vmatprep.subr.mxu0 0.0
          %6715 = vmatpush1.msra.mxu0 0.0
          %6716 = vmatprep.subr.mxu0 0.0
          %6717 = vmatpush1.msra.mxu0 0.0
          %6718 = vmatprep.subr.mxu0 0.0
          %6719 = vmatpush1.msra.mxu0 0.0
          %6720 = vmatprep.subr.mxu0 0.0
          %6721 = vmatpush1.msra.mxu0 0.0
          %6722 = vmatprep.subr.mxu0 0.0
          %6723 = vmatpush1.msra.mxu0 0.0
          %6724 = vmatprep.subr.mxu0 %v6704
          %6725 = vmatpush1.msra.mxu0 %v6703
          %6726 = vmatprep.subr.mxu0 %v6702
          %6727 = vmatpush1.msra.mxu0 %v6701
          %6728 = vmatprep.subr.mxu0 %v6700
          %6729 = vmatpush1.msra.mxu0 %v6699
          %6730 = vmatprep.subr.mxu0 %v6698
          %6731 = vmatpush1.msra.mxu0 %v6697
          %6732 = vmatprep.subr.mxu0 %v6696
          %6733 = vmatpush1.msra.mxu0 %v6695
          %6734 = vmatprep.subr.mxu0 %v6694
          %6735 = vmatpush1.msra.mxu0 %v6693
          %6736 = vmatprep.subr.mxu0 %v6692
          %6737 = vmatpush1.msra.mxu0 %v6691
          %6738 = vmatprep.subr.mxu0 %v6690
          %6739 = vmatpush1.msra.mxu0 %v6689
          %6740 = vmatprep.subr.mxu0 0.0
          %6741 = vmatpush2.msra.mxu0 0.0
          %6742 = vmatprep.subr.mxu0 0.0
          %6743 = vmatpush2.msra.mxu0 0.0
          %6744 = vmatprep.subr.mxu0 0.0
          %6745 = vmatpush2.msra.mxu0 0.0
          %6746 = vmatprep.subr.mxu0 0.0
          %6747 = vmatpush2.msra.mxu0 0.0
          %6748 = vmatprep.subr.mxu0 0.0
          %6749 = vmatpush2.msra.mxu0 0.0
          %6750 = vmatprep.subr.mxu0 0.0
          %6751 = vmatpush2.msra.mxu0 0.0
          %6752 = vmatprep.subr.mxu0 0.0
          %6753 = vmatpush2.msra.mxu0 0.0
          %6754 = vmatprep.subr.mxu0 0.0
          %6755 = vmatpush2.msra.mxu0 0.0
          %6756 = vmatprep.subr.mxu0 0.0
          %6757 = vmatpush2.msra.mxu0 0.0
          %6758 = vmatprep.subr.mxu0 0.0
          %6759 = vmatpush2.msra.mxu0 0.0
          %6760 = vmatprep.subr.mxu0 0.0
          %6761 = vmatpush2.msra.mxu0 0.0
          %6762 = vmatprep.subr.mxu0 0.0
          %6763 = vmatpush2.msra.mxu0 0.0
          %6764 = vmatprep.subr.mxu0 0.0
          %6765 = vmatpush2.msra.mxu0 0.0
          %6766 = vmatprep.subr.mxu0 0.0
          %6767 = vmatpush2.msra.mxu0 0.0
          %6768 = vmatprep.subr.mxu0 0.0
          %6769 = vmatpush2.msra.mxu0 0.0
          %6770 = vmatprep.subr.mxu0 0.0
          %6771 = vmatpush2.msra.mxu0 0.0
          %6772 = vmatprep.mubr.f32.mxu0 0.0
          %6773 = vmatmul.mubr.f32.gmra.mxu0 %v6706
          %v6774 = vpop.f32.mrf.mxu0
          %v6775 = vadd.f32 0.0, %v6774
          %v6776 = vpop.f32.mrf.mxu0
          %v6777 = vadd.f32 0.0, %v6776
          %6778 = vdwg.mxu0
          %v6779 = vadd.f32 %v6685, %v6775
          %v6780 = vadd.f32 %v6686, %v6777
          %v6781 = vld [vmem:[%s6402 + $0x2] sm:$0x3]
          %s6782 = scalar_lea.vmem %s6, 1792
          %v6783 = vld [vmem:[%s6782] sm:$0xff]
          %v6784 = vld [vmem:[%s6782 + $0x8] sm:$0xff]
          %v6785 = vld [vmem:[%s6782 + $0x10] sm:$0xff]
          %v6786 = vld [vmem:[%s6782 + $0x18] sm:$0xff]
          %v6787 = vld [vmem:[%s6782 + $0x20] sm:$0xff]
          %v6788 = vld [vmem:[%s6782 + $0x28] sm:$0xff]
          %v6789 = vld [vmem:[%s6782 + $0x30] sm:$0xff]
          %v6790 = vld [vmem:[%s6782 + $0x38] sm:$0xff]
          %v6791 = vld [vmem:[%s6782 + $0x40] sm:$0xff]
          %v6792 = vld [vmem:[%s6782 + $0x48] sm:$0xff]
          %v6793 = vld [vmem:[%s6782 + $0x50] sm:$0xff]
          %v6794 = vld [vmem:[%s6782 + $0x58] sm:$0xff]
          %v6795 = vld [vmem:[%s6782 + $0x60] sm:$0xff]
          %v6796 = vld [vmem:[%s6782 + $0x68] sm:$0xff]
          %v6797 = vld [vmem:[%s6782 + $0x70] sm:$0xff]
          %v6798 = vld [vmem:[%s6782 + $0x78] sm:$0xff]
          %v6800 = vsel %vm5494, %v6781, 0
          %6802 = vmatprep.subr.mxu0 0.0
          %6803 = vmatpush1.msra.mxu0 0.0
          %6804 = vmatprep.subr.mxu0 0.0
          %6805 = vmatpush1.msra.mxu0 0.0
          %6806 = vmatprep.subr.mxu0 0.0
          %6807 = vmatpush1.msra.mxu0 0.0
          %6808 = vmatprep.subr.mxu0 0.0
          %6809 = vmatpush1.msra.mxu0 0.0
          %6810 = vmatprep.subr.mxu0 0.0
          %6811 = vmatpush1.msra.mxu0 0.0
          %6812 = vmatprep.subr.mxu0 0.0
          %6813 = vmatpush1.msra.mxu0 0.0
          %6814 = vmatprep.subr.mxu0 0.0
          %6815 = vmatpush1.msra.mxu0 0.0
          %6816 = vmatprep.subr.mxu0 0.0
          %6817 = vmatpush1.msra.mxu0 0.0
          %6818 = vmatprep.subr.mxu0 %v6798
          %6819 = vmatpush1.msra.mxu0 %v6797
          %6820 = vmatprep.subr.mxu0 %v6796
          %6821 = vmatpush1.msra.mxu0 %v6795
          %6822 = vmatprep.subr.mxu0 %v6794
          %6823 = vmatpush1.msra.mxu0 %v6793
          %6824 = vmatprep.subr.mxu0 %v6792
          %6825 = vmatpush1.msra.mxu0 %v6791
          %6826 = vmatprep.subr.mxu0 %v6790
          %6827 = vmatpush1.msra.mxu0 %v6789
          %6828 = vmatprep.subr.mxu0 %v6788
          %6829 = vmatpush1.msra.mxu0 %v6787
          %6830 = vmatprep.subr.mxu0 %v6786
          %6831 = vmatpush1.msra.mxu0 %v6785
          %6832 = vmatprep.subr.mxu0 %v6784
          %6833 = vmatpush1.msra.mxu0 %v6783
          %6834 = vmatprep.subr.mxu0 0.0
          %6835 = vmatpush2.msra.mxu0 0.0
          %6836 = vmatprep.subr.mxu0 0.0
          %6837 = vmatpush2.msra.mxu0 0.0
          %6838 = vmatprep.subr.mxu0 0.0
          %6839 = vmatpush2.msra.mxu0 0.0
          %6840 = vmatprep.subr.mxu0 0.0
          %6841 = vmatpush2.msra.mxu0 0.0
          %6842 = vmatprep.subr.mxu0 0.0
          %6843 = vmatpush2.msra.mxu0 0.0
          %6844 = vmatprep.subr.mxu0 0.0
          %6845 = vmatpush2.msra.mxu0 0.0
          %6846 = vmatprep.subr.mxu0 0.0
          %6847 = vmatpush2.msra.mxu0 0.0
          %6848 = vmatprep.subr.mxu0 0.0
          %6849 = vmatpush2.msra.mxu0 0.0
          %6850 = vmatprep.subr.mxu0 0.0
          %6851 = vmatpush2.msra.mxu0 0.0
          %6852 = vmatprep.subr.mxu0 0.0
          %6853 = vmatpush2.msra.mxu0 0.0
          %6854 = vmatprep.subr.mxu0 0.0
          %6855 = vmatpush2.msra.mxu0 0.0
          %6856 = vmatprep.subr.mxu0 0.0
          %6857 = vmatpush2.msra.mxu0 0.0
          %6858 = vmatprep.subr.mxu0 0.0
          %6859 = vmatpush2.msra.mxu0 0.0
          %6860 = vmatprep.subr.mxu0 0.0
          %6861 = vmatpush2.msra.mxu0 0.0
          %6862 = vmatprep.subr.mxu0 0.0
          %6863 = vmatpush2.msra.mxu0 0.0
          %6864 = vmatprep.subr.mxu0 0.0
          %6865 = vmatpush2.msra.mxu0 0.0
          %6866 = vmatprep.mubr.f32.mxu0 0.0
          %6867 = vmatmul.mubr.f32.gmra.mxu0 %v6800
          %v6868 = vpop.f32.mrf.mxu0
          %v6869 = vadd.f32 0.0, %v6868
          %v6870 = vpop.f32.mrf.mxu0
          %v6871 = vadd.f32 0.0, %v6870
          %6872 = vdwg.mxu0
          %v6873 = vadd.f32 %v6779, %v6869
          %v6874 = vadd.f32 %v6780, %v6871
          %s6875 = sadd.s32 %s5454, 3
          %s6876 = smul.u32 %s6875, 4
          %s6877 = scalar_lea.vmem [#allocation3], %s6876
          %v6878 = vld [vmem:[%s6877] sm:$0x3]
          %s6879 = scalar_lea.vmem %s6, 1920
          %v6880 = vld [vmem:[%s6879] sm:$0xff]
          %v6881 = vld [vmem:[%s6879 + $0x8] sm:$0xff]
          %v6882 = vld [vmem:[%s6879 + $0x10] sm:$0xff]
          %v6883 = vld [vmem:[%s6879 + $0x18] sm:$0xff]
          %v6884 = vld [vmem:[%s6879 + $0x20] sm:$0xff]
          %v6885 = vld [vmem:[%s6879 + $0x28] sm:$0xff]
          %v6886 = vld [vmem:[%s6879 + $0x30] sm:$0xff]
          %v6887 = vld [vmem:[%s6879 + $0x38] sm:$0xff]
          %v6888 = vld [vmem:[%s6879 + $0x40] sm:$0xff]
          %v6889 = vld [vmem:[%s6879 + $0x48] sm:$0xff]
          %v6890 = vld [vmem:[%s6879 + $0x50] sm:$0xff]
          %v6891 = vld [vmem:[%s6879 + $0x58] sm:$0xff]
          %v6892 = vld [vmem:[%s6879 + $0x60] sm:$0xff]
          %v6893 = vld [vmem:[%s6879 + $0x68] sm:$0xff]
          %v6894 = vld [vmem:[%s6879 + $0x70] sm:$0xff]
          %v6895 = vld [vmem:[%s6879 + $0x78] sm:$0xff]
          %v6897 = vsel %vm5494, %v6878, 0
          %6899 = vmatprep.subr.mxu0 0.0
          %6900 = vmatpush1.msra.mxu0 0.0
          %6901 = vmatprep.subr.mxu0 0.0
          %6902 = vmatpush1.msra.mxu0 0.0
          %6903 = vmatprep.subr.mxu0 0.0
          %6904 = vmatpush1.msra.mxu0 0.0
          %6905 = vmatprep.subr.mxu0 0.0
          %6906 = vmatpush1.msra.mxu0 0.0
          %6907 = vmatprep.subr.mxu0 0.0
          %6908 = vmatpush1.msra.mxu0 0.0
          %6909 = vmatprep.subr.mxu0 0.0
          %6910 = vmatpush1.msra.mxu0 0.0
          %6911 = vmatprep.subr.mxu0 0.0
          %6912 = vmatpush1.msra.mxu0 0.0
          %6913 = vmatprep.subr.mxu0 0.0
          %6914 = vmatpush1.msra.mxu0 0.0
          %6915 = vmatprep.subr.mxu0 %v6895
          %6916 = vmatpush1.msra.mxu0 %v6894
          %6917 = vmatprep.subr.mxu0 %v6893
          %6918 = vmatpush1.msra.mxu0 %v6892
          %6919 = vmatprep.subr.mxu0 %v6891
          %6920 = vmatpush1.msra.mxu0 %v6890
          %6921 = vmatprep.subr.mxu0 %v6889
          %6922 = vmatpush1.msra.mxu0 %v6888
          %6923 = vmatprep.subr.mxu0 %v6887
          %6924 = vmatpush1.msra.mxu0 %v6886
          %6925 = vmatprep.subr.mxu0 %v6885
          %6926 = vmatpush1.msra.mxu0 %v6884
          %6927 = vmatprep.subr.mxu0 %v6883
          %6928 = vmatpush1.msra.mxu0 %v6882
          %6929 = vmatprep.subr.mxu0 %v6881
          %6930 = vmatpush1.msra.mxu0 %v6880
          %6931 = vmatprep.subr.mxu0 0.0
          %6932 = vmatpush2.msra.mxu0 0.0
          %6933 = vmatprep.subr.mxu0 0.0
          %6934 = vmatpush2.msra.mxu0 0.0
          %6935 = vmatprep.subr.mxu0 0.0
          %6936 = vmatpush2.msra.mxu0 0.0
          %6937 = vmatprep.subr.mxu0 0.0
          %6938 = vmatpush2.msra.mxu0 0.0
          %6939 = vmatprep.subr.mxu0 0.0
          %6940 = vmatpush2.msra.mxu0 0.0
          %6941 = vmatprep.subr.mxu0 0.0
          %6942 = vmatpush2.msra.mxu0 0.0
          %6943 = vmatprep.subr.mxu0 0.0
          %6944 = vmatpush2.msra.mxu0 0.0
          %6945 = vmatprep.subr.mxu0 0.0
          %6946 = vmatpush2.msra.mxu0 0.0
          %6947 = vmatprep.subr.mxu0 0.0
          %6948 = vmatpush2.msra.mxu0 0.0
          %6949 = vmatprep.subr.mxu0 0.0
          %6950 = vmatpush2.msra.mxu0 0.0
          %6951 = vmatprep.subr.mxu0 0.0
          %6952 = vmatpush2.msra.mxu0 0.0
          %6953 = vmatprep.subr.mxu0 0.0
          %6954 = vmatpush2.msra.mxu0 0.0
          %6955 = vmatprep.subr.mxu0 0.0
          %6956 = vmatpush2.msra.mxu0 0.0
          %6957 = vmatprep.subr.mxu0 0.0
          %6958 = vmatpush2.msra.mxu0 0.0
          %6959 = vmatprep.subr.mxu0 0.0
          %6960 = vmatpush2.msra.mxu0 0.0
          %6961 = vmatprep.subr.mxu0 0.0
          %6962 = vmatpush2.msra.mxu0 0.0
          %6963 = vmatprep.mubr.f32.mxu0 0.0
          %6964 = vmatmul.mubr.f32.gmra.mxu0 %v6897
          %v6965 = vpop.f32.mrf.mxu0
          %v6966 = vadd.f32 0.0, %v6965
          %v6967 = vpop.f32.mrf.mxu0
          %v6968 = vadd.f32 0.0, %v6967
          %6969 = vdwg.mxu0
          %v6970 = vadd.f32 %v6873, %v6966
          %v6971 = vadd.f32 %v6874, %v6968
          %s6972 = sadd.s32 %s6876, 28
          %s6973 = scalar_lea.vmem [#allocation3], %s6972
          %v6974 = vld [vmem:[%s6973] sm:$0x3]
          %s6975 = scalar_lea.vmem %s6, 2048
          %v6976 = vld [vmem:[%s6975] sm:$0xff]
          %v6977 = vld [vmem:[%s6975 + $0x8] sm:$0xff]
          %v6978 = vld [vmem:[%s6975 + $0x10] sm:$0xff]
          %v6979 = vld [vmem:[%s6975 + $0x18] sm:$0xff]
          %v6980 = vld [vmem:[%s6975 + $0x20] sm:$0xff]
          %v6981 = vld [vmem:[%s6975 + $0x28] sm:$0xff]
          %v6982 = vld [vmem:[%s6975 + $0x30] sm:$0xff]
          %v6983 = vld [vmem:[%s6975 + $0x38] sm:$0xff]
          %v6984 = vld [vmem:[%s6975 + $0x40] sm:$0xff]
          %v6985 = vld [vmem:[%s6975 + $0x48] sm:$0xff]
          %v6986 = vld [vmem:[%s6975 + $0x50] sm:$0xff]
          %v6987 = vld [vmem:[%s6975 + $0x58] sm:$0xff]
          %v6988 = vld [vmem:[%s6975 + $0x60] sm:$0xff]
          %v6989 = vld [vmem:[%s6975 + $0x68] sm:$0xff]
          %v6990 = vld [vmem:[%s6975 + $0x70] sm:$0xff]
          %v6991 = vld [vmem:[%s6975 + $0x78] sm:$0xff]
          %v6993 = vsel %vm5494, %v6974, 0
          %6995 = vmatprep.subr.mxu0 0.0
          %6996 = vmatpush1.msra.mxu0 0.0
          %6997 = vmatprep.subr.mxu0 0.0
          %6998 = vmatpush1.msra.mxu0 0.0
          %6999 = vmatprep.subr.mxu0 0.0
          %7000 = vmatpush1.msra.mxu0 0.0
          %7001 = vmatprep.subr.mxu0 0.0
          %7002 = vmatpush1.msra.mxu0 0.0
          %7003 = vmatprep.subr.mxu0 0.0
          %7004 = vmatpush1.msra.mxu0 0.0
          %7005 = vmatprep.subr.mxu0 0.0
          %7006 = vmatpush1.msra.mxu0 0.0
          %7007 = vmatprep.subr.mxu0 0.0
          %7008 = vmatpush1.msra.mxu0 0.0
          %7009 = vmatprep.subr.mxu0 0.0
          %7010 = vmatpush1.msra.mxu0 0.0
          %7011 = vmatprep.subr.mxu0 %v6991
          %7012 = vmatpush1.msra.mxu0 %v6990
          %7013 = vmatprep.subr.mxu0 %v6989
          %7014 = vmatpush1.msra.mxu0 %v6988
          %7015 = vmatprep.subr.mxu0 %v6987
          %7016 = vmatpush1.msra.mxu0 %v6986
          %7017 = vmatprep.subr.mxu0 %v6985
          %7018 = vmatpush1.msra.mxu0 %v6984
          %7019 = vmatprep.subr.mxu0 %v6983
          %7020 = vmatpush1.msra.mxu0 %v6982
          %7021 = vmatprep.subr.mxu0 %v6981
          %7022 = vmatpush1.msra.mxu0 %v6980
          %7023 = vmatprep.subr.mxu0 %v6979
          %7024 = vmatpush1.msra.mxu0 %v6978
          %7025 = vmatprep.subr.mxu0 %v6977
          %7026 = vmatpush1.msra.mxu0 %v6976
          %7027 = vmatprep.subr.mxu0 0.0
          %7028 = vmatpush2.msra.mxu0 0.0
          %7029 = vmatprep.subr.mxu0 0.0
          %7030 = vmatpush2.msra.mxu0 0.0
          %7031 = vmatprep.subr.mxu0 0.0
          %7032 = vmatpush2.msra.mxu0 0.0
          %7033 = vmatprep.subr.mxu0 0.0
          %7034 = vmatpush2.msra.mxu0 0.0
          %7035 = vmatprep.subr.mxu0 0.0
          %7036 = vmatpush2.msra.mxu0 0.0
          %7037 = vmatprep.subr.mxu0 0.0
          %7038 = vmatpush2.msra.mxu0 0.0
          %7039 = vmatprep.subr.mxu0 0.0
          %7040 = vmatpush2.msra.mxu0 0.0
          %7041 = vmatprep.subr.mxu0 0.0
          %7042 = vmatpush2.msra.mxu0 0.0
          %7043 = vmatprep.subr.mxu0 0.0
          %7044 = vmatpush2.msra.mxu0 0.0
          %7045 = vmatprep.subr.mxu0 0.0
          %7046 = vmatpush2.msra.mxu0 0.0
          %7047 = vmatprep.subr.mxu0 0.0
          %7048 = vmatpush2.msra.mxu0 0.0
          %7049 = vmatprep.subr.mxu0 0.0
          %7050 = vmatpush2.msra.mxu0 0.0
          %7051 = vmatprep.subr.mxu0 0.0
          %7052 = vmatpush2.msra.mxu0 0.0
          %7053 = vmatprep.subr.mxu0 0.0
          %7054 = vmatpush2.msra.mxu0 0.0
          %7055 = vmatprep.subr.mxu0 0.0
          %7056 = vmatpush2.msra.mxu0 0.0
          %7057 = vmatprep.subr.mxu0 0.0
          %7058 = vmatpush2.msra.mxu0 0.0
          %7059 = vmatprep.mubr.f32.mxu0 0.0
          %7060 = vmatmul.mubr.f32.gmra.mxu0 %v6993
          %v7061 = vpop.f32.mrf.mxu0
          %v7062 = vadd.f32 0.0, %v7061
          %v7063 = vpop.f32.mrf.mxu0
          %v7064 = vadd.f32 0.0, %v7063
          %7065 = vdwg.mxu0
          %v7066 = vadd.f32 %v6970, %v7062
          %v7067 = vadd.f32 %v6971, %v7064
          %v7068 = vld [vmem:[%s6877 + $0x1] sm:$0x3]
          %s7069 = scalar_lea.vmem %s6, 2176
          %v7070 = vld [vmem:[%s7069] sm:$0xff]
          %v7071 = vld [vmem:[%s7069 + $0x8] sm:$0xff]
          %v7072 = vld [vmem:[%s7069 + $0x10] sm:$0xff]
          %v7073 = vld [vmem:[%s7069 + $0x18] sm:$0xff]
          %v7074 = vld [vmem:[%s7069 + $0x20] sm:$0xff]
          %v7075 = vld [vmem:[%s7069 + $0x28] sm:$0xff]
          %v7076 = vld [vmem:[%s7069 + $0x30] sm:$0xff]
          %v7077 = vld [vmem:[%s7069 + $0x38] sm:$0xff]
          %v7078 = vld [vmem:[%s7069 + $0x40] sm:$0xff]
          %v7079 = vld [vmem:[%s7069 + $0x48] sm:$0xff]
          %v7080 = vld [vmem:[%s7069 + $0x50] sm:$0xff]
          %v7081 = vld [vmem:[%s7069 + $0x58] sm:$0xff]
          %v7082 = vld [vmem:[%s7069 + $0x60] sm:$0xff]
          %v7083 = vld [vmem:[%s7069 + $0x68] sm:$0xff]
          %v7084 = vld [vmem:[%s7069 + $0x70] sm:$0xff]
          %v7085 = vld [vmem:[%s7069 + $0x78] sm:$0xff]
          %v7087 = vsel %vm5494, %v7068, 0
          %7089 = vmatprep.subr.mxu0 0.0
          %7090 = vmatpush1.msra.mxu0 0.0
          %7091 = vmatprep.subr.mxu0 0.0
          %7092 = vmatpush1.msra.mxu0 0.0
          %7093 = vmatprep.subr.mxu0 0.0
          %7094 = vmatpush1.msra.mxu0 0.0
          %7095 = vmatprep.subr.mxu0 0.0
          %7096 = vmatpush1.msra.mxu0 0.0
          %7097 = vmatprep.subr.mxu0 0.0
          %7098 = vmatpush1.msra.mxu0 0.0
          %7099 = vmatprep.subr.mxu0 0.0
          %7100 = vmatpush1.msra.mxu0 0.0
          %7101 = vmatprep.subr.mxu0 0.0
          %7102 = vmatpush1.msra.mxu0 0.0
          %7103 = vmatprep.subr.mxu0 0.0
          %7104 = vmatpush1.msra.mxu0 0.0
          %7105 = vmatprep.subr.mxu0 %v7085
          %7106 = vmatpush1.msra.mxu0 %v7084
          %7107 = vmatprep.subr.mxu0 %v7083
          %7108 = vmatpush1.msra.mxu0 %v7082
          %7109 = vmatprep.subr.mxu0 %v7081
          %7110 = vmatpush1.msra.mxu0 %v7080
          %7111 = vmatprep.subr.mxu0 %v7079
          %7112 = vmatpush1.msra.mxu0 %v7078
          %7113 = vmatprep.subr.mxu0 %v7077
          %7114 = vmatpush1.msra.mxu0 %v7076
          %7115 = vmatprep.subr.mxu0 %v7075
          %7116 = vmatpush1.msra.mxu0 %v7074
          %7117 = vmatprep.subr.mxu0 %v7073
          %7118 = vmatpush1.msra.mxu0 %v7072
          %7119 = vmatprep.subr.mxu0 %v7071
          %7120 = vmatpush1.msra.mxu0 %v7070
          %7121 = vmatprep.subr.mxu0 0.0
          %7122 = vmatpush2.msra.mxu0 0.0
          %7123 = vmatprep.subr.mxu0 0.0
          %7124 = vmatpush2.msra.mxu0 0.0
          %7125 = vmatprep.subr.mxu0 0.0
          %7126 = vmatpush2.msra.mxu0 0.0
          %7127 = vmatprep.subr.mxu0 0.0
          %7128 = vmatpush2.msra.mxu0 0.0
          %7129 = vmatprep.subr.mxu0 0.0
          %7130 = vmatpush2.msra.mxu0 0.0
          %7131 = vmatprep.subr.mxu0 0.0
          %7132 = vmatpush2.msra.mxu0 0.0
          %7133 = vmatprep.subr.mxu0 0.0
          %7134 = vmatpush2.msra.mxu0 0.0
          %7135 = vmatprep.subr.mxu0 0.0
          %7136 = vmatpush2.msra.mxu0 0.0
          %7137 = vmatprep.subr.mxu0 0.0
          %7138 = vmatpush2.msra.mxu0 0.0
          %7139 = vmatprep.subr.mxu0 0.0
          %7140 = vmatpush2.msra.mxu0 0.0
          %7141 = vmatprep.subr.mxu0 0.0
          %7142 = vmatpush2.msra.mxu0 0.0
          %7143 = vmatprep.subr.mxu0 0.0
          %7144 = vmatpush2.msra.mxu0 0.0
          %7145 = vmatprep.subr.mxu0 0.0
          %7146 = vmatpush2.msra.mxu0 0.0
          %7147 = vmatprep.subr.mxu0 0.0
          %7148 = vmatpush2.msra.mxu0 0.0
          %7149 = vmatprep.subr.mxu0 0.0
          %7150 = vmatpush2.msra.mxu0 0.0
          %7151 = vmatprep.subr.mxu0 0.0
          %7152 = vmatpush2.msra.mxu0 0.0
          %7153 = vmatprep.mubr.f32.mxu0 0.0
          %7154 = vmatmul.mubr.f32.gmra.mxu0 %v7087
          %v7155 = vpop.f32.mrf.mxu0
          %v7156 = vadd.f32 0.0, %v7155
          %v7157 = vpop.f32.mrf.mxu0
          %v7158 = vadd.f32 0.0, %v7157
          %7159 = vdwg.mxu0
          %v7160 = vadd.f32 %v7066, %v7156
          %v7161 = vadd.f32 %v7067, %v7158
          %v7162 = vld [vmem:[%s6973 + $0x1] sm:$0x3]
          %s7163 = scalar_lea.vmem %s6, 2304
          %v7164 = vld [vmem:[%s7163] sm:$0xff]
          %v7165 = vld [vmem:[%s7163 + $0x8] sm:$0xff]
          %v7166 = vld [vmem:[%s7163 + $0x10] sm:$0xff]
          %v7167 = vld [vmem:[%s7163 + $0x18] sm:$0xff]
          %v7168 = vld [vmem:[%s7163 + $0x20] sm:$0xff]
          %v7169 = vld [vmem:[%s7163 + $0x28] sm:$0xff]
          %v7170 = vld [vmem:[%s7163 + $0x30] sm:$0xff]
          %v7171 = vld [vmem:[%s7163 + $0x38] sm:$0xff]
          %v7172 = vld [vmem:[%s7163 + $0x40] sm:$0xff]
          %v7173 = vld [vmem:[%s7163 + $0x48] sm:$0xff]
          %v7174 = vld [vmem:[%s7163 + $0x50] sm:$0xff]
          %v7175 = vld [vmem:[%s7163 + $0x58] sm:$0xff]
          %v7176 = vld [vmem:[%s7163 + $0x60] sm:$0xff]
          %v7177 = vld [vmem:[%s7163 + $0x68] sm:$0xff]
          %v7178 = vld [vmem:[%s7163 + $0x70] sm:$0xff]
          %v7179 = vld [vmem:[%s7163 + $0x78] sm:$0xff]
          %v7181 = vsel %vm5494, %v7162, 0
          %7183 = vmatprep.subr.mxu0 0.0
          %7184 = vmatpush1.msra.mxu0 0.0
          %7185 = vmatprep.subr.mxu0 0.0
          %7186 = vmatpush1.msra.mxu0 0.0
          %7187 = vmatprep.subr.mxu0 0.0
          %7188 = vmatpush1.msra.mxu0 0.0
          %7189 = vmatprep.subr.mxu0 0.0
          %7190 = vmatpush1.msra.mxu0 0.0
          %7191 = vmatprep.subr.mxu0 0.0
          %7192 = vmatpush1.msra.mxu0 0.0
          %7193 = vmatprep.subr.mxu0 0.0
          %7194 = vmatpush1.msra.mxu0 0.0
          %7195 = vmatprep.subr.mxu0 0.0
          %7196 = vmatpush1.msra.mxu0 0.0
          %7197 = vmatprep.subr.mxu0 0.0
          %7198 = vmatpush1.msra.mxu0 0.0
          %7199 = vmatprep.subr.mxu0 %v7179
          %7200 = vmatpush1.msra.mxu0 %v7178
          %7201 = vmatprep.subr.mxu0 %v7177
          %7202 = vmatpush1.msra.mxu0 %v7176
          %7203 = vmatprep.subr.mxu0 %v7175
          %7204 = vmatpush1.msra.mxu0 %v7174
          %7205 = vmatprep.subr.mxu0 %v7173
          %7206 = vmatpush1.msra.mxu0 %v7172
          %7207 = vmatprep.subr.mxu0 %v7171
          %7208 = vmatpush1.msra.mxu0 %v7170
          %7209 = vmatprep.subr.mxu0 %v7169
          %7210 = vmatpush1.msra.mxu0 %v7168
          %7211 = vmatprep.subr.mxu0 %v7167
          %7212 = vmatpush1.msra.mxu0 %v7166
          %7213 = vmatprep.subr.mxu0 %v7165
          %7214 = vmatpush1.msra.mxu0 %v7164
          %7215 = vmatprep.subr.mxu0 0.0
          %7216 = vmatpush2.msra.mxu0 0.0
          %7217 = vmatprep.subr.mxu0 0.0
          %7218 = vmatpush2.msra.mxu0 0.0
          %7219 = vmatprep.subr.mxu0 0.0
          %7220 = vmatpush2.msra.mxu0 0.0
          %7221 = vmatprep.subr.mxu0 0.0
          %7222 = vmatpush2.msra.mxu0 0.0
          %7223 = vmatprep.subr.mxu0 0.0
          %7224 = vmatpush2.msra.mxu0 0.0
          %7225 = vmatprep.subr.mxu0 0.0
          %7226 = vmatpush2.msra.mxu0 0.0
          %7227 = vmatprep.subr.mxu0 0.0
          %7228 = vmatpush2.msra.mxu0 0.0
          %7229 = vmatprep.subr.mxu0 0.0
          %7230 = vmatpush2.msra.mxu0 0.0
          %7231 = vmatprep.subr.mxu0 0.0
          %7232 = vmatpush2.msra.mxu0 0.0
          %7233 = vmatprep.subr.mxu0 0.0
          %7234 = vmatpush2.msra.mxu0 0.0
          %7235 = vmatprep.subr.mxu0 0.0
          %7236 = vmatpush2.msra.mxu0 0.0
          %7237 = vmatprep.subr.mxu0 0.0
          %7238 = vmatpush2.msra.mxu0 0.0
          %7239 = vmatprep.subr.mxu0 0.0
          %7240 = vmatpush2.msra.mxu0 0.0
          %7241 = vmatprep.subr.mxu0 0.0
          %7242 = vmatpush2.msra.mxu0 0.0
          %7243 = vmatprep.subr.mxu0 0.0
          %7244 = vmatpush2.msra.mxu0 0.0
          %7245 = vmatprep.subr.mxu0 0.0
          %7246 = vmatpush2.msra.mxu0 0.0
          %7247 = vmatprep.mubr.f32.mxu0 0.0
          %7248 = vmatmul.mubr.f32.gmra.mxu0 %v7181
          %v7249 = vpop.f32.mrf.mxu0
          %v7250 = vadd.f32 0.0, %v7249
          %v7251 = vpop.f32.mrf.mxu0
          %v7252 = vadd.f32 0.0, %v7251
          %7253 = vdwg.mxu0
          %v7254 = vadd.f32 %v7160, %v7250
          %v7255 = vadd.f32 %v7161, %v7252
          %v7256 = vld [vmem:[%s6877 + $0x2] sm:$0x3]
          %s7257 = scalar_lea.vmem %s6, 2432
          %v7258 = vld [vmem:[%s7257] sm:$0xff]
          %v7259 = vld [vmem:[%s7257 + $0x8] sm:$0xff]
          %v7260 = vld [vmem:[%s7257 + $0x10] sm:$0xff]
          %v7261 = vld [vmem:[%s7257 + $0x18] sm:$0xff]
          %v7262 = vld [vmem:[%s7257 + $0x20] sm:$0xff]
          %v7263 = vld [vmem:[%s7257 + $0x28] sm:$0xff]
          %v7264 = vld [vmem:[%s7257 + $0x30] sm:$0xff]
          %v7265 = vld [vmem:[%s7257 + $0x38] sm:$0xff]
          %v7266 = vld [vmem:[%s7257 + $0x40] sm:$0xff]
          %v7267 = vld [vmem:[%s7257 + $0x48] sm:$0xff]
          %v7268 = vld [vmem:[%s7257 + $0x50] sm:$0xff]
          %v7269 = vld [vmem:[%s7257 + $0x58] sm:$0xff]
          %v7270 = vld [vmem:[%s7257 + $0x60] sm:$0xff]
          %v7271 = vld [vmem:[%s7257 + $0x68] sm:$0xff]
          %v7272 = vld [vmem:[%s7257 + $0x70] sm:$0xff]
          %v7273 = vld [vmem:[%s7257 + $0x78] sm:$0xff]
          %v7275 = vsel %vm5494, %v7256, 0
          %7277 = vmatprep.subr.mxu0 0.0
          %7278 = vmatpush1.msra.mxu0 0.0
          %7279 = vmatprep.subr.mxu0 0.0
          %7280 = vmatpush1.msra.mxu0 0.0
          %7281 = vmatprep.subr.mxu0 0.0
          %7282 = vmatpush1.msra.mxu0 0.0
          %7283 = vmatprep.subr.mxu0 0.0
          %7284 = vmatpush1.msra.mxu0 0.0
          %7285 = vmatprep.subr.mxu0 0.0
          %7286 = vmatpush1.msra.mxu0 0.0
          %7287 = vmatprep.subr.mxu0 0.0
          %7288 = vmatpush1.msra.mxu0 0.0
          %7289 = vmatprep.subr.mxu0 0.0
          %7290 = vmatpush1.msra.mxu0 0.0
          %7291 = vmatprep.subr.mxu0 0.0
          %7292 = vmatpush1.msra.mxu0 0.0
          %7293 = vmatprep.subr.mxu0 %v7273
          %7294 = vmatpush1.msra.mxu0 %v7272
          %7295 = vmatprep.subr.mxu0 %v7271
          %7296 = vmatpush1.msra.mxu0 %v7270
          %7297 = vmatprep.subr.mxu0 %v7269
          %7298 = vmatpush1.msra.mxu0 %v7268
          %7299 = vmatprep.subr.mxu0 %v7267
          %7300 = vmatpush1.msra.mxu0 %v7266
          %7301 = vmatprep.subr.mxu0 %v7265
          %7302 = vmatpush1.msra.mxu0 %v7264
          %7303 = vmatprep.subr.mxu0 %v7263
          %7304 = vmatpush1.msra.mxu0 %v7262
          %7305 = vmatprep.subr.mxu0 %v7261
          %7306 = vmatpush1.msra.mxu0 %v7260
          %7307 = vmatprep.subr.mxu0 %v7259
          %7308 = vmatpush1.msra.mxu0 %v7258
          %7309 = vmatprep.subr.mxu0 0.0
          %7310 = vmatpush2.msra.mxu0 0.0
          %7311 = vmatprep.subr.mxu0 0.0
          %7312 = vmatpush2.msra.mxu0 0.0
          %7313 = vmatprep.subr.mxu0 0.0
          %7314 = vmatpush2.msra.mxu0 0.0
          %7315 = vmatprep.subr.mxu0 0.0
          %7316 = vmatpush2.msra.mxu0 0.0
          %7317 = vmatprep.subr.mxu0 0.0
          %7318 = vmatpush2.msra.mxu0 0.0
          %7319 = vmatprep.subr.mxu0 0.0
          %7320 = vmatpush2.msra.mxu0 0.0
          %7321 = vmatprep.subr.mxu0 0.0
          %7322 = vmatpush2.msra.mxu0 0.0
          %7323 = vmatprep.subr.mxu0 0.0
          %7324 = vmatpush2.msra.mxu0 0.0
          %7325 = vmatprep.subr.mxu0 0.0
          %7326 = vmatpush2.msra.mxu0 0.0
          %7327 = vmatprep.subr.mxu0 0.0
          %7328 = vmatpush2.msra.mxu0 0.0
          %7329 = vmatprep.subr.mxu0 0.0
          %7330 = vmatpush2.msra.mxu0 0.0
          %7331 = vmatprep.subr.mxu0 0.0
          %7332 = vmatpush2.msra.mxu0 0.0
          %7333 = vmatprep.subr.mxu0 0.0
          %7334 = vmatpush2.msra.mxu0 0.0
          %7335 = vmatprep.subr.mxu0 0.0
          %7336 = vmatpush2.msra.mxu0 0.0
          %7337 = vmatprep.subr.mxu0 0.0
          %7338 = vmatpush2.msra.mxu0 0.0
          %7339 = vmatprep.subr.mxu0 0.0
          %7340 = vmatpush2.msra.mxu0 0.0
          %7341 = vmatprep.mubr.f32.mxu0 0.0
          %7342 = vmatmul.mubr.f32.gmra.mxu0 %v7275
          %v7343 = vpop.f32.mrf.mxu0
          %v7344 = vadd.f32 0.0, %v7343
          %v7345 = vpop.f32.mrf.mxu0
          %v7346 = vadd.f32 0.0, %v7345
          %7347 = vdwg.mxu0
          %v7348 = vadd.f32 %v7254, %v7344
          %v7349 = vadd.f32 %v7255, %v7346
          %s7350 = sadd.s32 %s5454, 4
          %s7351 = smul.u32 %s7350, 4
          %s7352 = scalar_lea.vmem [#allocation3], %s7351
          %v7353 = vld [vmem:[%s7352] sm:$0x3]
          %s7354 = scalar_lea.vmem %s6, 2560
          %v7355 = vld [vmem:[%s7354] sm:$0xff]
          %v7356 = vld [vmem:[%s7354 + $0x8] sm:$0xff]
          %v7357 = vld [vmem:[%s7354 + $0x10] sm:$0xff]
          %v7358 = vld [vmem:[%s7354 + $0x18] sm:$0xff]
          %v7359 = vld [vmem:[%s7354 + $0x20] sm:$0xff]
          %v7360 = vld [vmem:[%s7354 + $0x28] sm:$0xff]
          %v7361 = vld [vmem:[%s7354 + $0x30] sm:$0xff]
          %v7362 = vld [vmem:[%s7354 + $0x38] sm:$0xff]
          %v7363 = vld [vmem:[%s7354 + $0x40] sm:$0xff]
          %v7364 = vld [vmem:[%s7354 + $0x48] sm:$0xff]
          %v7365 = vld [vmem:[%s7354 + $0x50] sm:$0xff]
          %v7366 = vld [vmem:[%s7354 + $0x58] sm:$0xff]
          %v7367 = vld [vmem:[%s7354 + $0x60] sm:$0xff]
          %v7368 = vld [vmem:[%s7354 + $0x68] sm:$0xff]
          %v7369 = vld [vmem:[%s7354 + $0x70] sm:$0xff]
          %v7370 = vld [vmem:[%s7354 + $0x78] sm:$0xff]
          %v7372 = vsel %vm5494, %v7353, 0
          %7374 = vmatprep.subr.mxu0 0.0
          %7375 = vmatpush1.msra.mxu0 0.0
          %7376 = vmatprep.subr.mxu0 0.0
          %7377 = vmatpush1.msra.mxu0 0.0
          %7378 = vmatprep.subr.mxu0 0.0
          %7379 = vmatpush1.msra.mxu0 0.0
          %7380 = vmatprep.subr.mxu0 0.0
          %7381 = vmatpush1.msra.mxu0 0.0
          %7382 = vmatprep.subr.mxu0 0.0
          %7383 = vmatpush1.msra.mxu0 0.0
          %7384 = vmatprep.subr.mxu0 0.0
          %7385 = vmatpush1.msra.mxu0 0.0
          %7386 = vmatprep.subr.mxu0 0.0
          %7387 = vmatpush1.msra.mxu0 0.0
          %7388 = vmatprep.subr.mxu0 0.0
          %7389 = vmatpush1.msra.mxu0 0.0
          %7390 = vmatprep.subr.mxu0 %v7370
          %7391 = vmatpush1.msra.mxu0 %v7369
          %7392 = vmatprep.subr.mxu0 %v7368
          %7393 = vmatpush1.msra.mxu0 %v7367
          %7394 = vmatprep.subr.mxu0 %v7366
          %7395 = vmatpush1.msra.mxu0 %v7365
          %7396 = vmatprep.subr.mxu0 %v7364
          %7397 = vmatpush1.msra.mxu0 %v7363
          %7398 = vmatprep.subr.mxu0 %v7362
          %7399 = vmatpush1.msra.mxu0 %v7361
          %7400 = vmatprep.subr.mxu0 %v7360
          %7401 = vmatpush1.msra.mxu0 %v7359
          %7402 = vmatprep.subr.mxu0 %v7358
          %7403 = vmatpush1.msra.mxu0 %v7357
          %7404 = vmatprep.subr.mxu0 %v7356
          %7405 = vmatpush1.msra.mxu0 %v7355
          %7406 = vmatprep.subr.mxu0 0.0
          %7407 = vmatpush2.msra.mxu0 0.0
          %7408 = vmatprep.subr.mxu0 0.0
          %7409 = vmatpush2.msra.mxu0 0.0
          %7410 = vmatprep.subr.mxu0 0.0
          %7411 = vmatpush2.msra.mxu0 0.0
          %7412 = vmatprep.subr.mxu0 0.0
          %7413 = vmatpush2.msra.mxu0 0.0
          %7414 = vmatprep.subr.mxu0 0.0
          %7415 = vmatpush2.msra.mxu0 0.0
          %7416 = vmatprep.subr.mxu0 0.0
          %7417 = vmatpush2.msra.mxu0 0.0
          %7418 = vmatprep.subr.mxu0 0.0
          %7419 = vmatpush2.msra.mxu0 0.0
          %7420 = vmatprep.subr.mxu0 0.0
          %7421 = vmatpush2.msra.mxu0 0.0
          %7422 = vmatprep.subr.mxu0 0.0
          %7423 = vmatpush2.msra.mxu0 0.0
          %7424 = vmatprep.subr.mxu0 0.0
          %7425 = vmatpush2.msra.mxu0 0.0
          %7426 = vmatprep.subr.mxu0 0.0
          %7427 = vmatpush2.msra.mxu0 0.0
          %7428 = vmatprep.subr.mxu0 0.0
          %7429 = vmatpush2.msra.mxu0 0.0
          %7430 = vmatprep.subr.mxu0 0.0
          %7431 = vmatpush2.msra.mxu0 0.0
          %7432 = vmatprep.subr.mxu0 0.0
          %7433 = vmatpush2.msra.mxu0 0.0
          %7434 = vmatprep.subr.mxu0 0.0
          %7435 = vmatpush2.msra.mxu0 0.0
          %7436 = vmatprep.subr.mxu0 0.0
          %7437 = vmatpush2.msra.mxu0 0.0
          %7438 = vmatprep.mubr.f32.mxu0 0.0
          %7439 = vmatmul.mubr.f32.gmra.mxu0 %v7372
          %v7440 = vpop.f32.mrf.mxu0
          %v7441 = vadd.f32 0.0, %v7440
          %v7442 = vpop.f32.mrf.mxu0
          %v7443 = vadd.f32 0.0, %v7442
          %7444 = vdwg.mxu0
          %v7445 = vadd.f32 %v7348, %v7441
          %v7446 = vadd.f32 %v7349, %v7443
          %s7447 = sadd.s32 %s7351, 28
          %s7448 = scalar_lea.vmem [#allocation3], %s7447
          %v7449 = vld [vmem:[%s7448] sm:$0x3]
          %s7450 = scalar_lea.vmem %s6, 2688
          %v7451 = vld [vmem:[%s7450] sm:$0xff]
          %v7452 = vld [vmem:[%s7450 + $0x8] sm:$0xff]
          %v7453 = vld [vmem:[%s7450 + $0x10] sm:$0xff]
          %v7454 = vld [vmem:[%s7450 + $0x18] sm:$0xff]
          %v7455 = vld [vmem:[%s7450 + $0x20] sm:$0xff]
          %v7456 = vld [vmem:[%s7450 + $0x28] sm:$0xff]
          %v7457 = vld [vmem:[%s7450 + $0x30] sm:$0xff]
          %v7458 = vld [vmem:[%s7450 + $0x38] sm:$0xff]
          %v7459 = vld [vmem:[%s7450 + $0x40] sm:$0xff]
          %v7460 = vld [vmem:[%s7450 + $0x48] sm:$0xff]
          %v7461 = vld [vmem:[%s7450 + $0x50] sm:$0xff]
          %v7462 = vld [vmem:[%s7450 + $0x58] sm:$0xff]
          %v7463 = vld [vmem:[%s7450 + $0x60] sm:$0xff]
          %v7464 = vld [vmem:[%s7450 + $0x68] sm:$0xff]
          %v7465 = vld [vmem:[%s7450 + $0x70] sm:$0xff]
          %v7466 = vld [vmem:[%s7450 + $0x78] sm:$0xff]
          %v7468 = vsel %vm5494, %v7449, 0
          %7470 = vmatprep.subr.mxu0 0.0
          %7471 = vmatpush1.msra.mxu0 0.0
          %7472 = vmatprep.subr.mxu0 0.0
          %7473 = vmatpush1.msra.mxu0 0.0
          %7474 = vmatprep.subr.mxu0 0.0
          %7475 = vmatpush1.msra.mxu0 0.0
          %7476 = vmatprep.subr.mxu0 0.0
          %7477 = vmatpush1.msra.mxu0 0.0
          %7478 = vmatprep.subr.mxu0 0.0
          %7479 = vmatpush1.msra.mxu0 0.0
          %7480 = vmatprep.subr.mxu0 0.0
          %7481 = vmatpush1.msra.mxu0 0.0
          %7482 = vmatprep.subr.mxu0 0.0
          %7483 = vmatpush1.msra.mxu0 0.0
          %7484 = vmatprep.subr.mxu0 0.0
          %7485 = vmatpush1.msra.mxu0 0.0
          %7486 = vmatprep.subr.mxu0 %v7466
          %7487 = vmatpush1.msra.mxu0 %v7465
          %7488 = vmatprep.subr.mxu0 %v7464
          %7489 = vmatpush1.msra.mxu0 %v7463
          %7490 = vmatprep.subr.mxu0 %v7462
          %7491 = vmatpush1.msra.mxu0 %v7461
          %7492 = vmatprep.subr.mxu0 %v7460
          %7493 = vmatpush1.msra.mxu0 %v7459
          %7494 = vmatprep.subr.mxu0 %v7458
          %7495 = vmatpush1.msra.mxu0 %v7457
          %7496 = vmatprep.subr.mxu0 %v7456
          %7497 = vmatpush1.msra.mxu0 %v7455
          %7498 = vmatprep.subr.mxu0 %v7454
          %7499 = vmatpush1.msra.mxu0 %v7453
          %7500 = vmatprep.subr.mxu0 %v7452
          %7501 = vmatpush1.msra.mxu0 %v7451
          %7502 = vmatprep.subr.mxu0 0.0
          %7503 = vmatpush2.msra.mxu0 0.0
          %7504 = vmatprep.subr.mxu0 0.0
          %7505 = vmatpush2.msra.mxu0 0.0
          %7506 = vmatprep.subr.mxu0 0.0
          %7507 = vmatpush2.msra.mxu0 0.0
          %7508 = vmatprep.subr.mxu0 0.0
          %7509 = vmatpush2.msra.mxu0 0.0
          %7510 = vmatprep.subr.mxu0 0.0
          %7511 = vmatpush2.msra.mxu0 0.0
          %7512 = vmatprep.subr.mxu0 0.0
          %7513 = vmatpush2.msra.mxu0 0.0
          %7514 = vmatprep.subr.mxu0 0.0
          %7515 = vmatpush2.msra.mxu0 0.0
          %7516 = vmatprep.subr.mxu0 0.0
          %7517 = vmatpush2.msra.mxu0 0.0
          %7518 = vmatprep.subr.mxu0 0.0
          %7519 = vmatpush2.msra.mxu0 0.0
          %7520 = vmatprep.subr.mxu0 0.0
          %7521 = vmatpush2.msra.mxu0 0.0
          %7522 = vmatprep.subr.mxu0 0.0
          %7523 = vmatpush2.msra.mxu0 0.0
          %7524 = vmatprep.subr.mxu0 0.0
          %7525 = vmatpush2.msra.mxu0 0.0
          %7526 = vmatprep.subr.mxu0 0.0
          %7527 = vmatpush2.msra.mxu0 0.0
          %7528 = vmatprep.subr.mxu0 0.0
          %7529 = vmatpush2.msra.mxu0 0.0
          %7530 = vmatprep.subr.mxu0 0.0
          %7531 = vmatpush2.msra.mxu0 0.0
          %7532 = vmatprep.subr.mxu0 0.0
          %7533 = vmatpush2.msra.mxu0 0.0
          %7534 = vmatprep.mubr.f32.mxu0 0.0
          %7535 = vmatmul.mubr.f32.gmra.mxu0 %v7468
          %v7536 = vpop.f32.mrf.mxu0
          %v7537 = vadd.f32 0.0, %v7536
          %v7538 = vpop.f32.mrf.mxu0
          %v7539 = vadd.f32 0.0, %v7538
          %7540 = vdwg.mxu0
          %v7541 = vadd.f32 %v7445, %v7537
          %v7542 = vadd.f32 %v7446, %v7539
          %v7543 = vld [vmem:[%s7352 + $0x1] sm:$0x3]
          %s7544 = scalar_lea.vmem %s6, 2816
          %v7545 = vld [vmem:[%s7544] sm:$0xff]
          %v7546 = vld [vmem:[%s7544 + $0x8] sm:$0xff]
          %v7547 = vld [vmem:[%s7544 + $0x10] sm:$0xff]
          %v7548 = vld [vmem:[%s7544 + $0x18] sm:$0xff]
          %v7549 = vld [vmem:[%s7544 + $0x20] sm:$0xff]
          %v7550 = vld [vmem:[%s7544 + $0x28] sm:$0xff]
          %v7551 = vld [vmem:[%s7544 + $0x30] sm:$0xff]
          %v7552 = vld [vmem:[%s7544 + $0x38] sm:$0xff]
          %v7553 = vld [vmem:[%s7544 + $0x40] sm:$0xff]
          %v7554 = vld [vmem:[%s7544 + $0x48] sm:$0xff]
          %v7555 = vld [vmem:[%s7544 + $0x50] sm:$0xff]
          %v7556 = vld [vmem:[%s7544 + $0x58] sm:$0xff]
          %v7557 = vld [vmem:[%s7544 + $0x60] sm:$0xff]
          %v7558 = vld [vmem:[%s7544 + $0x68] sm:$0xff]
          %v7559 = vld [vmem:[%s7544 + $0x70] sm:$0xff]
          %v7560 = vld [vmem:[%s7544 + $0x78] sm:$0xff]
          %v7562 = vsel %vm5494, %v7543, 0
          %7564 = vmatprep.subr.mxu0 0.0
          %7565 = vmatpush1.msra.mxu0 0.0
          %7566 = vmatprep.subr.mxu0 0.0
          %7567 = vmatpush1.msra.mxu0 0.0
          %7568 = vmatprep.subr.mxu0 0.0
          %7569 = vmatpush1.msra.mxu0 0.0
          %7570 = vmatprep.subr.mxu0 0.0
          %7571 = vmatpush1.msra.mxu0 0.0
          %7572 = vmatprep.subr.mxu0 0.0
          %7573 = vmatpush1.msra.mxu0 0.0
          %7574 = vmatprep.subr.mxu0 0.0
          %7575 = vmatpush1.msra.mxu0 0.0
          %7576 = vmatprep.subr.mxu0 0.0
          %7577 = vmatpush1.msra.mxu0 0.0
          %7578 = vmatprep.subr.mxu0 0.0
          %7579 = vmatpush1.msra.mxu0 0.0
          %7580 = vmatprep.subr.mxu0 %v7560
          %7581 = vmatpush1.msra.mxu0 %v7559
          %7582 = vmatprep.subr.mxu0 %v7558
          %7583 = vmatpush1.msra.mxu0 %v7557
          %7584 = vmatprep.subr.mxu0 %v7556
          %7585 = vmatpush1.msra.mxu0 %v7555
          %7586 = vmatprep.subr.mxu0 %v7554
          %7587 = vmatpush1.msra.mxu0 %v7553
          %7588 = vmatprep.subr.mxu0 %v7552
          %7589 = vmatpush1.msra.mxu0 %v7551
          %7590 = vmatprep.subr.mxu0 %v7550
          %7591 = vmatpush1.msra.mxu0 %v7549
          %7592 = vmatprep.subr.mxu0 %v7548
          %7593 = vmatpush1.msra.mxu0 %v7547
          %7594 = vmatprep.subr.mxu0 %v7546
          %7595 = vmatpush1.msra.mxu0 %v7545
          %7596 = vmatprep.subr.mxu0 0.0
          %7597 = vmatpush2.msra.mxu0 0.0
          %7598 = vmatprep.subr.mxu0 0.0
          %7599 = vmatpush2.msra.mxu0 0.0
          %7600 = vmatprep.subr.mxu0 0.0
          %7601 = vmatpush2.msra.mxu0 0.0
          %7602 = vmatprep.subr.mxu0 0.0
          %7603 = vmatpush2.msra.mxu0 0.0
          %7604 = vmatprep.subr.mxu0 0.0
          %7605 = vmatpush2.msra.mxu0 0.0
          %7606 = vmatprep.subr.mxu0 0.0
          %7607 = vmatpush2.msra.mxu0 0.0
          %7608 = vmatprep.subr.mxu0 0.0
          %7609 = vmatpush2.msra.mxu0 0.0
          %7610 = vmatprep.subr.mxu0 0.0
          %7611 = vmatpush2.msra.mxu0 0.0
          %7612 = vmatprep.subr.mxu0 0.0
          %7613 = vmatpush2.msra.mxu0 0.0
          %7614 = vmatprep.subr.mxu0 0.0
          %7615 = vmatpush2.msra.mxu0 0.0
          %7616 = vmatprep.subr.mxu0 0.0
          %7617 = vmatpush2.msra.mxu0 0.0
          %7618 = vmatprep.subr.mxu0 0.0
          %7619 = vmatpush2.msra.mxu0 0.0
          %7620 = vmatprep.subr.mxu0 0.0
          %7621 = vmatpush2.msra.mxu0 0.0
          %7622 = vmatprep.subr.mxu0 0.0
          %7623 = vmatpush2.msra.mxu0 0.0
          %7624 = vmatprep.subr.mxu0 0.0
          %7625 = vmatpush2.msra.mxu0 0.0
          %7626 = vmatprep.subr.mxu0 0.0
          %7627 = vmatpush2.msra.mxu0 0.0
          %7628 = vmatprep.mubr.f32.mxu0 0.0
          %7629 = vmatmul.mubr.f32.gmra.mxu0 %v7562
          %v7630 = vpop.f32.mrf.mxu0
          %v7631 = vadd.f32 0.0, %v7630
          %v7632 = vpop.f32.mrf.mxu0
          %v7633 = vadd.f32 0.0, %v7632
          %7634 = vdwg.mxu0
          %v7635 = vadd.f32 %v7541, %v7631
          %v7636 = vadd.f32 %v7542, %v7633
          %v7637 = vld [vmem:[%s7448 + $0x1] sm:$0x3]
          %s7638 = scalar_lea.vmem %s6, 2944
          %v7639 = vld [vmem:[%s7638] sm:$0xff]
          %v7640 = vld [vmem:[%s7638 + $0x8] sm:$0xff]
          %v7641 = vld [vmem:[%s7638 + $0x10] sm:$0xff]
          %v7642 = vld [vmem:[%s7638 + $0x18] sm:$0xff]
          %v7643 = vld [vmem:[%s7638 + $0x20] sm:$0xff]
          %v7644 = vld [vmem:[%s7638 + $0x28] sm:$0xff]
          %v7645 = vld [vmem:[%s7638 + $0x30] sm:$0xff]
          %v7646 = vld [vmem:[%s7638 + $0x38] sm:$0xff]
          %v7647 = vld [vmem:[%s7638 + $0x40] sm:$0xff]
          %v7648 = vld [vmem:[%s7638 + $0x48] sm:$0xff]
          %v7649 = vld [vmem:[%s7638 + $0x50] sm:$0xff]
          %v7650 = vld [vmem:[%s7638 + $0x58] sm:$0xff]
          %v7651 = vld [vmem:[%s7638 + $0x60] sm:$0xff]
          %v7652 = vld [vmem:[%s7638 + $0x68] sm:$0xff]
          %v7653 = vld [vmem:[%s7638 + $0x70] sm:$0xff]
          %v7654 = vld [vmem:[%s7638 + $0x78] sm:$0xff]
          %v7656 = vsel %vm5494, %v7637, 0
          %7658 = vmatprep.subr.mxu0 0.0
          %7659 = vmatpush1.msra.mxu0 0.0
          %7660 = vmatprep.subr.mxu0 0.0
          %7661 = vmatpush1.msra.mxu0 0.0
          %7662 = vmatprep.subr.mxu0 0.0
          %7663 = vmatpush1.msra.mxu0 0.0
          %7664 = vmatprep.subr.mxu0 0.0
          %7665 = vmatpush1.msra.mxu0 0.0
          %7666 = vmatprep.subr.mxu0 0.0
          %7667 = vmatpush1.msra.mxu0 0.0
          %7668 = vmatprep.subr.mxu0 0.0
          %7669 = vmatpush1.msra.mxu0 0.0
          %7670 = vmatprep.subr.mxu0 0.0
          %7671 = vmatpush1.msra.mxu0 0.0
          %7672 = vmatprep.subr.mxu0 0.0
          %7673 = vmatpush1.msra.mxu0 0.0
          %7674 = vmatprep.subr.mxu0 %v7654
          %7675 = vmatpush1.msra.mxu0 %v7653
          %7676 = vmatprep.subr.mxu0 %v7652
          %7677 = vmatpush1.msra.mxu0 %v7651
          %7678 = vmatprep.subr.mxu0 %v7650
          %7679 = vmatpush1.msra.mxu0 %v7649
          %7680 = vmatprep.subr.mxu0 %v7648
          %7681 = vmatpush1.msra.mxu0 %v7647
          %7682 = vmatprep.subr.mxu0 %v7646
          %7683 = vmatpush1.msra.mxu0 %v7645
          %7684 = vmatprep.subr.mxu0 %v7644
          %7685 = vmatpush1.msra.mxu0 %v7643
          %7686 = vmatprep.subr.mxu0 %v7642
          %7687 = vmatpush1.msra.mxu0 %v7641
          %7688 = vmatprep.subr.mxu0 %v7640
          %7689 = vmatpush1.msra.mxu0 %v7639
          %7690 = vmatprep.subr.mxu0 0.0
          %7691 = vmatpush2.msra.mxu0 0.0
          %7692 = vmatprep.subr.mxu0 0.0
          %7693 = vmatpush2.msra.mxu0 0.0
          %7694 = vmatprep.subr.mxu0 0.0
          %7695 = vmatpush2.msra.mxu0 0.0
          %7696 = vmatprep.subr.mxu0 0.0
          %7697 = vmatpush2.msra.mxu0 0.0
          %7698 = vmatprep.subr.mxu0 0.0
          %7699 = vmatpush2.msra.mxu0 0.0
          %7700 = vmatprep.subr.mxu0 0.0
          %7701 = vmatpush2.msra.mxu0 0.0
          %7702 = vmatprep.subr.mxu0 0.0
          %7703 = vmatpush2.msra.mxu0 0.0
          %7704 = vmatprep.subr.mxu0 0.0
          %7705 = vmatpush2.msra.mxu0 0.0
          %7706 = vmatprep.subr.mxu0 0.0
          %7707 = vmatpush2.msra.mxu0 0.0
          %7708 = vmatprep.subr.mxu0 0.0
          %7709 = vmatpush2.msra.mxu0 0.0
          %7710 = vmatprep.subr.mxu0 0.0
          %7711 = vmatpush2.msra.mxu0 0.0
          %7712 = vmatprep.subr.mxu0 0.0
          %7713 = vmatpush2.msra.mxu0 0.0
          %7714 = vmatprep.subr.mxu0 0.0
          %7715 = vmatpush2.msra.mxu0 0.0
          %7716 = vmatprep.subr.mxu0 0.0
          %7717 = vmatpush2.msra.mxu0 0.0
          %7718 = vmatprep.subr.mxu0 0.0
          %7719 = vmatpush2.msra.mxu0 0.0
          %7720 = vmatprep.subr.mxu0 0.0
          %7721 = vmatpush2.msra.mxu0 0.0
          %7722 = vmatprep.mubr.f32.mxu0 0.0
          %7723 = vmatmul.mubr.f32.gmra.mxu0 %v7656
          %v7724 = vpop.f32.mrf.mxu0
          %v7725 = vadd.f32 0.0, %v7724
          %v7726 = vpop.f32.mrf.mxu0
          %v7727 = vadd.f32 0.0, %v7726
          %7728 = vdwg.mxu0
          %v7729 = vadd.f32 %v7635, %v7725
          %v7730 = vadd.f32 %v7636, %v7727
          %v7731 = vld [vmem:[%s7352 + $0x2] sm:$0x3]
          %s7732 = scalar_lea.vmem %s6, 3072
          %v7733 = vld [vmem:[%s7732] sm:$0xff]
          %v7734 = vld [vmem:[%s7732 + $0x8] sm:$0xff]
          %v7735 = vld [vmem:[%s7732 + $0x10] sm:$0xff]
          %v7736 = vld [vmem:[%s7732 + $0x18] sm:$0xff]
          %v7737 = vld [vmem:[%s7732 + $0x20] sm:$0xff]
          %v7738 = vld [vmem:[%s7732 + $0x28] sm:$0xff]
          %v7739 = vld [vmem:[%s7732 + $0x30] sm:$0xff]
          %v7740 = vld [vmem:[%s7732 + $0x38] sm:$0xff]
          %v7741 = vld [vmem:[%s7732 + $0x40] sm:$0xff]
          %v7742 = vld [vmem:[%s7732 + $0x48] sm:$0xff]
          %v7743 = vld [vmem:[%s7732 + $0x50] sm:$0xff]
          %v7744 = vld [vmem:[%s7732 + $0x58] sm:$0xff]
          %v7745 = vld [vmem:[%s7732 + $0x60] sm:$0xff]
          %v7746 = vld [vmem:[%s7732 + $0x68] sm:$0xff]
          %v7747 = vld [vmem:[%s7732 + $0x70] sm:$0xff]
          %v7748 = vld [vmem:[%s7732 + $0x78] sm:$0xff]
          %v7750 = vsel %vm5494, %v7731, 0
          %7752 = vmatprep.subr.mxu0 0.0
          %7753 = vmatpush1.msra.mxu0 0.0
          %7754 = vmatprep.subr.mxu0 0.0
          %7755 = vmatpush1.msra.mxu0 0.0
          %7756 = vmatprep.subr.mxu0 0.0
          %7757 = vmatpush1.msra.mxu0 0.0
          %7758 = vmatprep.subr.mxu0 0.0
          %7759 = vmatpush1.msra.mxu0 0.0
          %7760 = vmatprep.subr.mxu0 0.0
          %7761 = vmatpush1.msra.mxu0 0.0
          %7762 = vmatprep.subr.mxu0 0.0
          %7763 = vmatpush1.msra.mxu0 0.0
          %7764 = vmatprep.subr.mxu0 0.0
          %7765 = vmatpush1.msra.mxu0 0.0
          %7766 = vmatprep.subr.mxu0 0.0
          %7767 = vmatpush1.msra.mxu0 0.0
          %7768 = vmatprep.subr.mxu0 %v7748
          %7769 = vmatpush1.msra.mxu0 %v7747
          %7770 = vmatprep.subr.mxu0 %v7746
          %7771 = vmatpush1.msra.mxu0 %v7745
          %7772 = vmatprep.subr.mxu0 %v7744
          %7773 = vmatpush1.msra.mxu0 %v7743
          %7774 = vmatprep.subr.mxu0 %v7742
          %7775 = vmatpush1.msra.mxu0 %v7741
          %7776 = vmatprep.subr.mxu0 %v7740
          %7777 = vmatpush1.msra.mxu0 %v7739
          %7778 = vmatprep.subr.mxu0 %v7738
          %7779 = vmatpush1.msra.mxu0 %v7737
          %7780 = vmatprep.subr.mxu0 %v7736
          %7781 = vmatpush1.msra.mxu0 %v7735
          %7782 = vmatprep.subr.mxu0 %v7734
          %7783 = vmatpush1.msra.mxu0 %v7733
          %7784 = vmatprep.subr.mxu0 0.0
          %7785 = vmatpush2.msra.mxu0 0.0
          %7786 = vmatprep.subr.mxu0 0.0
          %7787 = vmatpush2.msra.mxu0 0.0
          %7788 = vmatprep.subr.mxu0 0.0
          %7789 = vmatpush2.msra.mxu0 0.0
          %7790 = vmatprep.subr.mxu0 0.0
          %7791 = vmatpush2.msra.mxu0 0.0
          %7792 = vmatprep.subr.mxu0 0.0
          %7793 = vmatpush2.msra.mxu0 0.0
          %7794 = vmatprep.subr.mxu0 0.0
          %7795 = vmatpush2.msra.mxu0 0.0
          %7796 = vmatprep.subr.mxu0 0.0
          %7797 = vmatpush2.msra.mxu0 0.0
          %7798 = vmatprep.subr.mxu0 0.0
          %7799 = vmatpush2.msra.mxu0 0.0
          %7800 = vmatprep.subr.mxu0 0.0
          %7801 = vmatpush2.msra.mxu0 0.0
          %7802 = vmatprep.subr.mxu0 0.0
          %7803 = vmatpush2.msra.mxu0 0.0
          %7804 = vmatprep.subr.mxu0 0.0
          %7805 = vmatpush2.msra.mxu0 0.0
          %7806 = vmatprep.subr.mxu0 0.0
          %7807 = vmatpush2.msra.mxu0 0.0
          %7808 = vmatprep.subr.mxu0 0.0
          %7809 = vmatpush2.msra.mxu0 0.0
          %7810 = vmatprep.subr.mxu0 0.0
          %7811 = vmatpush2.msra.mxu0 0.0
          %7812 = vmatprep.subr.mxu0 0.0
          %7813 = vmatpush2.msra.mxu0 0.0
          %7814 = vmatprep.subr.mxu0 0.0
          %7815 = vmatpush2.msra.mxu0 0.0
          %7816 = vmatprep.mubr.f32.mxu0 0.0
          %7817 = vmatmul.mubr.f32.gmra.mxu0 %v7750
          %v7818 = vpop.f32.mrf.mxu0
          %v7819 = vadd.f32 0.0, %v7818
          %v7820 = vpop.f32.mrf.mxu0
          %v7821 = vadd.f32 0.0, %v7820
          %7822 = vdwg.mxu0
          %v7823 = vadd.f32 %v7729, %v7819
          %v7824 = vadd.f32 %v7730, %v7821
          %v7825 = vld [vmem:[%s7] sm:$0x3]
          %v7827 = vlaneseq
          %v7828 = vshrl.u32 %v7827, 7
          %v7829 = vsub.s32 0, %v7828
          %v7830 = vrot.slane %v7825, %v7829
          %v7831 = vlaneseq
          %v7832 = vshrl.u32 %v7831, 7
          %v7833 = vsub.s32 1, %v7832
          %v7834 = vrot.slane %v7825, %v7833
          %v7837 = vadd.f32 %v7823, %v7830
          %v7838 = vadd.f32 %v7824, %v7834
          %v7839 = vmax.f32 %v7837, 0.0
          %v7840 = vmax.f32 %v7838, 0.0
          %v7841 = vld [vmem:[#allocation4] sm:$0x3]
          %vm7842 = vcmask 1041408
          %v7843 = vsel %vm7842, %v7839, 0.0
          %v7844 = vrot.slane %v7843, 4
          %v7845 = vadd.f32 %v7843, %v7844
          %v7846 = vrot.slane %v7845, 2
          %v7847 = vadd.f32 %v7845, %v7846
          %v7848 = vrot.slane %v7847, 1
          %v7849 = vadd.f32 %v7847, %v7848
          %v7850 = vsel %vm7842, %v7840, 0.0
          %v7851 = vrot.slane %v7850, 4
          %v7852 = vadd.f32 %v7850, %v7851
          %v7853 = vrot.slane %v7852, 2
          %v7854 = vadd.f32 %v7852, %v7853
          %v7855 = vrot.slane %v7854, 1
          %v7856 = vadd.f32 %v7854, %v7855
          %v7859 = vcombine.low %v7849, %v7856
          %v7861 = vunpack.c.l.s4 1966171168
          %v7862 = vunpack.c.0.s8 %v7861
          %v7863 = vlaneseq
          %v7864 = vshrl.u32 %v7863, 7
          %v7865 = vsub.s32 %v7862, %v7864
          %v7866 = vrot.slane %v7859, %v7865
          %v7868 = vunpack.c.l.s4 1966171168
          %v7869 = vunpack.c.0.s8 %v7868
          %v7870 = vlaneseq
          %v7871 = vshrl.u32 %v7870, 7
          %v7872 = vsub.s32 %v7869, %v7871
          %v7873 = vrot.slane %v7866, %v7872
          %v7875 = vadd.f32 %v7841, %v7873
          %7876 = vst.msk [vmem:[#allocation4] sm:$0x3] %vm5446, %v7875
        $region107: #{value_network_forward.1} parent=87 // loop_footer
          %s5453 = sadd.s32 1, %s5449
        $region108: #{value_network_forward.1} parent=87 // loop_footer_branch
          %5448 = sbr.rel target = $region104
        $region109: #{value_network_forward.1} parent=87 // loop_exit
          _
        %v7877 = vld [vmem:[#allocation4] sm:$0x3]
        %v7878 = vmul.f32 %v7877, 0.25
        %v7879 = vld [vmem:[%s559] sm:$0x1]
        %v7880 = vld [vmem:[%s8] sm:$0x1f]
        %v7881 = vld [vmem:[%s9] sm:$0x1]
        %vm7882 = vcmask 39936
        %v7884 = vsel %vm7882, %v7879, 0
        %vm7886 = vcmask 1044480
        %v7888 = vsel %vm7886, %v7880, 0
        %7890 = vmatprep.subr.mxu0 0.0
        %7891 = vmatpush1.msra.mxu0 0.0
        %7892 = vmatprep.subr.mxu0 0.0
        %7893 = vmatpush1.msra.mxu0 0.0
        %7894 = vmatprep.subr.mxu0 0.0
        %7895 = vmatpush1.msra.mxu0 0.0
        %7896 = vmatprep.subr.mxu0 0.0
        %7897 = vmatpush1.msra.mxu0 0.0
        %7898 = vmatprep.subr.mxu0 0.0
        %7899 = vmatpush1.msra.mxu0 0.0
        %7900 = vmatprep.subr.mxu0 0.0
        %7901 = vmatpush1.msra.mxu0 0.0
        %7902 = vmatprep.subr.mxu0 0.0
        %7903 = vmatpush1.msra.mxu0 0.0
        %7904 = vmatprep.subr.mxu0 0.0
        %7905 = vmatpush1.msra.mxu0 0.0
        %7906 = vmatprep.subr.mxu0 0.0
        %7907 = vmatpush1.msra.mxu0 0.0
        %7908 = vmatprep.subr.mxu0 0.0
        %7909 = vmatpush1.msra.mxu0 0.0
        %7910 = vmatprep.subr.mxu0 0.0
        %7911 = vmatpush1.msra.mxu0 0.0
        %7912 = vmatprep.subr.mxu0 0.0
        %7913 = vmatpush1.msra.mxu0 0.0
        %7914 = vmatprep.subr.mxu0 0.0
        %7915 = vmatpush1.msra.mxu0 0.0
        %7916 = vmatprep.subr.mxu0 0.0
        %7917 = vmatpush1.msra.mxu0 0.0
        %7918 = vmatprep.subr.mxu0 0.0
        %7919 = vmatpush1.msra.mxu0 0.0
        %7920 = vmatprep.subr.mxu0 0.0
        %7921 = vmatpush1.msra.mxu0 %v7888
        %7922 = vmatprep.subr.mxu0 0.0
        %7923 = vmatpush2.msra.mxu0 0.0
        %7924 = vmatprep.subr.mxu0 0.0
        %7925 = vmatpush2.msra.mxu0 0.0
        %7926 = vmatprep.subr.mxu0 0.0
        %7927 = vmatpush2.msra.mxu0 0.0
        %7928 = vmatprep.subr.mxu0 0.0
        %7929 = vmatpush2.msra.mxu0 0.0
        %7930 = vmatprep.subr.mxu0 0.0
        %7931 = vmatpush2.msra.mxu0 0.0
        %7932 = vmatprep.subr.mxu0 0.0
        %7933 = vmatpush2.msra.mxu0 0.0
        %7934 = vmatprep.subr.mxu0 0.0
        %7935 = vmatpush2.msra.mxu0 0.0
        %7936 = vmatprep.subr.mxu0 0.0
        %7937 = vmatpush2.msra.mxu0 0.0
        %7938 = vmatprep.subr.mxu0 0.0
        %7939 = vmatpush2.msra.mxu0 0.0
        %7940 = vmatprep.subr.mxu0 0.0
        %7941 = vmatpush2.msra.mxu0 0.0
        %7942 = vmatprep.subr.mxu0 0.0
        %7943 = vmatpush2.msra.mxu0 0.0
        %7944 = vmatprep.subr.mxu0 0.0
        %7945 = vmatpush2.msra.mxu0 0.0
        %7946 = vmatprep.subr.mxu0 0.0
        %7947 = vmatpush2.msra.mxu0 0.0
        %7948 = vmatprep.subr.mxu0 0.0
        %7949 = vmatpush2.msra.mxu0 0.0
        %7950 = vmatprep.subr.mxu0 0.0
        %7951 = vmatpush2.msra.mxu0 0.0
        %7952 = vmatprep.subr.mxu0 0.0
        %7953 = vmatpush2.msra.mxu0 0.0
        %7954 = vmatprep.mubr.f32.mxu0 0.0
        %7955 = vmatmul.mubr.f32.gmra.mxu0 %v7884
        %v7956 = vpop.f32.mrf.mxu0
        %v7957 = vadd.f32 %v7881, %v7956
        %v7958 = vpop.f32.mrf.mxu0
        %7959 = vdwg.mxu0
        %v7960 = vmax.f32 %v7957, 0.0
        %v7961 = vld [vmem:[%s10] sm:$0xff]
        %v7962 = vld [vmem:[%s10 + $0x8] sm:$0xff]
        %v7963 = vld [vmem:[%s10 + $0x10] sm:$0xff]
        %v7964 = vld [vmem:[%s10 + $0x18] sm:$0xff]
        %v7965 = vld [vmem:[%s10 + $0x20] sm:$0xff]
        %v7966 = vld [vmem:[%s10 + $0x28] sm:$0xff]
        %v7967 = vld [vmem:[%s10 + $0x30] sm:$0xff]
        %v7968 = vld [vmem:[%s10 + $0x38] sm:$0xff]
        %v7969 = vld [vmem:[%s10 + $0x40] sm:$0xff]
        %v7970 = vld [vmem:[%s10 + $0x48] sm:$0xff]
        %v7971 = vld [vmem:[%s10 + $0x50] sm:$0xff]
        %v7972 = vld [vmem:[%s10 + $0x58] sm:$0xff]
        %v7973 = vld [vmem:[%s10 + $0x60] sm:$0xff]
        %v7974 = vld [vmem:[%s10 + $0x68] sm:$0xff]
        %v7975 = vld [vmem:[%s10 + $0x70] sm:$0xff]
        %v7976 = vld [vmem:[%s10 + $0x78] sm:$0xff]
        %v7977 = vld [vmem:[%s10 + $0x80] sm:$0xff]
        %v7978 = vld [vmem:[%s10 + $0x88] sm:$0xff]
        %v7979 = vld [vmem:[%s10 + $0x90] sm:$0xff]
        %v7980 = vld [vmem:[%s10 + $0x98] sm:$0xff]
        %v7981 = vld [vmem:[%s10 + $0xa0] sm:$0xff]
        %v7982 = vld [vmem:[%s10 + $0xa8] sm:$0xff]
        %v7983 = vld [vmem:[%s10 + $0xb0] sm:$0xff]
        %v7984 = vld [vmem:[%s10 + $0xb8] sm:$0xff]
        %v7985 = vld [vmem:[%s10 + $0xc0] sm:$0xff]
        %v7986 = vld [vmem:[%s10 + $0xc8] sm:$0xff]
        %v7987 = vld [vmem:[%s10 + $0xd0] sm:$0xff]
        %v7988 = vld [vmem:[%s10 + $0xd8] sm:$0xff]
        %v7989 = vld [vmem:[%s10 + $0xe0] sm:$0xff]
        %v7990 = vld [vmem:[%s10 + $0xe8] sm:$0xff]
        %v7991 = vld [vmem:[%s10 + $0xf0] sm:$0xff]
        %v7992 = vld [vmem:[%s10 + $0xf8] sm:$0xff]
        %v7993 = vld [vmem:[%s11] sm:$0xff]
        %v7994 = vld [vmem:[%s11 + $0x8] sm:$0xff]
        %v7995 = vld [vmem:[%s11 + $0x10] sm:$0xff]
        %v7996 = vld [vmem:[%s11 + $0x18] sm:$0xff]
        %vm7997 = vcmask 261120
        %v7999 = vsel %vm7997, %v7960, 0
        %8001 = vmatprep.subr.mxu0 0.0
        %8002 = vmatpush1.msra.mxu0 0.0
        %8003 = vmatprep.subr.mxu0 0.0
        %8004 = vmatpush1.msra.mxu0 0.0
        %8005 = vmatprep.subr.mxu0 0.0
        %8006 = vmatpush1.msra.mxu0 0.0
        %8007 = vmatprep.subr.mxu0 0.0
        %8008 = vmatpush1.msra.mxu0 0.0
        %8009 = vmatprep.subr.mxu0 0.0
        %8010 = vmatpush1.msra.mxu0 0.0
        %8011 = vmatprep.subr.mxu0 0.0
        %8012 = vmatpush1.msra.mxu0 0.0
        %8013 = vmatprep.subr.mxu0 0.0
        %8014 = vmatpush1.msra.mxu0 0.0
        %8015 = vmatprep.subr.mxu0 0.0
        %8016 = vmatpush1.msra.mxu0 0.0
        %8017 = vmatprep.subr.mxu0 0.0
        %8018 = vmatpush1.msra.mxu0 0.0
        %8019 = vmatprep.subr.mxu0 0.0
        %8020 = vmatpush1.msra.mxu0 0.0
        %8021 = vmatprep.subr.mxu0 0.0
        %8022 = vmatpush1.msra.mxu0 0.0
        %8023 = vmatprep.subr.mxu0 0.0
        %8024 = vmatpush1.msra.mxu0 0.0
        %8025 = vmatprep.subr.mxu0 0.0
        %8026 = vmatpush1.msra.mxu0 %v7996
        %8027 = vmatprep.subr.mxu0 0.0
        %8028 = vmatpush1.msra.mxu0 %v7995
        %8029 = vmatprep.subr.mxu0 0.0
        %8030 = vmatpush1.msra.mxu0 %v7994
        %8031 = vmatprep.subr.mxu0 0.0
        %8032 = vmatpush1.msra.mxu0 %v7993
        %8033 = vmatprep.subr.mxu0 0.0
        %8034 = vmatpush2.msra.mxu0 0.0
        %8035 = vmatprep.subr.mxu0 0.0
        %8036 = vmatpush2.msra.mxu0 0.0
        %8037 = vmatprep.subr.mxu0 0.0
        %8038 = vmatpush2.msra.mxu0 0.0
        %8039 = vmatprep.subr.mxu0 0.0
        %8040 = vmatpush2.msra.mxu0 0.0
        %8041 = vmatprep.subr.mxu0 0.0
        %8042 = vmatpush2.msra.mxu0 0.0
        %8043 = vmatprep.subr.mxu0 0.0
        %8044 = vmatpush2.msra.mxu0 0.0
        %8045 = vmatprep.subr.mxu0 0.0
        %8046 = vmatpush2.msra.mxu0 0.0
        %8047 = vmatprep.subr.mxu0 0.0
        %8048 = vmatpush2.msra.mxu0 0.0
        %8049 = vmatprep.subr.mxu0 0.0
        %8050 = vmatpush2.msra.mxu0 0.0
        %8051 = vmatprep.subr.mxu0 0.0
        %8052 = vmatpush2.msra.mxu0 0.0
        %8053 = vmatprep.subr.mxu0 0.0
        %8054 = vmatpush2.msra.mxu0 0.0
        %8055 = vmatprep.subr.mxu0 0.0
        %8056 = vmatpush2.msra.mxu0 0.0
        %8057 = vmatprep.subr.mxu0 0.0
        %8058 = vmatpush2.msra.mxu0 0.0
        %8059 = vmatprep.subr.mxu0 0.0
        %8060 = vmatpush2.msra.mxu0 0.0
        %8061 = vmatprep.subr.mxu0 0.0
        %8062 = vmatpush2.msra.mxu0 0.0
        %8063 = vmatprep.subr.mxu0 0.0
        %8064 = vmatpush2.msra.mxu0 0.0
        %8065 = vmatprep.mubr.f32.mxu0 0.0
        %8066 = vmatmul.mubr.f32.gmra.mxu0 %v7999
        %v8067 = vpop.f32.mrf.mxu0
        %v8068 = vadd.f32 0.0, %v8067
        %v8069 = vpop.f32.mrf.mxu0
        %8070 = vdwg.mxu0
        %v8072 = vlaneseq
        %v8073 = vshrl.u32 %v8072, 7
        %v8074 = vsub.s32 0, %v8073
        %v8075 = vrot.slane %v7878, %v8074
        %v8076 = vlaneseq
        %v8077 = vshrl.u32 %v8076, 7
        %v8078 = vsub.s32 1, %v8077
        %v8079 = vrot.slane %v7878, %v8078
        %8082 = vmatprep.subr.mxu0 0.0
        %8083 = vmatpush1.msra.mxu0 %v7976
        %8084 = vmatprep.subr.mxu0 0.0
        %8085 = vmatpush1.msra.mxu0 %v7975
        %8086 = vmatprep.subr.mxu0 0.0
        %8087 = vmatpush1.msra.mxu0 %v7974
        %8088 = vmatprep.subr.mxu0 0.0
        %8089 = vmatpush1.msra.mxu0 %v7973
        %8090 = vmatprep.subr.mxu0 0.0
        %8091 = vmatpush1.msra.mxu0 %v7972
        %8092 = vmatprep.subr.mxu0 0.0
        %8093 = vmatpush1.msra.mxu0 %v7971
        %8094 = vmatprep.subr.mxu0 0.0
        %8095 = vmatpush1.msra.mxu0 %v7970
        %8096 = vmatprep.subr.mxu0 0.0
        %8097 = vmatpush1.msra.mxu0 %v7969
        %8098 = vmatprep.subr.mxu0 0.0
        %8099 = vmatpush1.msra.mxu0 %v7968
        %8100 = vmatprep.subr.mxu0 0.0
        %8101 = vmatpush1.msra.mxu0 %v7967
        %8102 = vmatprep.subr.mxu0 0.0
        %8103 = vmatpush1.msra.mxu0 %v7966
        %8104 = vmatprep.subr.mxu0 0.0
        %8105 = vmatpush1.msra.mxu0 %v7965
        %8106 = vmatprep.subr.mxu0 0.0
        %8107 = vmatpush1.msra.mxu0 %v7964
        %8108 = vmatprep.subr.mxu0 0.0
        %8109 = vmatpush1.msra.mxu0 %v7963
        %8110 = vmatprep.subr.mxu0 0.0
        %8111 = vmatpush1.msra.mxu0 %v7962
        %8112 = vmatprep.subr.mxu0 0.0
        %8113 = vmatpush1.msra.mxu0 %v7961
        %8114 = vmatprep.subr.mxu0 0.0
        %8115 = vmatpush2.msra.mxu0 %v7992
        %8116 = vmatprep.subr.mxu0 0.0
        %8117 = vmatpush2.msra.mxu0 %v7991
        %8118 = vmatprep.subr.mxu0 0.0
        %8119 = vmatpush2.msra.mxu0 %v7990
        %8120 = vmatprep.subr.mxu0 0.0
        %8121 = vmatpush2.msra.mxu0 %v7989
        %8122 = vmatprep.subr.mxu0 0.0
        %8123 = vmatpush2.msra.mxu0 %v7988
        %8124 = vmatprep.subr.mxu0 0.0
        %8125 = vmatpush2.msra.mxu0 %v7987
        %8126 = vmatprep.subr.mxu0 0.0
        %8127 = vmatpush2.msra.mxu0 %v7986
        %8128 = vmatprep.subr.mxu0 0.0
        %8129 = vmatpush2.msra.mxu0 %v7985
        %8130 = vmatprep.subr.mxu0 0.0
        %8131 = vmatpush2.msra.mxu0 %v7984
        %8132 = vmatprep.subr.mxu0 0.0
        %8133 = vmatpush2.msra.mxu0 %v7983
        %8134 = vmatprep.subr.mxu0 0.0
        %8135 = vmatpush2.msra.mxu0 %v7982
        %8136 = vmatprep.subr.mxu0 0.0
        %8137 = vmatpush2.msra.mxu0 %v7981
        %8138 = vmatprep.subr.mxu0 0.0
        %8139 = vmatpush2.msra.mxu0 %v7980
        %8140 = vmatprep.subr.mxu0 0.0
        %8141 = vmatpush2.msra.mxu0 %v7979
        %8142 = vmatprep.subr.mxu0 0.0
        %8143 = vmatpush2.msra.mxu0 %v7978
        %8144 = vmatprep.subr.mxu0 0.0
        %8145 = vmatpush2.msra.mxu0 %v7977
        %8146 = vmatprep.mubr.f32.mxu0 %v8079
        %8147 = vmatmul.mubr.f32.gmra.mxu0 %v8075
        %v8148 = vpop.f32.mrf.mxu0
        %v8149 = vadd.f32 %v8068, %v8148
        %v8150 = vpop.f32.mrf.mxu0
        %8151 = vdwg.mxu0
        %v8152 = vld [vmem:[%s12] sm:$0x1]
        %v8153 = vadd.f32 %v8149, %v8152
        %v8154 = vmax.f32 %v8153, 0.0
        %v8155 = vld [vmem:[%s13] sm:$0xff]
        %v8156 = vld [vmem:[%s13 + $0x8] sm:$0xff]
        %v8157 = vld [vmem:[%s13 + $0x10] sm:$0xff]
        %v8158 = vld [vmem:[%s13 + $0x18] sm:$0xff]
        %v8159 = vld [vmem:[%s13 + $0x20] sm:$0xff]
        %v8160 = vld [vmem:[%s13 + $0x28] sm:$0xff]
        %v8161 = vld [vmem:[%s13 + $0x30] sm:$0xff]
        %v8162 = vld [vmem:[%s13 + $0x38] sm:$0xff]
        %v8163 = vld [vmem:[%s13 + $0x40] sm:$0xff]
        %v8164 = vld [vmem:[%s13 + $0x48] sm:$0xff]
        %v8165 = vld [vmem:[%s13 + $0x50] sm:$0xff]
        %v8166 = vld [vmem:[%s13 + $0x58] sm:$0xff]
        %v8167 = vld [vmem:[%s13 + $0x60] sm:$0xff]
        %v8168 = vld [vmem:[%s13 + $0x68] sm:$0xff]
        %v8169 = vld [vmem:[%s13 + $0x70] sm:$0xff]
        %v8170 = vld [vmem:[%s13 + $0x78] sm:$0xff]
        %v8171 = vld [vmem:[%s14] sm:$0x1]
        %8172 = vmatprep.subr.mxu0 0.0
        %8173 = vmatpush1.msra.mxu0 %v8170
        %8174 = vmatprep.subr.mxu0 0.0
        %8175 = vmatpush1.msra.mxu0 %v8169
        %8176 = vmatprep.subr.mxu0 0.0
        %8177 = vmatpush1.msra.mxu0 %v8168
        %8178 = vmatprep.subr.mxu0 0.0
        %8179 = vmatpush1.msra.mxu0 %v8167
        %8180 = vmatprep.subr.mxu0 0.0
        %8181 = vmatpush1.msra.mxu0 %v8166
        %8182 = vmatprep.subr.mxu0 0.0
        %8183 = vmatpush1.msra.mxu0 %v8165
        %8184 = vmatprep.subr.mxu0 0.0
        %8185 = vmatpush1.msra.mxu0 %v8164
        %8186 = vmatprep.subr.mxu0 0.0
        %8187 = vmatpush1.msra.mxu0 %v8163
        %8188 = vmatprep.subr.mxu0 0.0
        %8189 = vmatpush1.msra.mxu0 %v8162
        %8190 = vmatprep.subr.mxu0 0.0
        %8191 = vmatpush1.msra.mxu0 %v8161
        %8192 = vmatprep.subr.mxu0 0.0
        %8193 = vmatpush1.msra.mxu0 %v8160
        %8194 = vmatprep.subr.mxu0 0.0
        %8195 = vmatpush1.msra.mxu0 %v8159
        %8196 = vmatprep.subr.mxu0 0.0
        %8197 = vmatpush1.msra.mxu0 %v8158
        %8198 = vmatprep.subr.mxu0 0.0
        %8199 = vmatpush1.msra.mxu0 %v8157
        %8200 = vmatprep.subr.mxu0 0.0
        %8201 = vmatpush1.msra.mxu0 %v8156
        %8202 = vmatprep.subr.mxu0 0.0
        %8203 = vmatpush1.msra.mxu0 %v8155
        %8204 = vmatprep.subr.mxu0 0.0
        %8205 = vmatpush2.msra.mxu0 0.0
        %8206 = vmatprep.subr.mxu0 0.0
        %8207 = vmatpush2.msra.mxu0 0.0
        %8208 = vmatprep.subr.mxu0 0.0
        %8209 = vmatpush2.msra.mxu0 0.0
        %8210 = vmatprep.subr.mxu0 0.0
        %8211 = vmatpush2.msra.mxu0 0.0
        %8212 = vmatprep.subr.mxu0 0.0
        %8213 = vmatpush2.msra.mxu0 0.0
        %8214 = vmatprep.subr.mxu0 0.0
        %8215 = vmatpush2.msra.mxu0 0.0
        %8216 = vmatprep.subr.mxu0 0.0
        %8217 = vmatpush2.msra.mxu0 0.0
        %8218 = vmatprep.subr.mxu0 0.0
        %8219 = vmatpush2.msra.mxu0 0.0
        %8220 = vmatprep.subr.mxu0 0.0
        %8221 = vmatpush2.msra.mxu0 0.0
        %8222 = vmatprep.subr.mxu0 0.0
        %8223 = vmatpush2.msra.mxu0 0.0
        %8224 = vmatprep.subr.mxu0 0.0
        %8225 = vmatpush2.msra.mxu0 0.0
        %8226 = vmatprep.subr.mxu0 0.0
        %8227 = vmatpush2.msra.mxu0 0.0
        %8228 = vmatprep.subr.mxu0 0.0
        %8229 = vmatpush2.msra.mxu0 0.0
        %8230 = vmatprep.subr.mxu0 0.0
        %8231 = vmatpush2.msra.mxu0 0.0
        %8232 = vmatprep.subr.mxu0 0.0
        %8233 = vmatpush2.msra.mxu0 0.0
        %8234 = vmatprep.subr.mxu0 0.0
        %8235 = vmatpush2.msra.mxu0 0.0
        %8236 = vmatprep.mubr.f32.mxu0 0.0
        %8237 = vmatmul.mubr.f32.gmra.mxu0 %v8154
        %v8238 = vpop.f32.mrf.mxu0
        %v8239 = vadd.f32 %v8171, %v8238
        %v8240 = vpop.f32.mrf.mxu0
        %8241 = vdwg.mxu0
        %v8242 = vmax.f32 %v8239, 0.0
        %v8243 = vld [vmem:[%s15] sm:$0xff]
        %v8244 = vld [vmem:[%s15 + $0x8] sm:$0xff]
        %v8245 = vld [vmem:[%s15 + $0x10] sm:$0xff]
        %v8246 = vld [vmem:[%s15 + $0x18] sm:$0xff]
        %v8247 = vld [vmem:[%s16] sm:$0x1]
        %v8249 = vsel %vm7997, %v8242, 0
        %8251 = vmatprep.subr.mxu0 0.0
        %8252 = vmatpush1.msra.mxu0 0.0
        %8253 = vmatprep.subr.mxu0 0.0
        %8254 = vmatpush1.msra.mxu0 0.0
        %8255 = vmatprep.subr.mxu0 0.0
        %8256 = vmatpush1.msra.mxu0 0.0
        %8257 = vmatprep.subr.mxu0 0.0
        %8258 = vmatpush1.msra.mxu0 0.0
        %8259 = vmatprep.subr.mxu0 0.0
        %8260 = vmatpush1.msra.mxu0 0.0
        %8261 = vmatprep.subr.mxu0 0.0
        %8262 = vmatpush1.msra.mxu0 0.0
        %8263 = vmatprep.subr.mxu0 0.0
        %8264 = vmatpush1.msra.mxu0 0.0
        %8265 = vmatprep.subr.mxu0 0.0
        %8266 = vmatpush1.msra.mxu0 0.0
        %8267 = vmatprep.subr.mxu0 0.0
        %8268 = vmatpush1.msra.mxu0 0.0
        %8269 = vmatprep.subr.mxu0 0.0
        %8270 = vmatpush1.msra.mxu0 0.0
        %8271 = vmatprep.subr.mxu0 0.0
        %8272 = vmatpush1.msra.mxu0 0.0
        %8273 = vmatprep.subr.mxu0 0.0
        %8274 = vmatpush1.msra.mxu0 0.0
        %8275 = vmatprep.subr.mxu0 0.0
        %8276 = vmatpush1.msra.mxu0 %v8246
        %8277 = vmatprep.subr.mxu0 0.0
        %8278 = vmatpush1.msra.mxu0 %v8245
        %8279 = vmatprep.subr.mxu0 0.0
        %8280 = vmatpush1.msra.mxu0 %v8244
        %8281 = vmatprep.subr.mxu0 0.0
        %8282 = vmatpush1.msra.mxu0 %v8243
        %8283 = vmatprep.subr.mxu0 0.0
        %8284 = vmatpush2.msra.mxu0 0.0
        %8285 = vmatprep.subr.mxu0 0.0
        %8286 = vmatpush2.msra.mxu0 0.0
        %8287 = vmatprep.subr.mxu0 0.0
        %8288 = vmatpush2.msra.mxu0 0.0
        %8289 = vmatprep.subr.mxu0 0.0
        %8290 = vmatpush2.msra.mxu0 0.0
        %8291 = vmatprep.subr.mxu0 0.0
        %8292 = vmatpush2.msra.mxu0 0.0
        %8293 = vmatprep.subr.mxu0 0.0
        %8294 = vmatpush2.msra.mxu0 0.0
        %8295 = vmatprep.subr.mxu0 0.0
        %8296 = vmatpush2.msra.mxu0 0.0
        %8297 = vmatprep.subr.mxu0 0.0
        %8298 = vmatpush2.msra.mxu0 0.0
        %8299 = vmatprep.subr.mxu0 0.0
        %8300 = vmatpush2.msra.mxu0 0.0
        %8301 = vmatprep.subr.mxu0 0.0
        %8302 = vmatpush2.msra.mxu0 0.0
        %8303 = vmatprep.subr.mxu0 0.0
        %8304 = vmatpush2.msra.mxu0 0.0
        %8305 = vmatprep.subr.mxu0 0.0
        %8306 = vmatpush2.msra.mxu0 0.0
        %8307 = vmatprep.subr.mxu0 0.0
        %8308 = vmatpush2.msra.mxu0 0.0
        %8309 = vmatprep.subr.mxu0 0.0
        %8310 = vmatpush2.msra.mxu0 0.0
        %8311 = vmatprep.subr.mxu0 0.0
        %8312 = vmatpush2.msra.mxu0 0.0
        %8313 = vmatprep.subr.mxu0 0.0
        %8314 = vmatpush2.msra.mxu0 0.0
        %8315 = vmatprep.mubr.f32.mxu0 0.0
        %8316 = vmatmul.mubr.f32.gmra.mxu0 %v8249
        %v8317 = vpop.f32.mrf.mxu0
        %v8318 = vadd.f32 %v8247, %v8317
        %v8319 = vpop.f32.mrf.mxu0
        %8320 = vdwg.mxu0
        %vm8321 = vcmask 16384
        %8322 = vst.msk [vmem:[%s551] sm:$0x1] %vm8321, %v8318
        %s8323 = sand.u32 %s406, 1
        %s8324 = scalar_lea.sflag [#allocation6], %s8323
        %s8325 = sand.u32 %s406, 1
        %s8326 = scalar_lea.vmem [#allocation5], %s8325
        // Predicated region
        $region110: #{value_network_forward.1} parent=87 // pred_check
          %p8327 = pneg %p416
        $region111: #{value_network_forward.1} parent=87 // pred_check_branch
          %8329 = sbr.rel (%p8327) target = $region113
        $region112: #{value_network_forward.1} parent=87 // pred_region
          %s8331 = ssub.s32 16, 16
          %8332 = vsyncadd %s8324, %s8331
          %s8333 = smul.addr %s31, 16
          %s8334 = scalar_lea.hbm %s17, %s8333
          %s8336 = sshll.u32 %s8326, 4
          %s8337 = int_to_ptr.vmem [resolvable:$true] %s8336
          %8339 = dma.vmem_to_hbm [thread:$0]  %s8337, 16, %s8334, %s8324
        $region113: #{value_network_forward.1} parent=87 // pred_fallthru
          _
      $region88: #{value_network_forward.1} parent=5 // pred_fallthru
        _
      %p8340 = scmp.le.s32.totalorder 2, %s26
      // Predicated region
      $region114: #{value_network_forward.1} parent=5 // pred_check
        %p8341 = pneg %p8340
      $region115: #{value_network_forward.1} parent=5 // pred_check_branch
        %8343 = sbr.rel (%p8341) target = $region117
      $region116: #{value_network_forward.1} parent=5 // pred_region
        %s8344 = ssub.s32 %s26, 2
        // Predicated region
        $region118: #{value_network_forward.1} parent=116 // pred_check
          %p8345 = pneg %p422
        $region119: #{value_network_forward.1} parent=116 // pred_check_branch
          %8347 = sbr.rel (%p8345) target = $region121
        $region120: #{value_network_forward.1} parent=116 // pred_region
          %s8348 = sand.u32 %s407, 1
          %s8349 = scalar_lea.sflag [#allocation6], %s8348
          %s8350 = sand.u32 %s407, 1
          %s8351 = scalar_lea.vmem [#allocation5], %s8350
          %8352 = dma.done %s8349, 16
        $region121: #{value_network_forward.1} parent=116 // pred_fallthru
          _
      $region117: #{value_network_forward.1} parent=5 // pred_fallthru
        _
    $region6: #{value_network_forward.1} parent=1 // loop_footer
      %s30 = sadd.s32 1, %s26
    $region7: #{value_network_forward.1} parent=1 // loop_footer_branch
      %25 = sbr.rel target = $region3
    $region8: #{value_network_forward.1} parent=1 // loop_exit
      _
    %8353 = vsyncpa [#allocation6], 1
    %s8354 = scalar_lea.sflag [#allocation6], 1
    %8355 = vsyncpa %s8354, 1

</llo_original>
